<compile_context>
chip_gen: v7x
topology: tpu7x:2x2x1
jax: 0.10.0
libtpu: 0.0.40
codegen_flags: <defaults>
</compile_context>

<pallas_src>
import functools

import numpy as np

import jax
import jax.numpy as jnp
from jax import lax
from jax.experimental import pallas as pl
from jax.experimental.pallas import tpu as pltpu


# ----------------------------------------------------------------------------
# Polyphase tables for ConvTranspose2d(k=3, stride=2, padding=1, out_pad=1):
# output pixel (2m+ar, 2n+ac) accumulates taps ((kh, kw), shift-slot) where the
# shift slot indexes the stacked shift matrices built for shifts [0, +1, +W, +W+1]
# (reading input[m, n], input[m, n+1], input[m+1, n], input[m+1, n+1]).
# ----------------------------------------------------------------------------
_PHASES = ((0, 0), (0, 1), (1, 0), (1, 1))
_PHASE_TAPS = {
    (0, 0): (((1, 1), 0),),
    (0, 1): (((1, 2), 0), ((1, 0), 1)),
    (1, 0): (((2, 1), 0), ((0, 1), 2)),
    (1, 1): (((2, 2), 0), ((2, 0), 1), ((0, 2), 2), ((0, 0), 3)),
}

_OPERAND_ORDER = ("fcw", "fcb", "wd", "bd", "td",
                  "w1", "b1", "t1", "s1",
                  "w2", "b2", "t2")


# ----------------------------------------------------------------------------
# One-time parameter preparation (hoisted out of the forward pass).
# Activation layouts used by the kernel:
#   stage-1: (32 ch, 81)  = flattened 9x9 buffer (7x7 interior, zero border)
#   stage-2: (16 ch, 225) = flattened 15x15 buffer (14x14 valid, zero row/col 14)
# ----------------------------------------------------------------------------
def prepare_decoder_params(params):
    f32 = np.float32
    fc_w = np.asarray(params["fc_w"], f32)   # (1568, d)
    fc_b = np.asarray(params["fc_b"], f32)   # (1568,)
    cd_w = np.asarray(params["cd_w"], f32)   # (32, 32, 3, 3)
    cd_b = np.asarray(params["cd_b"], f32)   # (32,)
    c1_w = np.asarray(params["c1_w"], f32)   # (32, 16, 3, 3)  (in, out, kh, kw)
    c1_b = np.asarray(params["c1_b"], f32)   # (16,)
    c2_w = np.asarray(params["c2_w"], f32)   # (16, 1, 3, 3)
    c2_b = np.asarray(params["c2_b"], f32)   # (1,)
    d = fc_w.shape[1]

    # interior of the 9x9 buffer (the real 7x7 pixels) / valid part of 15x15.
    interior81 = np.array([(r + 1) * 9 + (c + 1) for r in range(7) for c in range(7)])
    valid225 = np.array([r * 15 + c for r in range(14) for c in range(14)])

    # fc: fold torch's .view(-1, 32, 7, 7) (channel-major) and the zero padding
    # of the 9x9 buffer directly into the weight/bias layout.
    fcw = np.zeros((d, 32, 81), f32)
    fcb = np.zeros((32, 81), f32)
    for c in range(32):
        for hh in range(7):
            for ww in range(7):
                src = c * 49 + hh * 7 + ww
                dst = (hh + 1) * 9 + (ww + 1)
                fcw[:, c, dst] = fc_w[src, :]
                fcb[c, dst] = fc_b[src]

    # depth conv (Conv2d 32->32, k=3, pad=1): per-tap channel matrices, per-tap
    # shift matrices (with padding columns zeroed), bias scattered to interior.
    wd = np.stack([cd_w[:, :, ky, kx] for ky in range(3) for kx in range(3)])   # (9,32,32)
    td = np.zeros((9, 81, 81), f32)
    for t, (ky, kx) in enumerate([(ky, kx) for ky in range(3) for kx in range(3)]):
        sh = (ky - 1) * 9 + (kx - 1)
        td[t, interior81 + sh, interior81] = 1.0
    bd = np.zeros((32, 81), f32)
    bd[:, interior81] = cd_b[:, None]

    # ConvTranspose 32->16 (7x7 -> 14x14): tap channel matrices (transposed, since
    # torch ConvT weights are (in, out, kh, kw)), shift matrices for the 4 taps
    # and per-phase scatter matrices into the 15x15 flat buffer.
    w1 = np.stack([c1_w[:, :, kh, kw].T for kh in range(3) for kw in range(3)])  # (9,16,32)
    t1 = np.zeros((4, 81, 81), f32)
    for si, sh in enumerate((0, 1, 9, 10)):
        t1[si, interior81 + sh, interior81] = 1.0
    s1 = np.zeros((4, 81, 225), f32)
    for pi, (ar, ac) in enumerate(_PHASES):
        for m in range(7):
            for n in range(7):
                s1[pi, (m + 1) * 9 + (n + 1), (2 * m + ar) * 15 + (2 * n + ac)] = 1.0
    b1 = c1_b.reshape(16, 1)

    # ConvTranspose 16->1 (14x14 -> 28x28 as 4 output phases).
    w2 = np.stack([c2_w[:, :, kh, kw].T for kh in range(3) for kw in range(3)])  # (9,1,16)
    t2 = np.zeros((4, 225, 225), f32)
    for si, sh in enumerate((0, 1, 15, 16)):
        t2[si, valid225 + sh, valid225] = 1.0
    b2 = c2_b.reshape(1, 1)

    prepped = dict(fcw=fcw, fcb=fcb, wd=wd, bd=bd, td=td,
                   w1=w1, b1=b1, t1=t1, s1=s1,
                   w2=w2, b2=b2, t2=t2)
    return {k: jnp.asarray(v) for k, v in prepped.items()}


# ----------------------------------------------------------------------------
# Fused Pallas kernel: the entire decoder forward for one batch element.
# ----------------------------------------------------------------------------
def _decoder_kernel(x_sm, fcw, fcb, wd, bd, td, w1, b1, t1, s1, w2, b2, t2,
                    out_ref, *, d, depth):
    f32 = jnp.float32
    b = pl.program_id(0)

    # ---- fc (d -> 32x7x7), produced directly in the zero-padded (32, 81) layout.
    h = fcb[...]
    for k in range(d):
        h = h + x_sm[b, k] * fcw[k]

    # ---- depth x [Conv2d(32,32,3,pad=1) + ReLU], tap-accumulated in VMEM.
    for _ in range(depth):
        acc = jnp.zeros((32, 81), f32)
        for t in range(9):
            shifted = jnp.dot(h, td[t], preferred_element_type=f32)          # spatial shift
            acc = acc + jnp.dot(wd[t], shifted, preferred_element_type=f32)  # channel mix
        h = jnp.maximum(acc + bd[...], 0.0)   # bias only on interior -> border stays 0

    # ---- ConvTranspose2d(32,16,3,s=2,p=1,op=1) + ReLU  (polyphase, no zero-dilation).
    hs = [jnp.dot(h, t1[si], preferred_element_type=f32) for si in range(4)]
    y = jnp.zeros((16, 225), f32)
    for pi, phase in enumerate(_PHASES):
        p = jnp.zeros((16, 81), f32)
        for (kh, kw), si in _PHASE_TAPS[phase]:
            p = p + jnp.dot(w1[kh * 3 + kw], hs[si], preferred_element_type=f32)
        p = jnp.maximum(p + b1[...], 0.0)
        y = y + jnp.dot(p, s1[pi], preferred_element_type=f32)  # scatter into 15x15 flat

    # ---- ConvTranspose2d(16,1,3,s=2,p=1,op=1) + sigmoid: emit 4 output phases.
    ys = [jnp.dot(y, t2[si], preferred_element_type=f32) for si in range(4)]
    for pi, phase in enumerate(_PHASES):
        q = jnp.zeros((1, 225), f32)
        for (kh, kw), si in _PHASE_TAPS[phase]:
            q = q + jnp.dot(w2[kh * 3 + kw], ys[si], preferred_element_type=f32)
        out_ref[:, pi, :] = jax.nn.sigmoid(q + b2[...])


# ----------------------------------------------------------------------------
# Forward wrapper: one pallas_call (grid over batch) + tiny XLA epilogue.
# ----------------------------------------------------------------------------
def decoder_depth_forward(prepped, x, depth):
    B, d = x.shape
    kernel = functools.partial(_decoder_kernel, d=d, depth=depth)

    in_specs = [pl.BlockSpec(memory_space=pltpu.MemorySpace.SMEM)]  # x: scalars in SMEM
    for name in _OPERAND_ORDER:
        shp = prepped[name].shape
        if len(shp) == 2:
            in_specs.append(pl.BlockSpec(shp, lambda b: (0, 0)))
        else:
            in_specs.append(pl.BlockSpec(shp, lambda b: (0, 0, 0)))

    phases = pl.pallas_call(
        kernel,
        grid=(B,),
        out_shape=jax.ShapeDtypeStruct((B, 4, 225), jnp.float32),
        in_specs=in_specs,
        out_specs=pl.BlockSpec((1, 4, 225), lambda b: (b, 0, 0)),
        compiler_params=pltpu.CompilerParams(
            dimension_semantics=("parallel",)),
    )(x, *(prepped[name] for name in _OPERAND_ORDER))

    # Epilogue: interleave the 4 stride-2 output phases into the 28x28 image.
    # (~6 KB pure layout permute; all compute ran inside the fused kernel.)
    ph = phases.reshape(B, 2, 2, 15, 15)[:, :, :, :14, :14]       # (B, ar, ac, m, n)
    img = jnp.transpose(ph, (0, 3, 1, 4, 2)).reshape(B, 28, 28)   # rows 2m+ar, cols 2n+ac
    return img[:, None, :, :]                                     # NCHW, like torch


# ----------------------------------------------------------------------------
# Pure-JAX reference (lax convolutions) for the correctness check.
# ----------------------------------------------------------------------------
def conv_w_to_hwio(w_oihw):
    return jnp.transpose(w_oihw, (2, 3, 1, 0))


def convT_w_to_hwio(w_iohw):
    return jnp.transpose(w_iohw, (2, 3, 0, 1))[::-1, ::-1, :, :]


def decoder_depth_reference(params, x, depth):
    dn = ("NHWC", "HWIO", "NHWC")
    B = x.shape[0]
    h = x @ params["fc_w"].T + params["fc_b"]
    h = h.reshape(B, 32, 7, 7).transpose(0, 2, 3, 1)
    cd_w = conv_w_to_hwio(params["cd_w"])
    for _ in range(depth):
        h = lax.conv_general_dilated(h, cd_w, (1, 1), ((1, 1), (1, 1)),
                                     dimension_numbers=dn)
        h = jnp.maximum(h + params["cd_b"], 0.0)
    for w, b, act in ((params["c1_w"], params["c1_b"], "relu"),
                      (params["c2_w"], params["c2_b"], "sigmoid")):
        wh = convT_w_to_hwio(w)
        h = lax.conv_general_dilated(h, wh, (1, 1), ((1, 2), (1, 2)),
                                     lhs_dilation=(2, 2), dimension_numbers=dn)
        h = h + b
        h = jnp.maximum(h, 0.0) if act == "relu" else jax.nn.sigmoid(h)
    return jnp.transpose(h, (0, 3, 1, 2))


# ----------------------------------------------------------------------------
# Deterministic parameter init (shapes follow the torch module's __init__).
# ----------------------------------------------------------------------------
def init_params(key, d):
    ks = jax.random.split(key, 8)

    def u(k, shape, fan_in):
        bound = 1.0 / jnp.sqrt(jnp.float32(fan_in))
        return jax.random.uniform(k, shape, jnp.float32, -bound, bound)

    return {
        "fc_w": u(ks[0], (32 * 7 * 7, d), d),
        "fc_b": u(ks[1], (32 * 7 * 7,), d),
        "cd_w": u(ks[2], (32, 32, 3, 3), 32 * 9),
        "cd_b": u(ks[3], (32,), 32 * 9),
        "c1_w": u(ks[4], (32, 16, 3, 3), 16 * 9),
        "c1_b": u(ks[5], (16,), 16 * 9),
        "c2_w": u(ks[6], (16, 1, 3, 3), 1 * 9),
        "c2_b": u(ks[7], (1,), 1 * 9),
    }


if __name__ == "__main__":
    B, d, depth = 2, 32, 2

    key = jax.random.PRNGKey(0)
    pkey, xkey = jax.random.split(key)
    params = init_params(pkey, d)
    x = jax.random.normal(xkey, (B, d), jnp.float32)

    prepped = prepare_decoder_params(params)   # one-time weight-layout prep
    fwd = jax.jit(functools.partial(decoder_depth_forward, depth=depth))
    out = jax.block_until_ready(fwd(prepped, x))
    assert out.shape == (B, 1, 28, 28), out.shape

    ref = decoder_depth_reference(params, x, depth)
    max_err = float(jnp.max(jnp.abs(out - ref)))
    assert jnp.allclose(out, ref, atol=1e-2, rtol=1e-2), max_err

    print("KERNEL_OK")
</pallas_src>

<mosaic_0001>
module attributes {stable_mosaic.version = 11 : i64} {
  func.func @_decoder_kernel(%arg0: i32, %arg1: memref<2x32xf32, #tpu.memory_space<smem>>, %arg2: memref<32x32x81xf32, #tpu.memory_space<vmem>>, %arg3: memref<32x81xf32, #tpu.memory_space<vmem>>, %arg4: memref<9x32x32xf32, #tpu.memory_space<vmem>>, %arg5: memref<32x81xf32, #tpu.memory_space<vmem>>, %arg6: memref<9x81x81xf32, #tpu.memory_space<vmem>>, %arg7: memref<9x16x32xf32, #tpu.memory_space<vmem>>, %arg8: memref<16x1xf32, #tpu.memory_space<vmem>>, %arg9: memref<4x81x81xf32, #tpu.memory_space<vmem>>, %arg10: memref<4x81x225xf32, #tpu.memory_space<vmem>>, %arg11: memref<9x1x16xf32, #tpu.memory_space<vmem>>, %arg12: memref<1x1xf32, #tpu.memory_space<vmem>>, %arg13: memref<4x225x225xf32, #tpu.memory_space<vmem>>, %arg14: memref<1x4x225xf32, #tpu.memory_space<vmem>>) attributes {dimension_semantics = [#tpu.dimension_semantics<parallel>], iteration_bounds = array<i64: 2>, scalar_prefetch = 0 : i64, scratch_operands = 0 : i64, tpu.core_type = #tpu.core_type<tc>, window_params = [{transform_indices = @transform_0, window_bounds = array<i64: 2, 32>}, {pipeline_mode = #tpu.pipeline_mode<synchronous>, transform_indices = @transform_1, window_bounds = array<i64: 32, 32, 81>}, {pipeline_mode = #tpu.pipeline_mode<synchronous>, transform_indices = @transform_2, window_bounds = array<i64: 32, 81>}, {pipeline_mode = #tpu.pipeline_mode<synchronous>, transform_indices = @transform_3, window_bounds = array<i64: 9, 32, 32>}, {pipeline_mode = #tpu.pipeline_mode<synchronous>, transform_indices = @transform_4, window_bounds = array<i64: 32, 81>}, {pipeline_mode = #tpu.pipeline_mode<synchronous>, transform_indices = @transform_5, window_bounds = array<i64: 9, 81, 81>}, {pipeline_mode = #tpu.pipeline_mode<synchronous>, transform_indices = @transform_6, window_bounds = array<i64: 9, 16, 32>}, {pipeline_mode = #tpu.pipeline_mode<synchronous>, transform_indices = @transform_7, window_bounds = array<i64: 16, 1>}, {pipeline_mode = #tpu.pipeline_mode<synchronous>, transform_indices = @transform_8, window_bounds = array<i64: 4, 81, 81>}, {pipeline_mode = #tpu.pipeline_mode<synchronous>, transform_indices = @transform_9, window_bounds = array<i64: 4, 81, 225>}, {pipeline_mode = #tpu.pipeline_mode<synchronous>, transform_indices = @transform_10, window_bounds = array<i64: 9, 1, 16>}, {pipeline_mode = #tpu.pipeline_mode<synchronous>, transform_indices = @transform_11, window_bounds = array<i64: 1, 1>}, {pipeline_mode = #tpu.pipeline_mode<synchronous>, transform_indices = @transform_12, window_bounds = array<i64: 4, 225, 225>}, {transform_indices = @transform_13, window_bounds = array<i64: 1, 4, 225>}]} {
    %c0 = arith.constant 0 : index
    %c0_0 = arith.constant 0 : index
    %0 = vector.load %arg3[%c0, %c0_0] : memref<32x81xf32, #tpu.memory_space<vmem>>, vector<32x81xf32>
    %1 = arith.index_cast %arg0 : i32 to index
    %c0_1 = arith.constant 0 : index
    %2 = memref.load %arg1[%1, %c0_1] : memref<2x32xf32, #tpu.memory_space<smem>>
    %c0_2 = arith.constant 0 : index
    %c0_3 = arith.constant 0 : index
    %c0_4 = arith.constant 0 : index
    %3 = vector.load %arg2[%c0_2, %c0_3, %c0_4] : memref<32x32x81xf32, #tpu.memory_space<vmem>>, vector<1x32x81xf32>
    %4 = vector.shape_cast %3 : vector<1x32x81xf32> to vector<32x81xf32>
    %5 = vector.broadcast %2 : f32 to vector<32x81xf32>
    %6 = arith.mulf %5, %4 : vector<32x81xf32>
    %7 = arith.addf %0, %6 : vector<32x81xf32>
    %8 = arith.index_cast %arg0 : i32 to index
    %c1 = arith.constant 1 : index
    %9 = memref.load %arg1[%8, %c1] : memref<2x32xf32, #tpu.memory_space<smem>>
    %c1_5 = arith.constant 1 : index
    %c0_6 = arith.constant 0 : index
    %c0_7 = arith.constant 0 : index
    %10 = vector.load %arg2[%c1_5, %c0_6, %c0_7] : memref<32x32x81xf32, #tpu.memory_space<vmem>>, vector<1x32x81xf32>
    %11 = vector.shape_cast %10 : vector<1x32x81xf32> to vector<32x81xf32>
    %12 = vector.broadcast %9 : f32 to vector<32x81xf32>
    %13 = arith.mulf %12, %11 : vector<32x81xf32>
    %14 = arith.addf %7, %13 : vector<32x81xf32>
    %15 = arith.index_cast %arg0 : i32 to index
    %c2 = arith.constant 2 : index
    %16 = memref.load %arg1[%15, %c2] : memref<2x32xf32, #tpu.memory_space<smem>>
    %c2_8 = arith.constant 2 : index
    %c0_9 = arith.constant 0 : index
    %c0_10 = arith.constant 0 : index
    %17 = vector.load %arg2[%c2_8, %c0_9, %c0_10] : memref<32x32x81xf32, #tpu.memory_space<vmem>>, vector<1x32x81xf32>
    %18 = vector.shape_cast %17 : vector<1x32x81xf32> to vector<32x81xf32>
    %19 = vector.broadcast %16 : f32 to vector<32x81xf32>
    %20 = arith.mulf %19, %18 : vector<32x81xf32>
    %21 = arith.addf %14, %20 : vector<32x81xf32>
    %22 = arith.index_cast %arg0 : i32 to index
    %c3 = arith.constant 3 : index
    %23 = memref.load %arg1[%22, %c3] : memref<2x32xf32, #tpu.memory_space<smem>>
    %c3_11 = arith.constant 3 : index
    %c0_12 = arith.constant 0 : index
    %c0_13 = arith.constant 0 : index
    %24 = vector.load %arg2[%c3_11, %c0_12, %c0_13] : memref<32x32x81xf32, #tpu.memory_space<vmem>>, vector<1x32x81xf32>
    %25 = vector.shape_cast %24 : vector<1x32x81xf32> to vector<32x81xf32>
    %26 = vector.broadcast %23 : f32 to vector<32x81xf32>
    %27 = arith.mulf %26, %25 : vector<32x81xf32>
    %28 = arith.addf %21, %27 : vector<32x81xf32>
    %29 = arith.index_cast %arg0 : i32 to index
    %c4 = arith.constant 4 : index
    %30 = memref.load %arg1[%29, %c4] : memref<2x32xf32, #tpu.memory_space<smem>>
    %c4_14 = arith.constant 4 : index
    %c0_15 = arith.constant 0 : index
    %c0_16 = arith.constant 0 : index
    %31 = vector.load %arg2[%c4_14, %c0_15, %c0_16] : memref<32x32x81xf32, #tpu.memory_space<vmem>>, vector<1x32x81xf32>
    %32 = vector.shape_cast %31 : vector<1x32x81xf32> to vector<32x81xf32>
    %33 = vector.broadcast %30 : f32 to vector<32x81xf32>
    %34 = arith.mulf %33, %32 : vector<32x81xf32>
    %35 = arith.addf %28, %34 : vector<32x81xf32>
    %36 = arith.index_cast %arg0 : i32 to index
    %c5 = arith.constant 5 : index
    %37 = memref.load %arg1[%36, %c5] : memref<2x32xf32, #tpu.memory_space<smem>>
    %c5_17 = arith.constant 5 : index
    %c0_18 = arith.constant 0 : index
    %c0_19 = arith.constant 0 : index
    %38 = vector.load %arg2[%c5_17, %c0_18, %c0_19] : memref<32x32x81xf32, #tpu.memory_space<vmem>>, vector<1x32x81xf32>
    %39 = vector.shape_cast %38 : vector<1x32x81xf32> to vector<32x81xf32>
    %40 = vector.broadcast %37 : f32 to vector<32x81xf32>
    %41 = arith.mulf %40, %39 : vector<32x81xf32>
    %42 = arith.addf %35, %41 : vector<32x81xf32>
    %43 = arith.index_cast %arg0 : i32 to index
    %c6 = arith.constant 6 : index
    %44 = memref.load %arg1[%43, %c6] : memref<2x32xf32, #tpu.memory_space<smem>>
    %c6_20 = arith.constant 6 : index
    %c0_21 = arith.constant 0 : index
    %c0_22 = arith.constant 0 : index
    %45 = vector.load %arg2[%c6_20, %c0_21, %c0_22] : memref<32x32x81xf32, #tpu.memory_space<vmem>>, vector<1x32x81xf32>
    %46 = vector.shape_cast %45 : vector<1x32x81xf32> to vector<32x81xf32>
    %47 = vector.broadcast %44 : f32 to vector<32x81xf32>
    %48 = arith.mulf %47, %46 : vector<32x81xf32>
    %49 = arith.addf %42, %48 : vector<32x81xf32>
    %50 = arith.index_cast %arg0 : i32 to index
    %c7 = arith.constant 7 : index
    %51 = memref.load %arg1[%50, %c7] : memref<2x32xf32, #tpu.memory_space<smem>>
    %c7_23 = arith.constant 7 : index
    %c0_24 = arith.constant 0 : index
    %c0_25 = arith.constant 0 : index
    %52 = vector.load %arg2[%c7_23, %c0_24, %c0_25] : memref<32x32x81xf32, #tpu.memory_space<vmem>>, vector<1x32x81xf32>
    %53 = vector.shape_cast %52 : vector<1x32x81xf32> to vector<32x81xf32>
    %54 = vector.broadcast %51 : f32 to vector<32x81xf32>
    %55 = arith.mulf %54, %53 : vector<32x81xf32>
    %56 = arith.addf %49, %55 : vector<32x81xf32>
    %57 = arith.index_cast %arg0 : i32 to index
    %c8 = arith.constant 8 : index
    %58 = memref.load %arg1[%57, %c8] : memref<2x32xf32, #tpu.memory_space<smem>>
    %c8_26 = arith.constant 8 : index
    %c0_27 = arith.constant 0 : index
    %c0_28 = arith.constant 0 : index
    %59 = vector.load %arg2[%c8_26, %c0_27, %c0_28] : memref<32x32x81xf32, #tpu.memory_space<vmem>>, vector<1x32x81xf32>
    %60 = vector.shape_cast %59 : vector<1x32x81xf32> to vector<32x81xf32>
    %61 = vector.broadcast %58 : f32 to vector<32x81xf32>
    %62 = arith.mulf %61, %60 : vector<32x81xf32>
    %63 = arith.addf %56, %62 : vector<32x81xf32>
    %64 = arith.index_cast %arg0 : i32 to index
    %c9 = arith.constant 9 : index
    %65 = memref.load %arg1[%64, %c9] : memref<2x32xf32, #tpu.memory_space<smem>>
    %c9_29 = arith.constant 9 : index
    %c0_30 = arith.constant 0 : index
    %c0_31 = arith.constant 0 : index
    %66 = vector.load %arg2[%c9_29, %c0_30, %c0_31] : memref<32x32x81xf32, #tpu.memory_space<vmem>>, vector<1x32x81xf32>
    %67 = vector.shape_cast %66 : vector<1x32x81xf32> to vector<32x81xf32>
    %68 = vector.broadcast %65 : f32 to vector<32x81xf32>
    %69 = arith.mulf %68, %67 : vector<32x81xf32>
    %70 = arith.addf %63, %69 : vector<32x81xf32>
    %71 = arith.index_cast %arg0 : i32 to index
    %c10 = arith.constant 10 : index
    %72 = memref.load %arg1[%71, %c10] : memref<2x32xf32, #tpu.memory_space<smem>>
    %c10_32 = arith.constant 10 : index
    %c0_33 = arith.constant 0 : index
    %c0_34 = arith.constant 0 : index
    %73 = vector.load %arg2[%c10_32, %c0_33, %c0_34] : memref<32x32x81xf32, #tpu.memory_space<vmem>>, vector<1x32x81xf32>
    %74 = vector.shape_cast %73 : vector<1x32x81xf32> to vector<32x81xf32>
    %75 = vector.broadcast %72 : f32 to vector<32x81xf32>
    %76 = arith.mulf %75, %74 : vector<32x81xf32>
    %77 = arith.addf %70, %76 : vector<32x81xf32>
    %78 = arith.index_cast %arg0 : i32 to index
    %c11 = arith.constant 11 : index
    %79 = memref.load %arg1[%78, %c11] : memref<2x32xf32, #tpu.memory_space<smem>>
    %c11_35 = arith.constant 11 : index
    %c0_36 = arith.constant 0 : index
    %c0_37 = arith.constant 0 : index
    %80 = vector.load %arg2[%c11_35, %c0_36, %c0_37] : memref<32x32x81xf32, #tpu.memory_space<vmem>>, vector<1x32x81xf32>
    %81 = vector.shape_cast %80 : vector<1x32x81xf32> to vector<32x81xf32>
    %82 = vector.broadcast %79 : f32 to vector<32x81xf32>
    %83 = arith.mulf %82, %81 : vector<32x81xf32>
    %84 = arith.addf %77, %83 : vector<32x81xf32>
    %85 = arith.index_cast %arg0 : i32 to index
    %c12 = arith.constant 12 : index
    %86 = memref.load %arg1[%85, %c12] : memref<2x32xf32, #tpu.memory_space<smem>>
    %c12_38 = arith.constant 12 : index
    %c0_39 = arith.constant 0 : index
    %c0_40 = arith.constant 0 : index
    %87 = vector.load %arg2[%c12_38, %c0_39, %c0_40] : memref<32x32x81xf32, #tpu.memory_space<vmem>>, vector<1x32x81xf32>
    %88 = vector.shape_cast %87 : vector<1x32x81xf32> to vector<32x81xf32>
    %89 = vector.broadcast %86 : f32 to vector<32x81xf32>
    %90 = arith.mulf %89, %88 : vector<32x81xf32>
    %91 = arith.addf %84, %90 : vector<32x81xf32>
    %92 = arith.index_cast %arg0 : i32 to index
    %c13 = arith.constant 13 : index
    %93 = memref.load %arg1[%92, %c13] : memref<2x32xf32, #tpu.memory_space<smem>>
    %c13_41 = arith.constant 13 : index
    %c0_42 = arith.constant 0 : index
    %c0_43 = arith.constant 0 : index
    %94 = vector.load %arg2[%c13_41, %c0_42, %c0_43] : memref<32x32x81xf32, #tpu.memory_space<vmem>>, vector<1x32x81xf32>
    %95 = vector.shape_cast %94 : vector<1x32x81xf32> to vector<32x81xf32>
    %96 = vector.broadcast %93 : f32 to vector<32x81xf32>
    %97 = arith.mulf %96, %95 : vector<32x81xf32>
    %98 = arith.addf %91, %97 : vector<32x81xf32>
    %99 = arith.index_cast %arg0 : i32 to index
    %c14 = arith.constant 14 : index
    %100 = memref.load %arg1[%99, %c14] : memref<2x32xf32, #tpu.memory_space<smem>>
    %c14_44 = arith.constant 14 : index
    %c0_45 = arith.constant 0 : index
    %c0_46 = arith.constant 0 : index
    %101 = vector.load %arg2[%c14_44, %c0_45, %c0_46] : memref<32x32x81xf32, #tpu.memory_space<vmem>>, vector<1x32x81xf32>
    %102 = vector.shape_cast %101 : vector<1x32x81xf32> to vector<32x81xf32>
    %103 = vector.broadcast %100 : f32 to vector<32x81xf32>
    %104 = arith.mulf %103, %102 : vector<32x81xf32>
    %105 = arith.addf %98, %104 : vector<32x81xf32>
    %106 = arith.index_cast %arg0 : i32 to index
    %c15 = arith.constant 15 : index
    %107 = memref.load %arg1[%106, %c15] : memref<2x32xf32, #tpu.memory_space<smem>>
    %c15_47 = arith.constant 15 : index
    %c0_48 = arith.constant 0 : index
    %c0_49 = arith.constant 0 : index
    %108 = vector.load %arg2[%c15_47, %c0_48, %c0_49] : memref<32x32x81xf32, #tpu.memory_space<vmem>>, vector<1x32x81xf32>
    %109 = vector.shape_cast %108 : vector<1x32x81xf32> to vector<32x81xf32>
    %110 = vector.broadcast %107 : f32 to vector<32x81xf32>
    %111 = arith.mulf %110, %109 : vector<32x81xf32>
    %112 = arith.addf %105, %111 : vector<32x81xf32>
    %113 = arith.index_cast %arg0 : i32 to index
    %c16 = arith.constant 16 : index
    %114 = memref.load %arg1[%113, %c16] : memref<2x32xf32, #tpu.memory_space<smem>>
    %c16_50 = arith.constant 16 : index
    %c0_51 = arith.constant 0 : index
    %c0_52 = arith.constant 0 : index
    %115 = vector.load %arg2[%c16_50, %c0_51, %c0_52] : memref<32x32x81xf32, #tpu.memory_space<vmem>>, vector<1x32x81xf32>
    %116 = vector.shape_cast %115 : vector<1x32x81xf32> to vector<32x81xf32>
    %117 = vector.broadcast %114 : f32 to vector<32x81xf32>
    %118 = arith.mulf %117, %116 : vector<32x81xf32>
    %119 = arith.addf %112, %118 : vector<32x81xf32>
    %120 = arith.index_cast %arg0 : i32 to index
    %c17 = arith.constant 17 : index
    %121 = memref.load %arg1[%120, %c17] : memref<2x32xf32, #tpu.memory_space<smem>>
    %c17_53 = arith.constant 17 : index
    %c0_54 = arith.constant 0 : index
    %c0_55 = arith.constant 0 : index
    %122 = vector.load %arg2[%c17_53, %c0_54, %c0_55] : memref<32x32x81xf32, #tpu.memory_space<vmem>>, vector<1x32x81xf32>
    %123 = vector.shape_cast %122 : vector<1x32x81xf32> to vector<32x81xf32>
    %124 = vector.broadcast %121 : f32 to vector<32x81xf32>
    %125 = arith.mulf %124, %123 : vector<32x81xf32>
    %126 = arith.addf %119, %125 : vector<32x81xf32>
    %127 = arith.index_cast %arg0 : i32 to index
    %c18 = arith.constant 18 : index
    %128 = memref.load %arg1[%127, %c18] : memref<2x32xf32, #tpu.memory_space<smem>>
    %c18_56 = arith.constant 18 : index
    %c0_57 = arith.constant 0 : index
    %c0_58 = arith.constant 0 : index
    %129 = vector.load %arg2[%c18_56, %c0_57, %c0_58] : memref<32x32x81xf32, #tpu.memory_space<vmem>>, vector<1x32x81xf32>
    %130 = vector.shape_cast %129 : vector<1x32x81xf32> to vector<32x81xf32>
    %131 = vector.broadcast %128 : f32 to vector<32x81xf32>
    %132 = arith.mulf %131, %130 : vector<32x81xf32>
    %133 = arith.addf %126, %132 : vector<32x81xf32>
    %134 = arith.index_cast %arg0 : i32 to index
    %c19 = arith.constant 19 : index
    %135 = memref.load %arg1[%134, %c19] : memref<2x32xf32, #tpu.memory_space<smem>>
    %c19_59 = arith.constant 19 : index
    %c0_60 = arith.constant 0 : index
    %c0_61 = arith.constant 0 : index
    %136 = vector.load %arg2[%c19_59, %c0_60, %c0_61] : memref<32x32x81xf32, #tpu.memory_space<vmem>>, vector<1x32x81xf32>
    %137 = vector.shape_cast %136 : vector<1x32x81xf32> to vector<32x81xf32>
    %138 = vector.broadcast %135 : f32 to vector<32x81xf32>
    %139 = arith.mulf %138, %137 : vector<32x81xf32>
    %140 = arith.addf %133, %139 : vector<32x81xf32>
    %141 = arith.index_cast %arg0 : i32 to index
    %c20 = arith.constant 20 : index
    %142 = memref.load %arg1[%141, %c20] : memref<2x32xf32, #tpu.memory_space<smem>>
    %c20_62 = arith.constant 20 : index
    %c0_63 = arith.constant 0 : index
    %c0_64 = arith.constant 0 : index
    %143 = vector.load %arg2[%c20_62, %c0_63, %c0_64] : memref<32x32x81xf32, #tpu.memory_space<vmem>>, vector<1x32x81xf32>
    %144 = vector.shape_cast %143 : vector<1x32x81xf32> to vector<32x81xf32>
    %145 = vector.broadcast %142 : f32 to vector<32x81xf32>
    %146 = arith.mulf %145, %144 : vector<32x81xf32>
    %147 = arith.addf %140, %146 : vector<32x81xf32>
    %148 = arith.index_cast %arg0 : i32 to index
    %c21 = arith.constant 21 : index
    %149 = memref.load %arg1[%148, %c21] : memref<2x32xf32, #tpu.memory_space<smem>>
    %c21_65 = arith.constant 21 : index
    %c0_66 = arith.constant 0 : index
    %c0_67 = arith.constant 0 : index
    %150 = vector.load %arg2[%c21_65, %c0_66, %c0_67] : memref<32x32x81xf32, #tpu.memory_space<vmem>>, vector<1x32x81xf32>
    %151 = vector.shape_cast %150 : vector<1x32x81xf32> to vector<32x81xf32>
    %152 = vector.broadcast %149 : f32 to vector<32x81xf32>
    %153 = arith.mulf %152, %151 : vector<32x81xf32>
    %154 = arith.addf %147, %153 : vector<32x81xf32>
    %155 = arith.index_cast %arg0 : i32 to index
    %c22 = arith.constant 22 : index
    %156 = memref.load %arg1[%155, %c22] : memref<2x32xf32, #tpu.memory_space<smem>>
    %c22_68 = arith.constant 22 : index
    %c0_69 = arith.constant 0 : index
    %c0_70 = arith.constant 0 : index
    %157 = vector.load %arg2[%c22_68, %c0_69, %c0_70] : memref<32x32x81xf32, #tpu.memory_space<vmem>>, vector<1x32x81xf32>
    %158 = vector.shape_cast %157 : vector<1x32x81xf32> to vector<32x81xf32>
    %159 = vector.broadcast %156 : f32 to vector<32x81xf32>
    %160 = arith.mulf %159, %158 : vector<32x81xf32>
    %161 = arith.addf %154, %160 : vector<32x81xf32>
    %162 = arith.index_cast %arg0 : i32 to index
    %c23 = arith.constant 23 : index
    %163 = memref.load %arg1[%162, %c23] : memref<2x32xf32, #tpu.memory_space<smem>>
    %c23_71 = arith.constant 23 : index
    %c0_72 = arith.constant 0 : index
    %c0_73 = arith.constant 0 : index
    %164 = vector.load %arg2[%c23_71, %c0_72, %c0_73] : memref<32x32x81xf32, #tpu.memory_space<vmem>>, vector<1x32x81xf32>
    %165 = vector.shape_cast %164 : vector<1x32x81xf32> to vector<32x81xf32>
    %166 = vector.broadcast %163 : f32 to vector<32x81xf32>
    %167 = arith.mulf %166, %165 : vector<32x81xf32>
    %168 = arith.addf %161, %167 : vector<32x81xf32>
    %169 = arith.index_cast %arg0 : i32 to index
    %c24 = arith.constant 24 : index
    %170 = memref.load %arg1[%169, %c24] : memref<2x32xf32, #tpu.memory_space<smem>>
    %c24_74 = arith.constant 24 : index
    %c0_75 = arith.constant 0 : index
    %c0_76 = arith.constant 0 : index
    %171 = vector.load %arg2[%c24_74, %c0_75, %c0_76] : memref<32x32x81xf32, #tpu.memory_space<vmem>>, vector<1x32x81xf32>
    %172 = vector.shape_cast %171 : vector<1x32x81xf32> to vector<32x81xf32>
    %173 = vector.broadcast %170 : f32 to vector<32x81xf32>
    %174 = arith.mulf %173, %172 : vector<32x81xf32>
    %175 = arith.addf %168, %174 : vector<32x81xf32>
    %176 = arith.index_cast %arg0 : i32 to index
    %c25 = arith.constant 25 : index
    %177 = memref.load %arg1[%176, %c25] : memref<2x32xf32, #tpu.memory_space<smem>>
    %c25_77 = arith.constant 25 : index
    %c0_78 = arith.constant 0 : index
    %c0_79 = arith.constant 0 : index
    %178 = vector.load %arg2[%c25_77, %c0_78, %c0_79] : memref<32x32x81xf32, #tpu.memory_space<vmem>>, vector<1x32x81xf32>
    %179 = vector.shape_cast %178 : vector<1x32x81xf32> to vector<32x81xf32>
    %180 = vector.broadcast %177 : f32 to vector<32x81xf32>
    %181 = arith.mulf %180, %179 : vector<32x81xf32>
    %182 = arith.addf %175, %181 : vector<32x81xf32>
    %183 = arith.index_cast %arg0 : i32 to index
    %c26 = arith.constant 26 : index
    %184 = memref.load %arg1[%183, %c26] : memref<2x32xf32, #tpu.memory_space<smem>>
    %c26_80 = arith.constant 26 : index
    %c0_81 = arith.constant 0 : index
    %c0_82 = arith.constant 0 : index
    %185 = vector.load %arg2[%c26_80, %c0_81, %c0_82] : memref<32x32x81xf32, #tpu.memory_space<vmem>>, vector<1x32x81xf32>
    %186 = vector.shape_cast %185 : vector<1x32x81xf32> to vector<32x81xf32>
    %187 = vector.broadcast %184 : f32 to vector<32x81xf32>
    %188 = arith.mulf %187, %186 : vector<32x81xf32>
    %189 = arith.addf %182, %188 : vector<32x81xf32>
    %190 = arith.index_cast %arg0 : i32 to index
    %c27 = arith.constant 27 : index
    %191 = memref.load %arg1[%190, %c27] : memref<2x32xf32, #tpu.memory_space<smem>>
    %c27_83 = arith.constant 27 : index
    %c0_84 = arith.constant 0 : index
    %c0_85 = arith.constant 0 : index
    %192 = vector.load %arg2[%c27_83, %c0_84, %c0_85] : memref<32x32x81xf32, #tpu.memory_space<vmem>>, vector<1x32x81xf32>
    %193 = vector.shape_cast %192 : vector<1x32x81xf32> to vector<32x81xf32>
    %194 = vector.broadcast %191 : f32 to vector<32x81xf32>
    %195 = arith.mulf %194, %193 : vector<32x81xf32>
    %196 = arith.addf %189, %195 : vector<32x81xf32>
    %197 = arith.index_cast %arg0 : i32 to index
    %c28 = arith.constant 28 : index
    %198 = memref.load %arg1[%197, %c28] : memref<2x32xf32, #tpu.memory_space<smem>>
    %c28_86 = arith.constant 28 : index
    %c0_87 = arith.constant 0 : index
    %c0_88 = arith.constant 0 : index
    %199 = vector.load %arg2[%c28_86, %c0_87, %c0_88] : memref<32x32x81xf32, #tpu.memory_space<vmem>>, vector<1x32x81xf32>
    %200 = vector.shape_cast %199 : vector<1x32x81xf32> to vector<32x81xf32>
    %201 = vector.broadcast %198 : f32 to vector<32x81xf32>
    %202 = arith.mulf %201, %200 : vector<32x81xf32>
    %203 = arith.addf %196, %202 : vector<32x81xf32>
    %204 = arith.index_cast %arg0 : i32 to index
    %c29 = arith.constant 29 : index
    %205 = memref.load %arg1[%204, %c29] : memref<2x32xf32, #tpu.memory_space<smem>>
    %c29_89 = arith.constant 29 : index
    %c0_90 = arith.constant 0 : index
    %c0_91 = arith.constant 0 : index
    %206 = vector.load %arg2[%c29_89, %c0_90, %c0_91] : memref<32x32x81xf32, #tpu.memory_space<vmem>>, vector<1x32x81xf32>
    %207 = vector.shape_cast %206 : vector<1x32x81xf32> to vector<32x81xf32>
    %208 = vector.broadcast %205 : f32 to vector<32x81xf32>
    %209 = arith.mulf %208, %207 : vector<32x81xf32>
    %210 = arith.addf %203, %209 : vector<32x81xf32>
    %211 = arith.index_cast %arg0 : i32 to index
    %c30 = arith.constant 30 : index
    %212 = memref.load %arg1[%211, %c30] : memref<2x32xf32, #tpu.memory_space<smem>>
    %c30_92 = arith.constant 30 : index
    %c0_93 = arith.constant 0 : index
    %c0_94 = arith.constant 0 : index
    %213 = vector.load %arg2[%c30_92, %c0_93, %c0_94] : memref<32x32x81xf32, #tpu.memory_space<vmem>>, vector<1x32x81xf32>
    %214 = vector.shape_cast %213 : vector<1x32x81xf32> to vector<32x81xf32>
    %215 = vector.broadcast %212 : f32 to vector<32x81xf32>
    %216 = arith.mulf %215, %214 : vector<32x81xf32>
    %217 = arith.addf %210, %216 : vector<32x81xf32>
    %218 = arith.index_cast %arg0 : i32 to index
    %c31 = arith.constant 31 : index
    %219 = memref.load %arg1[%218, %c31] : memref<2x32xf32, #tpu.memory_space<smem>>
    %c31_95 = arith.constant 31 : index
    %c0_96 = arith.constant 0 : index
    %c0_97 = arith.constant 0 : index
    %220 = vector.load %arg2[%c31_95, %c0_96, %c0_97] : memref<32x32x81xf32, #tpu.memory_space<vmem>>, vector<1x32x81xf32>
    %221 = vector.shape_cast %220 : vector<1x32x81xf32> to vector<32x81xf32>
    %222 = vector.broadcast %219 : f32 to vector<32x81xf32>
    %223 = arith.mulf %222, %221 : vector<32x81xf32>
    %224 = arith.addf %217, %223 : vector<32x81xf32>
    %cst = arith.constant 0.000000e+00 : f32
    %225 = vector.broadcast %cst : f32 to vector<32x81xf32>
    %c0_98 = arith.constant 0 : index
    %c0_99 = arith.constant 0 : index
    %c0_100 = arith.constant 0 : index
    %226 = vector.load %arg6[%c0_98, %c0_99, %c0_100] : memref<9x81x81xf32, #tpu.memory_space<vmem>>, vector<1x81x81xf32>
    %227 = vector.shape_cast %226 : vector<1x81x81xf32> to vector<81x81xf32>
    %cst_101 = arith.constant dense<0.000000e+00> : vector<32x81xf32>
    %228 = tpu.matmul %224, %227, %cst_101 {dimension_numbers = #tpu.dot_dimension_numbers<[1], [0], [0], [1], [0, 0, 1, 1], [], []>} : vector<32x81xf32>, vector<81x81xf32>, vector<32x81xf32> -> vector<32x81xf32>
    %c0_102 = arith.constant 0 : index
    %c0_103 = arith.constant 0 : index
    %c0_104 = arith.constant 0 : index
    %229 = vector.load %arg4[%c0_102, %c0_103, %c0_104] : memref<9x32x32xf32, #tpu.memory_space<vmem>>, vector<1x32x32xf32>
    %230 = vector.shape_cast %229 : vector<1x32x32xf32> to vector<32x32xf32>
    %cst_105 = arith.constant dense<0.000000e+00> : vector<32x81xf32>
    %231 = tpu.matmul %230, %228, %cst_105 {dimension_numbers = #tpu.dot_dimension_numbers<[1], [0], [0], [1], [0, 0, 1, 1], [], []>} : vector<32x32xf32>, vector<32x81xf32>, vector<32x81xf32> -> vector<32x81xf32>
    %232 = arith.addf %225, %231 : vector<32x81xf32>
    %c1_106 = arith.constant 1 : index
    %c0_107 = arith.constant 0 : index
    %c0_108 = arith.constant 0 : index
    %233 = vector.load %arg6[%c1_106, %c0_107, %c0_108] : memref<9x81x81xf32, #tpu.memory_space<vmem>>, vector<1x81x81xf32>
    %234 = vector.shape_cast %233 : vector<1x81x81xf32> to vector<81x81xf32>
    %cst_109 = arith.constant dense<0.000000e+00> : vector<32x81xf32>
    %235 = tpu.matmul %224, %234, %cst_109 {dimension_numbers = #tpu.dot_dimension_numbers<[1], [0], [0], [1], [0, 0, 1, 1], [], []>} : vector<32x81xf32>, vector<81x81xf32>, vector<32x81xf32> -> vector<32x81xf32>
    %c1_110 = arith.constant 1 : index
    %c0_111 = arith.constant 0 : index
    %c0_112 = arith.constant 0 : index
    %236 = vector.load %arg4[%c1_110, %c0_111, %c0_112] : memref<9x32x32xf32, #tpu.memory_space<vmem>>, vector<1x32x32xf32>
    %237 = vector.shape_cast %236 : vector<1x32x32xf32> to vector<32x32xf32>
    %cst_113 = arith.constant dense<0.000000e+00> : vector<32x81xf32>
    %238 = tpu.matmul %237, %235, %cst_113 {dimension_numbers = #tpu.dot_dimension_numbers<[1], [0], [0], [1], [0, 0, 1, 1], [], []>} : vector<32x32xf32>, vector<32x81xf32>, vector<32x81xf32> -> vector<32x81xf32>
    %239 = arith.addf %232, %238 : vector<32x81xf32>
    %c2_114 = arith.constant 2 : index
    %c0_115 = arith.constant 0 : index
    %c0_116 = arith.constant 0 : index
    %240 = vector.load %arg6[%c2_114, %c0_115, %c0_116] : memref<9x81x81xf32, #tpu.memory_space<vmem>>, vector<1x81x81xf32>
    %241 = vector.shape_cast %240 : vector<1x81x81xf32> to vector<81x81xf32>
    %cst_117 = arith.constant dense<0.000000e+00> : vector<32x81xf32>
    %242 = tpu.matmul %224, %241, %cst_117 {dimension_numbers = #tpu.dot_dimension_numbers<[1], [0], [0], [1], [0, 0, 1, 1], [], []>} : vector<32x81xf32>, vector<81x81xf32>, vector<32x81xf32> -> vector<32x81xf32>
    %c2_118 = arith.constant 2 : index
    %c0_119 = arith.constant 0 : index
    %c0_120 = arith.constant 0 : index
    %243 = vector.load %arg4[%c2_118, %c0_119, %c0_120] : memref<9x32x32xf32, #tpu.memory_space<vmem>>, vector<1x32x32xf32>
    %244 = vector.shape_cast %243 : vector<1x32x32xf32> to vector<32x32xf32>
    %cst_121 = arith.constant dense<0.000000e+00> : vector<32x81xf32>
    %245 = tpu.matmul %244, %242, %cst_121 {dimension_numbers = #tpu.dot_dimension_numbers<[1], [0], [0], [1], [0, 0, 1, 1], [], []>} : vector<32x32xf32>, vector<32x81xf32>, vector<32x81xf32> -> vector<32x81xf32>
    %246 = arith.addf %239, %245 : vector<32x81xf32>
    %c3_122 = arith.constant 3 : index
    %c0_123 = arith.constant 0 : index
    %c0_124 = arith.constant 0 : index
    %247 = vector.load %arg6[%c3_122, %c0_123, %c0_124] : memref<9x81x81xf32, #tpu.memory_space<vmem>>, vector<1x81x81xf32>
    %248 = vector.shape_cast %247 : vector<1x81x81xf32> to vector<81x81xf32>
    %cst_125 = arith.constant dense<0.000000e+00> : vector<32x81xf32>
    %249 = tpu.matmul %224, %248, %cst_125 {dimension_numbers = #tpu.dot_dimension_numbers<[1], [0], [0], [1], [0, 0, 1, 1], [], []>} : vector<32x81xf32>, vector<81x81xf32>, vector<32x81xf32> -> vector<32x81xf32>
    %c3_126 = arith.constant 3 : index
    %c0_127 = arith.constant 0 : index
    %c0_128 = arith.constant 0 : index
    %250 = vector.load %arg4[%c3_126, %c0_127, %c0_128] : memref<9x32x32xf32, #tpu.memory_space<vmem>>, vector<1x32x32xf32>
    %251 = vector.shape_cast %250 : vector<1x32x32xf32> to vector<32x32xf32>
    %cst_129 = arith.constant dense<0.000000e+00> : vector<32x81xf32>
    %252 = tpu.matmul %251, %249, %cst_129 {dimension_numbers = #tpu.dot_dimension_numbers<[1], [0], [0], [1], [0, 0, 1, 1], [], []>} : vector<32x32xf32>, vector<32x81xf32>, vector<32x81xf32> -> vector<32x81xf32>
    %253 = arith.addf %246, %252 : vector<32x81xf32>
    %c4_130 = arith.constant 4 : index
    %c0_131 = arith.constant 0 : index
    %c0_132 = arith.constant 0 : index
    %254 = vector.load %arg6[%c4_130, %c0_131, %c0_132] : memref<9x81x81xf32, #tpu.memory_space<vmem>>, vector<1x81x81xf32>
    %255 = vector.shape_cast %254 : vector<1x81x81xf32> to vector<81x81xf32>
    %cst_133 = arith.constant dense<0.000000e+00> : vector<32x81xf32>
    %256 = tpu.matmul %224, %255, %cst_133 {dimension_numbers = #tpu.dot_dimension_numbers<[1], [0], [0], [1], [0, 0, 1, 1], [], []>} : vector<32x81xf32>, vector<81x81xf32>, vector<32x81xf32> -> vector<32x81xf32>
    %c4_134 = arith.constant 4 : index
    %c0_135 = arith.constant 0 : index
    %c0_136 = arith.constant 0 : index
    %257 = vector.load %arg4[%c4_134, %c0_135, %c0_136] : memref<9x32x32xf32, #tpu.memory_space<vmem>>, vector<1x32x32xf32>
    %258 = vector.shape_cast %257 : vector<1x32x32xf32> to vector<32x32xf32>
    %cst_137 = arith.constant dense<0.000000e+00> : vector<32x81xf32>
    %259 = tpu.matmul %258, %256, %cst_137 {dimension_numbers = #tpu.dot_dimension_numbers<[1], [0], [0], [1], [0, 0, 1, 1], [], []>} : vector<32x32xf32>, vector<32x81xf32>, vector<32x81xf32> -> vector<32x81xf32>
    %260 = arith.addf %253, %259 : vector<32x81xf32>
    %c5_138 = arith.constant 5 : index
    %c0_139 = arith.constant 0 : index
    %c0_140 = arith.constant 0 : index
    %261 = vector.load %arg6[%c5_138, %c0_139, %c0_140] : memref<9x81x81xf32, #tpu.memory_space<vmem>>, vector<1x81x81xf32>
    %262 = vector.shape_cast %261 : vector<1x81x81xf32> to vector<81x81xf32>
    %cst_141 = arith.constant dense<0.000000e+00> : vector<32x81xf32>
    %263 = tpu.matmul %224, %262, %cst_141 {dimension_numbers = #tpu.dot_dimension_numbers<[1], [0], [0], [1], [0, 0, 1, 1], [], []>} : vector<32x81xf32>, vector<81x81xf32>, vector<32x81xf32> -> vector<32x81xf32>
    %c5_142 = arith.constant 5 : index
    %c0_143 = arith.constant 0 : index
    %c0_144 = arith.constant 0 : index
    %264 = vector.load %arg4[%c5_142, %c0_143, %c0_144] : memref<9x32x32xf32, #tpu.memory_space<vmem>>, vector<1x32x32xf32>
    %265 = vector.shape_cast %264 : vector<1x32x32xf32> to vector<32x32xf32>
    %cst_145 = arith.constant dense<0.000000e+00> : vector<32x81xf32>
    %266 = tpu.matmul %265, %263, %cst_145 {dimension_numbers = #tpu.dot_dimension_numbers<[1], [0], [0], [1], [0, 0, 1, 1], [], []>} : vector<32x32xf32>, vector<32x81xf32>, vector<32x81xf32> -> vector<32x81xf32>
    %267 = arith.addf %260, %266 : vector<32x81xf32>
    %c6_146 = arith.constant 6 : index
    %c0_147 = arith.constant 0 : index
    %c0_148 = arith.constant 0 : index
    %268 = vector.load %arg6[%c6_146, %c0_147, %c0_148] : memref<9x81x81xf32, #tpu.memory_space<vmem>>, vector<1x81x81xf32>
    %269 = vector.shape_cast %268 : vector<1x81x81xf32> to vector<81x81xf32>
    %cst_149 = arith.constant dense<0.000000e+00> : vector<32x81xf32>
    %270 = tpu.matmul %224, %269, %cst_149 {dimension_numbers = #tpu.dot_dimension_numbers<[1], [0], [0], [1], [0, 0, 1, 1], [], []>} : vector<32x81xf32>, vector<81x81xf32>, vector<32x81xf32> -> vector<32x81xf32>
    %c6_150 = arith.constant 6 : index
    %c0_151 = arith.constant 0 : index
    %c0_152 = arith.constant 0 : index
    %271 = vector.load %arg4[%c6_150, %c0_151, %c0_152] : memref<9x32x32xf32, #tpu.memory_space<vmem>>, vector<1x32x32xf32>
    %272 = vector.shape_cast %271 : vector<1x32x32xf32> to vector<32x32xf32>
    %cst_153 = arith.constant dense<0.000000e+00> : vector<32x81xf32>
    %273 = tpu.matmul %272, %270, %cst_153 {dimension_numbers = #tpu.dot_dimension_numbers<[1], [0], [0], [1], [0, 0, 1, 1], [], []>} : vector<32x32xf32>, vector<32x81xf32>, vector<32x81xf32> -> vector<32x81xf32>
    %274 = arith.addf %267, %273 : vector<32x81xf32>
    %c7_154 = arith.constant 7 : index
    %c0_155 = arith.constant 0 : index
    %c0_156 = arith.constant 0 : index
    %275 = vector.load %arg6[%c7_154, %c0_155, %c0_156] : memref<9x81x81xf32, #tpu.memory_space<vmem>>, vector<1x81x81xf32>
    %276 = vector.shape_cast %275 : vector<1x81x81xf32> to vector<81x81xf32>
    %cst_157 = arith.constant dense<0.000000e+00> : vector<32x81xf32>
    %277 = tpu.matmul %224, %276, %cst_157 {dimension_numbers = #tpu.dot_dimension_numbers<[1], [0], [0], [1], [0, 0, 1, 1], [], []>} : vector<32x81xf32>, vector<81x81xf32>, vector<32x81xf32> -> vector<32x81xf32>
    %c7_158 = arith.constant 7 : index
    %c0_159 = arith.constant 0 : index
    %c0_160 = arith.constant 0 : index
    %278 = vector.load %arg4[%c7_158, %c0_159, %c0_160] : memref<9x32x32xf32, #tpu.memory_space<vmem>>, vector<1x32x32xf32>
    %279 = vector.shape_cast %278 : vector<1x32x32xf32> to vector<32x32xf32>
    %cst_161 = arith.constant dense<0.000000e+00> : vector<32x81xf32>
    %280 = tpu.matmul %279, %277, %cst_161 {dimension_numbers = #tpu.dot_dimension_numbers<[1], [0], [0], [1], [0, 0, 1, 1], [], []>} : vector<32x32xf32>, vector<32x81xf32>, vector<32x81xf32> -> vector<32x81xf32>
    %281 = arith.addf %274, %280 : vector<32x81xf32>
    %c8_162 = arith.constant 8 : index
    %c0_163 = arith.constant 0 : index
    %c0_164 = arith.constant 0 : index
    %282 = vector.load %arg6[%c8_162, %c0_163, %c0_164] : memref<9x81x81xf32, #tpu.memory_space<vmem>>, vector<1x81x81xf32>
    %283 = vector.shape_cast %282 : vector<1x81x81xf32> to vector<81x81xf32>
    %cst_165 = arith.constant dense<0.000000e+00> : vector<32x81xf32>
    %284 = tpu.matmul %224, %283, %cst_165 {dimension_numbers = #tpu.dot_dimension_numbers<[1], [0], [0], [1], [0, 0, 1, 1], [], []>} : vector<32x81xf32>, vector<81x81xf32>, vector<32x81xf32> -> vector<32x81xf32>
    %c8_166 = arith.constant 8 : index
    %c0_167 = arith.constant 0 : index
    %c0_168 = arith.constant 0 : index
    %285 = vector.load %arg4[%c8_166, %c0_167, %c0_168] : memref<9x32x32xf32, #tpu.memory_space<vmem>>, vector<1x32x32xf32>
    %286 = vector.shape_cast %285 : vector<1x32x32xf32> to vector<32x32xf32>
    %cst_169 = arith.constant dense<0.000000e+00> : vector<32x81xf32>
    %287 = tpu.matmul %286, %284, %cst_169 {dimension_numbers = #tpu.dot_dimension_numbers<[1], [0], [0], [1], [0, 0, 1, 1], [], []>} : vector<32x32xf32>, vector<32x81xf32>, vector<32x81xf32> -> vector<32x81xf32>
    %288 = arith.addf %281, %287 : vector<32x81xf32>
    %c0_170 = arith.constant 0 : index
    %c0_171 = arith.constant 0 : index
    %289 = vector.load %arg5[%c0_170, %c0_171] : memref<32x81xf32, #tpu.memory_space<vmem>>, vector<32x81xf32>
    %290 = arith.addf %288, %289 : vector<32x81xf32>
    %cst_172 = arith.constant 0.000000e+00 : f32
    %291 = vector.broadcast %cst_172 : f32 to vector<32x81xf32>
    %292 = arith.maximumf %290, %291 : vector<32x81xf32>
    %cst_173 = arith.constant 0.000000e+00 : f32
    %293 = vector.broadcast %cst_173 : f32 to vector<32x81xf32>
    %c0_174 = arith.constant 0 : index
    %c0_175 = arith.constant 0 : index
    %c0_176 = arith.constant 0 : index
    %294 = vector.load %arg6[%c0_174, %c0_175, %c0_176] : memref<9x81x81xf32, #tpu.memory_space<vmem>>, vector<1x81x81xf32>
    %295 = vector.shape_cast %294 : vector<1x81x81xf32> to vector<81x81xf32>
    %cst_177 = arith.constant dense<0.000000e+00> : vector<32x81xf32>
    %296 = tpu.matmul %292, %295, %cst_177 {dimension_numbers = #tpu.dot_dimension_numbers<[1], [0], [0], [1], [0, 0, 1, 1], [], []>} : vector<32x81xf32>, vector<81x81xf32>, vector<32x81xf32> -> vector<32x81xf32>
    %c0_178 = arith.constant 0 : index
    %c0_179 = arith.constant 0 : index
    %c0_180 = arith.constant 0 : index
    %297 = vector.load %arg4[%c0_178, %c0_179, %c0_180] : memref<9x32x32xf32, #tpu.memory_space<vmem>>, vector<1x32x32xf32>
    %298 = vector.shape_cast %297 : vector<1x32x32xf32> to vector<32x32xf32>
    %cst_181 = arith.constant dense<0.000000e+00> : vector<32x81xf32>
    %299 = tpu.matmul %298, %296, %cst_181 {dimension_numbers = #tpu.dot_dimension_numbers<[1], [0], [0], [1], [0, 0, 1, 1], [], []>} : vector<32x32xf32>, vector<32x81xf32>, vector<32x81xf32> -> vector<32x81xf32>
    %300 = arith.addf %293, %299 : vector<32x81xf32>
    %c1_182 = arith.constant 1 : index
    %c0_183 = arith.constant 0 : index
    %c0_184 = arith.constant 0 : index
    %301 = vector.load %arg6[%c1_182, %c0_183, %c0_184] : memref<9x81x81xf32, #tpu.memory_space<vmem>>, vector<1x81x81xf32>
    %302 = vector.shape_cast %301 : vector<1x81x81xf32> to vector<81x81xf32>
    %cst_185 = arith.constant dense<0.000000e+00> : vector<32x81xf32>
    %303 = tpu.matmul %292, %302, %cst_185 {dimension_numbers = #tpu.dot_dimension_numbers<[1], [0], [0], [1], [0, 0, 1, 1], [], []>} : vector<32x81xf32>, vector<81x81xf32>, vector<32x81xf32> -> vector<32x81xf32>
    %c1_186 = arith.constant 1 : index
    %c0_187 = arith.constant 0 : index
    %c0_188 = arith.constant 0 : index
    %304 = vector.load %arg4[%c1_186, %c0_187, %c0_188] : memref<9x32x32xf32, #tpu.memory_space<vmem>>, vector<1x32x32xf32>
    %305 = vector.shape_cast %304 : vector<1x32x32xf32> to vector<32x32xf32>
    %cst_189 = arith.constant dense<0.000000e+00> : vector<32x81xf32>
    %306 = tpu.matmul %305, %303, %cst_189 {dimension_numbers = #tpu.dot_dimension_numbers<[1], [0], [0], [1], [0, 0, 1, 1], [], []>} : vector<32x32xf32>, vector<32x81xf32>, vector<32x81xf32> -> vector<32x81xf32>
    %307 = arith.addf %300, %306 : vector<32x81xf32>
    %c2_190 = arith.constant 2 : index
    %c0_191 = arith.constant 0 : index
    %c0_192 = arith.constant 0 : index
    %308 = vector.load %arg6[%c2_190, %c0_191, %c0_192] : memref<9x81x81xf32, #tpu.memory_space<vmem>>, vector<1x81x81xf32>
    %309 = vector.shape_cast %308 : vector<1x81x81xf32> to vector<81x81xf32>
    %cst_193 = arith.constant dense<0.000000e+00> : vector<32x81xf32>
    %310 = tpu.matmul %292, %309, %cst_193 {dimension_numbers = #tpu.dot_dimension_numbers<[1], [0], [0], [1], [0, 0, 1, 1], [], []>} : vector<32x81xf32>, vector<81x81xf32>, vector<32x81xf32> -> vector<32x81xf32>
    %c2_194 = arith.constant 2 : index
    %c0_195 = arith.constant 0 : index
    %c0_196 = arith.constant 0 : index
    %311 = vector.load %arg4[%c2_194, %c0_195, %c0_196] : memref<9x32x32xf32, #tpu.memory_space<vmem>>, vector<1x32x32xf32>
    %312 = vector.shape_cast %311 : vector<1x32x32xf32> to vector<32x32xf32>
    %cst_197 = arith.constant dense<0.000000e+00> : vector<32x81xf32>
    %313 = tpu.matmul %312, %310, %cst_197 {dimension_numbers = #tpu.dot_dimension_numbers<[1], [0], [0], [1], [0, 0, 1, 1], [], []>} : vector<32x32xf32>, vector<32x81xf32>, vector<32x81xf32> -> vector<32x81xf32>
    %314 = arith.addf %307, %313 : vector<32x81xf32>
    %c3_198 = arith.constant 3 : index
    %c0_199 = arith.constant 0 : index
    %c0_200 = arith.constant 0 : index
    %315 = vector.load %arg6[%c3_198, %c0_199, %c0_200] : memref<9x81x81xf32, #tpu.memory_space<vmem>>, vector<1x81x81xf32>
    %316 = vector.shape_cast %315 : vector<1x81x81xf32> to vector<81x81xf32>
    %cst_201 = arith.constant dense<0.000000e+00> : vector<32x81xf32>
    %317 = tpu.matmul %292, %316, %cst_201 {dimension_numbers = #tpu.dot_dimension_numbers<[1], [0], [0], [1], [0, 0, 1, 1], [], []>} : vector<32x81xf32>, vector<81x81xf32>, vector<32x81xf32> -> vector<32x81xf32>
    %c3_202 = arith.constant 3 : index
    %c0_203 = arith.constant 0 : index
    %c0_204 = arith.constant 0 : index
    %318 = vector.load %arg4[%c3_202, %c0_203, %c0_204] : memref<9x32x32xf32, #tpu.memory_space<vmem>>, vector<1x32x32xf32>
    %319 = vector.shape_cast %318 : vector<1x32x32xf32> to vector<32x32xf32>
    %cst_205 = arith.constant dense<0.000000e+00> : vector<32x81xf32>
    %320 = tpu.matmul %319, %317, %cst_205 {dimension_numbers = #tpu.dot_dimension_numbers<[1], [0], [0], [1], [0, 0, 1, 1], [], []>} : vector<32x32xf32>, vector<32x81xf32>, vector<32x81xf32> -> vector<32x81xf32>
    %321 = arith.addf %314, %320 : vector<32x81xf32>
    %c4_206 = arith.constant 4 : index
    %c0_207 = arith.constant 0 : index
    %c0_208 = arith.constant 0 : index
    %322 = vector.load %arg6[%c4_206, %c0_207, %c0_208] : memref<9x81x81xf32, #tpu.memory_space<vmem>>, vector<1x81x81xf32>
    %323 = vector.shape_cast %322 : vector<1x81x81xf32> to vector<81x81xf32>
    %cst_209 = arith.constant dense<0.000000e+00> : vector<32x81xf32>
    %324 = tpu.matmul %292, %323, %cst_209 {dimension_numbers = #tpu.dot_dimension_numbers<[1], [0], [0], [1], [0, 0, 1, 1], [], []>} : vector<32x81xf32>, vector<81x81xf32>, vector<32x81xf32> -> vector<32x81xf32>
    %c4_210 = arith.constant 4 : index
    %c0_211 = arith.constant 0 : index
    %c0_212 = arith.constant 0 : index
    %325 = vector.load %arg4[%c4_210, %c0_211, %c0_212] : memref<9x32x32xf32, #tpu.memory_space<vmem>>, vector<1x32x32xf32>
    %326 = vector.shape_cast %325 : vector<1x32x32xf32> to vector<32x32xf32>
    %cst_213 = arith.constant dense<0.000000e+00> : vector<32x81xf32>
    %327 = tpu.matmul %326, %324, %cst_213 {dimension_numbers = #tpu.dot_dimension_numbers<[1], [0], [0], [1], [0, 0, 1, 1], [], []>} : vector<32x32xf32>, vector<32x81xf32>, vector<32x81xf32> -> vector<32x81xf32>
    %328 = arith.addf %321, %327 : vector<32x81xf32>
    %c5_214 = arith.constant 5 : index
    %c0_215 = arith.constant 0 : index
    %c0_216 = arith.constant 0 : index
    %329 = vector.load %arg6[%c5_214, %c0_215, %c0_216] : memref<9x81x81xf32, #tpu.memory_space<vmem>>, vector<1x81x81xf32>
    %330 = vector.shape_cast %329 : vector<1x81x81xf32> to vector<81x81xf32>
    %cst_217 = arith.constant dense<0.000000e+00> : vector<32x81xf32>
    %331 = tpu.matmul %292, %330, %cst_217 {dimension_numbers = #tpu.dot_dimension_numbers<[1], [0], [0], [1], [0, 0, 1, 1], [], []>} : vector<32x81xf32>, vector<81x81xf32>, vector<32x81xf32> -> vector<32x81xf32>
    %c5_218 = arith.constant 5 : index
    %c0_219 = arith.constant 0 : index
    %c0_220 = arith.constant 0 : index
    %332 = vector.load %arg4[%c5_218, %c0_219, %c0_220] : memref<9x32x32xf32, #tpu.memory_space<vmem>>, vector<1x32x32xf32>
    %333 = vector.shape_cast %332 : vector<1x32x32xf32> to vector<32x32xf32>
    %cst_221 = arith.constant dense<0.000000e+00> : vector<32x81xf32>
    %334 = tpu.matmul %333, %331, %cst_221 {dimension_numbers = #tpu.dot_dimension_numbers<[1], [0], [0], [1], [0, 0, 1, 1], [], []>} : vector<32x32xf32>, vector<32x81xf32>, vector<32x81xf32> -> vector<32x81xf32>
    %335 = arith.addf %328, %334 : vector<32x81xf32>
    %c6_222 = arith.constant 6 : index
    %c0_223 = arith.constant 0 : index
    %c0_224 = arith.constant 0 : index
    %336 = vector.load %arg6[%c6_222, %c0_223, %c0_224] : memref<9x81x81xf32, #tpu.memory_space<vmem>>, vector<1x81x81xf32>
    %337 = vector.shape_cast %336 : vector<1x81x81xf32> to vector<81x81xf32>
    %cst_225 = arith.constant dense<0.000000e+00> : vector<32x81xf32>
    %338 = tpu.matmul %292, %337, %cst_225 {dimension_numbers = #tpu.dot_dimension_numbers<[1], [0], [0], [1], [0, 0, 1, 1], [], []>} : vector<32x81xf32>, vector<81x81xf32>, vector<32x81xf32> -> vector<32x81xf32>
    %c6_226 = arith.constant 6 : index
    %c0_227 = arith.constant 0 : index
    %c0_228 = arith.constant 0 : index
    %339 = vector.load %arg4[%c6_226, %c0_227, %c0_228] : memref<9x32x32xf32, #tpu.memory_space<vmem>>, vector<1x32x32xf32>
    %340 = vector.shape_cast %339 : vector<1x32x32xf32> to vector<32x32xf32>
    %cst_229 = arith.constant dense<0.000000e+00> : vector<32x81xf32>
    %341 = tpu.matmul %340, %338, %cst_229 {dimension_numbers = #tpu.dot_dimension_numbers<[1], [0], [0], [1], [0, 0, 1, 1], [], []>} : vector<32x32xf32>, vector<32x81xf32>, vector<32x81xf32> -> vector<32x81xf32>
    %342 = arith.addf %335, %341 : vector<32x81xf32>
    %c7_230 = arith.constant 7 : index
    %c0_231 = arith.constant 0 : index
    %c0_232 = arith.constant 0 : index
    %343 = vector.load %arg6[%c7_230, %c0_231, %c0_232] : memref<9x81x81xf32, #tpu.memory_space<vmem>>, vector<1x81x81xf32>
    %344 = vector.shape_cast %343 : vector<1x81x81xf32> to vector<81x81xf32>
    %cst_233 = arith.constant dense<0.000000e+00> : vector<32x81xf32>
    %345 = tpu.matmul %292, %344, %cst_233 {dimension_numbers = #tpu.dot_dimension_numbers<[1], [0], [0], [1], [0, 0, 1, 1], [], []>} : vector<32x81xf32>, vector<81x81xf32>, vector<32x81xf32> -> vector<32x81xf32>
    %c7_234 = arith.constant 7 : index
    %c0_235 = arith.constant 0 : index
    %c0_236 = arith.constant 0 : index
    %346 = vector.load %arg4[%c7_234, %c0_235, %c0_236] : memref<9x32x32xf32, #tpu.memory_space<vmem>>, vector<1x32x32xf32>
    %347 = vector.shape_cast %346 : vector<1x32x32xf32> to vector<32x32xf32>
    %cst_237 = arith.constant dense<0.000000e+00> : vector<32x81xf32>
    %348 = tpu.matmul %347, %345, %cst_237 {dimension_numbers = #tpu.dot_dimension_numbers<[1], [0], [0], [1], [0, 0, 1, 1], [], []>} : vector<32x32xf32>, vector<32x81xf32>, vector<32x81xf32> -> vector<32x81xf32>
    %349 = arith.addf %342, %348 : vector<32x81xf32>
    %c8_238 = arith.constant 8 : index
    %c0_239 = arith.constant 0 : index
    %c0_240 = arith.constant 0 : index
    %350 = vector.load %arg6[%c8_238, %c0_239, %c0_240] : memref<9x81x81xf32, #tpu.memory_space<vmem>>, vector<1x81x81xf32>
    %351 = vector.shape_cast %350 : vector<1x81x81xf32> to vector<81x81xf32>
    %cst_241 = arith.constant dense<0.000000e+00> : vector<32x81xf32>
    %352 = tpu.matmul %292, %351, %cst_241 {dimension_numbers = #tpu.dot_dimension_numbers<[1], [0], [0], [1], [0, 0, 1, 1], [], []>} : vector<32x81xf32>, vector<81x81xf32>, vector<32x81xf32> -> vector<32x81xf32>
    %c8_242 = arith.constant 8 : index
    %c0_243 = arith.constant 0 : index
    %c0_244 = arith.constant 0 : index
    %353 = vector.load %arg4[%c8_242, %c0_243, %c0_244] : memref<9x32x32xf32, #tpu.memory_space<vmem>>, vector<1x32x32xf32>
    %354 = vector.shape_cast %353 : vector<1x32x32xf32> to vector<32x32xf32>
    %cst_245 = arith.constant dense<0.000000e+00> : vector<32x81xf32>
    %355 = tpu.matmul %354, %352, %cst_245 {dimension_numbers = #tpu.dot_dimension_numbers<[1], [0], [0], [1], [0, 0, 1, 1], [], []>} : vector<32x32xf32>, vector<32x81xf32>, vector<32x81xf32> -> vector<32x81xf32>
    %356 = arith.addf %349, %355 : vector<32x81xf32>
    %c0_246 = arith.constant 0 : index
    %c0_247 = arith.constant 0 : index
    %357 = vector.load %arg5[%c0_246, %c0_247] : memref<32x81xf32, #tpu.memory_space<vmem>>, vector<32x81xf32>
    %358 = arith.addf %356, %357 : vector<32x81xf32>
    %cst_248 = arith.constant 0.000000e+00 : f32
    %359 = vector.broadcast %cst_248 : f32 to vector<32x81xf32>
    %360 = arith.maximumf %358, %359 : vector<32x81xf32>
    %c0_249 = arith.constant 0 : index
    %c0_250 = arith.constant 0 : index
    %c0_251 = arith.constant 0 : index
    %361 = vector.load %arg9[%c0_249, %c0_250, %c0_251] : memref<4x81x81xf32, #tpu.memory_space<vmem>>, vector<1x81x81xf32>
    %362 = vector.shape_cast %361 : vector<1x81x81xf32> to vector<81x81xf32>
    %cst_252 = arith.constant dense<0.000000e+00> : vector<32x81xf32>
    %363 = tpu.matmul %360, %362, %cst_252 {dimension_numbers = #tpu.dot_dimension_numbers<[1], [0], [0], [1], [0, 0, 1, 1], [], []>} : vector<32x81xf32>, vector<81x81xf32>, vector<32x81xf32> -> vector<32x81xf32>
    %c1_253 = arith.constant 1 : index
    %c0_254 = arith.constant 0 : index
    %c0_255 = arith.constant 0 : index
    %364 = vector.load %arg9[%c1_253, %c0_254, %c0_255] : memref<4x81x81xf32, #tpu.memory_space<vmem>>, vector<1x81x81xf32>
    %365 = vector.shape_cast %364 : vector<1x81x81xf32> to vector<81x81xf32>
    %cst_256 = arith.constant dense<0.000000e+00> : vector<32x81xf32>
    %366 = tpu.matmul %360, %365, %cst_256 {dimension_numbers = #tpu.dot_dimension_numbers<[1], [0], [0], [1], [0, 0, 1, 1], [], []>} : vector<32x81xf32>, vector<81x81xf32>, vector<32x81xf32> -> vector<32x81xf32>
    %c2_257 = arith.constant 2 : index
    %c0_258 = arith.constant 0 : index
    %c0_259 = arith.constant 0 : index
    %367 = vector.load %arg9[%c2_257, %c0_258, %c0_259] : memref<4x81x81xf32, #tpu.memory_space<vmem>>, vector<1x81x81xf32>
    %368 = vector.shape_cast %367 : vector<1x81x81xf32> to vector<81x81xf32>
    %cst_260 = arith.constant dense<0.000000e+00> : vector<32x81xf32>
    %369 = tpu.matmul %360, %368, %cst_260 {dimension_numbers = #tpu.dot_dimension_numbers<[1], [0], [0], [1], [0, 0, 1, 1], [], []>} : vector<32x81xf32>, vector<81x81xf32>, vector<32x81xf32> -> vector<32x81xf32>
    %c3_261 = arith.constant 3 : index
    %c0_262 = arith.constant 0 : index
    %c0_263 = arith.constant 0 : index
    %370 = vector.load %arg9[%c3_261, %c0_262, %c0_263] : memref<4x81x81xf32, #tpu.memory_space<vmem>>, vector<1x81x81xf32>
    %371 = vector.shape_cast %370 : vector<1x81x81xf32> to vector<81x81xf32>
    %cst_264 = arith.constant dense<0.000000e+00> : vector<32x81xf32>
    %372 = tpu.matmul %360, %371, %cst_264 {dimension_numbers = #tpu.dot_dimension_numbers<[1], [0], [0], [1], [0, 0, 1, 1], [], []>} : vector<32x81xf32>, vector<81x81xf32>, vector<32x81xf32> -> vector<32x81xf32>
    %cst_265 = arith.constant 0.000000e+00 : f32
    %373 = vector.broadcast %cst_265 : f32 to vector<16x225xf32>
    %cst_266 = arith.constant 0.000000e+00 : f32
    %374 = vector.broadcast %cst_266 : f32 to vector<16x81xf32>
    %c4_267 = arith.constant 4 : index
    %c0_268 = arith.constant 0 : index
    %c0_269 = arith.constant 0 : index
    %375 = vector.load %arg7[%c4_267, %c0_268, %c0_269] : memref<9x16x32xf32, #tpu.memory_space<vmem>>, vector<1x16x32xf32>
    %376 = vector.shape_cast %375 : vector<1x16x32xf32> to vector<16x32xf32>
    %cst_270 = arith.constant dense<0.000000e+00> : vector<16x81xf32>
    %377 = tpu.matmul %376, %363, %cst_270 {dimension_numbers = #tpu.dot_dimension_numbers<[1], [0], [0], [1], [0, 0, 1, 1], [], []>} : vector<16x32xf32>, vector<32x81xf32>, vector<16x81xf32> -> vector<16x81xf32>
    %378 = arith.addf %374, %377 : vector<16x81xf32>
    %c0_271 = arith.constant 0 : index
    %c0_272 = arith.constant 0 : index
    %379 = vector.load %arg8[%c0_271, %c0_272] : memref<16x1xf32, #tpu.memory_space<vmem>>, vector<16x1xf32>
    %380 = vector.broadcast %379 : vector<16x1xf32> to vector<16x81xf32>
    %381 = arith.addf %378, %380 : vector<16x81xf32>
    %cst_273 = arith.constant 0.000000e+00 : f32
    %382 = vector.broadcast %cst_273 : f32 to vector<16x81xf32>
    %383 = arith.maximumf %381, %382 : vector<16x81xf32>
    %c0_274 = arith.constant 0 : index
    %c0_275 = arith.constant 0 : index
    %c0_276 = arith.constant 0 : index
    %384 = vector.load %arg10[%c0_274, %c0_275, %c0_276] : memref<4x81x225xf32, #tpu.memory_space<vmem>>, vector<1x81x225xf32>
    %385 = vector.shape_cast %384 : vector<1x81x225xf32> to vector<81x225xf32>
    %cst_277 = arith.constant dense<0.000000e+00> : vector<16x225xf32>
    %386 = tpu.matmul %383, %385, %cst_277 {dimension_numbers = #tpu.dot_dimension_numbers<[1], [0], [0], [1], [0, 0, 1, 1], [], []>} : vector<16x81xf32>, vector<81x225xf32>, vector<16x225xf32> -> vector<16x225xf32>
    %387 = arith.addf %373, %386 : vector<16x225xf32>
    %cst_278 = arith.constant 0.000000e+00 : f32
    %388 = vector.broadcast %cst_278 : f32 to vector<16x81xf32>
    %c5_279 = arith.constant 5 : index
    %c0_280 = arith.constant 0 : index
    %c0_281 = arith.constant 0 : index
    %389 = vector.load %arg7[%c5_279, %c0_280, %c0_281] : memref<9x16x32xf32, #tpu.memory_space<vmem>>, vector<1x16x32xf32>
    %390 = vector.shape_cast %389 : vector<1x16x32xf32> to vector<16x32xf32>
    %cst_282 = arith.constant dense<0.000000e+00> : vector<16x81xf32>
    %391 = tpu.matmul %390, %363, %cst_282 {dimension_numbers = #tpu.dot_dimension_numbers<[1], [0], [0], [1], [0, 0, 1, 1], [], []>} : vector<16x32xf32>, vector<32x81xf32>, vector<16x81xf32> -> vector<16x81xf32>
    %392 = arith.addf %388, %391 : vector<16x81xf32>
    %c3_283 = arith.constant 3 : index
    %c0_284 = arith.constant 0 : index
    %c0_285 = arith.constant 0 : index
    %393 = vector.load %arg7[%c3_283, %c0_284, %c0_285] : memref<9x16x32xf32, #tpu.memory_space<vmem>>, vector<1x16x32xf32>
    %394 = vector.shape_cast %393 : vector<1x16x32xf32> to vector<16x32xf32>
    %cst_286 = arith.constant dense<0.000000e+00> : vector<16x81xf32>
    %395 = tpu.matmul %394, %366, %cst_286 {dimension_numbers = #tpu.dot_dimension_numbers<[1], [0], [0], [1], [0, 0, 1, 1], [], []>} : vector<16x32xf32>, vector<32x81xf32>, vector<16x81xf32> -> vector<16x81xf32>
    %396 = arith.addf %392, %395 : vector<16x81xf32>
    %c0_287 = arith.constant 0 : index
    %c0_288 = arith.constant 0 : index
    %397 = vector.load %arg8[%c0_287, %c0_288] : memref<16x1xf32, #tpu.memory_space<vmem>>, vector<16x1xf32>
    %398 = vector.broadcast %397 : vector<16x1xf32> to vector<16x81xf32>
    %399 = arith.addf %396, %398 : vector<16x81xf32>
    %cst_289 = arith.constant 0.000000e+00 : f32
    %400 = vector.broadcast %cst_289 : f32 to vector<16x81xf32>
    %401 = arith.maximumf %399, %400 : vector<16x81xf32>
    %c1_290 = arith.constant 1 : index
    %c0_291 = arith.constant 0 : index
    %c0_292 = arith.constant 0 : index
    %402 = vector.load %arg10[%c1_290, %c0_291, %c0_292] : memref<4x81x225xf32, #tpu.memory_space<vmem>>, vector<1x81x225xf32>
    %403 = vector.shape_cast %402 : vector<1x81x225xf32> to vector<81x225xf32>
    %cst_293 = arith.constant dense<0.000000e+00> : vector<16x225xf32>
    %404 = tpu.matmul %401, %403, %cst_293 {dimension_numbers = #tpu.dot_dimension_numbers<[1], [0], [0], [1], [0, 0, 1, 1], [], []>} : vector<16x81xf32>, vector<81x225xf32>, vector<16x225xf32> -> vector<16x225xf32>
    %405 = arith.addf %387, %404 : vector<16x225xf32>
    %cst_294 = arith.constant 0.000000e+00 : f32
    %406 = vector.broadcast %cst_294 : f32 to vector<16x81xf32>
    %c7_295 = arith.constant 7 : index
    %c0_296 = arith.constant 0 : index
    %c0_297 = arith.constant 0 : index
    %407 = vector.load %arg7[%c7_295, %c0_296, %c0_297] : memref<9x16x32xf32, #tpu.memory_space<vmem>>, vector<1x16x32xf32>
    %408 = vector.shape_cast %407 : vector<1x16x32xf32> to vector<16x32xf32>
    %cst_298 = arith.constant dense<0.000000e+00> : vector<16x81xf32>
    %409 = tpu.matmul %408, %363, %cst_298 {dimension_numbers = #tpu.dot_dimension_numbers<[1], [0], [0], [1], [0, 0, 1, 1], [], []>} : vector<16x32xf32>, vector<32x81xf32>, vector<16x81xf32> -> vector<16x81xf32>
    %410 = arith.addf %406, %409 : vector<16x81xf32>
    %c1_299 = arith.constant 1 : index
    %c0_300 = arith.constant 0 : index
    %c0_301 = arith.constant 0 : index
    %411 = vector.load %arg7[%c1_299, %c0_300, %c0_301] : memref<9x16x32xf32, #tpu.memory_space<vmem>>, vector<1x16x32xf32>
    %412 = vector.shape_cast %411 : vector<1x16x32xf32> to vector<16x32xf32>
    %cst_302 = arith.constant dense<0.000000e+00> : vector<16x81xf32>
    %413 = tpu.matmul %412, %369, %cst_302 {dimension_numbers = #tpu.dot_dimension_numbers<[1], [0], [0], [1], [0, 0, 1, 1], [], []>} : vector<16x32xf32>, vector<32x81xf32>, vector<16x81xf32> -> vector<16x81xf32>
    %414 = arith.addf %410, %413 : vector<16x81xf32>
    %c0_303 = arith.constant 0 : index
    %c0_304 = arith.constant 0 : index
    %415 = vector.load %arg8[%c0_303, %c0_304] : memref<16x1xf32, #tpu.memory_space<vmem>>, vector<16x1xf32>
    %416 = vector.broadcast %415 : vector<16x1xf32> to vector<16x81xf32>
    %417 = arith.addf %414, %416 : vector<16x81xf32>
    %cst_305 = arith.constant 0.000000e+00 : f32
    %418 = vector.broadcast %cst_305 : f32 to vector<16x81xf32>
    %419 = arith.maximumf %417, %418 : vector<16x81xf32>
    %c2_306 = arith.constant 2 : index
    %c0_307 = arith.constant 0 : index
    %c0_308 = arith.constant 0 : index
    %420 = vector.load %arg10[%c2_306, %c0_307, %c0_308] : memref<4x81x225xf32, #tpu.memory_space<vmem>>, vector<1x81x225xf32>
    %421 = vector.shape_cast %420 : vector<1x81x225xf32> to vector<81x225xf32>
    %cst_309 = arith.constant dense<0.000000e+00> : vector<16x225xf32>
    %422 = tpu.matmul %419, %421, %cst_309 {dimension_numbers = #tpu.dot_dimension_numbers<[1], [0], [0], [1], [0, 0, 1, 1], [], []>} : vector<16x81xf32>, vector<81x225xf32>, vector<16x225xf32> -> vector<16x225xf32>
    %423 = arith.addf %405, %422 : vector<16x225xf32>
    %cst_310 = arith.constant 0.000000e+00 : f32
    %424 = vector.broadcast %cst_310 : f32 to vector<16x81xf32>
    %c8_311 = arith.constant 8 : index
    %c0_312 = arith.constant 0 : index
    %c0_313 = arith.constant 0 : index
    %425 = vector.load %arg7[%c8_311, %c0_312, %c0_313] : memref<9x16x32xf32, #tpu.memory_space<vmem>>, vector<1x16x32xf32>
    %426 = vector.shape_cast %425 : vector<1x16x32xf32> to vector<16x32xf32>
    %cst_314 = arith.constant dense<0.000000e+00> : vector<16x81xf32>
    %427 = tpu.matmul %426, %363, %cst_314 {dimension_numbers = #tpu.dot_dimension_numbers<[1], [0], [0], [1], [0, 0, 1, 1], [], []>} : vector<16x32xf32>, vector<32x81xf32>, vector<16x81xf32> -> vector<16x81xf32>
    %428 = arith.addf %424, %427 : vector<16x81xf32>
    %c6_315 = arith.constant 6 : index
    %c0_316 = arith.constant 0 : index
    %c0_317 = arith.constant 0 : index
    %429 = vector.load %arg7[%c6_315, %c0_316, %c0_317] : memref<9x16x32xf32, #tpu.memory_space<vmem>>, vector<1x16x32xf32>
    %430 = vector.shape_cast %429 : vector<1x16x32xf32> to vector<16x32xf32>
    %cst_318 = arith.constant dense<0.000000e+00> : vector<16x81xf32>
    %431 = tpu.matmul %430, %366, %cst_318 {dimension_numbers = #tpu.dot_dimension_numbers<[1], [0], [0], [1], [0, 0, 1, 1], [], []>} : vector<16x32xf32>, vector<32x81xf32>, vector<16x81xf32> -> vector<16x81xf32>
    %432 = arith.addf %428, %431 : vector<16x81xf32>
    %c2_319 = arith.constant 2 : index
    %c0_320 = arith.constant 0 : index
    %c0_321 = arith.constant 0 : index
    %433 = vector.load %arg7[%c2_319, %c0_320, %c0_321] : memref<9x16x32xf32, #tpu.memory_space<vmem>>, vector<1x16x32xf32>
    %434 = vector.shape_cast %433 : vector<1x16x32xf32> to vector<16x32xf32>
    %cst_322 = arith.constant dense<0.000000e+00> : vector<16x81xf32>
    %435 = tpu.matmul %434, %369, %cst_322 {dimension_numbers = #tpu.dot_dimension_numbers<[1], [0], [0], [1], [0, 0, 1, 1], [], []>} : vector<16x32xf32>, vector<32x81xf32>, vector<16x81xf32> -> vector<16x81xf32>
    %436 = arith.addf %432, %435 : vector<16x81xf32>
    %c0_323 = arith.constant 0 : index
    %c0_324 = arith.constant 0 : index
    %c0_325 = arith.constant 0 : index
    %437 = vector.load %arg7[%c0_323, %c0_324, %c0_325] : memref<9x16x32xf32, #tpu.memory_space<vmem>>, vector<1x16x32xf32>
    %438 = vector.shape_cast %437 : vector<1x16x32xf32> to vector<16x32xf32>
    %cst_326 = arith.constant dense<0.000000e+00> : vector<16x81xf32>
    %439 = tpu.matmul %438, %372, %cst_326 {dimension_numbers = #tpu.dot_dimension_numbers<[1], [0], [0], [1], [0, 0, 1, 1], [], []>} : vector<16x32xf32>, vector<32x81xf32>, vector<16x81xf32> -> vector<16x81xf32>
    %440 = arith.addf %436, %439 : vector<16x81xf32>
    %c0_327 = arith.constant 0 : index
    %c0_328 = arith.constant 0 : index
    %441 = vector.load %arg8[%c0_327, %c0_328] : memref<16x1xf32, #tpu.memory_space<vmem>>, vector<16x1xf32>
    %442 = vector.broadcast %441 : vector<16x1xf32> to vector<16x81xf32>
    %443 = arith.addf %440, %442 : vector<16x81xf32>
    %cst_329 = arith.constant 0.000000e+00 : f32
    %444 = vector.broadcast %cst_329 : f32 to vector<16x81xf32>
    %445 = arith.maximumf %443, %444 : vector<16x81xf32>
    %c3_330 = arith.constant 3 : index
    %c0_331 = arith.constant 0 : index
    %c0_332 = arith.constant 0 : index
    %446 = vector.load %arg10[%c3_330, %c0_331, %c0_332] : memref<4x81x225xf32, #tpu.memory_space<vmem>>, vector<1x81x225xf32>
    %447 = vector.shape_cast %446 : vector<1x81x225xf32> to vector<81x225xf32>
    %cst_333 = arith.constant dense<0.000000e+00> : vector<16x225xf32>
    %448 = tpu.matmul %445, %447, %cst_333 {dimension_numbers = #tpu.dot_dimension_numbers<[1], [0], [0], [1], [0, 0, 1, 1], [], []>} : vector<16x81xf32>, vector<81x225xf32>, vector<16x225xf32> -> vector<16x225xf32>
    %449 = arith.addf %423, %448 : vector<16x225xf32>
    %c0_334 = arith.constant 0 : index
    %c0_335 = arith.constant 0 : index
    %c0_336 = arith.constant 0 : index
    %450 = vector.load %arg13[%c0_334, %c0_335, %c0_336] : memref<4x225x225xf32, #tpu.memory_space<vmem>>, vector<1x225x225xf32>
    %451 = vector.shape_cast %450 : vector<1x225x225xf32> to vector<225x225xf32>
    %cst_337 = arith.constant dense<0.000000e+00> : vector<16x225xf32>
    %452 = tpu.matmul %449, %451, %cst_337 {dimension_numbers = #tpu.dot_dimension_numbers<[1], [0], [0], [1], [0, 0, 1, 1], [], []>} : vector<16x225xf32>, vector<225x225xf32>, vector<16x225xf32> -> vector<16x225xf32>
    %c1_338 = arith.constant 1 : index
    %c0_339 = arith.constant 0 : index
    %c0_340 = arith.constant 0 : index
    %453 = vector.load %arg13[%c1_338, %c0_339, %c0_340] : memref<4x225x225xf32, #tpu.memory_space<vmem>>, vector<1x225x225xf32>
    %454 = vector.shape_cast %453 : vector<1x225x225xf32> to vector<225x225xf32>
    %cst_341 = arith.constant dense<0.000000e+00> : vector<16x225xf32>
    %455 = tpu.matmul %449, %454, %cst_341 {dimension_numbers = #tpu.dot_dimension_numbers<[1], [0], [0], [1], [0, 0, 1, 1], [], []>} : vector<16x225xf32>, vector<225x225xf32>, vector<16x225xf32> -> vector<16x225xf32>
    %c2_342 = arith.constant 2 : index
    %c0_343 = arith.constant 0 : index
    %c0_344 = arith.constant 0 : index
    %456 = vector.load %arg13[%c2_342, %c0_343, %c0_344] : memref<4x225x225xf32, #tpu.memory_space<vmem>>, vector<1x225x225xf32>
    %457 = vector.shape_cast %456 : vector<1x225x225xf32> to vector<225x225xf32>
    %cst_345 = arith.constant dense<0.000000e+00> : vector<16x225xf32>
    %458 = tpu.matmul %449, %457, %cst_345 {dimension_numbers = #tpu.dot_dimension_numbers<[1], [0], [0], [1], [0, 0, 1, 1], [], []>} : vector<16x225xf32>, vector<225x225xf32>, vector<16x225xf32> -> vector<16x225xf32>
    %c3_346 = arith.constant 3 : index
    %c0_347 = arith.constant 0 : index
    %c0_348 = arith.constant 0 : index
    %459 = vector.load %arg13[%c3_346, %c0_347, %c0_348] : memref<4x225x225xf32, #tpu.memory_space<vmem>>, vector<1x225x225xf32>
    %460 = vector.shape_cast %459 : vector<1x225x225xf32> to vector<225x225xf32>
    %cst_349 = arith.constant dense<0.000000e+00> : vector<16x225xf32>
    %461 = tpu.matmul %449, %460, %cst_349 {dimension_numbers = #tpu.dot_dimension_numbers<[1], [0], [0], [1], [0, 0, 1, 1], [], []>} : vector<16x225xf32>, vector<225x225xf32>, vector<16x225xf32> -> vector<16x225xf32>
    %cst_350 = arith.constant 0.000000e+00 : f32
    %462 = vector.broadcast %cst_350 : f32 to vector<1x225xf32>
    %c4_351 = arith.constant 4 : index
    %c0_352 = arith.constant 0 : index
    %c0_353 = arith.constant 0 : index
    %463 = vector.load %arg11[%c4_351, %c0_352, %c0_353] : memref<9x1x16xf32, #tpu.memory_space<vmem>>, vector<1x1x16xf32>
    %464 = vector.shape_cast %463 : vector<1x1x16xf32> to vector<1x16xf32>
    %cst_354 = arith.constant dense<0.000000e+00> : vector<1x225xf32>
    %465 = tpu.matmul %464, %452, %cst_354 {dimension_numbers = #tpu.dot_dimension_numbers<[1], [0], [0], [1], [0, 0, 1, 1], [], []>} : vector<1x16xf32>, vector<16x225xf32>, vector<1x225xf32> -> vector<1x225xf32>
    %466 = arith.addf %462, %465 : vector<1x225xf32>
    %c0_355 = arith.constant 0 : index
    %c0_356 = arith.constant 0 : index
    %467 = vector.load %arg12[%c0_355, %c0_356] : memref<1x1xf32, #tpu.memory_space<vmem>>, vector<1x1xf32>
    %468 = vector.broadcast %467 : vector<1x1xf32> to vector<1x225xf32>
    %469 = arith.addf %466, %468 : vector<1x225xf32>
    %470 = arith.negf %469 : vector<1x225xf32>
    %471 = math.exp %470 : vector<1x225xf32>
    %cst_357 = arith.constant 1.000000e+00 : f32
    %472 = vector.broadcast %cst_357 : f32 to vector<1x225xf32>
    %473 = arith.addf %472, %471 : vector<1x225xf32>
    %474 = arith.divf %472, %473 : vector<1x225xf32>
    %c0_358 = arith.constant 0 : index
    %c0_359 = arith.constant 0 : index
    %c0_360 = arith.constant 0 : index
    %475 = vector.load %arg14[%c0_358, %c0_359, %c0_360] : memref<1x4x225xf32, #tpu.memory_space<vmem>>, vector<1x1x225xf32>
    %476 = vector.shape_cast %475 : vector<1x1x225xf32> to vector<1x225xf32>
    %477 = vector.shape_cast %474 : vector<1x225xf32> to vector<1x1x225xf32>
    tpu.vector_store %arg14[%c0_358, %c0_359, %c0_360], %477 {strides = array<i32>} : memref<1x4x225xf32, #tpu.memory_space<vmem>>, vector<1x1x225xf32>,
    %cst_361 = arith.constant 0.000000e+00 : f32
    %478 = vector.broadcast %cst_361 : f32 to vector<1x225xf32>
    %c5_362 = arith.constant 5 : index
    %c0_363 = arith.constant 0 : index
    %c0_364 = arith.constant 0 : index
    %479 = vector.load %arg11[%c5_362, %c0_363, %c0_364] : memref<9x1x16xf32, #tpu.memory_space<vmem>>, vector<1x1x16xf32>
    %480 = vector.shape_cast %479 : vector<1x1x16xf32> to vector<1x16xf32>
    %cst_365 = arith.constant dense<0.000000e+00> : vector<1x225xf32>
    %481 = tpu.matmul %480, %452, %cst_365 {dimension_numbers = #tpu.dot_dimension_numbers<[1], [0], [0], [1], [0, 0, 1, 1], [], []>} : vector<1x16xf32>, vector<16x225xf32>, vector<1x225xf32> -> vector<1x225xf32>
    %482 = arith.addf %478, %481 : vector<1x225xf32>
    %c3_366 = arith.constant 3 : index
    %c0_367 = arith.constant 0 : index
    %c0_368 = arith.constant 0 : index
    %483 = vector.load %arg11[%c3_366, %c0_367, %c0_368] : memref<9x1x16xf32, #tpu.memory_space<vmem>>, vector<1x1x16xf32>
    %484 = vector.shape_cast %483 : vector<1x1x16xf32> to vector<1x16xf32>
    %cst_369 = arith.constant dense<0.000000e+00> : vector<1x225xf32>
    %485 = tpu.matmul %484, %455, %cst_369 {dimension_numbers = #tpu.dot_dimension_numbers<[1], [0], [0], [1], [0, 0, 1, 1], [], []>} : vector<1x16xf32>, vector<16x225xf32>, vector<1x225xf32> -> vector<1x225xf32>
    %486 = arith.addf %482, %485 : vector<1x225xf32>
    %c0_370 = arith.constant 0 : index
    %c0_371 = arith.constant 0 : index
    %487 = vector.load %arg12[%c0_370, %c0_371] : memref<1x1xf32, #tpu.memory_space<vmem>>, vector<1x1xf32>
    %488 = vector.broadcast %487 : vector<1x1xf32> to vector<1x225xf32>
    %489 = arith.addf %486, %488 : vector<1x225xf32>
    %490 = arith.negf %489 : vector<1x225xf32>
    %491 = math.exp %490 : vector<1x225xf32>
    %cst_372 = arith.constant 1.000000e+00 : f32
    %492 = vector.broadcast %cst_372 : f32 to vector<1x225xf32>
    %493 = arith.addf %492, %491 : vector<1x225xf32>
    %494 = arith.divf %492, %493 : vector<1x225xf32>
    %c0_373 = arith.constant 0 : index
    %c1_374 = arith.constant 1 : index
    %c0_375 = arith.constant 0 : index
    %495 = vector.load %arg14[%c0_373, %c1_374, %c0_375] : memref<1x4x225xf32, #tpu.memory_space<vmem>>, vector<1x1x225xf32>
    %496 = vector.shape_cast %495 : vector<1x1x225xf32> to vector<1x225xf32>
    %497 = vector.shape_cast %494 : vector<1x225xf32> to vector<1x1x225xf32>
    tpu.vector_store %arg14[%c0_373, %c1_374, %c0_375], %497 {strides = array<i32>} : memref<1x4x225xf32, #tpu.memory_space<vmem>>, vector<1x1x225xf32>,
    %cst_376 = arith.constant 0.000000e+00 : f32
    %498 = vector.broadcast %cst_376 : f32 to vector<1x225xf32>
    %c7_377 = arith.constant 7 : index
    %c0_378 = arith.constant 0 : index
    %c0_379 = arith.constant 0 : index
    %499 = vector.load %arg11[%c7_377, %c0_378, %c0_379] : memref<9x1x16xf32, #tpu.memory_space<vmem>>, vector<1x1x16xf32>
    %500 = vector.shape_cast %499 : vector<1x1x16xf32> to vector<1x16xf32>
    %cst_380 = arith.constant dense<0.000000e+00> : vector<1x225xf32>
    %501 = tpu.matmul %500, %452, %cst_380 {dimension_numbers = #tpu.dot_dimension_numbers<[1], [0], [0], [1], [0, 0, 1, 1], [], []>} : vector<1x16xf32>, vector<16x225xf32>, vector<1x225xf32> -> vector<1x225xf32>
    %502 = arith.addf %498, %501 : vector<1x225xf32>
    %c1_381 = arith.constant 1 : index
    %c0_382 = arith.constant 0 : index
    %c0_383 = arith.constant 0 : index
    %503 = vector.load %arg11[%c1_381, %c0_382, %c0_383] : memref<9x1x16xf32, #tpu.memory_space<vmem>>, vector<1x1x16xf32>
    %504 = vector.shape_cast %503 : vector<1x1x16xf32> to vector<1x16xf32>
    %cst_384 = arith.constant dense<0.000000e+00> : vector<1x225xf32>
    %505 = tpu.matmul %504, %458, %cst_384 {dimension_numbers = #tpu.dot_dimension_numbers<[1], [0], [0], [1], [0, 0, 1, 1], [], []>} : vector<1x16xf32>, vector<16x225xf32>, vector<1x225xf32> -> vector<1x225xf32>
    %506 = arith.addf %502, %505 : vector<1x225xf32>
    %c0_385 = arith.constant 0 : index
    %c0_386 = arith.constant 0 : index
    %507 = vector.load %arg12[%c0_385, %c0_386] : memref<1x1xf32, #tpu.memory_space<vmem>>, vector<1x1xf32>
    %508 = vector.broadcast %507 : vector<1x1xf32> to vector<1x225xf32>
    %509 = arith.addf %506, %508 : vector<1x225xf32>
    %510 = arith.negf %509 : vector<1x225xf32>
    %511 = math.exp %510 : vector<1x225xf32>
    %cst_387 = arith.constant 1.000000e+00 : f32
    %512 = vector.broadcast %cst_387 : f32 to vector<1x225xf32>
    %513 = arith.addf %512, %511 : vector<1x225xf32>
    %514 = arith.divf %512, %513 : vector<1x225xf32>
    %c0_388 = arith.constant 0 : index
    %c2_389 = arith.constant 2 : index
    %c0_390 = arith.constant 0 : index
    %515 = vector.load %arg14[%c0_388, %c2_389, %c0_390] : memref<1x4x225xf32, #tpu.memory_space<vmem>>, vector<1x1x225xf32>
    %516 = vector.shape_cast %515 : vector<1x1x225xf32> to vector<1x225xf32>
    %517 = vector.shape_cast %514 : vector<1x225xf32> to vector<1x1x225xf32>
    tpu.vector_store %arg14[%c0_388, %c2_389, %c0_390], %517 {strides = array<i32>} : memref<1x4x225xf32, #tpu.memory_space<vmem>>, vector<1x1x225xf32>,
    %cst_391 = arith.constant 0.000000e+00 : f32
    %518 = vector.broadcast %cst_391 : f32 to vector<1x225xf32>
    %c8_392 = arith.constant 8 : index
    %c0_393 = arith.constant 0 : index
    %c0_394 = arith.constant 0 : index
    %519 = vector.load %arg11[%c8_392, %c0_393, %c0_394] : memref<9x1x16xf32, #tpu.memory_space<vmem>>, vector<1x1x16xf32>
    %520 = vector.shape_cast %519 : vector<1x1x16xf32> to vector<1x16xf32>
    %cst_395 = arith.constant dense<0.000000e+00> : vector<1x225xf32>
    %521 = tpu.matmul %520, %452, %cst_395 {dimension_numbers = #tpu.dot_dimension_numbers<[1], [0], [0], [1], [0, 0, 1, 1], [], []>} : vector<1x16xf32>, vector<16x225xf32>, vector<1x225xf32> -> vector<1x225xf32>
    %522 = arith.addf %518, %521 : vector<1x225xf32>
    %c6_396 = arith.constant 6 : index
    %c0_397 = arith.constant 0 : index
    %c0_398 = arith.constant 0 : index
    %523 = vector.load %arg11[%c6_396, %c0_397, %c0_398] : memref<9x1x16xf32, #tpu.memory_space<vmem>>, vector<1x1x16xf32>
    %524 = vector.shape_cast %523 : vector<1x1x16xf32> to vector<1x16xf32>
    %cst_399 = arith.constant dense<0.000000e+00> : vector<1x225xf32>
    %525 = tpu.matmul %524, %455, %cst_399 {dimension_numbers = #tpu.dot_dimension_numbers<[1], [0], [0], [1], [0, 0, 1, 1], [], []>} : vector<1x16xf32>, vector<16x225xf32>, vector<1x225xf32> -> vector<1x225xf32>
    %526 = arith.addf %522, %525 : vector<1x225xf32>
    %c2_400 = arith.constant 2 : index
    %c0_401 = arith.constant 0 : index
    %c0_402 = arith.constant 0 : index
    %527 = vector.load %arg11[%c2_400, %c0_401, %c0_402] : memref<9x1x16xf32, #tpu.memory_space<vmem>>, vector<1x1x16xf32>
    %528 = vector.shape_cast %527 : vector<1x1x16xf32> to vector<1x16xf32>
    %cst_403 = arith.constant dense<0.000000e+00> : vector<1x225xf32>
    %529 = tpu.matmul %528, %458, %cst_403 {dimension_numbers = #tpu.dot_dimension_numbers<[1], [0], [0], [1], [0, 0, 1, 1], [], []>} : vector<1x16xf32>, vector<16x225xf32>, vector<1x225xf32> -> vector<1x225xf32>
    %530 = arith.addf %526, %529 : vector<1x225xf32>
    %c0_404 = arith.constant 0 : index
    %c0_405 = arith.constant 0 : index
    %c0_406 = arith.constant 0 : index
    %531 = vector.load %arg11[%c0_404, %c0_405, %c0_406] : memref<9x1x16xf32, #tpu.memory_space<vmem>>, vector<1x1x16xf32>
    %532 = vector.shape_cast %531 : vector<1x1x16xf32> to vector<1x16xf32>
    %cst_407 = arith.constant dense<0.000000e+00> : vector<1x225xf32>
    %533 = tpu.matmul %532, %461, %cst_407 {dimension_numbers = #tpu.dot_dimension_numbers<[1], [0], [0], [1], [0, 0, 1, 1], [], []>} : vector<1x16xf32>, vector<16x225xf32>, vector<1x225xf32> -> vector<1x225xf32>
    %534 = arith.addf %530, %533 : vector<1x225xf32>
    %c0_408 = arith.constant 0 : index
    %c0_409 = arith.constant 0 : index
    %535 = vector.load %arg12[%c0_408, %c0_409] : memref<1x1xf32, #tpu.memory_space<vmem>>, vector<1x1xf32>
    %536 = vector.broadcast %535 : vector<1x1xf32> to vector<1x225xf32>
    %537 = arith.addf %534, %536 : vector<1x225xf32>
    %538 = arith.negf %537 : vector<1x225xf32>
    %539 = math.exp %538 : vector<1x225xf32>
    %cst_410 = arith.constant 1.000000e+00 : f32
    %540 = vector.broadcast %cst_410 : f32 to vector<1x225xf32>
    %541 = arith.addf %540, %539 : vector<1x225xf32>
    %542 = arith.divf %540, %541 : vector<1x225xf32>
    %c0_411 = arith.constant 0 : index
    %c3_412 = arith.constant 3 : index
    %c0_413 = arith.constant 0 : index
    %543 = vector.load %arg14[%c0_411, %c3_412, %c0_413] : memref<1x4x225xf32, #tpu.memory_space<vmem>>, vector<1x1x225xf32>
    %544 = vector.shape_cast %543 : vector<1x1x225xf32> to vector<1x225xf32>
    %545 = vector.shape_cast %542 : vector<1x225xf32> to vector<1x1x225xf32>
    tpu.vector_store %arg14[%c0_411, %c3_412, %c0_413], %545 {strides = array<i32>} : memref<1x4x225xf32, #tpu.memory_space<vmem>>, vector<1x1x225xf32>,
    return
  }
  func.func @transform_0(%arg0: i32) -> (i32, i32) {
    %c0_i32 = arith.constant 0 : i32
    %c0_i32_0 = arith.constant 0 : i32
    %c0_i32_1 = arith.constant 0 : i32
    return %c0_i32, %c0_i32_0 : i32, i32
  }
  func.func @transform_1(%arg0: i32) -> (i32, i32, i32) {
    %c0_i32 = arith.constant 0 : i32
    %c0_i32_0 = arith.constant 0 : i32
    %c0_i32_1 = arith.constant 0 : i32
    %c0_i32_2 = arith.constant 0 : i32
    return %c0_i32, %c0_i32_0, %c0_i32_1 : i32, i32, i32
  }
  func.func @transform_2(%arg0: i32) -> (i32, i32) {
    %c0_i32 = arith.constant 0 : i32
    %c0_i32_0 = arith.constant 0 : i32
    %c0_i32_1 = arith.constant 0 : i32
    return %c0_i32, %c0_i32_0 : i32, i32
  }
  func.func @transform_3(%arg0: i32) -> (i32, i32, i32) {
    %c0_i32 = arith.constant 0 : i32
    %c0_i32_0 = arith.constant 0 : i32
    %c0_i32_1 = arith.constant 0 : i32
    %c0_i32_2 = arith.constant 0 : i32
    return %c0_i32, %c0_i32_0, %c0_i32_1 : i32, i32, i32
  }
  func.func @transform_4(%arg0: i32) -> (i32, i32) {
    %c0_i32 = arith.constant 0 : i32
    %c0_i32_0 = arith.constant 0 : i32
    %c0_i32_1 = arith.constant 0 : i32
    return %c0_i32, %c0_i32_0 : i32, i32
  }
  func.func @transform_5(%arg0: i32) -> (i32, i32, i32) {
    %c0_i32 = arith.constant 0 : i32
    %c0_i32_0 = arith.constant 0 : i32
    %c0_i32_1 = arith.constant 0 : i32
    %c0_i32_2 = arith.constant 0 : i32
    return %c0_i32, %c0_i32_0, %c0_i32_1 : i32, i32, i32
  }
  func.func @transform_6(%arg0: i32) -> (i32, i32, i32) {
    %c0_i32 = arith.constant 0 : i32
    %c0_i32_0 = arith.constant 0 : i32
    %c0_i32_1 = arith.constant 0 : i32
    %c0_i32_2 = arith.constant 0 : i32
    return %c0_i32, %c0_i32_0, %c0_i32_1 : i32, i32, i32
  }
  func.func @transform_7(%arg0: i32) -> (i32, i32) {
    %c0_i32 = arith.constant 0 : i32
    %c0_i32_0 = arith.constant 0 : i32
    %c0_i32_1 = arith.constant 0 : i32
    return %c0_i32, %c0_i32_0 : i32, i32
  }
  func.func @transform_8(%arg0: i32) -> (i32, i32, i32) {
    %c0_i32 = arith.constant 0 : i32
    %c0_i32_0 = arith.constant 0 : i32
    %c0_i32_1 = arith.constant 0 : i32
    %c0_i32_2 = arith.constant 0 : i32
    return %c0_i32, %c0_i32_0, %c0_i32_1 : i32, i32, i32
  }
  func.func @transform_9(%arg0: i32) -> (i32, i32, i32) {
    %c0_i32 = arith.constant 0 : i32
    %c0_i32_0 = arith.constant 0 : i32
    %c0_i32_1 = arith.constant 0 : i32
    %c0_i32_2 = arith.constant 0 : i32
    return %c0_i32, %c0_i32_0, %c0_i32_1 : i32, i32, i32
  }
  func.func @transform_10(%arg0: i32) -> (i32, i32, i32) {
    %c0_i32 = arith.constant 0 : i32
    %c0_i32_0 = arith.constant 0 : i32
    %c0_i32_1 = arith.constant 0 : i32
    %c0_i32_2 = arith.constant 0 : i32
    return %c0_i32, %c0_i32_0, %c0_i32_1 : i32, i32, i32
  }
  func.func @transform_11(%arg0: i32) -> (i32, i32) {
    %c0_i32 = arith.constant 0 : i32
    %c0_i32_0 = arith.constant 0 : i32
    %c0_i32_1 = arith.constant 0 : i32
    return %c0_i32, %c0_i32_0 : i32, i32
  }
  func.func @transform_12(%arg0: i32) -> (i32, i32, i32) {
    %c0_i32 = arith.constant 0 : i32
    %c0_i32_0 = arith.constant 0 : i32
    %c0_i32_1 = arith.constant 0 : i32
    %c0_i32_2 = arith.constant 0 : i32
    return %c0_i32, %c0_i32_0, %c0_i32_1 : i32, i32, i32
  }
  func.func @transform_13(%arg0: i32) -> (i32, i32, i32) {
    %c0_i32 = arith.constant 0 : i32
    %c0_i32_0 = arith.constant 0 : i32
    %c0_i32_1 = arith.constant 0 : i32
    return %arg0, %c0_i32, %c0_i32_0 : i32, i32, i32
  }
}

</mosaic_0001>

<llo_original>
// kernel: decoder_depth_forward.1
$region0: #{decoder_depth_forward.1}
  #allocation0 [shape = 'u32[]', space=smem, size = 0x4, offset = 0x4, fixed_abs, tag = 'smem constant byte address 0x4 - core index']
  #allocation1 [shape = 'u32[144,128]{1,0:T(1,128)}', space=vmem, size = 0x12000, scoped, tag = 'internal scratch']
  #allocation2 [shape = 'f32[1,1]{1,0:T(1,128)S(1)}', space=vmem, size = 0x200, scoped, tag = 'scoped memory for decoder_depth_forward.1']
  %s0 = inlined_call_operand.vmem [shape: f32[2,32], index: 0, kind: input, shape index: {}]
  %s1 = inlined_call_operand.vmem [shape: f32[32,32,81], index: 1, kind: input, shape index: {}]
  %s2 = inlined_call_operand.vmem [shape: f32[32,81], index: 2, kind: input, shape index: {}]
  %s3 = inlined_call_operand.vmem [shape: f32[9,32,32], index: 3, kind: input, shape index: {}]
  %s4 = inlined_call_operand.vmem [shape: f32[32,81], index: 4, kind: input, shape index: {}]
  %s5 = inlined_call_operand.vmem [shape: f32[9,81,81], index: 5, kind: input, shape index: {}]
  %s6 = inlined_call_operand.vmem [shape: f32[9,16,32], index: 6, kind: input, shape index: {}]
  %s7 = inlined_call_operand.vmem [shape: f32[16,1], index: 7, kind: input, shape index: {}]
  %s8 = inlined_call_operand.vmem [shape: f32[4,81,81], index: 8, kind: input, shape index: {}]
  %s9 = inlined_call_operand.vmem [shape: f32[4,81,225], index: 9, kind: input, shape index: {}]
  %s10 = inlined_call_operand.vmem [shape: f32[9,1,16], index: 10, kind: input, shape index: {}]
  %s11 = inlined_call_operand.<no memory space> [shape: f32[1,1], index: 11, kind: input, shape index: {}]
  %s12 = inlined_call_operand.vmem [shape: f32[4,225,225], index: 12, kind: input, shape index: {}]
  %s13 = inlined_call_operand.vmem [shape: f32[2,4,225], index: 13, kind: output, shape index: {}]
  %s14 = sld [smem:[#allocation0]]
  $region89: #{decoder_depth_forward.1} parent=0
    _
  %s16 = ssub.s32 1, %s14
  %s17 = scalar_select 0, %s16, %s14
  %v18 = vstv %s11
  %19 = vst [vmem:[#allocation2] sm:$0x1] %v18
  $region1: #{decoder_depth_forward.1} parent=0
    #allocation3 [shape = 'u8[1024]{0}', space=smem, size = 0x400, scoped, tag = 'input window, operand 0, single buffered']
    #allocation4 [shape = 's32[2]{0}', space=sflag, size = 0x8, scoped, tag = 'scoped memory for decoder_depth_forward.1']
    %20 = vsyncpa [#allocation4], 0
    loop: start=0, step=1, limit=4
    $region2: #{decoder_depth_forward.1} parent=1 // loop_pre_header
      _
    $region3: #{decoder_depth_forward.1} parent=1 // loop_header
      %s22 = sphi 0, %s26
      %p23 = scmp.ge.s32.totalorder %s22, 4
      %s30 = sphi 0, %s30
      %s32 = sphi 0, %s30
      %s33 = sphi 0, %s32
      %s47 = sphi 0, %s33
      %s51 = sphi 0, %s51
      %s53 = sphi 0, %s51
      %s54 = sphi 0, %s53
      %s68 = sphi 0, %s54
      %s72 = sphi 0, %s72
      %s74 = sphi 0, %s72
      %s75 = sphi 0, %s74
      %s89 = sphi 0, %s75
      %s93 = sphi 0, %s93
      %s95 = sphi 0, %s93
      %s96 = sphi 0, %s95
      %s110 = sphi 0, %s96
      %s114 = sphi 0, %s114
      %s116 = sphi 0, %s114
      %s117 = sphi 0, %s116
      %s131 = sphi 0, %s117
      %s135 = sphi 0, %s135
      %s137 = sphi 0, %s135
      %s138 = sphi 0, %s137
      %s152 = sphi 0, %s138
      %s156 = sphi 0, %s156
      %s158 = sphi 0, %s156
      %s159 = sphi 0, %s158
      %s173 = sphi 0, %s159
      %s177 = sphi 0, %s177
      %s179 = sphi 0, %s177
      %s180 = sphi 0, %s179
      %s194 = sphi 0, %s180
      %s198 = sphi 0, %s198
      %s200 = sphi 0, %s198
      %s201 = sphi 0, %s200
      %s215 = sphi 0, %s201
      %s219 = sphi 0, %s219
      %s221 = sphi 0, %s219
      %s222 = sphi 0, %s221
      %s236 = sphi 0, %s222
      %s240 = sphi 0, %s240
      %s242 = sphi 0, %s240
      %s243 = sphi 0, %s242
      %s257 = sphi 0, %s243
      %s261 = sphi 0, %s261
      %s263 = sphi 0, %s261
      %s264 = sphi 0, %s263
      %s278 = sphi 0, %s264
      %s282 = sphi 0, %s282
      %s284 = sphi 0, %s282
      %s285 = sphi 0, %s284
      %s299 = sphi 0, %s285
      %s305 = sphi 0, %s307
      %s308 = sphi 0, %s305
      %s309 = sphi 0, %s308
      %s325 = sphi 0, %s309
    $region4: #{decoder_depth_forward.1} parent=1 // loop_header_branch
      %25 = sbr.rel (%p23) target = $region8
    $region5: #{decoder_depth_forward.1} parent=1 // loop_body
      %s27 = ssub.s32 %s22, 1
      %s28 = ssub.s32 %s22, 2
      %s29 = sadd.s32 %s22, 1
      %s31 = sadd.s32 %s30, 1
      %p34 = scmp.eq.s32.totalorder %s22, 1
      %p35 = scmp.ne.s32.totalorder %s30, %s32
      %p36 = scmp.eq.s32.totalorder %s22, 0
      %p37 = por %p35, %p36
      %p38 = scmp.ne.s32.totalorder %s30, %s32
      %p39 = scmp.eq.s32.totalorder %s27, 1
      %p40 = por %p38, %p39
      %p41 = scmp.ne.s32.totalorder %s32, %s33
      %p42 = scmp.eq.s32.totalorder %s27, 0
      %p43 = por %p41, %p42
      %p44 = scmp.ne.s32.totalorder %s32, %s33
      %p45 = scmp.eq.s32.totalorder %s28, 1
      %p46 = por %p44, %p45
      %p48 = scmp.ne.s32.totalorder %s33, %s47
      %p49 = scmp.eq.s32.totalorder %s28, 0
      %p50 = por %p48, %p49
      %s52 = sadd.s32 %s51, 1
      %p55 = scmp.eq.s32.totalorder %s22, 1
      %p56 = scmp.ne.s32.totalorder %s51, %s53
      %p57 = scmp.eq.s32.totalorder %s22, 0
      %p58 = por %p56, %p57
      %p59 = scmp.ne.s32.totalorder %s51, %s53
      %p60 = scmp.eq.s32.totalorder %s27, 1
      %p61 = por %p59, %p60
      %p62 = scmp.ne.s32.totalorder %s53, %s54
      %p63 = scmp.eq.s32.totalorder %s27, 0
      %p64 = por %p62, %p63
      %p65 = scmp.ne.s32.totalorder %s53, %s54
      %p66 = scmp.eq.s32.totalorder %s28, 1
      %p67 = por %p65, %p66
      %p69 = scmp.ne.s32.totalorder %s54, %s68
      %p70 = scmp.eq.s32.totalorder %s28, 0
      %p71 = por %p69, %p70
      %s73 = sadd.s32 %s72, 1
      %p76 = scmp.eq.s32.totalorder %s22, 1
      %p77 = scmp.ne.s32.totalorder %s72, %s74
      %p78 = scmp.eq.s32.totalorder %s22, 0
      %p79 = por %p77, %p78
      %p80 = scmp.ne.s32.totalorder %s72, %s74
      %p81 = scmp.eq.s32.totalorder %s27, 1
      %p82 = por %p80, %p81
      %p83 = scmp.ne.s32.totalorder %s74, %s75
      %p84 = scmp.eq.s32.totalorder %s27, 0
      %p85 = por %p83, %p84
      %p86 = scmp.ne.s32.totalorder %s74, %s75
      %p87 = scmp.eq.s32.totalorder %s28, 1
      %p88 = por %p86, %p87
      %p90 = scmp.ne.s32.totalorder %s75, %s89
      %p91 = scmp.eq.s32.totalorder %s28, 0
      %p92 = por %p90, %p91
      %s94 = sadd.s32 %s93, 1
      %p97 = scmp.eq.s32.totalorder %s22, 1
      %p98 = scmp.ne.s32.totalorder %s93, %s95
      %p99 = scmp.eq.s32.totalorder %s22, 0
      %p100 = por %p98, %p99
      %p101 = scmp.ne.s32.totalorder %s93, %s95
      %p102 = scmp.eq.s32.totalorder %s27, 1
      %p103 = por %p101, %p102
      %p104 = scmp.ne.s32.totalorder %s95, %s96
      %p105 = scmp.eq.s32.totalorder %s27, 0
      %p106 = por %p104, %p105
      %p107 = scmp.ne.s32.totalorder %s95, %s96
      %p108 = scmp.eq.s32.totalorder %s28, 1
      %p109 = por %p107, %p108
      %p111 = scmp.ne.s32.totalorder %s96, %s110
      %p112 = scmp.eq.s32.totalorder %s28, 0
      %p113 = por %p111, %p112
      %s115 = sadd.s32 %s114, 1
      %p118 = scmp.eq.s32.totalorder %s22, 1
      %p119 = scmp.ne.s32.totalorder %s114, %s116
      %p120 = scmp.eq.s32.totalorder %s22, 0
      %p121 = por %p119, %p120
      %p122 = scmp.ne.s32.totalorder %s114, %s116
      %p123 = scmp.eq.s32.totalorder %s27, 1
      %p124 = por %p122, %p123
      %p125 = scmp.ne.s32.totalorder %s116, %s117
      %p126 = scmp.eq.s32.totalorder %s27, 0
      %p127 = por %p125, %p126
      %p128 = scmp.ne.s32.totalorder %s116, %s117
      %p129 = scmp.eq.s32.totalorder %s28, 1
      %p130 = por %p128, %p129
      %p132 = scmp.ne.s32.totalorder %s117, %s131
      %p133 = scmp.eq.s32.totalorder %s28, 0
      %p134 = por %p132, %p133
      %s136 = sadd.s32 %s135, 1
      %p139 = scmp.eq.s32.totalorder %s22, 1
      %p140 = scmp.ne.s32.totalorder %s135, %s137
      %p141 = scmp.eq.s32.totalorder %s22, 0
      %p142 = por %p140, %p141
      %p143 = scmp.ne.s32.totalorder %s135, %s137
      %p144 = scmp.eq.s32.totalorder %s27, 1
      %p145 = por %p143, %p144
      %p146 = scmp.ne.s32.totalorder %s137, %s138
      %p147 = scmp.eq.s32.totalorder %s27, 0
      %p148 = por %p146, %p147
      %p149 = scmp.ne.s32.totalorder %s137, %s138
      %p150 = scmp.eq.s32.totalorder %s28, 1
      %p151 = por %p149, %p150
      %p153 = scmp.ne.s32.totalorder %s138, %s152
      %p154 = scmp.eq.s32.totalorder %s28, 0
      %p155 = por %p153, %p154
      %s157 = sadd.s32 %s156, 1
      %p160 = scmp.eq.s32.totalorder %s22, 1
      %p161 = scmp.ne.s32.totalorder %s156, %s158
      %p162 = scmp.eq.s32.totalorder %s22, 0
      %p163 = por %p161, %p162
      %p164 = scmp.ne.s32.totalorder %s156, %s158
      %p165 = scmp.eq.s32.totalorder %s27, 1
      %p166 = por %p164, %p165
      %p167 = scmp.ne.s32.totalorder %s158, %s159
      %p168 = scmp.eq.s32.totalorder %s27, 0
      %p169 = por %p167, %p168
      %p170 = scmp.ne.s32.totalorder %s158, %s159
      %p171 = scmp.eq.s32.totalorder %s28, 1
      %p172 = por %p170, %p171
      %p174 = scmp.ne.s32.totalorder %s159, %s173
      %p175 = scmp.eq.s32.totalorder %s28, 0
      %p176 = por %p174, %p175
      %s178 = sadd.s32 %s177, 1
      %p181 = scmp.eq.s32.totalorder %s22, 1
      %p182 = scmp.ne.s32.totalorder %s177, %s179
      %p183 = scmp.eq.s32.totalorder %s22, 0
      %p184 = por %p182, %p183
      %p185 = scmp.ne.s32.totalorder %s177, %s179
      %p186 = scmp.eq.s32.totalorder %s27, 1
      %p187 = por %p185, %p186
      %p188 = scmp.ne.s32.totalorder %s179, %s180
      %p189 = scmp.eq.s32.totalorder %s27, 0
      %p190 = por %p188, %p189
      %p191 = scmp.ne.s32.totalorder %s179, %s180
      %p192 = scmp.eq.s32.totalorder %s28, 1
      %p193 = por %p191, %p192
      %p195 = scmp.ne.s32.totalorder %s180, %s194
      %p196 = scmp.eq.s32.totalorder %s28, 0
      %p197 = por %p195, %p196
      %s199 = sadd.s32 %s198, 1
      %p202 = scmp.eq.s32.totalorder %s22, 1
      %p203 = scmp.ne.s32.totalorder %s198, %s200
      %p204 = scmp.eq.s32.totalorder %s22, 0
      %p205 = por %p203, %p204
      %p206 = scmp.ne.s32.totalorder %s198, %s200
      %p207 = scmp.eq.s32.totalorder %s27, 1
      %p208 = por %p206, %p207
      %p209 = scmp.ne.s32.totalorder %s200, %s201
      %p210 = scmp.eq.s32.totalorder %s27, 0
      %p211 = por %p209, %p210
      %p212 = scmp.ne.s32.totalorder %s200, %s201
      %p213 = scmp.eq.s32.totalorder %s28, 1
      %p214 = por %p212, %p213
      %p216 = scmp.ne.s32.totalorder %s201, %s215
      %p217 = scmp.eq.s32.totalorder %s28, 0
      %p218 = por %p216, %p217
      %s220 = sadd.s32 %s219, 1
      %p223 = scmp.eq.s32.totalorder %s22, 1
      %p224 = scmp.ne.s32.totalorder %s219, %s221
      %p225 = scmp.eq.s32.totalorder %s22, 0
      %p226 = por %p224, %p225
      %p227 = scmp.ne.s32.totalorder %s219, %s221
      %p228 = scmp.eq.s32.totalorder %s27, 1
      %p229 = por %p227, %p228
      %p230 = scmp.ne.s32.totalorder %s221, %s222
      %p231 = scmp.eq.s32.totalorder %s27, 0
      %p232 = por %p230, %p231
      %p233 = scmp.ne.s32.totalorder %s221, %s222
      %p234 = scmp.eq.s32.totalorder %s28, 1
      %p235 = por %p233, %p234
      %p237 = scmp.ne.s32.totalorder %s222, %s236
      %p238 = scmp.eq.s32.totalorder %s28, 0
      %p239 = por %p237, %p238
      %s241 = sadd.s32 %s240, 1
      %p244 = scmp.eq.s32.totalorder %s22, 1
      %p245 = scmp.ne.s32.totalorder %s240, %s242
      %p246 = scmp.eq.s32.totalorder %s22, 0
      %p247 = por %p245, %p246
      %p248 = scmp.ne.s32.totalorder %s240, %s242
      %p249 = scmp.eq.s32.totalorder %s27, 1
      %p250 = por %p248, %p249
      %p251 = scmp.ne.s32.totalorder %s242, %s243
      %p252 = scmp.eq.s32.totalorder %s27, 0
      %p253 = por %p251, %p252
      %p254 = scmp.ne.s32.totalorder %s242, %s243
      %p255 = scmp.eq.s32.totalorder %s28, 1
      %p256 = por %p254, %p255
      %p258 = scmp.ne.s32.totalorder %s243, %s257
      %p259 = scmp.eq.s32.totalorder %s28, 0
      %p260 = por %p258, %p259
      %s262 = sadd.s32 %s261, 1
      %p265 = scmp.eq.s32.totalorder %s22, 1
      %p266 = scmp.ne.s32.totalorder %s261, %s263
      %p267 = scmp.eq.s32.totalorder %s22, 0
      %p268 = por %p266, %p267
      %p269 = scmp.ne.s32.totalorder %s261, %s263
      %p270 = scmp.eq.s32.totalorder %s27, 1
      %p271 = por %p269, %p270
      %p272 = scmp.ne.s32.totalorder %s263, %s264
      %p273 = scmp.eq.s32.totalorder %s27, 0
      %p274 = por %p272, %p273
      %p275 = scmp.ne.s32.totalorder %s263, %s264
      %p276 = scmp.eq.s32.totalorder %s28, 1
      %p277 = por %p275, %p276
      %p279 = scmp.ne.s32.totalorder %s264, %s278
      %p280 = scmp.eq.s32.totalorder %s28, 0
      %p281 = por %p279, %p280
      %s283 = sadd.s32 %s282, 1
      %p286 = scmp.eq.s32.totalorder %s22, 1
      %p287 = scmp.ne.s32.totalorder %s282, %s284
      %p288 = scmp.eq.s32.totalorder %s22, 0
      %p289 = por %p287, %p288
      %p290 = scmp.ne.s32.totalorder %s282, %s284
      %p291 = scmp.eq.s32.totalorder %s27, 1
      %p292 = por %p290, %p291
      %p293 = scmp.ne.s32.totalorder %s284, %s285
      %p294 = scmp.eq.s32.totalorder %s27, 0
      %p295 = por %p293, %p294
      %p296 = scmp.ne.s32.totalorder %s284, %s285
      %p297 = scmp.eq.s32.totalorder %s28, 1
      %p298 = por %p296, %p297
      %p300 = scmp.ne.s32.totalorder %s285, %s299
      %p301 = scmp.eq.s32.totalorder %s28, 0
      %p302 = por %p300, %p301
      %s303 = ssub.s32 %s22, %s29
      %p304 = scmp.eq.s32.totalorder %s303, 0
      %s306 = sadd.s32 %s305, 1
      %s307 = scalar_select %p304, %s305, %s306
      %p310 = pneg %p304
      %p311 = scmp.eq.s32.totalorder %s22, 1
      %p312 = por %p310, %p311
      %p313 = scmp.ne.s32.totalorder %s305, %s308
      %p314 = scmp.eq.s32.totalorder %s22, 0
      %p315 = por %p313, %p314
      %p316 = scmp.ne.s32.totalorder %s305, %s308
      %p317 = scmp.eq.s32.totalorder %s27, 1
      %p318 = por %p316, %p317
      %p319 = scmp.ne.s32.totalorder %s308, %s309
      %p320 = scmp.eq.s32.totalorder %s27, 0
      %p321 = por %p319, %p320
      %p322 = scmp.ne.s32.totalorder %s308, %s309
      %p323 = scmp.eq.s32.totalorder %s28, 1
      %p324 = por %p322, %p323
      %p326 = scmp.ne.s32.totalorder %s309, %s325
      %p327 = scmp.eq.s32.totalorder %s28, 0
      %p328 = por %p326, %p327
      %p329 = scmp.le.s32.totalorder 1, %s22
      %p330 = scmp.lt.s32.totalorder %s22, 3
      %p331 = pnand %p329, %p330
      %p332 = pneg %p331
      // Predicated region
      $region9: #{decoder_depth_forward.1} parent=5 // pred_check
        _
      $region10: #{decoder_depth_forward.1} parent=5 // pred_check_branch
        %334 = sbr.rel (%p331) target = $region12
      $region11: #{decoder_depth_forward.1} parent=5 // pred_region
        %s335 = ssub.s32 %s22, 1
        // Predicated region
        $region13: #{decoder_depth_forward.1} parent=11 // pred_check
          %p336 = pneg %p43
        $region14: #{decoder_depth_forward.1} parent=11 // pred_check_branch
          %338 = sbr.rel (%p336) target = $region16
        $region15: #{decoder_depth_forward.1} parent=11 // pred_region
          %s340 = ssub.s32 32, 32
          %341 = vsyncadd [#allocation4], %s340
          %s343 = sshll.u32 %s0, 4
          %s344 = int_to_ptr.vmem [resolvable:$true] %s343
          %346 = dma.vmem_to_smem %s344, 32, [#allocation3], [#allocation4]
        $region16: #{decoder_depth_forward.1} parent=11 // pred_fallthru
          _
        // Predicated region
        $region17: #{decoder_depth_forward.1} parent=11 // pred_check
          %p347 = pneg %p64
        $region18: #{decoder_depth_forward.1} parent=11 // pred_check_branch
          %349 = sbr.rel (%p347) target = $region20
        $region19: #{decoder_depth_forward.1} parent=11 // pred_region
          _
        $region20: #{decoder_depth_forward.1} parent=11 // pred_fallthru
          _
        // Predicated region
        $region21: #{decoder_depth_forward.1} parent=11 // pred_check
          %p350 = pneg %p85
        $region22: #{decoder_depth_forward.1} parent=11 // pred_check_branch
          %352 = sbr.rel (%p350) target = $region24
        $region23: #{decoder_depth_forward.1} parent=11 // pred_region
          _
        $region24: #{decoder_depth_forward.1} parent=11 // pred_fallthru
          _
        // Predicated region
        $region25: #{decoder_depth_forward.1} parent=11 // pred_check
          %p353 = pneg %p106
        $region26: #{decoder_depth_forward.1} parent=11 // pred_check_branch
          %355 = sbr.rel (%p353) target = $region28
        $region27: #{decoder_depth_forward.1} parent=11 // pred_region
          _
        $region28: #{decoder_depth_forward.1} parent=11 // pred_fallthru
          _
        // Predicated region
        $region29: #{decoder_depth_forward.1} parent=11 // pred_check
          %p356 = pneg %p127
        $region30: #{decoder_depth_forward.1} parent=11 // pred_check_branch
          %358 = sbr.rel (%p356) target = $region32
        $region31: #{decoder_depth_forward.1} parent=11 // pred_region
          _
        $region32: #{decoder_depth_forward.1} parent=11 // pred_fallthru
          _
        // Predicated region
        $region33: #{decoder_depth_forward.1} parent=11 // pred_check
          %p359 = pneg %p148
        $region34: #{decoder_depth_forward.1} parent=11 // pred_check_branch
          %361 = sbr.rel (%p359) target = $region36
        $region35: #{decoder_depth_forward.1} parent=11 // pred_region
          _
        $region36: #{decoder_depth_forward.1} parent=11 // pred_fallthru
          _
        // Predicated region
        $region37: #{decoder_depth_forward.1} parent=11 // pred_check
          %p362 = pneg %p169
        $region38: #{decoder_depth_forward.1} parent=11 // pred_check_branch
          %364 = sbr.rel (%p362) target = $region40
        $region39: #{decoder_depth_forward.1} parent=11 // pred_region
          _
        $region40: #{decoder_depth_forward.1} parent=11 // pred_fallthru
          _
        // Predicated region
        $region41: #{decoder_depth_forward.1} parent=11 // pred_check
          %p365 = pneg %p190
        $region42: #{decoder_depth_forward.1} parent=11 // pred_check_branch
          %367 = sbr.rel (%p365) target = $region44
        $region43: #{decoder_depth_forward.1} parent=11 // pred_region
          _
        $region44: #{decoder_depth_forward.1} parent=11 // pred_fallthru
          _
        // Predicated region
        $region45: #{decoder_depth_forward.1} parent=11 // pred_check
          %p368 = pneg %p211
        $region46: #{decoder_depth_forward.1} parent=11 // pred_check_branch
          %370 = sbr.rel (%p368) target = $region48
        $region47: #{decoder_depth_forward.1} parent=11 // pred_region
          _
        $region48: #{decoder_depth_forward.1} parent=11 // pred_fallthru
          _
        // Predicated region
        $region49: #{decoder_depth_forward.1} parent=11 // pred_check
          %p371 = pneg %p232
        $region50: #{decoder_depth_forward.1} parent=11 // pred_check_branch
          %373 = sbr.rel (%p371) target = $region52
        $region51: #{decoder_depth_forward.1} parent=11 // pred_region
          _
        $region52: #{decoder_depth_forward.1} parent=11 // pred_fallthru
          _
        // Predicated region
        $region53: #{decoder_depth_forward.1} parent=11 // pred_check
          %p374 = pneg %p253
        $region54: #{decoder_depth_forward.1} parent=11 // pred_check_branch
          %376 = sbr.rel (%p374) target = $region56
        $region55: #{decoder_depth_forward.1} parent=11 // pred_region
          _
        $region56: #{decoder_depth_forward.1} parent=11 // pred_fallthru
          _
        // Predicated region
        $region57: #{decoder_depth_forward.1} parent=11 // pred_check
          %p377 = pneg %p274
        $region58: #{decoder_depth_forward.1} parent=11 // pred_check_branch
          %379 = sbr.rel (%p377) target = $region60
        $region59: #{decoder_depth_forward.1} parent=11 // pred_region
          _
        $region60: #{decoder_depth_forward.1} parent=11 // pred_fallthru
          _
        // Predicated region
        $region61: #{decoder_depth_forward.1} parent=11 // pred_check
          %p380 = pneg %p295
        $region62: #{decoder_depth_forward.1} parent=11 // pred_check_branch
          %382 = sbr.rel (%p380) target = $region64
        $region63: #{decoder_depth_forward.1} parent=11 // pred_region
          _
        $region64: #{decoder_depth_forward.1} parent=11 // pred_fallthru
          _
      $region12: #{decoder_depth_forward.1} parent=5 // pred_fallthru
        _
      %p383 = scmp.lt.s32.totalorder %s22, 2
      // Predicated region
      $region65: #{decoder_depth_forward.1} parent=5 // pred_check
        %p384 = pneg %p383
      $region66: #{decoder_depth_forward.1} parent=5 // pred_check_branch
        %386 = sbr.rel (%p384) target = $region68
      $region67: #{decoder_depth_forward.1} parent=5 // pred_region
        _
      $region68: #{decoder_depth_forward.1} parent=5 // pred_fallthru
        _
      %p387 = scmp.le.s32.totalorder 1, %s22
      %p388 = scmp.lt.s32.totalorder %s22, 3
      %p389 = pnand %p387, %p388
      %p390 = pneg %p389
      // Predicated region
      $region69: #{decoder_depth_forward.1} parent=5 // pred_check
        _
      $region70: #{decoder_depth_forward.1} parent=5 // pred_check_branch
        %392 = sbr.rel (%p389) target = $region72
      $region71: #{decoder_depth_forward.1} parent=5 // pred_region
        %s393 = ssub.s32 %s22, 1
        // Predicated region
        $region73: #{decoder_depth_forward.1} parent=71 // pred_check
          %p394 = pneg %p43
        $region74: #{decoder_depth_forward.1} parent=71 // pred_check_branch
          %396 = sbr.rel (%p394) target = $region76
        $region75: #{decoder_depth_forward.1} parent=71 // pred_region
          %397 = dma.done [#allocation4], 32
        $region76: #{decoder_depth_forward.1} parent=71 // pred_fallthru
          _
        %398 = sfence
        %p399 = pneg %p43
        %p400 = pneg %p40
        %p401 = pneg %p64
        %p402 = pneg %p61
        %p403 = pneg %p85
        %p404 = pneg %p82
        %p405 = pneg %p106
        %p406 = pneg %p103
        %p407 = pneg %p127
        %p408 = pneg %p124
        %p409 = pneg %p148
        %p410 = pneg %p145
        %p411 = pneg %p169
        %p412 = pneg %p166
        %p413 = pneg %p190
        %p414 = pneg %p187
        %p415 = pneg %p211
        %p416 = pneg %p208
        %p417 = pneg %p232
        %p418 = pneg %p229
        %p419 = pneg %p253
        %p420 = pneg %p250
        %p421 = pneg %p274
        %p422 = pneg %p271
        %p423 = pneg %p295
        %p424 = pneg %p292
        %p425 = pneg %p321
        %p426 = pneg %p318
        %p427 = scmp.lt.s32.totalorder %s27, 1
        %s428 = scalar_select %p427, %s27, 1
        %s429 = smul.addr %s428, 2
        %s430 = smul.addr %s429, 4
        %s431 = scalar_lea.vmem %s13, %s430
        %p432 = scmp.lt.s32.totalorder %s27, 1
        %s433 = scalar_select %p432, %s27, 1
        %s434 = smul.addr %s433, 2
        %s435 = smul.addr %s434, 4
        %s436 = scalar_lea.vmem %s13, %s435
        %v437 = vld [vmem:[%s2] sm:$0xff]
        %v438 = vld [vmem:[%s2 + $0x8] sm:$0xff]
        %v439 = vld [vmem:[%s2 + $0x10] sm:$0xff]
        %v440 = vld [vmem:[%s2 + $0x18] sm:$0xff]
        %s441 = smul.u32 %s27, 128
        %s442 = sld [smem:[#allocation3 + %s441]]
        %v443 = vld [vmem:[%s1] sm:$0xff]
        %v444 = vld [vmem:[%s1 + $0x8] sm:$0xff]
        %v445 = vld [vmem:[%s1 + $0x10] sm:$0xff]
        %v446 = vld [vmem:[%s1 + $0x18] sm:$0xff]
        %v447 = vstv %s442
        %v448 = vmul.f32 %v447, %v443
        %v449 = vmul.f32 %v447, %v444
        %v450 = vmul.f32 %v447, %v445
        %v451 = vmul.f32 %v447, %v446
        %v452 = vadd.f32 %v437, %v448
        %v453 = vadd.f32 %v438, %v449
        %v454 = vadd.f32 %v439, %v450
        %v455 = vadd.f32 %v440, %v451
        %s456 = sadd.s32 %s441, 1
        %s457 = sld [smem:[#allocation3 + %s456]]
        %s458 = scalar_lea.vmem %s1, 32
        %v459 = vld [vmem:[%s458] sm:$0xff]
        %v460 = vld [vmem:[%s458 + $0x8] sm:$0xff]
        %v461 = vld [vmem:[%s458 + $0x10] sm:$0xff]
        %v462 = vld [vmem:[%s458 + $0x18] sm:$0xff]
        %v463 = vstv %s457
        %v464 = vmul.f32 %v463, %v459
        %v465 = vmul.f32 %v463, %v460
        %v466 = vmul.f32 %v463, %v461
        %v467 = vmul.f32 %v463, %v462
        %v468 = vadd.f32 %v452, %v464
        %v469 = vadd.f32 %v453, %v465
        %v470 = vadd.f32 %v454, %v466
        %v471 = vadd.f32 %v455, %v467
        %s472 = sadd.s32 %s441, 2
        %s473 = sld [smem:[#allocation3 + %s472]]
        %s474 = scalar_lea.vmem %s1, 64
        %v475 = vld [vmem:[%s474] sm:$0xff]
        %v476 = vld [vmem:[%s474 + $0x8] sm:$0xff]
        %v477 = vld [vmem:[%s474 + $0x10] sm:$0xff]
        %v478 = vld [vmem:[%s474 + $0x18] sm:$0xff]
        %v479 = vstv %s473
        %v480 = vmul.f32 %v479, %v475
        %v481 = vmul.f32 %v479, %v476
        %v482 = vmul.f32 %v479, %v477
        %v483 = vmul.f32 %v479, %v478
        %v484 = vadd.f32 %v468, %v480
        %v485 = vadd.f32 %v469, %v481
        %v486 = vadd.f32 %v470, %v482
        %v487 = vadd.f32 %v471, %v483
        %s488 = sadd.s32 %s441, 3
        %s489 = sld [smem:[#allocation3 + %s488]]
        %s490 = scalar_lea.vmem %s1, 96
        %v491 = vld [vmem:[%s490] sm:$0xff]
        %v492 = vld [vmem:[%s490 + $0x8] sm:$0xff]
        %v493 = vld [vmem:[%s490 + $0x10] sm:$0xff]
        %v494 = vld [vmem:[%s490 + $0x18] sm:$0xff]
        %v495 = vstv %s489
        %v496 = vmul.f32 %v495, %v491
        %v497 = vmul.f32 %v495, %v492
        %v498 = vmul.f32 %v495, %v493
        %v499 = vmul.f32 %v495, %v494
        %v500 = vadd.f32 %v484, %v496
        %v501 = vadd.f32 %v485, %v497
        %v502 = vadd.f32 %v486, %v498
        %v503 = vadd.f32 %v487, %v499
        %s504 = sadd.s32 %s441, 4
        %s505 = sld [smem:[#allocation3 + %s504]]
        %s506 = scalar_lea.vmem %s1, 128
        %v507 = vld [vmem:[%s506] sm:$0xff]
        %v508 = vld [vmem:[%s506 + $0x8] sm:$0xff]
        %v509 = vld [vmem:[%s506 + $0x10] sm:$0xff]
        %v510 = vld [vmem:[%s506 + $0x18] sm:$0xff]
        %v511 = vstv %s505
        %v512 = vmul.f32 %v511, %v507
        %v513 = vmul.f32 %v511, %v508
        %v514 = vmul.f32 %v511, %v509
        %v515 = vmul.f32 %v511, %v510
        %v516 = vadd.f32 %v500, %v512
        %v517 = vadd.f32 %v501, %v513
        %v518 = vadd.f32 %v502, %v514
        %v519 = vadd.f32 %v503, %v515
        %s520 = sadd.s32 %s441, 5
        %s521 = sld [smem:[#allocation3 + %s520]]
        %s522 = scalar_lea.vmem %s1, 160
        %v523 = vld [vmem:[%s522] sm:$0xff]
        %v524 = vld [vmem:[%s522 + $0x8] sm:$0xff]
        %v525 = vld [vmem:[%s522 + $0x10] sm:$0xff]
        %v526 = vld [vmem:[%s522 + $0x18] sm:$0xff]
        %v527 = vstv %s521
        %v528 = vmul.f32 %v527, %v523
        %v529 = vmul.f32 %v527, %v524
        %v530 = vmul.f32 %v527, %v525
        %v531 = vmul.f32 %v527, %v526
        %v532 = vadd.f32 %v516, %v528
        %v533 = vadd.f32 %v517, %v529
        %v534 = vadd.f32 %v518, %v530
        %v535 = vadd.f32 %v519, %v531
        %s536 = sadd.s32 %s441, 6
        %s537 = sld [smem:[#allocation3 + %s536]]
        %s538 = scalar_lea.vmem %s1, 192
        %v539 = vld [vmem:[%s538] sm:$0xff]
        %v540 = vld [vmem:[%s538 + $0x8] sm:$0xff]
        %v541 = vld [vmem:[%s538 + $0x10] sm:$0xff]
        %v542 = vld [vmem:[%s538 + $0x18] sm:$0xff]
        %v543 = vstv %s537
        %v544 = vmul.f32 %v543, %v539
        %v545 = vmul.f32 %v543, %v540
        %v546 = vmul.f32 %v543, %v541
        %v547 = vmul.f32 %v543, %v542
        %v548 = vadd.f32 %v532, %v544
        %v549 = vadd.f32 %v533, %v545
        %v550 = vadd.f32 %v534, %v546
        %v551 = vadd.f32 %v535, %v547
        %s552 = sadd.s32 %s441, 7
        %s553 = sld [smem:[#allocation3 + %s552]]
        %s554 = scalar_lea.vmem %s1, 224
        %v555 = vld [vmem:[%s554] sm:$0xff]
        %v556 = vld [vmem:[%s554 + $0x8] sm:$0xff]
        %v557 = vld [vmem:[%s554 + $0x10] sm:$0xff]
        %v558 = vld [vmem:[%s554 + $0x18] sm:$0xff]
        %v559 = vstv %s553
        %v560 = vmul.f32 %v559, %v555
        %v561 = vmul.f32 %v559, %v556
        %v562 = vmul.f32 %v559, %v557
        %v563 = vmul.f32 %v559, %v558
        %v564 = vadd.f32 %v548, %v560
        %v565 = vadd.f32 %v549, %v561
        %v566 = vadd.f32 %v550, %v562
        %v567 = vadd.f32 %v551, %v563
        %s568 = sadd.s32 %s441, 8
        %s569 = sld [smem:[#allocation3 + %s568]]
        %s570 = scalar_lea.vmem %s1, 256
        %v571 = vld [vmem:[%s570] sm:$0xff]
        %v572 = vld [vmem:[%s570 + $0x8] sm:$0xff]
        %v573 = vld [vmem:[%s570 + $0x10] sm:$0xff]
        %v574 = vld [vmem:[%s570 + $0x18] sm:$0xff]
        %v575 = vstv %s569
        %v576 = vmul.f32 %v575, %v571
        %v577 = vmul.f32 %v575, %v572
        %v578 = vmul.f32 %v575, %v573
        %v579 = vmul.f32 %v575, %v574
        %v580 = vadd.f32 %v564, %v576
        %v581 = vadd.f32 %v565, %v577
        %v582 = vadd.f32 %v566, %v578
        %v583 = vadd.f32 %v567, %v579
        %s584 = sadd.s32 %s441, 9
        %s585 = sld [smem:[#allocation3 + %s584]]
        %s586 = scalar_lea.vmem %s1, 288
        %v587 = vld [vmem:[%s586] sm:$0xff]
        %v588 = vld [vmem:[%s586 + $0x8] sm:$0xff]
        %v589 = vld [vmem:[%s586 + $0x10] sm:$0xff]
        %v590 = vld [vmem:[%s586 + $0x18] sm:$0xff]
        %v591 = vstv %s585
        %v592 = vmul.f32 %v591, %v587
        %v593 = vmul.f32 %v591, %v588
        %v594 = vmul.f32 %v591, %v589
        %v595 = vmul.f32 %v591, %v590
        %v596 = vadd.f32 %v580, %v592
        %v597 = vadd.f32 %v581, %v593
        %v598 = vadd.f32 %v582, %v594
        %v599 = vadd.f32 %v583, %v595
        %s600 = sadd.s32 %s441, 10
        %s601 = sld [smem:[#allocation3 + %s600]]
        %s602 = scalar_lea.vmem %s1, 320
        %v603 = vld [vmem:[%s602] sm:$0xff]
        %v604 = vld [vmem:[%s602 + $0x8] sm:$0xff]
        %v605 = vld [vmem:[%s602 + $0x10] sm:$0xff]
        %v606 = vld [vmem:[%s602 + $0x18] sm:$0xff]
        %v607 = vstv %s601
        %v608 = vmul.f32 %v607, %v603
        %v609 = vmul.f32 %v607, %v604
        %v610 = vmul.f32 %v607, %v605
        %v611 = vmul.f32 %v607, %v606
        %v612 = vadd.f32 %v596, %v608
        %v613 = vadd.f32 %v597, %v609
        %v614 = vadd.f32 %v598, %v610
        %v615 = vadd.f32 %v599, %v611
        %s616 = sadd.s32 %s441, 11
        %s617 = sld [smem:[#allocation3 + %s616]]
        %s618 = scalar_lea.vmem %s1, 352
        %v619 = vld [vmem:[%s618] sm:$0xff]
        %v620 = vld [vmem:[%s618 + $0x8] sm:$0xff]
        %v621 = vld [vmem:[%s618 + $0x10] sm:$0xff]
        %v622 = vld [vmem:[%s618 + $0x18] sm:$0xff]
        %v623 = vstv %s617
        %v624 = vmul.f32 %v623, %v619
        %v625 = vmul.f32 %v623, %v620
        %v626 = vmul.f32 %v623, %v621
        %v627 = vmul.f32 %v623, %v622
        %v628 = vadd.f32 %v612, %v624
        %v629 = vadd.f32 %v613, %v625
        %v630 = vadd.f32 %v614, %v626
        %v631 = vadd.f32 %v615, %v627
        %s632 = sadd.s32 %s441, 12
        %s633 = sld [smem:[#allocation3 + %s632]]
        %s634 = scalar_lea.vmem %s1, 384
        %v635 = vld [vmem:[%s634] sm:$0xff]
        %v636 = vld [vmem:[%s634 + $0x8] sm:$0xff]
        %v637 = vld [vmem:[%s634 + $0x10] sm:$0xff]
        %v638 = vld [vmem:[%s634 + $0x18] sm:$0xff]
        %v639 = vstv %s633
        %v640 = vmul.f32 %v639, %v635
        %v641 = vmul.f32 %v639, %v636
        %v642 = vmul.f32 %v639, %v637
        %v643 = vmul.f32 %v639, %v638
        %v644 = vadd.f32 %v628, %v640
        %v645 = vadd.f32 %v629, %v641
        %v646 = vadd.f32 %v630, %v642
        %v647 = vadd.f32 %v631, %v643
        %s648 = sadd.s32 %s441, 13
        %s649 = sld [smem:[#allocation3 + %s648]]
        %s650 = scalar_lea.vmem %s1, 416
        %v651 = vld [vmem:[%s650] sm:$0xff]
        %v652 = vld [vmem:[%s650 + $0x8] sm:$0xff]
        %v653 = vld [vmem:[%s650 + $0x10] sm:$0xff]
        %v654 = vld [vmem:[%s650 + $0x18] sm:$0xff]
        %v655 = vstv %s649
        %v656 = vmul.f32 %v655, %v651
        %v657 = vmul.f32 %v655, %v652
        %v658 = vmul.f32 %v655, %v653
        %v659 = vmul.f32 %v655, %v654
        %v660 = vadd.f32 %v644, %v656
        %v661 = vadd.f32 %v645, %v657
        %v662 = vadd.f32 %v646, %v658
        %v663 = vadd.f32 %v647, %v659
        %s664 = sadd.s32 %s441, 14
        %s665 = sld [smem:[#allocation3 + %s664]]
        %s666 = scalar_lea.vmem %s1, 448
        %v667 = vld [vmem:[%s666] sm:$0xff]
        %v668 = vld [vmem:[%s666 + $0x8] sm:$0xff]
        %v669 = vld [vmem:[%s666 + $0x10] sm:$0xff]
        %v670 = vld [vmem:[%s666 + $0x18] sm:$0xff]
        %v671 = vstv %s665
        %v672 = vmul.f32 %v671, %v667
        %v673 = vmul.f32 %v671, %v668
        %v674 = vmul.f32 %v671, %v669
        %v675 = vmul.f32 %v671, %v670
        %v676 = vadd.f32 %v660, %v672
        %v677 = vadd.f32 %v661, %v673
        %v678 = vadd.f32 %v662, %v674
        %v679 = vadd.f32 %v663, %v675
        %s680 = sadd.s32 %s441, 15
        %s681 = sld [smem:[#allocation3 + %s680]]
        %s682 = scalar_lea.vmem %s1, 480
        %v683 = vld [vmem:[%s682] sm:$0xff]
        %v684 = vld [vmem:[%s682 + $0x8] sm:$0xff]
        %v685 = vld [vmem:[%s682 + $0x10] sm:$0xff]
        %v686 = vld [vmem:[%s682 + $0x18] sm:$0xff]
        %v687 = vstv %s681
        %v688 = vmul.f32 %v687, %v683
        %v689 = vmul.f32 %v687, %v684
        %v690 = vmul.f32 %v687, %v685
        %v691 = vmul.f32 %v687, %v686
        %v692 = vadd.f32 %v676, %v688
        %v693 = vadd.f32 %v677, %v689
        %v694 = vadd.f32 %v678, %v690
        %v695 = vadd.f32 %v679, %v691
        %s696 = sadd.s32 %s441, 16
        %s697 = sld [smem:[#allocation3 + %s696]]
        %s698 = scalar_lea.vmem %s1, 512
        %v699 = vld [vmem:[%s698] sm:$0xff]
        %v700 = vld [vmem:[%s698 + $0x8] sm:$0xff]
        %v701 = vld [vmem:[%s698 + $0x10] sm:$0xff]
        %v702 = vld [vmem:[%s698 + $0x18] sm:$0xff]
        %v703 = vstv %s697
        %v704 = vmul.f32 %v703, %v699
        %v705 = vmul.f32 %v703, %v700
        %v706 = vmul.f32 %v703, %v701
        %v707 = vmul.f32 %v703, %v702
        %v708 = vadd.f32 %v692, %v704
        %v709 = vadd.f32 %v693, %v705
        %v710 = vadd.f32 %v694, %v706
        %v711 = vadd.f32 %v695, %v707
        %s712 = sadd.s32 %s441, 17
        %s713 = sld [smem:[#allocation3 + %s712]]
        %s714 = scalar_lea.vmem %s1, 544
        %v715 = vld [vmem:[%s714] sm:$0xff]
        %v716 = vld [vmem:[%s714 + $0x8] sm:$0xff]
        %v717 = vld [vmem:[%s714 + $0x10] sm:$0xff]
        %v718 = vld [vmem:[%s714 + $0x18] sm:$0xff]
        %v719 = vstv %s713
        %v720 = vmul.f32 %v719, %v715
        %v721 = vmul.f32 %v719, %v716
        %v722 = vmul.f32 %v719, %v717
        %v723 = vmul.f32 %v719, %v718
        %v724 = vadd.f32 %v708, %v720
        %v725 = vadd.f32 %v709, %v721
        %v726 = vadd.f32 %v710, %v722
        %v727 = vadd.f32 %v711, %v723
        %s728 = sadd.s32 %s441, 18
        %s729 = sld [smem:[#allocation3 + %s728]]
        %s730 = scalar_lea.vmem %s1, 576
        %v731 = vld [vmem:[%s730] sm:$0xff]
        %v732 = vld [vmem:[%s730 + $0x8] sm:$0xff]
        %v733 = vld [vmem:[%s730 + $0x10] sm:$0xff]
        %v734 = vld [vmem:[%s730 + $0x18] sm:$0xff]
        %v735 = vstv %s729
        %v736 = vmul.f32 %v735, %v731
        %v737 = vmul.f32 %v735, %v732
        %v738 = vmul.f32 %v735, %v733
        %v739 = vmul.f32 %v735, %v734
        %v740 = vadd.f32 %v724, %v736
        %v741 = vadd.f32 %v725, %v737
        %v742 = vadd.f32 %v726, %v738
        %v743 = vadd.f32 %v727, %v739
        %s744 = sadd.s32 %s441, 19
        %s745 = sld [smem:[#allocation3 + %s744]]
        %s746 = scalar_lea.vmem %s1, 608
        %v747 = vld [vmem:[%s746] sm:$0xff]
        %v748 = vld [vmem:[%s746 + $0x8] sm:$0xff]
        %v749 = vld [vmem:[%s746 + $0x10] sm:$0xff]
        %v750 = vld [vmem:[%s746 + $0x18] sm:$0xff]
        %v751 = vstv %s745
        %v752 = vmul.f32 %v751, %v747
        %v753 = vmul.f32 %v751, %v748
        %v754 = vmul.f32 %v751, %v749
        %v755 = vmul.f32 %v751, %v750
        %v756 = vadd.f32 %v740, %v752
        %v757 = vadd.f32 %v741, %v753
        %v758 = vadd.f32 %v742, %v754
        %v759 = vadd.f32 %v743, %v755
        %s760 = sadd.s32 %s441, 20
        %s761 = sld [smem:[#allocation3 + %s760]]
        %s762 = scalar_lea.vmem %s1, 640
        %v763 = vld [vmem:[%s762] sm:$0xff]
        %v764 = vld [vmem:[%s762 + $0x8] sm:$0xff]
        %v765 = vld [vmem:[%s762 + $0x10] sm:$0xff]
        %v766 = vld [vmem:[%s762 + $0x18] sm:$0xff]
        %v767 = vstv %s761
        %v768 = vmul.f32 %v767, %v763
        %v769 = vmul.f32 %v767, %v764
        %v770 = vmul.f32 %v767, %v765
        %v771 = vmul.f32 %v767, %v766
        %v772 = vadd.f32 %v756, %v768
        %v773 = vadd.f32 %v757, %v769
        %v774 = vadd.f32 %v758, %v770
        %v775 = vadd.f32 %v759, %v771
        %s776 = sadd.s32 %s441, 21
        %s777 = sld [smem:[#allocation3 + %s776]]
        %s778 = scalar_lea.vmem %s1, 672
        %v779 = vld [vmem:[%s778] sm:$0xff]
        %v780 = vld [vmem:[%s778 + $0x8] sm:$0xff]
        %v781 = vld [vmem:[%s778 + $0x10] sm:$0xff]
        %v782 = vld [vmem:[%s778 + $0x18] sm:$0xff]
        %v783 = vstv %s777
        %v784 = vmul.f32 %v783, %v779
        %v785 = vmul.f32 %v783, %v780
        %v786 = vmul.f32 %v783, %v781
        %v787 = vmul.f32 %v783, %v782
        %v788 = vadd.f32 %v772, %v784
        %v789 = vadd.f32 %v773, %v785
        %v790 = vadd.f32 %v774, %v786
        %v791 = vadd.f32 %v775, %v787
        %s792 = sadd.s32 %s441, 22
        %s793 = sld [smem:[#allocation3 + %s792]]
        %s794 = scalar_lea.vmem %s1, 704
        %v795 = vld [vmem:[%s794] sm:$0xff]
        %v796 = vld [vmem:[%s794 + $0x8] sm:$0xff]
        %v797 = vld [vmem:[%s794 + $0x10] sm:$0xff]
        %v798 = vld [vmem:[%s794 + $0x18] sm:$0xff]
        %v799 = vstv %s793
        %v800 = vmul.f32 %v799, %v795
        %v801 = vmul.f32 %v799, %v796
        %v802 = vmul.f32 %v799, %v797
        %v803 = vmul.f32 %v799, %v798
        %v804 = vadd.f32 %v788, %v800
        %v805 = vadd.f32 %v789, %v801
        %v806 = vadd.f32 %v790, %v802
        %v807 = vadd.f32 %v791, %v803
        %s808 = sadd.s32 %s441, 23
        %s809 = sld [smem:[#allocation3 + %s808]]
        %s810 = scalar_lea.vmem %s1, 736
        %v811 = vld [vmem:[%s810] sm:$0xff]
        %v812 = vld [vmem:[%s810 + $0x8] sm:$0xff]
        %v813 = vld [vmem:[%s810 + $0x10] sm:$0xff]
        %v814 = vld [vmem:[%s810 + $0x18] sm:$0xff]
        %v815 = vstv %s809
        %v816 = vmul.f32 %v815, %v811
        %v817 = vmul.f32 %v815, %v812
        %v818 = vmul.f32 %v815, %v813
        %v819 = vmul.f32 %v815, %v814
        %v820 = vadd.f32 %v804, %v816
        %v821 = vadd.f32 %v805, %v817
        %v822 = vadd.f32 %v806, %v818
        %v823 = vadd.f32 %v807, %v819
        %s824 = sadd.s32 %s441, 24
        %s825 = sld [smem:[#allocation3 + %s824]]
        %s826 = scalar_lea.vmem %s1, 768
        %v827 = vld [vmem:[%s826] sm:$0xff]
        %v828 = vld [vmem:[%s826 + $0x8] sm:$0xff]
        %v829 = vld [vmem:[%s826 + $0x10] sm:$0xff]
        %v830 = vld [vmem:[%s826 + $0x18] sm:$0xff]
        %v831 = vstv %s825
        %v832 = vmul.f32 %v831, %v827
        %v833 = vmul.f32 %v831, %v828
        %v834 = vmul.f32 %v831, %v829
        %v835 = vmul.f32 %v831, %v830
        %v836 = vadd.f32 %v820, %v832
        %v837 = vadd.f32 %v821, %v833
        %v838 = vadd.f32 %v822, %v834
        %v839 = vadd.f32 %v823, %v835
        %s840 = sadd.s32 %s441, 25
        %s841 = sld [smem:[#allocation3 + %s840]]
        %s842 = scalar_lea.vmem %s1, 800
        %v843 = vld [vmem:[%s842] sm:$0xff]
        %v844 = vld [vmem:[%s842 + $0x8] sm:$0xff]
        %v845 = vld [vmem:[%s842 + $0x10] sm:$0xff]
        %v846 = vld [vmem:[%s842 + $0x18] sm:$0xff]
        %v847 = vstv %s841
        %v848 = vmul.f32 %v847, %v843
        %v849 = vmul.f32 %v847, %v844
        %v850 = vmul.f32 %v847, %v845
        %v851 = vmul.f32 %v847, %v846
        %v852 = vadd.f32 %v836, %v848
        %v853 = vadd.f32 %v837, %v849
        %v854 = vadd.f32 %v838, %v850
        %v855 = vadd.f32 %v839, %v851
        %s856 = sadd.s32 %s441, 26
        %s857 = sld [smem:[#allocation3 + %s856]]
        %s858 = scalar_lea.vmem %s1, 832
        %v859 = vld [vmem:[%s858] sm:$0xff]
        %v860 = vld [vmem:[%s858 + $0x8] sm:$0xff]
        %v861 = vld [vmem:[%s858 + $0x10] sm:$0xff]
        %v862 = vld [vmem:[%s858 + $0x18] sm:$0xff]
        %v863 = vstv %s857
        %v864 = vmul.f32 %v863, %v859
        %v865 = vmul.f32 %v863, %v860
        %v866 = vmul.f32 %v863, %v861
        %v867 = vmul.f32 %v863, %v862
        %v868 = vadd.f32 %v852, %v864
        %v869 = vadd.f32 %v853, %v865
        %v870 = vadd.f32 %v854, %v866
        %v871 = vadd.f32 %v855, %v867
        %s872 = sadd.s32 %s441, 27
        %s873 = sld [smem:[#allocation3 + %s872]]
        %s874 = scalar_lea.vmem %s1, 864
        %v875 = vld [vmem:[%s874] sm:$0xff]
        %v876 = vld [vmem:[%s874 + $0x8] sm:$0xff]
        %v877 = vld [vmem:[%s874 + $0x10] sm:$0xff]
        %v878 = vld [vmem:[%s874 + $0x18] sm:$0xff]
        %v879 = vstv %s873
        %v880 = vmul.f32 %v879, %v875
        %v881 = vmul.f32 %v879, %v876
        %v882 = vmul.f32 %v879, %v877
        %v883 = vmul.f32 %v879, %v878
        %v884 = vadd.f32 %v868, %v880
        %v885 = vadd.f32 %v869, %v881
        %v886 = vadd.f32 %v870, %v882
        %v887 = vadd.f32 %v871, %v883
        %s888 = sadd.s32 %s441, 28
        %s889 = sld [smem:[#allocation3 + %s888]]
        %s890 = scalar_lea.vmem %s1, 896
        %v891 = vld [vmem:[%s890] sm:$0xff]
        %v892 = vld [vmem:[%s890 + $0x8] sm:$0xff]
        %v893 = vld [vmem:[%s890 + $0x10] sm:$0xff]
        %v894 = vld [vmem:[%s890 + $0x18] sm:$0xff]
        %v895 = vstv %s889
        %v896 = vmul.f32 %v895, %v891
        %v897 = vmul.f32 %v895, %v892
        %v898 = vmul.f32 %v895, %v893
        %v899 = vmul.f32 %v895, %v894
        %v900 = vadd.f32 %v884, %v896
        %v901 = vadd.f32 %v885, %v897
        %v902 = vadd.f32 %v886, %v898
        %v903 = vadd.f32 %v887, %v899
        %s904 = sadd.s32 %s441, 29
        %s905 = sld [smem:[#allocation3 + %s904]]
        %s906 = scalar_lea.vmem %s1, 928
        %v907 = vld [vmem:[%s906] sm:$0xff]
        %v908 = vld [vmem:[%s906 + $0x8] sm:$0xff]
        %v909 = vld [vmem:[%s906 + $0x10] sm:$0xff]
        %v910 = vld [vmem:[%s906 + $0x18] sm:$0xff]
        %v911 = vstv %s905
        %v912 = vmul.f32 %v911, %v907
        %v913 = vmul.f32 %v911, %v908
        %v914 = vmul.f32 %v911, %v909
        %v915 = vmul.f32 %v911, %v910
        %v916 = vadd.f32 %v900, %v912
        %v917 = vadd.f32 %v901, %v913
        %v918 = vadd.f32 %v902, %v914
        %v919 = vadd.f32 %v903, %v915
        %s920 = sadd.s32 %s441, 30
        %s921 = sld [smem:[#allocation3 + %s920]]
        %s922 = scalar_lea.vmem %s1, 960
        %v923 = vld [vmem:[%s922] sm:$0xff]
        %v924 = vld [vmem:[%s922 + $0x8] sm:$0xff]
        %v925 = vld [vmem:[%s922 + $0x10] sm:$0xff]
        %v926 = vld [vmem:[%s922 + $0x18] sm:$0xff]
        %v927 = vstv %s921
        %v928 = vmul.f32 %v927, %v923
        %v929 = vmul.f32 %v927, %v924
        %v930 = vmul.f32 %v927, %v925
        %v931 = vmul.f32 %v927, %v926
        %v932 = vadd.f32 %v916, %v928
        %v933 = vadd.f32 %v917, %v929
        %v934 = vadd.f32 %v918, %v930
        %v935 = vadd.f32 %v919, %v931
        %s936 = sadd.s32 %s441, 31
        %s937 = sld [smem:[#allocation3 + %s936]]
        %s938 = scalar_lea.vmem %s1, 992
        %v939 = vld [vmem:[%s938] sm:$0xff]
        %v940 = vld [vmem:[%s938 + $0x8] sm:$0xff]
        %v941 = vld [vmem:[%s938 + $0x10] sm:$0xff]
        %v942 = vld [vmem:[%s938 + $0x18] sm:$0xff]
        %v943 = vstv %s937
        %v944 = vmul.f32 %v943, %v939
        %v945 = vmul.f32 %v943, %v940
        %v946 = vmul.f32 %v943, %v941
        %v947 = vmul.f32 %v943, %v942
        %v948 = vadd.f32 %v932, %v944
        %v949 = vadd.f32 %v933, %v945
        %v950 = vadd.f32 %v934, %v946
        %v951 = vadd.f32 %v935, %v947
        %v952 = vld [vmem:[%s5] sm:$0xff]
        %v953 = vld [vmem:[%s5 + $0x8] sm:$0xff]
        %v954 = vld [vmem:[%s5 + $0x10] sm:$0xff]
        %v955 = vld [vmem:[%s5 + $0x18] sm:$0xff]
        %v956 = vld [vmem:[%s5 + $0x20] sm:$0xff]
        %v957 = vld [vmem:[%s5 + $0x28] sm:$0xff]
        %v958 = vld [vmem:[%s5 + $0x30] sm:$0xff]
        %v959 = vld [vmem:[%s5 + $0x38] sm:$0xff]
        %v960 = vld [vmem:[%s5 + $0x40] sm:$0xff]
        %v961 = vld [vmem:[%s5 + $0x48] sm:$0xff]
        %v962 = vld [vmem:[%s5 + $0x50] sm:$0x1]
        %vm963 = vcmask 662528
        %v965 = vsel %vm963, %v948, 0
        %v968 = vsel %vm963, %v949, 0
        %v971 = vsel %vm963, %v950, 0
        %v974 = vsel %vm963, %v951, 0
        %vm976 = vcmask 1040384
        %v978 = vsel %vm976, %v962, 0
        %980 = vmatprep.subr.mxu0 0.0
        %981 = vmatpush1.msra.mxu0 %v952
        %982 = vmatprep.subr.mxu0 0.0
        %983 = vmatpush1.msra.mxu0 %v953
        %984 = vmatprep.subr.mxu0 0.0
        %985 = vmatpush1.msra.mxu0 %v954
        %986 = vmatprep.subr.mxu0 0.0
        %987 = vmatpush1.msra.mxu0 %v955
        %988 = vmatprep.subr.mxu0 0.0
        %989 = vmatpush1.msra.mxu0 %v956
        %990 = vmatprep.subr.mxu0 0.0
        %991 = vmatpush1.msra.mxu0 %v957
        %992 = vmatprep.subr.mxu0 0.0
        %993 = vmatpush1.msra.mxu0 %v958
        %994 = vmatprep.subr.mxu0 0.0
        %995 = vmatpush1.msra.mxu0 %v959
        %996 = vmatprep.subr.mxu0 0.0
        %997 = vmatpush1.msra.mxu0 %v960
        %998 = vmatprep.subr.mxu0 0.0
        %999 = vmatpush1.msra.mxu0 %v961
        %1000 = vmatprep.subr.mxu0 0.0
        %1001 = vmatpush1.msra.mxu0 %v978
        %1002 = vmatprep.subr.mxu0 0.0
        %1003 = vmatpush1.msra.mxu0 0.0
        %1004 = vmatprep.subr.mxu0 0.0
        %1005 = vmatpush1.msra.mxu0 0.0
        %1006 = vmatprep.subr.mxu0 0.0
        %1007 = vmatpush1.msra.mxu0 0.0
        %1008 = vmatprep.subr.mxu0 0.0
        %1009 = vmatpush1.msra.mxu0 0.0
        %1010 = vmatprep.subr.mxu0 0.0
        %1011 = vmatpush1.msra.mxu0 0.0
        %1012 = vmatprep.subr.mxu0 0.0
        %1013 = vmatpush1.msra.mxu0 0.0
        %1014 = vmatprep.subr.mxu0 0.0
        %1015 = vmatpush1.msra.mxu0 0.0
        %1016 = vmatprep.subr.mxu0 0.0
        %1017 = vmatpush1.msra.mxu0 0.0
        %1018 = vmatprep.subr.mxu0 0.0
        %1019 = vmatpush1.msra.mxu0 0.0
        %1020 = vmatprep.subr.mxu0 0.0
        %1021 = vmatpush1.msra.mxu0 0.0
        %1022 = vmatprep.subr.mxu0 0.0
        %1023 = vmatpush1.msra.mxu0 0.0
        %1024 = vmatprep.subr.mxu0 0.0
        %1025 = vmatpush1.msra.mxu0 0.0
        %1026 = vmatprep.subr.mxu0 0.0
        %1027 = vmatpush1.msra.mxu0 0.0
        %1028 = vmatprep.subr.mxu0 0.0
        %1029 = vmatpush1.msra.mxu0 0.0
        %1030 = vmatprep.subr.mxu0 0.0
        %1031 = vmatpush1.msra.mxu0 0.0
        %1032 = vmatprep.subr.mxu0 0.0
        %1033 = vmatpush1.msra.mxu0 0.0
        %1034 = vmatprep.subr.mxu0 0.0
        %1035 = vmatpush1.msra.mxu0 0.0
        %1036 = vmatprep.subr.mxu0 0.0
        %1037 = vmatpush1.msra.mxu0 0.0
        %1038 = vmatprep.subr.mxu0 0.0
        %1039 = vmatpush1.msra.mxu0 0.0
        %1040 = vmatprep.subr.mxu0 0.0
        %1041 = vmatpush1.msra.mxu0 0.0
        %1042 = vmatprep.subr.mxu0 0.0
        %1043 = vmatpush1.msra.mxu0 0.0
        %1044 = vmatprep.mubr.f32.mxu0 0.0
        %1045 = vmatmul.mubr.f32.gmra.mrb[0].mxu0 %v965
        %v1046 = vpop.f32.mrb[0].mxu0
        %v1047 = vadd.f32 0.0, %v1046
        %v1048 = vpop.f32.mrb[0].mxu0
        %1049 = vmatprep.mubr.f32.mxu0 0.0
        %1050 = vmatmul.mubr.f32.gmra.mrb[0].mxu0 %v968
        %v1051 = vpop.f32.mrb[0].mxu0
        %v1052 = vadd.f32 0.0, %v1051
        %v1053 = vpop.f32.mrb[0].mxu0
        %1054 = vmatprep.mubr.f32.mxu0 0.0
        %1055 = vmatmul.mubr.f32.gmra.mrb[0].mxu0 %v971
        %v1056 = vpop.f32.mrb[0].mxu0
        %v1057 = vadd.f32 0.0, %v1056
        %v1058 = vpop.f32.mrb[0].mxu0
        %1059 = vmatprep.mubr.f32.mxu0 0.0
        %1060 = vmatmul.mubr.f32.gmra.mrb[0].mxu0 %v974
        %v1061 = vpop.f32.mrb[0].mxu0
        %v1062 = vadd.f32 0.0, %v1061
        %v1063 = vpop.f32.mrb[0].mxu0
        %1064 = vdwg.mxu0
        %v1065 = vld [vmem:[%s3] sm:$0xff]
        %v1066 = vld [vmem:[%s3 + $0x8] sm:$0xff]
        %v1067 = vld [vmem:[%s3 + $0x10] sm:$0xff]
        %v1068 = vld [vmem:[%s3 + $0x18] sm:$0xff]
        %s1069 = scalar_lea.vmem %s5, 88
        %v1070 = vld [vmem:[%s1069] sm:$0xff]
        %v1071 = vld [vmem:[%s1069 + $0x8] sm:$0xff]
        %v1072 = vld [vmem:[%s1069 + $0x10] sm:$0xff]
        %v1073 = vld [vmem:[%s1069 + $0x18] sm:$0xff]
        %v1074 = vld [vmem:[%s1069 + $0x20] sm:$0xff]
        %v1075 = vld [vmem:[%s1069 + $0x28] sm:$0xff]
        %v1076 = vld [vmem:[%s1069 + $0x30] sm:$0xff]
        %v1077 = vld [vmem:[%s1069 + $0x38] sm:$0xff]
        %v1078 = vld [vmem:[%s1069 + $0x40] sm:$0xff]
        %v1079 = vld [vmem:[%s1069 + $0x48] sm:$0xff]
        %v1080 = vld [vmem:[%s1069 + $0x50] sm:$0x1]
        %v1082 = vsel %vm976, %v1080, 0
        %1084 = vmatprep.subr.mxu0 0.0
        %1085 = vmatpush1.msra.mxu0 %v1070
        %1086 = vmatprep.subr.mxu0 0.0
        %1087 = vmatpush1.msra.mxu0 %v1071
        %1088 = vmatprep.subr.mxu0 0.0
        %1089 = vmatpush1.msra.mxu0 %v1072
        %1090 = vmatprep.subr.mxu0 0.0
        %1091 = vmatpush1.msra.mxu0 %v1073
        %1092 = vmatprep.subr.mxu0 0.0
        %1093 = vmatpush1.msra.mxu0 %v1074
        %1094 = vmatprep.subr.mxu0 0.0
        %1095 = vmatpush1.msra.mxu0 %v1075
        %1096 = vmatprep.subr.mxu0 0.0
        %1097 = vmatpush1.msra.mxu0 %v1076
        %1098 = vmatprep.subr.mxu0 0.0
        %1099 = vmatpush1.msra.mxu0 %v1077
        %1100 = vmatprep.subr.mxu0 0.0
        %1101 = vmatpush1.msra.mxu0 %v1078
        %1102 = vmatprep.subr.mxu0 0.0
        %1103 = vmatpush1.msra.mxu0 %v1079
        %1104 = vmatprep.subr.mxu0 0.0
        %1105 = vmatpush1.msra.mxu0 %v1082
        %1106 = vmatprep.subr.mxu0 0.0
        %1107 = vmatpush1.msra.mxu0 0.0
        %1108 = vmatprep.subr.mxu0 0.0
        %1109 = vmatpush1.msra.mxu0 0.0
        %1110 = vmatprep.subr.mxu0 0.0
        %1111 = vmatpush1.msra.mxu0 0.0
        %1112 = vmatprep.subr.mxu0 0.0
        %1113 = vmatpush1.msra.mxu0 0.0
        %1114 = vmatprep.subr.mxu0 0.0
        %1115 = vmatpush1.msra.mxu0 0.0
        %1116 = vmatprep.subr.mxu0 0.0
        %1117 = vmatpush1.msra.mxu0 0.0
        %1118 = vmatprep.subr.mxu0 0.0
        %1119 = vmatpush1.msra.mxu0 0.0
        %1120 = vmatprep.subr.mxu0 0.0
        %1121 = vmatpush1.msra.mxu0 0.0
        %1122 = vmatprep.subr.mxu0 0.0
        %1123 = vmatpush1.msra.mxu0 0.0
        %1124 = vmatprep.subr.mxu0 0.0
        %1125 = vmatpush1.msra.mxu0 0.0
        %1126 = vmatprep.subr.mxu0 0.0
        %1127 = vmatpush1.msra.mxu0 0.0
        %1128 = vmatprep.subr.mxu0 0.0
        %1129 = vmatpush1.msra.mxu0 0.0
        %1130 = vmatprep.subr.mxu0 0.0
        %1131 = vmatpush1.msra.mxu0 0.0
        %1132 = vmatprep.subr.mxu0 0.0
        %1133 = vmatpush1.msra.mxu0 0.0
        %1134 = vmatprep.subr.mxu0 0.0
        %1135 = vmatpush1.msra.mxu0 0.0
        %1136 = vmatprep.subr.mxu0 0.0
        %1137 = vmatpush1.msra.mxu0 0.0
        %1138 = vmatprep.subr.mxu0 0.0
        %1139 = vmatpush1.msra.mxu0 0.0
        %1140 = vmatprep.subr.mxu0 0.0
        %1141 = vmatpush1.msra.mxu0 0.0
        %1142 = vmatprep.subr.mxu0 0.0
        %1143 = vmatpush1.msra.mxu0 0.0
        %1144 = vmatprep.subr.mxu0 0.0
        %1145 = vmatpush1.msra.mxu0 0.0
        %1146 = vmatprep.subr.mxu0 0.0
        %1147 = vmatpush1.msra.mxu0 0.0
        %1148 = vmatprep.mubr.f32.mxu0 0.0
        %1149 = vmatmul.mubr.f32.gmra.mrb[0].mxu0 %v965
        %v1150 = vpop.f32.mrb[0].mxu0
        %v1151 = vadd.f32 0.0, %v1150
        %v1152 = vpop.f32.mrb[0].mxu0
        %1153 = vmatprep.mubr.f32.mxu0 0.0
        %1154 = vmatmul.mubr.f32.gmra.mrb[0].mxu0 %v968
        %v1155 = vpop.f32.mrb[0].mxu0
        %v1156 = vadd.f32 0.0, %v1155
        %v1157 = vpop.f32.mrb[0].mxu0
        %1158 = vmatprep.mubr.f32.mxu0 0.0
        %1159 = vmatmul.mubr.f32.gmra.mrb[0].mxu0 %v971
        %v1160 = vpop.f32.mrb[0].mxu0
        %v1161 = vadd.f32 0.0, %v1160
        %v1162 = vpop.f32.mrb[0].mxu0
        %1163 = vmatprep.mubr.f32.mxu0 0.0
        %1164 = vmatmul.mubr.f32.gmra.mrb[0].mxu0 %v974
        %v1165 = vpop.f32.mrb[0].mxu0
        %v1166 = vadd.f32 0.0, %v1165
        %v1167 = vpop.f32.mrb[0].mxu0
        %1168 = vdwg.mxu0
        %s1169 = scalar_lea.vmem %s3, 32
        %v1170 = vld [vmem:[%s1169] sm:$0xff]
        %v1171 = vld [vmem:[%s1169 + $0x8] sm:$0xff]
        %v1172 = vld [vmem:[%s1169 + $0x10] sm:$0xff]
        %v1173 = vld [vmem:[%s1169 + $0x18] sm:$0xff]
        %vm1174 = vcmask 261120
        %v1176 = vsel %vm1174, %v1170, 0
        %v1179 = vsel %vm1174, %v1171, 0
        %v1182 = vsel %vm1174, %v1172, 0
        %v1185 = vsel %vm1174, %v1173, 0
        %1187 = vmatprep.subr.mxu0 0.0
        %1188 = vmatpush1.msra.mxu0 %v1151
        %1189 = vmatprep.subr.mxu0 0.0
        %1190 = vmatpush1.msra.mxu0 %v1156
        %1191 = vmatprep.subr.mxu0 0.0
        %1192 = vmatpush1.msra.mxu0 %v1161
        %1193 = vmatprep.subr.mxu0 0.0
        %1194 = vmatpush1.msra.mxu0 %v1166
        %1195 = vmatprep.subr.mxu0 0.0
        %1196 = vmatpush1.msra.mxu0 0.0
        %1197 = vmatprep.subr.mxu0 0.0
        %1198 = vmatpush1.msra.mxu0 0.0
        %1199 = vmatprep.subr.mxu0 0.0
        %1200 = vmatpush1.msra.mxu0 0.0
        %1201 = vmatprep.subr.mxu0 0.0
        %1202 = vmatpush1.msra.mxu0 0.0
        %1203 = vmatprep.subr.mxu0 0.0
        %1204 = vmatpush1.msra.mxu0 0.0
        %1205 = vmatprep.subr.mxu0 0.0
        %1206 = vmatpush1.msra.mxu0 0.0
        %1207 = vmatprep.subr.mxu0 0.0
        %1208 = vmatpush1.msra.mxu0 0.0
        %1209 = vmatprep.subr.mxu0 0.0
        %1210 = vmatpush1.msra.mxu0 0.0
        %1211 = vmatprep.subr.mxu0 0.0
        %1212 = vmatpush1.msra.mxu0 0.0
        %1213 = vmatprep.subr.mxu0 0.0
        %1214 = vmatpush1.msra.mxu0 0.0
        %1215 = vmatprep.subr.mxu0 0.0
        %1216 = vmatpush1.msra.mxu0 0.0
        %1217 = vmatprep.subr.mxu0 0.0
        %1218 = vmatpush1.msra.mxu0 0.0
        %1219 = vmatprep.subr.mxu0 0.0
        %1220 = vmatpush1.msra.mxu0 0.0
        %1221 = vmatprep.subr.mxu0 0.0
        %1222 = vmatpush1.msra.mxu0 0.0
        %1223 = vmatprep.subr.mxu0 0.0
        %1224 = vmatpush1.msra.mxu0 0.0
        %1225 = vmatprep.subr.mxu0 0.0
        %1226 = vmatpush1.msra.mxu0 0.0
        %1227 = vmatprep.subr.mxu0 0.0
        %1228 = vmatpush1.msra.mxu0 0.0
        %1229 = vmatprep.subr.mxu0 0.0
        %1230 = vmatpush1.msra.mxu0 0.0
        %1231 = vmatprep.subr.mxu0 0.0
        %1232 = vmatpush1.msra.mxu0 0.0
        %1233 = vmatprep.subr.mxu0 0.0
        %1234 = vmatpush1.msra.mxu0 0.0
        %1235 = vmatprep.subr.mxu0 0.0
        %1236 = vmatpush1.msra.mxu0 0.0
        %1237 = vmatprep.subr.mxu0 0.0
        %1238 = vmatpush1.msra.mxu0 0.0
        %1239 = vmatprep.subr.mxu0 0.0
        %1240 = vmatpush1.msra.mxu0 0.0
        %1241 = vmatprep.subr.mxu0 0.0
        %1242 = vmatpush1.msra.mxu0 0.0
        %1243 = vmatprep.subr.mxu0 0.0
        %1244 = vmatpush1.msra.mxu0 0.0
        %1245 = vmatprep.subr.mxu0 0.0
        %1246 = vmatpush1.msra.mxu0 0.0
        %1247 = vmatprep.subr.mxu0 0.0
        %1248 = vmatpush1.msra.mxu0 0.0
        %1249 = vmatprep.subr.mxu0 0.0
        %1250 = vmatpush1.msra.mxu0 0.0
        %1251 = vmatprep.mubr.f32.mxu0 0.0
        %1252 = vmatmul.mubr.f32.gmra.mrb[0].mxu0 %v1176
        %v1253 = vpop.f32.mrb[0].mxu0
        %v1254 = vadd.f32 0.0, %v1253
        %v1255 = vpop.f32.mrb[0].mxu0
        %1256 = vmatprep.mubr.f32.mxu0 0.0
        %1257 = vmatmul.mubr.f32.gmra.mrb[0].mxu0 %v1179
        %v1258 = vpop.f32.mrb[0].mxu0
        %v1259 = vadd.f32 0.0, %v1258
        %v1260 = vpop.f32.mrb[0].mxu0
        %1261 = vmatprep.mubr.f32.mxu0 0.0
        %1262 = vmatmul.mubr.f32.gmra.mrb[0].mxu0 %v1182
        %v1263 = vpop.f32.mrb[0].mxu0
        %v1264 = vadd.f32 0.0, %v1263
        %v1265 = vpop.f32.mrb[0].mxu0
        %1266 = vmatprep.mubr.f32.mxu0 0.0
        %1267 = vmatmul.mubr.f32.gmra.mrb[0].mxu0 %v1185
        %v1268 = vpop.f32.mrb[0].mxu0
        %v1269 = vadd.f32 0.0, %v1268
        %v1270 = vpop.f32.mrb[0].mxu0
        %1271 = vdwg.mxu0
        %v1273 = vsel %vm1174, %v1065, 0
        %v1276 = vsel %vm1174, %v1066, 0
        %v1279 = vsel %vm1174, %v1067, 0
        %v1282 = vsel %vm1174, %v1068, 0
        %1284 = vmatprep.subr.mxu0 0.0
        %1285 = vmatpush1.msra.mxu0 %v1047
        %1286 = vmatprep.subr.mxu0 0.0
        %1287 = vmatpush1.msra.mxu0 %v1052
        %1288 = vmatprep.subr.mxu0 0.0
        %1289 = vmatpush1.msra.mxu0 %v1057
        %1290 = vmatprep.subr.mxu0 0.0
        %1291 = vmatpush1.msra.mxu0 %v1062
        %1292 = vmatprep.subr.mxu0 0.0
        %1293 = vmatpush1.msra.mxu0 0.0
        %1294 = vmatprep.subr.mxu0 0.0
        %1295 = vmatpush1.msra.mxu0 0.0
        %1296 = vmatprep.subr.mxu0 0.0
        %1297 = vmatpush1.msra.mxu0 0.0
        %1298 = vmatprep.subr.mxu0 0.0
        %1299 = vmatpush1.msra.mxu0 0.0
        %1300 = vmatprep.subr.mxu0 0.0
        %1301 = vmatpush1.msra.mxu0 0.0
        %1302 = vmatprep.subr.mxu0 0.0
        %1303 = vmatpush1.msra.mxu0 0.0
        %1304 = vmatprep.subr.mxu0 0.0
        %1305 = vmatpush1.msra.mxu0 0.0
        %1306 = vmatprep.subr.mxu0 0.0
        %1307 = vmatpush1.msra.mxu0 0.0
        %1308 = vmatprep.subr.mxu0 0.0
        %1309 = vmatpush1.msra.mxu0 0.0
        %1310 = vmatprep.subr.mxu0 0.0
        %1311 = vmatpush1.msra.mxu0 0.0
        %1312 = vmatprep.subr.mxu0 0.0
        %1313 = vmatpush1.msra.mxu0 0.0
        %1314 = vmatprep.subr.mxu0 0.0
        %1315 = vmatpush1.msra.mxu0 0.0
        %1316 = vmatprep.subr.mxu0 0.0
        %1317 = vmatpush1.msra.mxu0 0.0
        %1318 = vmatprep.subr.mxu0 0.0
        %1319 = vmatpush1.msra.mxu0 0.0
        %1320 = vmatprep.subr.mxu0 0.0
        %1321 = vmatpush1.msra.mxu0 0.0
        %1322 = vmatprep.subr.mxu0 0.0
        %1323 = vmatpush1.msra.mxu0 0.0
        %1324 = vmatprep.subr.mxu0 0.0
        %1325 = vmatpush1.msra.mxu0 0.0
        %1326 = vmatprep.subr.mxu0 0.0
        %1327 = vmatpush1.msra.mxu0 0.0
        %1328 = vmatprep.subr.mxu0 0.0
        %1329 = vmatpush1.msra.mxu0 0.0
        %1330 = vmatprep.subr.mxu0 0.0
        %1331 = vmatpush1.msra.mxu0 0.0
        %1332 = vmatprep.subr.mxu0 0.0
        %1333 = vmatpush1.msra.mxu0 0.0
        %1334 = vmatprep.subr.mxu0 0.0
        %1335 = vmatpush1.msra.mxu0 0.0
        %1336 = vmatprep.subr.mxu0 0.0
        %1337 = vmatpush1.msra.mxu0 0.0
        %1338 = vmatprep.subr.mxu0 0.0
        %1339 = vmatpush1.msra.mxu0 0.0
        %1340 = vmatprep.subr.mxu0 0.0
        %1341 = vmatpush1.msra.mxu0 0.0
        %1342 = vmatprep.subr.mxu0 0.0
        %1343 = vmatpush1.msra.mxu0 0.0
        %1344 = vmatprep.subr.mxu0 0.0
        %1345 = vmatpush1.msra.mxu0 0.0
        %1346 = vmatprep.subr.mxu0 0.0
        %1347 = vmatpush1.msra.mxu0 0.0
        %1348 = vmatprep.mubr.f32.mxu0 0.0
        %1349 = vmatmul.mubr.f32.gmra.mrb[0].mxu0 %v1273
        %v1350 = vpop.f32.mrb[0].mxu0
        %v1351 = vadd.f32 %v1254, %v1350
        %v1352 = vpop.f32.mrb[0].mxu0
        %1353 = vmatprep.mubr.f32.mxu0 0.0
        %1354 = vmatmul.mubr.f32.gmra.mrb[0].mxu0 %v1276
        %v1355 = vpop.f32.mrb[0].mxu0
        %v1356 = vadd.f32 %v1259, %v1355
        %v1357 = vpop.f32.mrb[0].mxu0
        %1358 = vmatprep.mubr.f32.mxu0 0.0
        %1359 = vmatmul.mubr.f32.gmra.mrb[0].mxu0 %v1279
        %v1360 = vpop.f32.mrb[0].mxu0
        %v1361 = vadd.f32 %v1264, %v1360
        %v1362 = vpop.f32.mrb[0].mxu0
        %1363 = vmatprep.mubr.f32.mxu0 0.0
        %1364 = vmatmul.mubr.f32.gmra.mrb[0].mxu0 %v1282
        %v1365 = vpop.f32.mrb[0].mxu0
        %v1366 = vadd.f32 %v1269, %v1365
        %v1367 = vpop.f32.mrb[0].mxu0
        %1368 = vdwg.mxu0
        %s1369 = scalar_lea.vmem %s5, 176
        %v1370 = vld [vmem:[%s1369] sm:$0xff]
        %v1371 = vld [vmem:[%s1369 + $0x8] sm:$0xff]
        %v1372 = vld [vmem:[%s1369 + $0x10] sm:$0xff]
        %v1373 = vld [vmem:[%s1369 + $0x18] sm:$0xff]
        %v1374 = vld [vmem:[%s1369 + $0x20] sm:$0xff]
        %v1375 = vld [vmem:[%s1369 + $0x28] sm:$0xff]
        %v1376 = vld [vmem:[%s1369 + $0x30] sm:$0xff]
        %v1377 = vld [vmem:[%s1369 + $0x38] sm:$0xff]
        %v1378 = vld [vmem:[%s1369 + $0x40] sm:$0xff]
        %v1379 = vld [vmem:[%s1369 + $0x48] sm:$0xff]
        %v1380 = vld [vmem:[%s1369 + $0x50] sm:$0x1]
        %v1382 = vsel %vm976, %v1380, 0
        %1384 = vmatprep.subr.mxu0 0.0
        %1385 = vmatpush1.msra.mxu0 %v1370
        %1386 = vmatprep.subr.mxu0 0.0
        %1387 = vmatpush1.msra.mxu0 %v1371
        %1388 = vmatprep.subr.mxu0 0.0
        %1389 = vmatpush1.msra.mxu0 %v1372
        %1390 = vmatprep.subr.mxu0 0.0
        %1391 = vmatpush1.msra.mxu0 %v1373
        %1392 = vmatprep.subr.mxu0 0.0
        %1393 = vmatpush1.msra.mxu0 %v1374
        %1394 = vmatprep.subr.mxu0 0.0
        %1395 = vmatpush1.msra.mxu0 %v1375
        %1396 = vmatprep.subr.mxu0 0.0
        %1397 = vmatpush1.msra.mxu0 %v1376
        %1398 = vmatprep.subr.mxu0 0.0
        %1399 = vmatpush1.msra.mxu0 %v1377
        %1400 = vmatprep.subr.mxu0 0.0
        %1401 = vmatpush1.msra.mxu0 %v1378
        %1402 = vmatprep.subr.mxu0 0.0
        %1403 = vmatpush1.msra.mxu0 %v1379
        %1404 = vmatprep.subr.mxu0 0.0
        %1405 = vmatpush1.msra.mxu0 %v1382
        %1406 = vmatprep.subr.mxu0 0.0
        %1407 = vmatpush1.msra.mxu0 0.0
        %1408 = vmatprep.subr.mxu0 0.0
        %1409 = vmatpush1.msra.mxu0 0.0
        %1410 = vmatprep.subr.mxu0 0.0
        %1411 = vmatpush1.msra.mxu0 0.0
        %1412 = vmatprep.subr.mxu0 0.0
        %1413 = vmatpush1.msra.mxu0 0.0
        %1414 = vmatprep.subr.mxu0 0.0
        %1415 = vmatpush1.msra.mxu0 0.0
        %1416 = vmatprep.subr.mxu0 0.0
        %1417 = vmatpush1.msra.mxu0 0.0
        %1418 = vmatprep.subr.mxu0 0.0
        %1419 = vmatpush1.msra.mxu0 0.0
        %1420 = vmatprep.subr.mxu0 0.0
        %1421 = vmatpush1.msra.mxu0 0.0
        %1422 = vmatprep.subr.mxu0 0.0
        %1423 = vmatpush1.msra.mxu0 0.0
        %1424 = vmatprep.subr.mxu0 0.0
        %1425 = vmatpush1.msra.mxu0 0.0
        %1426 = vmatprep.subr.mxu0 0.0
        %1427 = vmatpush1.msra.mxu0 0.0
        %1428 = vmatprep.subr.mxu0 0.0
        %1429 = vmatpush1.msra.mxu0 0.0
        %1430 = vmatprep.subr.mxu0 0.0
        %1431 = vmatpush1.msra.mxu0 0.0
        %1432 = vmatprep.subr.mxu0 0.0
        %1433 = vmatpush1.msra.mxu0 0.0
        %1434 = vmatprep.subr.mxu0 0.0
        %1435 = vmatpush1.msra.mxu0 0.0
        %1436 = vmatprep.subr.mxu0 0.0
        %1437 = vmatpush1.msra.mxu0 0.0
        %1438 = vmatprep.subr.mxu0 0.0
        %1439 = vmatpush1.msra.mxu0 0.0
        %1440 = vmatprep.subr.mxu0 0.0
        %1441 = vmatpush1.msra.mxu0 0.0
        %1442 = vmatprep.subr.mxu0 0.0
        %1443 = vmatpush1.msra.mxu0 0.0
        %1444 = vmatprep.subr.mxu0 0.0
        %1445 = vmatpush1.msra.mxu0 0.0
        %1446 = vmatprep.subr.mxu0 0.0
        %1447 = vmatpush1.msra.mxu0 0.0
        %1448 = vmatprep.mubr.f32.mxu0 0.0
        %1449 = vmatmul.mubr.f32.gmra.mrb[0].mxu0 %v965
        %v1450 = vpop.f32.mrb[0].mxu0
        %v1451 = vadd.f32 0.0, %v1450
        %v1452 = vpop.f32.mrb[0].mxu0
        %1453 = vmatprep.mubr.f32.mxu0 0.0
        %1454 = vmatmul.mubr.f32.gmra.mrb[0].mxu0 %v968
        %v1455 = vpop.f32.mrb[0].mxu0
        %v1456 = vadd.f32 0.0, %v1455
        %v1457 = vpop.f32.mrb[0].mxu0
        %1458 = vmatprep.mubr.f32.mxu0 0.0
        %1459 = vmatmul.mubr.f32.gmra.mrb[0].mxu0 %v971
        %v1460 = vpop.f32.mrb[0].mxu0
        %v1461 = vadd.f32 0.0, %v1460
        %v1462 = vpop.f32.mrb[0].mxu0
        %1463 = vmatprep.mubr.f32.mxu0 0.0
        %1464 = vmatmul.mubr.f32.gmra.mrb[0].mxu0 %v974
        %v1465 = vpop.f32.mrb[0].mxu0
        %v1466 = vadd.f32 0.0, %v1465
        %v1467 = vpop.f32.mrb[0].mxu0
        %1468 = vdwg.mxu0
        %s1469 = scalar_lea.vmem %s3, 64
        %v1470 = vld [vmem:[%s1469] sm:$0xff]
        %v1471 = vld [vmem:[%s1469 + $0x8] sm:$0xff]
        %v1472 = vld [vmem:[%s1469 + $0x10] sm:$0xff]
        %v1473 = vld [vmem:[%s1469 + $0x18] sm:$0xff]
        %v1475 = vsel %vm1174, %v1470, 0
        %v1478 = vsel %vm1174, %v1471, 0
        %v1481 = vsel %vm1174, %v1472, 0
        %v1484 = vsel %vm1174, %v1473, 0
        %1486 = vmatprep.subr.mxu0 0.0
        %1487 = vmatpush1.msra.mxu0 %v1451
        %1488 = vmatprep.subr.mxu0 0.0
        %1489 = vmatpush1.msra.mxu0 %v1456
        %1490 = vmatprep.subr.mxu0 0.0
        %1491 = vmatpush1.msra.mxu0 %v1461
        %1492 = vmatprep.subr.mxu0 0.0
        %1493 = vmatpush1.msra.mxu0 %v1466
        %1494 = vmatprep.subr.mxu0 0.0
        %1495 = vmatpush1.msra.mxu0 0.0
        %1496 = vmatprep.subr.mxu0 0.0
        %1497 = vmatpush1.msra.mxu0 0.0
        %1498 = vmatprep.subr.mxu0 0.0
        %1499 = vmatpush1.msra.mxu0 0.0
        %1500 = vmatprep.subr.mxu0 0.0
        %1501 = vmatpush1.msra.mxu0 0.0
        %1502 = vmatprep.subr.mxu0 0.0
        %1503 = vmatpush1.msra.mxu0 0.0
        %1504 = vmatprep.subr.mxu0 0.0
        %1505 = vmatpush1.msra.mxu0 0.0
        %1506 = vmatprep.subr.mxu0 0.0
        %1507 = vmatpush1.msra.mxu0 0.0
        %1508 = vmatprep.subr.mxu0 0.0
        %1509 = vmatpush1.msra.mxu0 0.0
        %1510 = vmatprep.subr.mxu0 0.0
        %1511 = vmatpush1.msra.mxu0 0.0
        %1512 = vmatprep.subr.mxu0 0.0
        %1513 = vmatpush1.msra.mxu0 0.0
        %1514 = vmatprep.subr.mxu0 0.0
        %1515 = vmatpush1.msra.mxu0 0.0
        %1516 = vmatprep.subr.mxu0 0.0
        %1517 = vmatpush1.msra.mxu0 0.0
        %1518 = vmatprep.subr.mxu0 0.0
        %1519 = vmatpush1.msra.mxu0 0.0
        %1520 = vmatprep.subr.mxu0 0.0
        %1521 = vmatpush1.msra.mxu0 0.0
        %1522 = vmatprep.subr.mxu0 0.0
        %1523 = vmatpush1.msra.mxu0 0.0
        %1524 = vmatprep.subr.mxu0 0.0
        %1525 = vmatpush1.msra.mxu0 0.0
        %1526 = vmatprep.subr.mxu0 0.0
        %1527 = vmatpush1.msra.mxu0 0.0
        %1528 = vmatprep.subr.mxu0 0.0
        %1529 = vmatpush1.msra.mxu0 0.0
        %1530 = vmatprep.subr.mxu0 0.0
        %1531 = vmatpush1.msra.mxu0 0.0
        %1532 = vmatprep.subr.mxu0 0.0
        %1533 = vmatpush1.msra.mxu0 0.0
        %1534 = vmatprep.subr.mxu0 0.0
        %1535 = vmatpush1.msra.mxu0 0.0
        %1536 = vmatprep.subr.mxu0 0.0
        %1537 = vmatpush1.msra.mxu0 0.0
        %1538 = vmatprep.subr.mxu0 0.0
        %1539 = vmatpush1.msra.mxu0 0.0
        %1540 = vmatprep.subr.mxu0 0.0
        %1541 = vmatpush1.msra.mxu0 0.0
        %1542 = vmatprep.subr.mxu0 0.0
        %1543 = vmatpush1.msra.mxu0 0.0
        %1544 = vmatprep.subr.mxu0 0.0
        %1545 = vmatpush1.msra.mxu0 0.0
        %1546 = vmatprep.subr.mxu0 0.0
        %1547 = vmatpush1.msra.mxu0 0.0
        %1548 = vmatprep.subr.mxu0 0.0
        %1549 = vmatpush1.msra.mxu0 0.0
        %1550 = vmatprep.mubr.f32.mxu0 0.0
        %1551 = vmatmul.mubr.f32.gmra.mrb[0].mxu0 %v1475
        %v1552 = vpop.f32.mrb[0].mxu0
        %v1553 = vadd.f32 0.0, %v1552
        %v1554 = vpop.f32.mrb[0].mxu0
        %1555 = vmatprep.mubr.f32.mxu0 0.0
        %1556 = vmatmul.mubr.f32.gmra.mrb[0].mxu0 %v1478
        %v1557 = vpop.f32.mrb[0].mxu0
        %v1558 = vadd.f32 0.0, %v1557
        %v1559 = vpop.f32.mrb[0].mxu0
        %1560 = vmatprep.mubr.f32.mxu0 0.0
        %1561 = vmatmul.mubr.f32.gmra.mrb[0].mxu0 %v1481
        %v1562 = vpop.f32.mrb[0].mxu0
        %v1563 = vadd.f32 0.0, %v1562
        %v1564 = vpop.f32.mrb[0].mxu0
        %1565 = vmatprep.mubr.f32.mxu0 0.0
        %1566 = vmatmul.mubr.f32.gmra.mrb[0].mxu0 %v1484
        %v1567 = vpop.f32.mrb[0].mxu0
        %v1568 = vadd.f32 0.0, %v1567
        %v1569 = vpop.f32.mrb[0].mxu0
        %1570 = vdwg.mxu0
        %v1571 = vadd.f32 %v1351, %v1553
        %v1572 = vadd.f32 %v1356, %v1558
        %v1573 = vadd.f32 %v1361, %v1563
        %v1574 = vadd.f32 %v1366, %v1568
        %s1575 = scalar_lea.vmem %s5, 264
        %v1576 = vld [vmem:[%s1575] sm:$0xff]
        %v1577 = vld [vmem:[%s1575 + $0x8] sm:$0xff]
        %v1578 = vld [vmem:[%s1575 + $0x10] sm:$0xff]
        %v1579 = vld [vmem:[%s1575 + $0x18] sm:$0xff]
        %v1580 = vld [vmem:[%s1575 + $0x20] sm:$0xff]
        %v1581 = vld [vmem:[%s1575 + $0x28] sm:$0xff]
        %v1582 = vld [vmem:[%s1575 + $0x30] sm:$0xff]
        %v1583 = vld [vmem:[%s1575 + $0x38] sm:$0xff]
        %v1584 = vld [vmem:[%s1575 + $0x40] sm:$0xff]
        %v1585 = vld [vmem:[%s1575 + $0x48] sm:$0xff]
        %v1586 = vld [vmem:[%s1575 + $0x50] sm:$0x1]
        %v1588 = vsel %vm976, %v1586, 0
        %1590 = vmatprep.subr.mxu0 0.0
        %1591 = vmatpush1.msra.mxu0 %v1576
        %1592 = vmatprep.subr.mxu0 0.0
        %1593 = vmatpush1.msra.mxu0 %v1577
        %1594 = vmatprep.subr.mxu0 0.0
        %1595 = vmatpush1.msra.mxu0 %v1578
        %1596 = vmatprep.subr.mxu0 0.0
        %1597 = vmatpush1.msra.mxu0 %v1579
        %1598 = vmatprep.subr.mxu0 0.0
        %1599 = vmatpush1.msra.mxu0 %v1580
        %1600 = vmatprep.subr.mxu0 0.0
        %1601 = vmatpush1.msra.mxu0 %v1581
        %1602 = vmatprep.subr.mxu0 0.0
        %1603 = vmatpush1.msra.mxu0 %v1582
        %1604 = vmatprep.subr.mxu0 0.0
        %1605 = vmatpush1.msra.mxu0 %v1583
        %1606 = vmatprep.subr.mxu0 0.0
        %1607 = vmatpush1.msra.mxu0 %v1584
        %1608 = vmatprep.subr.mxu0 0.0
        %1609 = vmatpush1.msra.mxu0 %v1585
        %1610 = vmatprep.subr.mxu0 0.0
        %1611 = vmatpush1.msra.mxu0 %v1588
        %1612 = vmatprep.subr.mxu0 0.0
        %1613 = vmatpush1.msra.mxu0 0.0
        %1614 = vmatprep.subr.mxu0 0.0
        %1615 = vmatpush1.msra.mxu0 0.0
        %1616 = vmatprep.subr.mxu0 0.0
        %1617 = vmatpush1.msra.mxu0 0.0
        %1618 = vmatprep.subr.mxu0 0.0
        %1619 = vmatpush1.msra.mxu0 0.0
        %1620 = vmatprep.subr.mxu0 0.0
        %1621 = vmatpush1.msra.mxu0 0.0
        %1622 = vmatprep.subr.mxu0 0.0
        %1623 = vmatpush1.msra.mxu0 0.0
        %1624 = vmatprep.subr.mxu0 0.0
        %1625 = vmatpush1.msra.mxu0 0.0
        %1626 = vmatprep.subr.mxu0 0.0
        %1627 = vmatpush1.msra.mxu0 0.0
        %1628 = vmatprep.subr.mxu0 0.0
        %1629 = vmatpush1.msra.mxu0 0.0
        %1630 = vmatprep.subr.mxu0 0.0
        %1631 = vmatpush1.msra.mxu0 0.0
        %1632 = vmatprep.subr.mxu0 0.0
        %1633 = vmatpush1.msra.mxu0 0.0
        %1634 = vmatprep.subr.mxu0 0.0
        %1635 = vmatpush1.msra.mxu0 0.0
        %1636 = vmatprep.subr.mxu0 0.0
        %1637 = vmatpush1.msra.mxu0 0.0
        %1638 = vmatprep.subr.mxu0 0.0
        %1639 = vmatpush1.msra.mxu0 0.0
        %1640 = vmatprep.subr.mxu0 0.0
        %1641 = vmatpush1.msra.mxu0 0.0
        %1642 = vmatprep.subr.mxu0 0.0
        %1643 = vmatpush1.msra.mxu0 0.0
        %1644 = vmatprep.subr.mxu0 0.0
        %1645 = vmatpush1.msra.mxu0 0.0
        %1646 = vmatprep.subr.mxu0 0.0
        %1647 = vmatpush1.msra.mxu0 0.0
        %1648 = vmatprep.subr.mxu0 0.0
        %1649 = vmatpush1.msra.mxu0 0.0
        %1650 = vmatprep.subr.mxu0 0.0
        %1651 = vmatpush1.msra.mxu0 0.0
        %1652 = vmatprep.subr.mxu0 0.0
        %1653 = vmatpush1.msra.mxu0 0.0
        %1654 = vmatprep.mubr.f32.mxu0 0.0
        %1655 = vmatmul.mubr.f32.gmra.mrb[0].mxu0 %v965
        %v1656 = vpop.f32.mrb[0].mxu0
        %v1657 = vadd.f32 0.0, %v1656
        %v1658 = vpop.f32.mrb[0].mxu0
        %1659 = vmatprep.mubr.f32.mxu0 0.0
        %1660 = vmatmul.mubr.f32.gmra.mrb[0].mxu0 %v968
        %v1661 = vpop.f32.mrb[0].mxu0
        %v1662 = vadd.f32 0.0, %v1661
        %v1663 = vpop.f32.mrb[0].mxu0
        %1664 = vmatprep.mubr.f32.mxu0 0.0
        %1665 = vmatmul.mubr.f32.gmra.mrb[0].mxu0 %v971
        %v1666 = vpop.f32.mrb[0].mxu0
        %v1667 = vadd.f32 0.0, %v1666
        %v1668 = vpop.f32.mrb[0].mxu0
        %1669 = vmatprep.mubr.f32.mxu0 0.0
        %1670 = vmatmul.mubr.f32.gmra.mrb[0].mxu0 %v974
        %v1671 = vpop.f32.mrb[0].mxu0
        %v1672 = vadd.f32 0.0, %v1671
        %v1673 = vpop.f32.mrb[0].mxu0
        %1674 = vdwg.mxu0
        %s1675 = scalar_lea.vmem %s3, 96
        %v1676 = vld [vmem:[%s1675] sm:$0xff]
        %v1677 = vld [vmem:[%s1675 + $0x8] sm:$0xff]
        %v1678 = vld [vmem:[%s1675 + $0x10] sm:$0xff]
        %v1679 = vld [vmem:[%s1675 + $0x18] sm:$0xff]
        %v1681 = vsel %vm1174, %v1676, 0
        %v1684 = vsel %vm1174, %v1677, 0
        %v1687 = vsel %vm1174, %v1678, 0
        %v1690 = vsel %vm1174, %v1679, 0
        %1692 = vmatprep.subr.mxu0 0.0
        %1693 = vmatpush1.msra.mxu0 %v1657
        %1694 = vmatprep.subr.mxu0 0.0
        %1695 = vmatpush1.msra.mxu0 %v1662
        %1696 = vmatprep.subr.mxu0 0.0
        %1697 = vmatpush1.msra.mxu0 %v1667
        %1698 = vmatprep.subr.mxu0 0.0
        %1699 = vmatpush1.msra.mxu0 %v1672
        %1700 = vmatprep.subr.mxu0 0.0
        %1701 = vmatpush1.msra.mxu0 0.0
        %1702 = vmatprep.subr.mxu0 0.0
        %1703 = vmatpush1.msra.mxu0 0.0
        %1704 = vmatprep.subr.mxu0 0.0
        %1705 = vmatpush1.msra.mxu0 0.0
        %1706 = vmatprep.subr.mxu0 0.0
        %1707 = vmatpush1.msra.mxu0 0.0
        %1708 = vmatprep.subr.mxu0 0.0
        %1709 = vmatpush1.msra.mxu0 0.0
        %1710 = vmatprep.subr.mxu0 0.0
        %1711 = vmatpush1.msra.mxu0 0.0
        %1712 = vmatprep.subr.mxu0 0.0
        %1713 = vmatpush1.msra.mxu0 0.0
        %1714 = vmatprep.subr.mxu0 0.0
        %1715 = vmatpush1.msra.mxu0 0.0
        %1716 = vmatprep.subr.mxu0 0.0
        %1717 = vmatpush1.msra.mxu0 0.0
        %1718 = vmatprep.subr.mxu0 0.0
        %1719 = vmatpush1.msra.mxu0 0.0
        %1720 = vmatprep.subr.mxu0 0.0
        %1721 = vmatpush1.msra.mxu0 0.0
        %1722 = vmatprep.subr.mxu0 0.0
        %1723 = vmatpush1.msra.mxu0 0.0
        %1724 = vmatprep.subr.mxu0 0.0
        %1725 = vmatpush1.msra.mxu0 0.0
        %1726 = vmatprep.subr.mxu0 0.0
        %1727 = vmatpush1.msra.mxu0 0.0
        %1728 = vmatprep.subr.mxu0 0.0
        %1729 = vmatpush1.msra.mxu0 0.0
        %1730 = vmatprep.subr.mxu0 0.0
        %1731 = vmatpush1.msra.mxu0 0.0
        %1732 = vmatprep.subr.mxu0 0.0
        %1733 = vmatpush1.msra.mxu0 0.0
        %1734 = vmatprep.subr.mxu0 0.0
        %1735 = vmatpush1.msra.mxu0 0.0
        %1736 = vmatprep.subr.mxu0 0.0
        %1737 = vmatpush1.msra.mxu0 0.0
        %1738 = vmatprep.subr.mxu0 0.0
        %1739 = vmatpush1.msra.mxu0 0.0
        %1740 = vmatprep.subr.mxu0 0.0
        %1741 = vmatpush1.msra.mxu0 0.0
        %1742 = vmatprep.subr.mxu0 0.0
        %1743 = vmatpush1.msra.mxu0 0.0
        %1744 = vmatprep.subr.mxu0 0.0
        %1745 = vmatpush1.msra.mxu0 0.0
        %1746 = vmatprep.subr.mxu0 0.0
        %1747 = vmatpush1.msra.mxu0 0.0
        %1748 = vmatprep.subr.mxu0 0.0
        %1749 = vmatpush1.msra.mxu0 0.0
        %1750 = vmatprep.subr.mxu0 0.0
        %1751 = vmatpush1.msra.mxu0 0.0
        %1752 = vmatprep.subr.mxu0 0.0
        %1753 = vmatpush1.msra.mxu0 0.0
        %1754 = vmatprep.subr.mxu0 0.0
        %1755 = vmatpush1.msra.mxu0 0.0
        %1756 = vmatprep.mubr.f32.mxu0 0.0
        %1757 = vmatmul.mubr.f32.gmra.mrb[0].mxu0 %v1681
        %v1758 = vpop.f32.mrb[0].mxu0
        %v1759 = vadd.f32 0.0, %v1758
        %v1760 = vpop.f32.mrb[0].mxu0
        %1761 = vmatprep.mubr.f32.mxu0 0.0
        %1762 = vmatmul.mubr.f32.gmra.mrb[0].mxu0 %v1684
        %v1763 = vpop.f32.mrb[0].mxu0
        %v1764 = vadd.f32 0.0, %v1763
        %v1765 = vpop.f32.mrb[0].mxu0
        %1766 = vmatprep.mubr.f32.mxu0 0.0
        %1767 = vmatmul.mubr.f32.gmra.mrb[0].mxu0 %v1687
        %v1768 = vpop.f32.mrb[0].mxu0
        %v1769 = vadd.f32 0.0, %v1768
        %v1770 = vpop.f32.mrb[0].mxu0
        %1771 = vmatprep.mubr.f32.mxu0 0.0
        %1772 = vmatmul.mubr.f32.gmra.mrb[0].mxu0 %v1690
        %v1773 = vpop.f32.mrb[0].mxu0
        %v1774 = vadd.f32 0.0, %v1773
        %v1775 = vpop.f32.mrb[0].mxu0
        %1776 = vdwg.mxu0
        %v1777 = vadd.f32 %v1571, %v1759
        %v1778 = vadd.f32 %v1572, %v1764
        %v1779 = vadd.f32 %v1573, %v1769
        %v1780 = vadd.f32 %v1574, %v1774
        %s1781 = scalar_lea.vmem %s5, 352
        %v1782 = vld [vmem:[%s1781] sm:$0xff]
        %v1783 = vld [vmem:[%s1781 + $0x8] sm:$0xff]
        %v1784 = vld [vmem:[%s1781 + $0x10] sm:$0xff]
        %v1785 = vld [vmem:[%s1781 + $0x18] sm:$0xff]
        %v1786 = vld [vmem:[%s1781 + $0x20] sm:$0xff]
        %v1787 = vld [vmem:[%s1781 + $0x28] sm:$0xff]
        %v1788 = vld [vmem:[%s1781 + $0x30] sm:$0xff]
        %v1789 = vld [vmem:[%s1781 + $0x38] sm:$0xff]
        %v1790 = vld [vmem:[%s1781 + $0x40] sm:$0xff]
        %v1791 = vld [vmem:[%s1781 + $0x48] sm:$0xff]
        %v1792 = vld [vmem:[%s1781 + $0x50] sm:$0x1]
        %v1794 = vsel %vm976, %v1792, 0
        %1796 = vmatprep.subr.mxu0 0.0
        %1797 = vmatpush1.msra.mxu0 %v1782
        %1798 = vmatprep.subr.mxu0 0.0
        %1799 = vmatpush1.msra.mxu0 %v1783
        %1800 = vmatprep.subr.mxu0 0.0
        %1801 = vmatpush1.msra.mxu0 %v1784
        %1802 = vmatprep.subr.mxu0 0.0
        %1803 = vmatpush1.msra.mxu0 %v1785
        %1804 = vmatprep.subr.mxu0 0.0
        %1805 = vmatpush1.msra.mxu0 %v1786
        %1806 = vmatprep.subr.mxu0 0.0
        %1807 = vmatpush1.msra.mxu0 %v1787
        %1808 = vmatprep.subr.mxu0 0.0
        %1809 = vmatpush1.msra.mxu0 %v1788
        %1810 = vmatprep.subr.mxu0 0.0
        %1811 = vmatpush1.msra.mxu0 %v1789
        %1812 = vmatprep.subr.mxu0 0.0
        %1813 = vmatpush1.msra.mxu0 %v1790
        %1814 = vmatprep.subr.mxu0 0.0
        %1815 = vmatpush1.msra.mxu0 %v1791
        %1816 = vmatprep.subr.mxu0 0.0
        %1817 = vmatpush1.msra.mxu0 %v1794
        %1818 = vmatprep.subr.mxu0 0.0
        %1819 = vmatpush1.msra.mxu0 0.0
        %1820 = vmatprep.subr.mxu0 0.0
        %1821 = vmatpush1.msra.mxu0 0.0
        %1822 = vmatprep.subr.mxu0 0.0
        %1823 = vmatpush1.msra.mxu0 0.0
        %1824 = vmatprep.subr.mxu0 0.0
        %1825 = vmatpush1.msra.mxu0 0.0
        %1826 = vmatprep.subr.mxu0 0.0
        %1827 = vmatpush1.msra.mxu0 0.0
        %1828 = vmatprep.subr.mxu0 0.0
        %1829 = vmatpush1.msra.mxu0 0.0
        %1830 = vmatprep.subr.mxu0 0.0
        %1831 = vmatpush1.msra.mxu0 0.0
        %1832 = vmatprep.subr.mxu0 0.0
        %1833 = vmatpush1.msra.mxu0 0.0
        %1834 = vmatprep.subr.mxu0 0.0
        %1835 = vmatpush1.msra.mxu0 0.0
        %1836 = vmatprep.subr.mxu0 0.0
        %1837 = vmatpush1.msra.mxu0 0.0
        %1838 = vmatprep.subr.mxu0 0.0
        %1839 = vmatpush1.msra.mxu0 0.0
        %1840 = vmatprep.subr.mxu0 0.0
        %1841 = vmatpush1.msra.mxu0 0.0
        %1842 = vmatprep.subr.mxu0 0.0
        %1843 = vmatpush1.msra.mxu0 0.0
        %1844 = vmatprep.subr.mxu0 0.0
        %1845 = vmatpush1.msra.mxu0 0.0
        %1846 = vmatprep.subr.mxu0 0.0
        %1847 = vmatpush1.msra.mxu0 0.0
        %1848 = vmatprep.subr.mxu0 0.0
        %1849 = vmatpush1.msra.mxu0 0.0
        %1850 = vmatprep.subr.mxu0 0.0
        %1851 = vmatpush1.msra.mxu0 0.0
        %1852 = vmatprep.subr.mxu0 0.0
        %1853 = vmatpush1.msra.mxu0 0.0
        %1854 = vmatprep.subr.mxu0 0.0
        %1855 = vmatpush1.msra.mxu0 0.0
        %1856 = vmatprep.subr.mxu0 0.0
        %1857 = vmatpush1.msra.mxu0 0.0
        %1858 = vmatprep.subr.mxu0 0.0
        %1859 = vmatpush1.msra.mxu0 0.0
        %1860 = vmatprep.mubr.f32.mxu0 0.0
        %1861 = vmatmul.mubr.f32.gmra.mrb[0].mxu0 %v965
        %v1862 = vpop.f32.mrb[0].mxu0
        %v1863 = vadd.f32 0.0, %v1862
        %v1864 = vpop.f32.mrb[0].mxu0
        %1865 = vmatprep.mubr.f32.mxu0 0.0
        %1866 = vmatmul.mubr.f32.gmra.mrb[0].mxu0 %v968
        %v1867 = vpop.f32.mrb[0].mxu0
        %v1868 = vadd.f32 0.0, %v1867
        %v1869 = vpop.f32.mrb[0].mxu0
        %1870 = vmatprep.mubr.f32.mxu0 0.0
        %1871 = vmatmul.mubr.f32.gmra.mrb[0].mxu0 %v971
        %v1872 = vpop.f32.mrb[0].mxu0
        %v1873 = vadd.f32 0.0, %v1872
        %v1874 = vpop.f32.mrb[0].mxu0
        %1875 = vmatprep.mubr.f32.mxu0 0.0
        %1876 = vmatmul.mubr.f32.gmra.mrb[0].mxu0 %v974
        %v1877 = vpop.f32.mrb[0].mxu0
        %v1878 = vadd.f32 0.0, %v1877
        %v1879 = vpop.f32.mrb[0].mxu0
        %1880 = vdwg.mxu0
        %s1881 = scalar_lea.vmem %s3, 128
        %v1882 = vld [vmem:[%s1881] sm:$0xff]
        %v1883 = vld [vmem:[%s1881 + $0x8] sm:$0xff]
        %v1884 = vld [vmem:[%s1881 + $0x10] sm:$0xff]
        %v1885 = vld [vmem:[%s1881 + $0x18] sm:$0xff]
        %v1887 = vsel %vm1174, %v1882, 0
        %v1890 = vsel %vm1174, %v1883, 0
        %v1893 = vsel %vm1174, %v1884, 0
        %v1896 = vsel %vm1174, %v1885, 0
        %1898 = vmatprep.subr.mxu0 0.0
        %1899 = vmatpush1.msra.mxu0 %v1863
        %1900 = vmatprep.subr.mxu0 0.0
        %1901 = vmatpush1.msra.mxu0 %v1868
        %1902 = vmatprep.subr.mxu0 0.0
        %1903 = vmatpush1.msra.mxu0 %v1873
        %1904 = vmatprep.subr.mxu0 0.0
        %1905 = vmatpush1.msra.mxu0 %v1878
        %1906 = vmatprep.subr.mxu0 0.0
        %1907 = vmatpush1.msra.mxu0 0.0
        %1908 = vmatprep.subr.mxu0 0.0
        %1909 = vmatpush1.msra.mxu0 0.0
        %1910 = vmatprep.subr.mxu0 0.0
        %1911 = vmatpush1.msra.mxu0 0.0
        %1912 = vmatprep.subr.mxu0 0.0
        %1913 = vmatpush1.msra.mxu0 0.0
        %1914 = vmatprep.subr.mxu0 0.0
        %1915 = vmatpush1.msra.mxu0 0.0
        %1916 = vmatprep.subr.mxu0 0.0
        %1917 = vmatpush1.msra.mxu0 0.0
        %1918 = vmatprep.subr.mxu0 0.0
        %1919 = vmatpush1.msra.mxu0 0.0
        %1920 = vmatprep.subr.mxu0 0.0
        %1921 = vmatpush1.msra.mxu0 0.0
        %1922 = vmatprep.subr.mxu0 0.0
        %1923 = vmatpush1.msra.mxu0 0.0
        %1924 = vmatprep.subr.mxu0 0.0
        %1925 = vmatpush1.msra.mxu0 0.0
        %1926 = vmatprep.subr.mxu0 0.0
        %1927 = vmatpush1.msra.mxu0 0.0
        %1928 = vmatprep.subr.mxu0 0.0
        %1929 = vmatpush1.msra.mxu0 0.0
        %1930 = vmatprep.subr.mxu0 0.0
        %1931 = vmatpush1.msra.mxu0 0.0
        %1932 = vmatprep.subr.mxu0 0.0
        %1933 = vmatpush1.msra.mxu0 0.0
        %1934 = vmatprep.subr.mxu0 0.0
        %1935 = vmatpush1.msra.mxu0 0.0
        %1936 = vmatprep.subr.mxu0 0.0
        %1937 = vmatpush1.msra.mxu0 0.0
        %1938 = vmatprep.subr.mxu0 0.0
        %1939 = vmatpush1.msra.mxu0 0.0
        %1940 = vmatprep.subr.mxu0 0.0
        %1941 = vmatpush1.msra.mxu0 0.0
        %1942 = vmatprep.subr.mxu0 0.0
        %1943 = vmatpush1.msra.mxu0 0.0
        %1944 = vmatprep.subr.mxu0 0.0
        %1945 = vmatpush1.msra.mxu0 0.0
        %1946 = vmatprep.subr.mxu0 0.0
        %1947 = vmatpush1.msra.mxu0 0.0
        %1948 = vmatprep.subr.mxu0 0.0
        %1949 = vmatpush1.msra.mxu0 0.0
        %1950 = vmatprep.subr.mxu0 0.0
        %1951 = vmatpush1.msra.mxu0 0.0
        %1952 = vmatprep.subr.mxu0 0.0
        %1953 = vmatpush1.msra.mxu0 0.0
        %1954 = vmatprep.subr.mxu0 0.0
        %1955 = vmatpush1.msra.mxu0 0.0
        %1956 = vmatprep.subr.mxu0 0.0
        %1957 = vmatpush1.msra.mxu0 0.0
        %1958 = vmatprep.subr.mxu0 0.0
        %1959 = vmatpush1.msra.mxu0 0.0
        %1960 = vmatprep.subr.mxu0 0.0
        %1961 = vmatpush1.msra.mxu0 0.0
        %1962 = vmatprep.mubr.f32.mxu0 0.0
        %1963 = vmatmul.mubr.f32.gmra.mrb[0].mxu0 %v1887
        %v1964 = vpop.f32.mrb[0].mxu0
        %v1965 = vadd.f32 0.0, %v1964
        %v1966 = vpop.f32.mrb[0].mxu0
        %1967 = vmatprep.mubr.f32.mxu0 0.0
        %1968 = vmatmul.mubr.f32.gmra.mrb[0].mxu0 %v1890
        %v1969 = vpop.f32.mrb[0].mxu0
        %v1970 = vadd.f32 0.0, %v1969
        %v1971 = vpop.f32.mrb[0].mxu0
        %1972 = vmatprep.mubr.f32.mxu0 0.0
        %1973 = vmatmul.mubr.f32.gmra.mrb[0].mxu0 %v1893
        %v1974 = vpop.f32.mrb[0].mxu0
        %v1975 = vadd.f32 0.0, %v1974
        %v1976 = vpop.f32.mrb[0].mxu0
        %1977 = vmatprep.mubr.f32.mxu0 0.0
        %1978 = vmatmul.mubr.f32.gmra.mrb[0].mxu0 %v1896
        %v1979 = vpop.f32.mrb[0].mxu0
        %v1980 = vadd.f32 0.0, %v1979
        %v1981 = vpop.f32.mrb[0].mxu0
        %1982 = vdwg.mxu0
        %v1983 = vadd.f32 %v1777, %v1965
        %v1984 = vadd.f32 %v1778, %v1970
        %v1985 = vadd.f32 %v1779, %v1975
        %v1986 = vadd.f32 %v1780, %v1980
        %s1987 = scalar_lea.vmem %s5, 440
        %v1988 = vld [vmem:[%s1987] sm:$0xff]
        %v1989 = vld [vmem:[%s1987 + $0x8] sm:$0xff]
        %v1990 = vld [vmem:[%s1987 + $0x10] sm:$0xff]
        %v1991 = vld [vmem:[%s1987 + $0x18] sm:$0xff]
        %v1992 = vld [vmem:[%s1987 + $0x20] sm:$0xff]
        %v1993 = vld [vmem:[%s1987 + $0x28] sm:$0xff]
        %v1994 = vld [vmem:[%s1987 + $0x30] sm:$0xff]
        %v1995 = vld [vmem:[%s1987 + $0x38] sm:$0xff]
        %v1996 = vld [vmem:[%s1987 + $0x40] sm:$0xff]
        %v1997 = vld [vmem:[%s1987 + $0x48] sm:$0xff]
        %v1998 = vld [vmem:[%s1987 + $0x50] sm:$0x1]
        %v2000 = vsel %vm976, %v1998, 0
        %2002 = vmatprep.subr.mxu0 0.0
        %2003 = vmatpush1.msra.mxu0 %v1988
        %2004 = vmatprep.subr.mxu0 0.0
        %2005 = vmatpush1.msra.mxu0 %v1989
        %2006 = vmatprep.subr.mxu0 0.0
        %2007 = vmatpush1.msra.mxu0 %v1990
        %2008 = vmatprep.subr.mxu0 0.0
        %2009 = vmatpush1.msra.mxu0 %v1991
        %2010 = vmatprep.subr.mxu0 0.0
        %2011 = vmatpush1.msra.mxu0 %v1992
        %2012 = vmatprep.subr.mxu0 0.0
        %2013 = vmatpush1.msra.mxu0 %v1993
        %2014 = vmatprep.subr.mxu0 0.0
        %2015 = vmatpush1.msra.mxu0 %v1994
        %2016 = vmatprep.subr.mxu0 0.0
        %2017 = vmatpush1.msra.mxu0 %v1995
        %2018 = vmatprep.subr.mxu0 0.0
        %2019 = vmatpush1.msra.mxu0 %v1996
        %2020 = vmatprep.subr.mxu0 0.0
        %2021 = vmatpush1.msra.mxu0 %v1997
        %2022 = vmatprep.subr.mxu0 0.0
        %2023 = vmatpush1.msra.mxu0 %v2000
        %2024 = vmatprep.subr.mxu0 0.0
        %2025 = vmatpush1.msra.mxu0 0.0
        %2026 = vmatprep.subr.mxu0 0.0
        %2027 = vmatpush1.msra.mxu0 0.0
        %2028 = vmatprep.subr.mxu0 0.0
        %2029 = vmatpush1.msra.mxu0 0.0
        %2030 = vmatprep.subr.mxu0 0.0
        %2031 = vmatpush1.msra.mxu0 0.0
        %2032 = vmatprep.subr.mxu0 0.0
        %2033 = vmatpush1.msra.mxu0 0.0
        %2034 = vmatprep.subr.mxu0 0.0
        %2035 = vmatpush1.msra.mxu0 0.0
        %2036 = vmatprep.subr.mxu0 0.0
        %2037 = vmatpush1.msra.mxu0 0.0
        %2038 = vmatprep.subr.mxu0 0.0
        %2039 = vmatpush1.msra.mxu0 0.0
        %2040 = vmatprep.subr.mxu0 0.0
        %2041 = vmatpush1.msra.mxu0 0.0
        %2042 = vmatprep.subr.mxu0 0.0
        %2043 = vmatpush1.msra.mxu0 0.0
        %2044 = vmatprep.subr.mxu0 0.0
        %2045 = vmatpush1.msra.mxu0 0.0
        %2046 = vmatprep.subr.mxu0 0.0
        %2047 = vmatpush1.msra.mxu0 0.0
        %2048 = vmatprep.subr.mxu0 0.0
        %2049 = vmatpush1.msra.mxu0 0.0
        %2050 = vmatprep.subr.mxu0 0.0
        %2051 = vmatpush1.msra.mxu0 0.0
        %2052 = vmatprep.subr.mxu0 0.0
        %2053 = vmatpush1.msra.mxu0 0.0
        %2054 = vmatprep.subr.mxu0 0.0
        %2055 = vmatpush1.msra.mxu0 0.0
        %2056 = vmatprep.subr.mxu0 0.0
        %2057 = vmatpush1.msra.mxu0 0.0
        %2058 = vmatprep.subr.mxu0 0.0
        %2059 = vmatpush1.msra.mxu0 0.0
        %2060 = vmatprep.subr.mxu0 0.0
        %2061 = vmatpush1.msra.mxu0 0.0
        %2062 = vmatprep.subr.mxu0 0.0
        %2063 = vmatpush1.msra.mxu0 0.0
        %2064 = vmatprep.subr.mxu0 0.0
        %2065 = vmatpush1.msra.mxu0 0.0
        %2066 = vmatprep.mubr.f32.mxu0 0.0
        %2067 = vmatmul.mubr.f32.gmra.mrb[0].mxu0 %v965
        %v2068 = vpop.f32.mrb[0].mxu0
        %v2069 = vadd.f32 0.0, %v2068
        %v2070 = vpop.f32.mrb[0].mxu0
        %2071 = vmatprep.mubr.f32.mxu0 0.0
        %2072 = vmatmul.mubr.f32.gmra.mrb[0].mxu0 %v968
        %v2073 = vpop.f32.mrb[0].mxu0
        %v2074 = vadd.f32 0.0, %v2073
        %v2075 = vpop.f32.mrb[0].mxu0
        %2076 = vmatprep.mubr.f32.mxu0 0.0
        %2077 = vmatmul.mubr.f32.gmra.mrb[0].mxu0 %v971
        %v2078 = vpop.f32.mrb[0].mxu0
        %v2079 = vadd.f32 0.0, %v2078
        %v2080 = vpop.f32.mrb[0].mxu0
        %2081 = vmatprep.mubr.f32.mxu0 0.0
        %2082 = vmatmul.mubr.f32.gmra.mrb[0].mxu0 %v974
        %v2083 = vpop.f32.mrb[0].mxu0
        %v2084 = vadd.f32 0.0, %v2083
        %v2085 = vpop.f32.mrb[0].mxu0
        %2086 = vdwg.mxu0
        %s2087 = scalar_lea.vmem %s3, 160
        %v2088 = vld [vmem:[%s2087] sm:$0xff]
        %v2089 = vld [vmem:[%s2087 + $0x8] sm:$0xff]
        %v2090 = vld [vmem:[%s2087 + $0x10] sm:$0xff]
        %v2091 = vld [vmem:[%s2087 + $0x18] sm:$0xff]
        %v2093 = vsel %vm1174, %v2088, 0
        %v2096 = vsel %vm1174, %v2089, 0
        %v2099 = vsel %vm1174, %v2090, 0
        %v2102 = vsel %vm1174, %v2091, 0
        %2104 = vmatprep.subr.mxu0 0.0
        %2105 = vmatpush1.msra.mxu0 %v2069
        %2106 = vmatprep.subr.mxu0 0.0
        %2107 = vmatpush1.msra.mxu0 %v2074
        %2108 = vmatprep.subr.mxu0 0.0
        %2109 = vmatpush1.msra.mxu0 %v2079
        %2110 = vmatprep.subr.mxu0 0.0
        %2111 = vmatpush1.msra.mxu0 %v2084
        %2112 = vmatprep.subr.mxu0 0.0
        %2113 = vmatpush1.msra.mxu0 0.0
        %2114 = vmatprep.subr.mxu0 0.0
        %2115 = vmatpush1.msra.mxu0 0.0
        %2116 = vmatprep.subr.mxu0 0.0
        %2117 = vmatpush1.msra.mxu0 0.0
        %2118 = vmatprep.subr.mxu0 0.0
        %2119 = vmatpush1.msra.mxu0 0.0
        %2120 = vmatprep.subr.mxu0 0.0
        %2121 = vmatpush1.msra.mxu0 0.0
        %2122 = vmatprep.subr.mxu0 0.0
        %2123 = vmatpush1.msra.mxu0 0.0
        %2124 = vmatprep.subr.mxu0 0.0
        %2125 = vmatpush1.msra.mxu0 0.0
        %2126 = vmatprep.subr.mxu0 0.0
        %2127 = vmatpush1.msra.mxu0 0.0
        %2128 = vmatprep.subr.mxu0 0.0
        %2129 = vmatpush1.msra.mxu0 0.0
        %2130 = vmatprep.subr.mxu0 0.0
        %2131 = vmatpush1.msra.mxu0 0.0
        %2132 = vmatprep.subr.mxu0 0.0
        %2133 = vmatpush1.msra.mxu0 0.0
        %2134 = vmatprep.subr.mxu0 0.0
        %2135 = vmatpush1.msra.mxu0 0.0
        %2136 = vmatprep.subr.mxu0 0.0
        %2137 = vmatpush1.msra.mxu0 0.0
        %2138 = vmatprep.subr.mxu0 0.0
        %2139 = vmatpush1.msra.mxu0 0.0
        %2140 = vmatprep.subr.mxu0 0.0
        %2141 = vmatpush1.msra.mxu0 0.0
        %2142 = vmatprep.subr.mxu0 0.0
        %2143 = vmatpush1.msra.mxu0 0.0
        %2144 = vmatprep.subr.mxu0 0.0
        %2145 = vmatpush1.msra.mxu0 0.0
        %2146 = vmatprep.subr.mxu0 0.0
        %2147 = vmatpush1.msra.mxu0 0.0
        %2148 = vmatprep.subr.mxu0 0.0
        %2149 = vmatpush1.msra.mxu0 0.0
        %2150 = vmatprep.subr.mxu0 0.0
        %2151 = vmatpush1.msra.mxu0 0.0
        %2152 = vmatprep.subr.mxu0 0.0
        %2153 = vmatpush1.msra.mxu0 0.0
        %2154 = vmatprep.subr.mxu0 0.0
        %2155 = vmatpush1.msra.mxu0 0.0
        %2156 = vmatprep.subr.mxu0 0.0
        %2157 = vmatpush1.msra.mxu0 0.0
        %2158 = vmatprep.subr.mxu0 0.0
        %2159 = vmatpush1.msra.mxu0 0.0
        %2160 = vmatprep.subr.mxu0 0.0
        %2161 = vmatpush1.msra.mxu0 0.0
        %2162 = vmatprep.subr.mxu0 0.0
        %2163 = vmatpush1.msra.mxu0 0.0
        %2164 = vmatprep.subr.mxu0 0.0
        %2165 = vmatpush1.msra.mxu0 0.0
        %2166 = vmatprep.subr.mxu0 0.0
        %2167 = vmatpush1.msra.mxu0 0.0
        %2168 = vmatprep.mubr.f32.mxu0 0.0
        %2169 = vmatmul.mubr.f32.gmra.mrb[0].mxu0 %v2093
        %v2170 = vpop.f32.mrb[0].mxu0
        %v2171 = vadd.f32 0.0, %v2170
        %v2172 = vpop.f32.mrb[0].mxu0
        %2173 = vmatprep.mubr.f32.mxu0 0.0
        %2174 = vmatmul.mubr.f32.gmra.mrb[0].mxu0 %v2096
        %v2175 = vpop.f32.mrb[0].mxu0
        %v2176 = vadd.f32 0.0, %v2175
        %v2177 = vpop.f32.mrb[0].mxu0
        %2178 = vmatprep.mubr.f32.mxu0 0.0
        %2179 = vmatmul.mubr.f32.gmra.mrb[0].mxu0 %v2099
        %v2180 = vpop.f32.mrb[0].mxu0
        %v2181 = vadd.f32 0.0, %v2180
        %v2182 = vpop.f32.mrb[0].mxu0
        %2183 = vmatprep.mubr.f32.mxu0 0.0
        %2184 = vmatmul.mubr.f32.gmra.mrb[0].mxu0 %v2102
        %v2185 = vpop.f32.mrb[0].mxu0
        %v2186 = vadd.f32 0.0, %v2185
        %v2187 = vpop.f32.mrb[0].mxu0
        %2188 = vdwg.mxu0
        %v2189 = vadd.f32 %v1983, %v2171
        %v2190 = vadd.f32 %v1984, %v2176
        %v2191 = vadd.f32 %v1985, %v2181
        %v2192 = vadd.f32 %v1986, %v2186
        %s2193 = scalar_lea.vmem %s5, 528
        %v2194 = vld [vmem:[%s2193] sm:$0xff]
        %v2195 = vld [vmem:[%s2193 + $0x8] sm:$0xff]
        %v2196 = vld [vmem:[%s2193 + $0x10] sm:$0xff]
        %v2197 = vld [vmem:[%s2193 + $0x18] sm:$0xff]
        %v2198 = vld [vmem:[%s2193 + $0x20] sm:$0xff]
        %v2199 = vld [vmem:[%s2193 + $0x28] sm:$0xff]
        %v2200 = vld [vmem:[%s2193 + $0x30] sm:$0xff]
        %v2201 = vld [vmem:[%s2193 + $0x38] sm:$0xff]
        %v2202 = vld [vmem:[%s2193 + $0x40] sm:$0xff]
        %v2203 = vld [vmem:[%s2193 + $0x48] sm:$0xff]
        %v2204 = vld [vmem:[%s2193 + $0x50] sm:$0x1]
        %v2206 = vsel %vm976, %v2204, 0
        %2208 = vmatprep.subr.mxu0 0.0
        %2209 = vmatpush1.msra.mxu0 %v2194
        %2210 = vmatprep.subr.mxu0 0.0
        %2211 = vmatpush1.msra.mxu0 %v2195
        %2212 = vmatprep.subr.mxu0 0.0
        %2213 = vmatpush1.msra.mxu0 %v2196
        %2214 = vmatprep.subr.mxu0 0.0
        %2215 = vmatpush1.msra.mxu0 %v2197
        %2216 = vmatprep.subr.mxu0 0.0
        %2217 = vmatpush1.msra.mxu0 %v2198
        %2218 = vmatprep.subr.mxu0 0.0
        %2219 = vmatpush1.msra.mxu0 %v2199
        %2220 = vmatprep.subr.mxu0 0.0
        %2221 = vmatpush1.msra.mxu0 %v2200
        %2222 = vmatprep.subr.mxu0 0.0
        %2223 = vmatpush1.msra.mxu0 %v2201
        %2224 = vmatprep.subr.mxu0 0.0
        %2225 = vmatpush1.msra.mxu0 %v2202
        %2226 = vmatprep.subr.mxu0 0.0
        %2227 = vmatpush1.msra.mxu0 %v2203
        %2228 = vmatprep.subr.mxu0 0.0
        %2229 = vmatpush1.msra.mxu0 %v2206
        %2230 = vmatprep.subr.mxu0 0.0
        %2231 = vmatpush1.msra.mxu0 0.0
        %2232 = vmatprep.subr.mxu0 0.0
        %2233 = vmatpush1.msra.mxu0 0.0
        %2234 = vmatprep.subr.mxu0 0.0
        %2235 = vmatpush1.msra.mxu0 0.0
        %2236 = vmatprep.subr.mxu0 0.0
        %2237 = vmatpush1.msra.mxu0 0.0
        %2238 = vmatprep.subr.mxu0 0.0
        %2239 = vmatpush1.msra.mxu0 0.0
        %2240 = vmatprep.subr.mxu0 0.0
        %2241 = vmatpush1.msra.mxu0 0.0
        %2242 = vmatprep.subr.mxu0 0.0
        %2243 = vmatpush1.msra.mxu0 0.0
        %2244 = vmatprep.subr.mxu0 0.0
        %2245 = vmatpush1.msra.mxu0 0.0
        %2246 = vmatprep.subr.mxu0 0.0
        %2247 = vmatpush1.msra.mxu0 0.0
        %2248 = vmatprep.subr.mxu0 0.0
        %2249 = vmatpush1.msra.mxu0 0.0
        %2250 = vmatprep.subr.mxu0 0.0
        %2251 = vmatpush1.msra.mxu0 0.0
        %2252 = vmatprep.subr.mxu0 0.0
        %2253 = vmatpush1.msra.mxu0 0.0
        %2254 = vmatprep.subr.mxu0 0.0
        %2255 = vmatpush1.msra.mxu0 0.0
        %2256 = vmatprep.subr.mxu0 0.0
        %2257 = vmatpush1.msra.mxu0 0.0
        %2258 = vmatprep.subr.mxu0 0.0
        %2259 = vmatpush1.msra.mxu0 0.0
        %2260 = vmatprep.subr.mxu0 0.0
        %2261 = vmatpush1.msra.mxu0 0.0
        %2262 = vmatprep.subr.mxu0 0.0
        %2263 = vmatpush1.msra.mxu0 0.0
        %2264 = vmatprep.subr.mxu0 0.0
        %2265 = vmatpush1.msra.mxu0 0.0
        %2266 = vmatprep.subr.mxu0 0.0
        %2267 = vmatpush1.msra.mxu0 0.0
        %2268 = vmatprep.subr.mxu0 0.0
        %2269 = vmatpush1.msra.mxu0 0.0
        %2270 = vmatprep.subr.mxu0 0.0
        %2271 = vmatpush1.msra.mxu0 0.0
        %2272 = vmatprep.mubr.f32.mxu0 0.0
        %2273 = vmatmul.mubr.f32.gmra.mrb[0].mxu0 %v965
        %v2274 = vpop.f32.mrb[0].mxu0
        %v2275 = vadd.f32 0.0, %v2274
        %v2276 = vpop.f32.mrb[0].mxu0
        %2277 = vmatprep.mubr.f32.mxu0 0.0
        %2278 = vmatmul.mubr.f32.gmra.mrb[0].mxu0 %v968
        %v2279 = vpop.f32.mrb[0].mxu0
        %v2280 = vadd.f32 0.0, %v2279
        %v2281 = vpop.f32.mrb[0].mxu0
        %2282 = vmatprep.mubr.f32.mxu0 0.0
        %2283 = vmatmul.mubr.f32.gmra.mrb[0].mxu0 %v971
        %v2284 = vpop.f32.mrb[0].mxu0
        %v2285 = vadd.f32 0.0, %v2284
        %v2286 = vpop.f32.mrb[0].mxu0
        %2287 = vmatprep.mubr.f32.mxu0 0.0
        %2288 = vmatmul.mubr.f32.gmra.mrb[0].mxu0 %v974
        %v2289 = vpop.f32.mrb[0].mxu0
        %v2290 = vadd.f32 0.0, %v2289
        %v2291 = vpop.f32.mrb[0].mxu0
        %2292 = vdwg.mxu0
        %s2293 = scalar_lea.vmem %s3, 192
        %v2294 = vld [vmem:[%s2293] sm:$0xff]
        %v2295 = vld [vmem:[%s2293 + $0x8] sm:$0xff]
        %v2296 = vld [vmem:[%s2293 + $0x10] sm:$0xff]
        %v2297 = vld [vmem:[%s2293 + $0x18] sm:$0xff]
        %v2299 = vsel %vm1174, %v2294, 0
        %v2302 = vsel %vm1174, %v2295, 0
        %v2305 = vsel %vm1174, %v2296, 0
        %v2308 = vsel %vm1174, %v2297, 0
        %2310 = vmatprep.subr.mxu0 0.0
        %2311 = vmatpush1.msra.mxu0 %v2275
        %2312 = vmatprep.subr.mxu0 0.0
        %2313 = vmatpush1.msra.mxu0 %v2280
        %2314 = vmatprep.subr.mxu0 0.0
        %2315 = vmatpush1.msra.mxu0 %v2285
        %2316 = vmatprep.subr.mxu0 0.0
        %2317 = vmatpush1.msra.mxu0 %v2290
        %2318 = vmatprep.subr.mxu0 0.0
        %2319 = vmatpush1.msra.mxu0 0.0
        %2320 = vmatprep.subr.mxu0 0.0
        %2321 = vmatpush1.msra.mxu0 0.0
        %2322 = vmatprep.subr.mxu0 0.0
        %2323 = vmatpush1.msra.mxu0 0.0
        %2324 = vmatprep.subr.mxu0 0.0
        %2325 = vmatpush1.msra.mxu0 0.0
        %2326 = vmatprep.subr.mxu0 0.0
        %2327 = vmatpush1.msra.mxu0 0.0
        %2328 = vmatprep.subr.mxu0 0.0
        %2329 = vmatpush1.msra.mxu0 0.0
        %2330 = vmatprep.subr.mxu0 0.0
        %2331 = vmatpush1.msra.mxu0 0.0
        %2332 = vmatprep.subr.mxu0 0.0
        %2333 = vmatpush1.msra.mxu0 0.0
        %2334 = vmatprep.subr.mxu0 0.0
        %2335 = vmatpush1.msra.mxu0 0.0
        %2336 = vmatprep.subr.mxu0 0.0
        %2337 = vmatpush1.msra.mxu0 0.0
        %2338 = vmatprep.subr.mxu0 0.0
        %2339 = vmatpush1.msra.mxu0 0.0
        %2340 = vmatprep.subr.mxu0 0.0
        %2341 = vmatpush1.msra.mxu0 0.0
        %2342 = vmatprep.subr.mxu0 0.0
        %2343 = vmatpush1.msra.mxu0 0.0
        %2344 = vmatprep.subr.mxu0 0.0
        %2345 = vmatpush1.msra.mxu0 0.0
        %2346 = vmatprep.subr.mxu0 0.0
        %2347 = vmatpush1.msra.mxu0 0.0
        %2348 = vmatprep.subr.mxu0 0.0
        %2349 = vmatpush1.msra.mxu0 0.0
        %2350 = vmatprep.subr.mxu0 0.0
        %2351 = vmatpush1.msra.mxu0 0.0
        %2352 = vmatprep.subr.mxu0 0.0
        %2353 = vmatpush1.msra.mxu0 0.0
        %2354 = vmatprep.subr.mxu0 0.0
        %2355 = vmatpush1.msra.mxu0 0.0
        %2356 = vmatprep.subr.mxu0 0.0
        %2357 = vmatpush1.msra.mxu0 0.0
        %2358 = vmatprep.subr.mxu0 0.0
        %2359 = vmatpush1.msra.mxu0 0.0
        %2360 = vmatprep.subr.mxu0 0.0
        %2361 = vmatpush1.msra.mxu0 0.0
        %2362 = vmatprep.subr.mxu0 0.0
        %2363 = vmatpush1.msra.mxu0 0.0
        %2364 = vmatprep.subr.mxu0 0.0
        %2365 = vmatpush1.msra.mxu0 0.0
        %2366 = vmatprep.subr.mxu0 0.0
        %2367 = vmatpush1.msra.mxu0 0.0
        %2368 = vmatprep.subr.mxu0 0.0
        %2369 = vmatpush1.msra.mxu0 0.0
        %2370 = vmatprep.subr.mxu0 0.0
        %2371 = vmatpush1.msra.mxu0 0.0
        %2372 = vmatprep.subr.mxu0 0.0
        %2373 = vmatpush1.msra.mxu0 0.0
        %2374 = vmatprep.mubr.f32.mxu0 0.0
        %2375 = vmatmul.mubr.f32.gmra.mrb[0].mxu0 %v2299
        %v2376 = vpop.f32.mrb[0].mxu0
        %v2377 = vadd.f32 0.0, %v2376
        %v2378 = vpop.f32.mrb[0].mxu0
        %2379 = vmatprep.mubr.f32.mxu0 0.0
        %2380 = vmatmul.mubr.f32.gmra.mrb[0].mxu0 %v2302
        %v2381 = vpop.f32.mrb[0].mxu0
        %v2382 = vadd.f32 0.0, %v2381
        %v2383 = vpop.f32.mrb[0].mxu0
        %2384 = vmatprep.mubr.f32.mxu0 0.0
        %2385 = vmatmul.mubr.f32.gmra.mrb[0].mxu0 %v2305
        %v2386 = vpop.f32.mrb[0].mxu0
        %v2387 = vadd.f32 0.0, %v2386
        %v2388 = vpop.f32.mrb[0].mxu0
        %2389 = vmatprep.mubr.f32.mxu0 0.0
        %2390 = vmatmul.mubr.f32.gmra.mrb[0].mxu0 %v2308
        %v2391 = vpop.f32.mrb[0].mxu0
        %v2392 = vadd.f32 0.0, %v2391
        %v2393 = vpop.f32.mrb[0].mxu0
        %2394 = vdwg.mxu0
        %v2395 = vadd.f32 %v2189, %v2377
        %v2396 = vadd.f32 %v2190, %v2382
        %v2397 = vadd.f32 %v2191, %v2387
        %v2398 = vadd.f32 %v2192, %v2392
        %s2399 = scalar_lea.vmem %s5, 616
        %v2400 = vld [vmem:[%s2399] sm:$0xff]
        %v2401 = vld [vmem:[%s2399 + $0x8] sm:$0xff]
        %v2402 = vld [vmem:[%s2399 + $0x10] sm:$0xff]
        %v2403 = vld [vmem:[%s2399 + $0x18] sm:$0xff]
        %v2404 = vld [vmem:[%s2399 + $0x20] sm:$0xff]
        %v2405 = vld [vmem:[%s2399 + $0x28] sm:$0xff]
        %v2406 = vld [vmem:[%s2399 + $0x30] sm:$0xff]
        %v2407 = vld [vmem:[%s2399 + $0x38] sm:$0xff]
        %v2408 = vld [vmem:[%s2399 + $0x40] sm:$0xff]
        %v2409 = vld [vmem:[%s2399 + $0x48] sm:$0xff]
        %v2410 = vld [vmem:[%s2399 + $0x50] sm:$0x1]
        %v2412 = vsel %vm976, %v2410, 0
        %2414 = vmatprep.subr.mxu0 0.0
        %2415 = vmatpush1.msra.mxu0 %v2400
        %2416 = vmatprep.subr.mxu0 0.0
        %2417 = vmatpush1.msra.mxu0 %v2401
        %2418 = vmatprep.subr.mxu0 0.0
        %2419 = vmatpush1.msra.mxu0 %v2402
        %2420 = vmatprep.subr.mxu0 0.0
        %2421 = vmatpush1.msra.mxu0 %v2403
        %2422 = vmatprep.subr.mxu0 0.0
        %2423 = vmatpush1.msra.mxu0 %v2404
        %2424 = vmatprep.subr.mxu0 0.0
        %2425 = vmatpush1.msra.mxu0 %v2405
        %2426 = vmatprep.subr.mxu0 0.0
        %2427 = vmatpush1.msra.mxu0 %v2406
        %2428 = vmatprep.subr.mxu0 0.0
        %2429 = vmatpush1.msra.mxu0 %v2407
        %2430 = vmatprep.subr.mxu0 0.0
        %2431 = vmatpush1.msra.mxu0 %v2408
        %2432 = vmatprep.subr.mxu0 0.0
        %2433 = vmatpush1.msra.mxu0 %v2409
        %2434 = vmatprep.subr.mxu0 0.0
        %2435 = vmatpush1.msra.mxu0 %v2412
        %2436 = vmatprep.subr.mxu0 0.0
        %2437 = vmatpush1.msra.mxu0 0.0
        %2438 = vmatprep.subr.mxu0 0.0
        %2439 = vmatpush1.msra.mxu0 0.0
        %2440 = vmatprep.subr.mxu0 0.0
        %2441 = vmatpush1.msra.mxu0 0.0
        %2442 = vmatprep.subr.mxu0 0.0
        %2443 = vmatpush1.msra.mxu0 0.0
        %2444 = vmatprep.subr.mxu0 0.0
        %2445 = vmatpush1.msra.mxu0 0.0
        %2446 = vmatprep.subr.mxu0 0.0
        %2447 = vmatpush1.msra.mxu0 0.0
        %2448 = vmatprep.subr.mxu0 0.0
        %2449 = vmatpush1.msra.mxu0 0.0
        %2450 = vmatprep.subr.mxu0 0.0
        %2451 = vmatpush1.msra.mxu0 0.0
        %2452 = vmatprep.subr.mxu0 0.0
        %2453 = vmatpush1.msra.mxu0 0.0
        %2454 = vmatprep.subr.mxu0 0.0
        %2455 = vmatpush1.msra.mxu0 0.0
        %2456 = vmatprep.subr.mxu0 0.0
        %2457 = vmatpush1.msra.mxu0 0.0
        %2458 = vmatprep.subr.mxu0 0.0
        %2459 = vmatpush1.msra.mxu0 0.0
        %2460 = vmatprep.subr.mxu0 0.0
        %2461 = vmatpush1.msra.mxu0 0.0
        %2462 = vmatprep.subr.mxu0 0.0
        %2463 = vmatpush1.msra.mxu0 0.0
        %2464 = vmatprep.subr.mxu0 0.0
        %2465 = vmatpush1.msra.mxu0 0.0
        %2466 = vmatprep.subr.mxu0 0.0
        %2467 = vmatpush1.msra.mxu0 0.0
        %2468 = vmatprep.subr.mxu0 0.0
        %2469 = vmatpush1.msra.mxu0 0.0
        %2470 = vmatprep.subr.mxu0 0.0
        %2471 = vmatpush1.msra.mxu0 0.0
        %2472 = vmatprep.subr.mxu0 0.0
        %2473 = vmatpush1.msra.mxu0 0.0
        %2474 = vmatprep.subr.mxu0 0.0
        %2475 = vmatpush1.msra.mxu0 0.0
        %2476 = vmatprep.subr.mxu0 0.0
        %2477 = vmatpush1.msra.mxu0 0.0
        %2478 = vmatprep.mubr.f32.mxu0 0.0
        %2479 = vmatmul.mubr.f32.gmra.mrb[0].mxu0 %v965
        %v2480 = vpop.f32.mrb[0].mxu0
        %v2481 = vadd.f32 0.0, %v2480
        %v2482 = vpop.f32.mrb[0].mxu0
        %2483 = vmatprep.mubr.f32.mxu0 0.0
        %2484 = vmatmul.mubr.f32.gmra.mrb[0].mxu0 %v968
        %v2485 = vpop.f32.mrb[0].mxu0
        %v2486 = vadd.f32 0.0, %v2485
        %v2487 = vpop.f32.mrb[0].mxu0
        %2488 = vmatprep.mubr.f32.mxu0 0.0
        %2489 = vmatmul.mubr.f32.gmra.mrb[0].mxu0 %v971
        %v2490 = vpop.f32.mrb[0].mxu0
        %v2491 = vadd.f32 0.0, %v2490
        %v2492 = vpop.f32.mrb[0].mxu0
        %2493 = vmatprep.mubr.f32.mxu0 0.0
        %2494 = vmatmul.mubr.f32.gmra.mrb[0].mxu0 %v974
        %v2495 = vpop.f32.mrb[0].mxu0
        %v2496 = vadd.f32 0.0, %v2495
        %v2497 = vpop.f32.mrb[0].mxu0
        %2498 = vdwg.mxu0
        %s2499 = scalar_lea.vmem %s3, 224
        %v2500 = vld [vmem:[%s2499] sm:$0xff]
        %v2501 = vld [vmem:[%s2499 + $0x8] sm:$0xff]
        %v2502 = vld [vmem:[%s2499 + $0x10] sm:$0xff]
        %v2503 = vld [vmem:[%s2499 + $0x18] sm:$0xff]
        %v2505 = vsel %vm1174, %v2500, 0
        %v2508 = vsel %vm1174, %v2501, 0
        %v2511 = vsel %vm1174, %v2502, 0
        %v2514 = vsel %vm1174, %v2503, 0
        %2516 = vmatprep.subr.mxu0 0.0
        %2517 = vmatpush1.msra.mxu0 %v2481
        %2518 = vmatprep.subr.mxu0 0.0
        %2519 = vmatpush1.msra.mxu0 %v2486
        %2520 = vmatprep.subr.mxu0 0.0
        %2521 = vmatpush1.msra.mxu0 %v2491
        %2522 = vmatprep.subr.mxu0 0.0
        %2523 = vmatpush1.msra.mxu0 %v2496
        %2524 = vmatprep.subr.mxu0 0.0
        %2525 = vmatpush1.msra.mxu0 0.0
        %2526 = vmatprep.subr.mxu0 0.0
        %2527 = vmatpush1.msra.mxu0 0.0
        %2528 = vmatprep.subr.mxu0 0.0
        %2529 = vmatpush1.msra.mxu0 0.0
        %2530 = vmatprep.subr.mxu0 0.0
        %2531 = vmatpush1.msra.mxu0 0.0
        %2532 = vmatprep.subr.mxu0 0.0
        %2533 = vmatpush1.msra.mxu0 0.0
        %2534 = vmatprep.subr.mxu0 0.0
        %2535 = vmatpush1.msra.mxu0 0.0
        %2536 = vmatprep.subr.mxu0 0.0
        %2537 = vmatpush1.msra.mxu0 0.0
        %2538 = vmatprep.subr.mxu0 0.0
        %2539 = vmatpush1.msra.mxu0 0.0
        %2540 = vmatprep.subr.mxu0 0.0
        %2541 = vmatpush1.msra.mxu0 0.0
        %2542 = vmatprep.subr.mxu0 0.0
        %2543 = vmatpush1.msra.mxu0 0.0
        %2544 = vmatprep.subr.mxu0 0.0
        %2545 = vmatpush1.msra.mxu0 0.0
        %2546 = vmatprep.subr.mxu0 0.0
        %2547 = vmatpush1.msra.mxu0 0.0
        %2548 = vmatprep.subr.mxu0 0.0
        %2549 = vmatpush1.msra.mxu0 0.0
        %2550 = vmatprep.subr.mxu0 0.0
        %2551 = vmatpush1.msra.mxu0 0.0
        %2552 = vmatprep.subr.mxu0 0.0
        %2553 = vmatpush1.msra.mxu0 0.0
        %2554 = vmatprep.subr.mxu0 0.0
        %2555 = vmatpush1.msra.mxu0 0.0
        %2556 = vmatprep.subr.mxu0 0.0
        %2557 = vmatpush1.msra.mxu0 0.0
        %2558 = vmatprep.subr.mxu0 0.0
        %2559 = vmatpush1.msra.mxu0 0.0
        %2560 = vmatprep.subr.mxu0 0.0
        %2561 = vmatpush1.msra.mxu0 0.0
        %2562 = vmatprep.subr.mxu0 0.0
        %2563 = vmatpush1.msra.mxu0 0.0
        %2564 = vmatprep.subr.mxu0 0.0
        %2565 = vmatpush1.msra.mxu0 0.0
        %2566 = vmatprep.subr.mxu0 0.0
        %2567 = vmatpush1.msra.mxu0 0.0
        %2568 = vmatprep.subr.mxu0 0.0
        %2569 = vmatpush1.msra.mxu0 0.0
        %2570 = vmatprep.subr.mxu0 0.0
        %2571 = vmatpush1.msra.mxu0 0.0
        %2572 = vmatprep.subr.mxu0 0.0
        %2573 = vmatpush1.msra.mxu0 0.0
        %2574 = vmatprep.subr.mxu0 0.0
        %2575 = vmatpush1.msra.mxu0 0.0
        %2576 = vmatprep.subr.mxu0 0.0
        %2577 = vmatpush1.msra.mxu0 0.0
        %2578 = vmatprep.subr.mxu0 0.0
        %2579 = vmatpush1.msra.mxu0 0.0
        %2580 = vmatprep.mubr.f32.mxu0 0.0
        %2581 = vmatmul.mubr.f32.gmra.mrb[0].mxu0 %v2505
        %v2582 = vpop.f32.mrb[0].mxu0
        %v2583 = vadd.f32 0.0, %v2582
        %v2584 = vpop.f32.mrb[0].mxu0
        %2585 = vmatprep.mubr.f32.mxu0 0.0
        %2586 = vmatmul.mubr.f32.gmra.mrb[0].mxu0 %v2508
        %v2587 = vpop.f32.mrb[0].mxu0
        %v2588 = vadd.f32 0.0, %v2587
        %v2589 = vpop.f32.mrb[0].mxu0
        %2590 = vmatprep.mubr.f32.mxu0 0.0
        %2591 = vmatmul.mubr.f32.gmra.mrb[0].mxu0 %v2511
        %v2592 = vpop.f32.mrb[0].mxu0
        %v2593 = vadd.f32 0.0, %v2592
        %v2594 = vpop.f32.mrb[0].mxu0
        %2595 = vmatprep.mubr.f32.mxu0 0.0
        %2596 = vmatmul.mubr.f32.gmra.mrb[0].mxu0 %v2514
        %v2597 = vpop.f32.mrb[0].mxu0
        %v2598 = vadd.f32 0.0, %v2597
        %v2599 = vpop.f32.mrb[0].mxu0
        %2600 = vdwg.mxu0
        %v2601 = vadd.f32 %v2395, %v2583
        %v2602 = vadd.f32 %v2396, %v2588
        %v2603 = vadd.f32 %v2397, %v2593
        %v2604 = vadd.f32 %v2398, %v2598
        %s2605 = scalar_lea.vmem %s5, 704
        %v2606 = vld [vmem:[%s2605] sm:$0xff]
        %v2607 = vld [vmem:[%s2605 + $0x8] sm:$0xff]
        %v2608 = vld [vmem:[%s2605 + $0x10] sm:$0xff]
        %v2609 = vld [vmem:[%s2605 + $0x18] sm:$0xff]
        %v2610 = vld [vmem:[%s2605 + $0x20] sm:$0xff]
        %v2611 = vld [vmem:[%s2605 + $0x28] sm:$0xff]
        %v2612 = vld [vmem:[%s2605 + $0x30] sm:$0xff]
        %v2613 = vld [vmem:[%s2605 + $0x38] sm:$0xff]
        %v2614 = vld [vmem:[%s2605 + $0x40] sm:$0xff]
        %v2615 = vld [vmem:[%s2605 + $0x48] sm:$0xff]
        %v2616 = vld [vmem:[%s2605 + $0x50] sm:$0x1]
        %v2618 = vsel %vm976, %v2616, 0
        %2620 = vmatprep.subr.mxu0 0.0
        %2621 = vmatpush1.msra.mxu0 %v2606
        %2622 = vmatprep.subr.mxu0 0.0
        %2623 = vmatpush1.msra.mxu0 %v2607
        %2624 = vmatprep.subr.mxu0 0.0
        %2625 = vmatpush1.msra.mxu0 %v2608
        %2626 = vmatprep.subr.mxu0 0.0
        %2627 = vmatpush1.msra.mxu0 %v2609
        %2628 = vmatprep.subr.mxu0 0.0
        %2629 = vmatpush1.msra.mxu0 %v2610
        %2630 = vmatprep.subr.mxu0 0.0
        %2631 = vmatpush1.msra.mxu0 %v2611
        %2632 = vmatprep.subr.mxu0 0.0
        %2633 = vmatpush1.msra.mxu0 %v2612
        %2634 = vmatprep.subr.mxu0 0.0
        %2635 = vmatpush1.msra.mxu0 %v2613
        %2636 = vmatprep.subr.mxu0 0.0
        %2637 = vmatpush1.msra.mxu0 %v2614
        %2638 = vmatprep.subr.mxu0 0.0
        %2639 = vmatpush1.msra.mxu0 %v2615
        %2640 = vmatprep.subr.mxu0 0.0
        %2641 = vmatpush1.msra.mxu0 %v2618
        %2642 = vmatprep.subr.mxu0 0.0
        %2643 = vmatpush1.msra.mxu0 0.0
        %2644 = vmatprep.subr.mxu0 0.0
        %2645 = vmatpush1.msra.mxu0 0.0
        %2646 = vmatprep.subr.mxu0 0.0
        %2647 = vmatpush1.msra.mxu0 0.0
        %2648 = vmatprep.subr.mxu0 0.0
        %2649 = vmatpush1.msra.mxu0 0.0
        %2650 = vmatprep.subr.mxu0 0.0
        %2651 = vmatpush1.msra.mxu0 0.0
        %2652 = vmatprep.subr.mxu0 0.0
        %2653 = vmatpush1.msra.mxu0 0.0
        %2654 = vmatprep.subr.mxu0 0.0
        %2655 = vmatpush1.msra.mxu0 0.0
        %2656 = vmatprep.subr.mxu0 0.0
        %2657 = vmatpush1.msra.mxu0 0.0
        %2658 = vmatprep.subr.mxu0 0.0
        %2659 = vmatpush1.msra.mxu0 0.0
        %2660 = vmatprep.subr.mxu0 0.0
        %2661 = vmatpush1.msra.mxu0 0.0
        %2662 = vmatprep.subr.mxu0 0.0
        %2663 = vmatpush1.msra.mxu0 0.0
        %2664 = vmatprep.subr.mxu0 0.0
        %2665 = vmatpush1.msra.mxu0 0.0
        %2666 = vmatprep.subr.mxu0 0.0
        %2667 = vmatpush1.msra.mxu0 0.0
        %2668 = vmatprep.subr.mxu0 0.0
        %2669 = vmatpush1.msra.mxu0 0.0
        %2670 = vmatprep.subr.mxu0 0.0
        %2671 = vmatpush1.msra.mxu0 0.0
        %2672 = vmatprep.subr.mxu0 0.0
        %2673 = vmatpush1.msra.mxu0 0.0
        %2674 = vmatprep.subr.mxu0 0.0
        %2675 = vmatpush1.msra.mxu0 0.0
        %2676 = vmatprep.subr.mxu0 0.0
        %2677 = vmatpush1.msra.mxu0 0.0
        %2678 = vmatprep.subr.mxu0 0.0
        %2679 = vmatpush1.msra.mxu0 0.0
        %2680 = vmatprep.subr.mxu0 0.0
        %2681 = vmatpush1.msra.mxu0 0.0
        %2682 = vmatprep.subr.mxu0 0.0
        %2683 = vmatpush1.msra.mxu0 0.0
        %2684 = vmatprep.mubr.f32.mxu0 0.0
        %2685 = vmatmul.mubr.f32.gmra.mrb[0].mxu0 %v965
        %v2686 = vpop.f32.mrb[0].mxu0
        %v2687 = vadd.f32 0.0, %v2686
        %v2688 = vpop.f32.mrb[0].mxu0
        %2689 = vmatprep.mubr.f32.mxu0 0.0
        %2690 = vmatmul.mubr.f32.gmra.mrb[0].mxu0 %v968
        %v2691 = vpop.f32.mrb[0].mxu0
        %v2692 = vadd.f32 0.0, %v2691
        %v2693 = vpop.f32.mrb[0].mxu0
        %2694 = vmatprep.mubr.f32.mxu0 0.0
        %2695 = vmatmul.mubr.f32.gmra.mrb[0].mxu0 %v971
        %v2696 = vpop.f32.mrb[0].mxu0
        %v2697 = vadd.f32 0.0, %v2696
        %v2698 = vpop.f32.mrb[0].mxu0
        %2699 = vmatprep.mubr.f32.mxu0 0.0
        %2700 = vmatmul.mubr.f32.gmra.mrb[0].mxu0 %v974
        %v2701 = vpop.f32.mrb[0].mxu0
        %v2702 = vadd.f32 0.0, %v2701
        %v2703 = vpop.f32.mrb[0].mxu0
        %2704 = vdwg.mxu0
        %s2705 = scalar_lea.vmem %s3, 256
        %v2706 = vld [vmem:[%s2705] sm:$0xff]
        %v2707 = vld [vmem:[%s2705 + $0x8] sm:$0xff]
        %v2708 = vld [vmem:[%s2705 + $0x10] sm:$0xff]
        %v2709 = vld [vmem:[%s2705 + $0x18] sm:$0xff]
        %v2711 = vsel %vm1174, %v2706, 0
        %v2714 = vsel %vm1174, %v2707, 0
        %v2717 = vsel %vm1174, %v2708, 0
        %v2720 = vsel %vm1174, %v2709, 0
        %2722 = vmatprep.subr.mxu0 0.0
        %2723 = vmatpush1.msra.mxu0 %v2687
        %2724 = vmatprep.subr.mxu0 0.0
        %2725 = vmatpush1.msra.mxu0 %v2692
        %2726 = vmatprep.subr.mxu0 0.0
        %2727 = vmatpush1.msra.mxu0 %v2697
        %2728 = vmatprep.subr.mxu0 0.0
        %2729 = vmatpush1.msra.mxu0 %v2702
        %2730 = vmatprep.subr.mxu0 0.0
        %2731 = vmatpush1.msra.mxu0 0.0
        %2732 = vmatprep.subr.mxu0 0.0
        %2733 = vmatpush1.msra.mxu0 0.0
        %2734 = vmatprep.subr.mxu0 0.0
        %2735 = vmatpush1.msra.mxu0 0.0
        %2736 = vmatprep.subr.mxu0 0.0
        %2737 = vmatpush1.msra.mxu0 0.0
        %2738 = vmatprep.subr.mxu0 0.0
        %2739 = vmatpush1.msra.mxu0 0.0
        %2740 = vmatprep.subr.mxu0 0.0
        %2741 = vmatpush1.msra.mxu0 0.0
        %2742 = vmatprep.subr.mxu0 0.0
        %2743 = vmatpush1.msra.mxu0 0.0
        %2744 = vmatprep.subr.mxu0 0.0
        %2745 = vmatpush1.msra.mxu0 0.0
        %2746 = vmatprep.subr.mxu0 0.0
        %2747 = vmatpush1.msra.mxu0 0.0
        %2748 = vmatprep.subr.mxu0 0.0
        %2749 = vmatpush1.msra.mxu0 0.0
        %2750 = vmatprep.subr.mxu0 0.0
        %2751 = vmatpush1.msra.mxu0 0.0
        %2752 = vmatprep.subr.mxu0 0.0
        %2753 = vmatpush1.msra.mxu0 0.0
        %2754 = vmatprep.subr.mxu0 0.0
        %2755 = vmatpush1.msra.mxu0 0.0
        %2756 = vmatprep.subr.mxu0 0.0
        %2757 = vmatpush1.msra.mxu0 0.0
        %2758 = vmatprep.subr.mxu0 0.0
        %2759 = vmatpush1.msra.mxu0 0.0
        %2760 = vmatprep.subr.mxu0 0.0
        %2761 = vmatpush1.msra.mxu0 0.0
        %2762 = vmatprep.subr.mxu0 0.0
        %2763 = vmatpush1.msra.mxu0 0.0
        %2764 = vmatprep.subr.mxu0 0.0
        %2765 = vmatpush1.msra.mxu0 0.0
        %2766 = vmatprep.subr.mxu0 0.0
        %2767 = vmatpush1.msra.mxu0 0.0
        %2768 = vmatprep.subr.mxu0 0.0
        %2769 = vmatpush1.msra.mxu0 0.0
        %2770 = vmatprep.subr.mxu0 0.0
        %2771 = vmatpush1.msra.mxu0 0.0
        %2772 = vmatprep.subr.mxu0 0.0
        %2773 = vmatpush1.msra.mxu0 0.0
        %2774 = vmatprep.subr.mxu0 0.0
        %2775 = vmatpush1.msra.mxu0 0.0
        %2776 = vmatprep.subr.mxu0 0.0
        %2777 = vmatpush1.msra.mxu0 0.0
        %2778 = vmatprep.subr.mxu0 0.0
        %2779 = vmatpush1.msra.mxu0 0.0
        %2780 = vmatprep.subr.mxu0 0.0
        %2781 = vmatpush1.msra.mxu0 0.0
        %2782 = vmatprep.subr.mxu0 0.0
        %2783 = vmatpush1.msra.mxu0 0.0
        %2784 = vmatprep.subr.mxu0 0.0
        %2785 = vmatpush1.msra.mxu0 0.0
        %2786 = vmatprep.mubr.f32.mxu0 0.0
        %2787 = vmatmul.mubr.f32.gmra.mrb[0].mxu0 %v2711
        %v2788 = vpop.f32.mrb[0].mxu0
        %v2789 = vadd.f32 0.0, %v2788
        %v2790 = vpop.f32.mrb[0].mxu0
        %2791 = vmatprep.mubr.f32.mxu0 0.0
        %2792 = vmatmul.mubr.f32.gmra.mrb[0].mxu0 %v2714
        %v2793 = vpop.f32.mrb[0].mxu0
        %v2794 = vadd.f32 0.0, %v2793
        %v2795 = vpop.f32.mrb[0].mxu0
        %2796 = vmatprep.mubr.f32.mxu0 0.0
        %2797 = vmatmul.mubr.f32.gmra.mrb[0].mxu0 %v2717
        %v2798 = vpop.f32.mrb[0].mxu0
        %v2799 = vadd.f32 0.0, %v2798
        %v2800 = vpop.f32.mrb[0].mxu0
        %2801 = vmatprep.mubr.f32.mxu0 0.0
        %2802 = vmatmul.mubr.f32.gmra.mrb[0].mxu0 %v2720
        %v2803 = vpop.f32.mrb[0].mxu0
        %v2804 = vadd.f32 0.0, %v2803
        %v2805 = vpop.f32.mrb[0].mxu0
        %2806 = vdwg.mxu0
        %v2807 = vadd.f32 %v2601, %v2789
        %v2808 = vadd.f32 %v2602, %v2794
        %v2809 = vadd.f32 %v2603, %v2799
        %v2810 = vadd.f32 %v2604, %v2804
        %v2811 = vld [vmem:[%s4] sm:$0xff]
        %v2812 = vld [vmem:[%s4 + $0x8] sm:$0xff]
        %v2813 = vld [vmem:[%s4 + $0x10] sm:$0xff]
        %v2814 = vld [vmem:[%s4 + $0x18] sm:$0xff]
        %v2815 = vadd.f32 %v2807, %v2811
        %v2816 = vadd.f32 %v2808, %v2812
        %v2817 = vadd.f32 %v2809, %v2813
        %v2818 = vadd.f32 %v2810, %v2814
        %v2819 = vmax.f32 %v2815, 0.0
        %v2820 = vmax.f32 %v2816, 0.0
        %v2821 = vmax.f32 %v2817, 0.0
        %v2822 = vmax.f32 %v2818, 0.0
        %v2824 = vsel %vm963, %v2819, 0
        %v2827 = vsel %vm963, %v2820, 0
        %v2830 = vsel %vm963, %v2821, 0
        %v2833 = vsel %vm963, %v2822, 0
        %2835 = vmatprep.subr.mxu0 0.0
        %2836 = vmatpush1.msra.mxu0 %v952
        %2837 = vmatprep.subr.mxu0 0.0
        %2838 = vmatpush1.msra.mxu0 %v953
        %2839 = vmatprep.subr.mxu0 0.0
        %2840 = vmatpush1.msra.mxu0 %v954
        %2841 = vmatprep.subr.mxu0 0.0
        %2842 = vmatpush1.msra.mxu0 %v955
        %2843 = vmatprep.subr.mxu0 0.0
        %2844 = vmatpush1.msra.mxu0 %v956
        %2845 = vmatprep.subr.mxu0 0.0
        %2846 = vmatpush1.msra.mxu0 %v957
        %2847 = vmatprep.subr.mxu0 0.0
        %2848 = vmatpush1.msra.mxu0 %v958
        %2849 = vmatprep.subr.mxu0 0.0
        %2850 = vmatpush1.msra.mxu0 %v959
        %2851 = vmatprep.subr.mxu0 0.0
        %2852 = vmatpush1.msra.mxu0 %v960
        %2853 = vmatprep.subr.mxu0 0.0
        %2854 = vmatpush1.msra.mxu0 %v961
        %2855 = vmatprep.subr.mxu0 0.0
        %2856 = vmatpush1.msra.mxu0 %v978
        %2857 = vmatprep.subr.mxu0 0.0
        %2858 = vmatpush1.msra.mxu0 0.0
        %2859 = vmatprep.subr.mxu0 0.0
        %2860 = vmatpush1.msra.mxu0 0.0
        %2861 = vmatprep.subr.mxu0 0.0
        %2862 = vmatpush1.msra.mxu0 0.0
        %2863 = vmatprep.subr.mxu0 0.0
        %2864 = vmatpush1.msra.mxu0 0.0
        %2865 = vmatprep.subr.mxu0 0.0
        %2866 = vmatpush1.msra.mxu0 0.0
        %2867 = vmatprep.subr.mxu0 0.0
        %2868 = vmatpush1.msra.mxu0 0.0
        %2869 = vmatprep.subr.mxu0 0.0
        %2870 = vmatpush1.msra.mxu0 0.0
        %2871 = vmatprep.subr.mxu0 0.0
        %2872 = vmatpush1.msra.mxu0 0.0
        %2873 = vmatprep.subr.mxu0 0.0
        %2874 = vmatpush1.msra.mxu0 0.0
        %2875 = vmatprep.subr.mxu0 0.0
        %2876 = vmatpush1.msra.mxu0 0.0
        %2877 = vmatprep.subr.mxu0 0.0
        %2878 = vmatpush1.msra.mxu0 0.0
        %2879 = vmatprep.subr.mxu0 0.0
        %2880 = vmatpush1.msra.mxu0 0.0
        %2881 = vmatprep.subr.mxu0 0.0
        %2882 = vmatpush1.msra.mxu0 0.0
        %2883 = vmatprep.subr.mxu0 0.0
        %2884 = vmatpush1.msra.mxu0 0.0
        %2885 = vmatprep.subr.mxu0 0.0
        %2886 = vmatpush1.msra.mxu0 0.0
        %2887 = vmatprep.subr.mxu0 0.0
        %2888 = vmatpush1.msra.mxu0 0.0
        %2889 = vmatprep.subr.mxu0 0.0
        %2890 = vmatpush1.msra.mxu0 0.0
        %2891 = vmatprep.subr.mxu0 0.0
        %2892 = vmatpush1.msra.mxu0 0.0
        %2893 = vmatprep.subr.mxu0 0.0
        %2894 = vmatpush1.msra.mxu0 0.0
        %2895 = vmatprep.subr.mxu0 0.0
        %2896 = vmatpush1.msra.mxu0 0.0
        %2897 = vmatprep.subr.mxu0 0.0
        %2898 = vmatpush1.msra.mxu0 0.0
        %2899 = vmatprep.mubr.f32.mxu0 0.0
        %2900 = vmatmul.mubr.f32.gmra.mrb[0].mxu0 %v2824
        %v2901 = vpop.f32.mrb[0].mxu0
        %v2902 = vadd.f32 0.0, %v2901
        %v2903 = vpop.f32.mrb[0].mxu0
        %2904 = vmatprep.mubr.f32.mxu0 0.0
        %2905 = vmatmul.mubr.f32.gmra.mrb[0].mxu0 %v2827
        %v2906 = vpop.f32.mrb[0].mxu0
        %v2907 = vadd.f32 0.0, %v2906
        %v2908 = vpop.f32.mrb[0].mxu0
        %2909 = vmatprep.mubr.f32.mxu0 0.0
        %2910 = vmatmul.mubr.f32.gmra.mrb[0].mxu0 %v2830
        %v2911 = vpop.f32.mrb[0].mxu0
        %v2912 = vadd.f32 0.0, %v2911
        %v2913 = vpop.f32.mrb[0].mxu0
        %2914 = vmatprep.mubr.f32.mxu0 0.0
        %2915 = vmatmul.mubr.f32.gmra.mrb[0].mxu0 %v2833
        %v2916 = vpop.f32.mrb[0].mxu0
        %v2917 = vadd.f32 0.0, %v2916
        %v2918 = vpop.f32.mrb[0].mxu0
        %2919 = vdwg.mxu0
        %2920 = vmatprep.subr.mxu0 0.0
        %2921 = vmatpush1.msra.mxu0 %v1070
        %2922 = vmatprep.subr.mxu0 0.0
        %2923 = vmatpush1.msra.mxu0 %v1071
        %2924 = vmatprep.subr.mxu0 0.0
        %2925 = vmatpush1.msra.mxu0 %v1072
        %2926 = vmatprep.subr.mxu0 0.0
        %2927 = vmatpush1.msra.mxu0 %v1073
        %2928 = vmatprep.subr.mxu0 0.0
        %2929 = vmatpush1.msra.mxu0 %v1074
        %2930 = vmatprep.subr.mxu0 0.0
        %2931 = vmatpush1.msra.mxu0 %v1075
        %2932 = vmatprep.subr.mxu0 0.0
        %2933 = vmatpush1.msra.mxu0 %v1076
        %2934 = vmatprep.subr.mxu0 0.0
        %2935 = vmatpush1.msra.mxu0 %v1077
        %2936 = vmatprep.subr.mxu0 0.0
        %2937 = vmatpush1.msra.mxu0 %v1078
        %2938 = vmatprep.subr.mxu0 0.0
        %2939 = vmatpush1.msra.mxu0 %v1079
        %2940 = vmatprep.subr.mxu0 0.0
        %2941 = vmatpush1.msra.mxu0 %v1082
        %2942 = vmatprep.subr.mxu0 0.0
        %2943 = vmatpush1.msra.mxu0 0.0
        %2944 = vmatprep.subr.mxu0 0.0
        %2945 = vmatpush1.msra.mxu0 0.0
        %2946 = vmatprep.subr.mxu0 0.0
        %2947 = vmatpush1.msra.mxu0 0.0
        %2948 = vmatprep.subr.mxu0 0.0
        %2949 = vmatpush1.msra.mxu0 0.0
        %2950 = vmatprep.subr.mxu0 0.0
        %2951 = vmatpush1.msra.mxu0 0.0
        %2952 = vmatprep.subr.mxu0 0.0
        %2953 = vmatpush1.msra.mxu0 0.0
        %2954 = vmatprep.subr.mxu0 0.0
        %2955 = vmatpush1.msra.mxu0 0.0
        %2956 = vmatprep.subr.mxu0 0.0
        %2957 = vmatpush1.msra.mxu0 0.0
        %2958 = vmatprep.subr.mxu0 0.0
        %2959 = vmatpush1.msra.mxu0 0.0
        %2960 = vmatprep.subr.mxu0 0.0
        %2961 = vmatpush1.msra.mxu0 0.0
        %2962 = vmatprep.subr.mxu0 0.0
        %2963 = vmatpush1.msra.mxu0 0.0
        %2964 = vmatprep.subr.mxu0 0.0
        %2965 = vmatpush1.msra.mxu0 0.0
        %2966 = vmatprep.subr.mxu0 0.0
        %2967 = vmatpush1.msra.mxu0 0.0
        %2968 = vmatprep.subr.mxu0 0.0
        %2969 = vmatpush1.msra.mxu0 0.0
        %2970 = vmatprep.subr.mxu0 0.0
        %2971 = vmatpush1.msra.mxu0 0.0
        %2972 = vmatprep.subr.mxu0 0.0
        %2973 = vmatpush1.msra.mxu0 0.0
        %2974 = vmatprep.subr.mxu0 0.0
        %2975 = vmatpush1.msra.mxu0 0.0
        %2976 = vmatprep.subr.mxu0 0.0
        %2977 = vmatpush1.msra.mxu0 0.0
        %2978 = vmatprep.subr.mxu0 0.0
        %2979 = vmatpush1.msra.mxu0 0.0
        %2980 = vmatprep.subr.mxu0 0.0
        %2981 = vmatpush1.msra.mxu0 0.0
        %2982 = vmatprep.subr.mxu0 0.0
        %2983 = vmatpush1.msra.mxu0 0.0
        %2984 = vmatprep.mubr.f32.mxu0 0.0
        %2985 = vmatmul.mubr.f32.gmra.mrb[0].mxu0 %v2824
        %v2986 = vpop.f32.mrb[0].mxu0
        %v2987 = vadd.f32 0.0, %v2986
        %v2988 = vpop.f32.mrb[0].mxu0
        %2989 = vmatprep.mubr.f32.mxu0 0.0
        %2990 = vmatmul.mubr.f32.gmra.mrb[0].mxu0 %v2827
        %v2991 = vpop.f32.mrb[0].mxu0
        %v2992 = vadd.f32 0.0, %v2991
        %v2993 = vpop.f32.mrb[0].mxu0
        %2994 = vmatprep.mubr.f32.mxu0 0.0
        %2995 = vmatmul.mubr.f32.gmra.mrb[0].mxu0 %v2830
        %v2996 = vpop.f32.mrb[0].mxu0
        %v2997 = vadd.f32 0.0, %v2996
        %v2998 = vpop.f32.mrb[0].mxu0
        %2999 = vmatprep.mubr.f32.mxu0 0.0
        %3000 = vmatmul.mubr.f32.gmra.mrb[0].mxu0 %v2833
        %v3001 = vpop.f32.mrb[0].mxu0
        %v3002 = vadd.f32 0.0, %v3001
        %v3003 = vpop.f32.mrb[0].mxu0
        %3004 = vdwg.mxu0
        %3005 = vmatprep.subr.mxu0 0.0
        %3006 = vmatpush1.msra.mxu0 %v2987
        %3007 = vmatprep.subr.mxu0 0.0
        %3008 = vmatpush1.msra.mxu0 %v2992
        %3009 = vmatprep.subr.mxu0 0.0
        %3010 = vmatpush1.msra.mxu0 %v2997
        %3011 = vmatprep.subr.mxu0 0.0
        %3012 = vmatpush1.msra.mxu0 %v3002
        %3013 = vmatprep.subr.mxu0 0.0
        %3014 = vmatpush1.msra.mxu0 0.0
        %3015 = vmatprep.subr.mxu0 0.0
        %3016 = vmatpush1.msra.mxu0 0.0
        %3017 = vmatprep.subr.mxu0 0.0
        %3018 = vmatpush1.msra.mxu0 0.0
        %3019 = vmatprep.subr.mxu0 0.0
        %3020 = vmatpush1.msra.mxu0 0.0
        %3021 = vmatprep.subr.mxu0 0.0
        %3022 = vmatpush1.msra.mxu0 0.0
        %3023 = vmatprep.subr.mxu0 0.0
        %3024 = vmatpush1.msra.mxu0 0.0
        %3025 = vmatprep.subr.mxu0 0.0
        %3026 = vmatpush1.msra.mxu0 0.0
        %3027 = vmatprep.subr.mxu0 0.0
        %3028 = vmatpush1.msra.mxu0 0.0
        %3029 = vmatprep.subr.mxu0 0.0
        %3030 = vmatpush1.msra.mxu0 0.0
        %3031 = vmatprep.subr.mxu0 0.0
        %3032 = vmatpush1.msra.mxu0 0.0
        %3033 = vmatprep.subr.mxu0 0.0
        %3034 = vmatpush1.msra.mxu0 0.0
        %3035 = vmatprep.subr.mxu0 0.0
        %3036 = vmatpush1.msra.mxu0 0.0
        %3037 = vmatprep.subr.mxu0 0.0
        %3038 = vmatpush1.msra.mxu0 0.0
        %3039 = vmatprep.subr.mxu0 0.0
        %3040 = vmatpush1.msra.mxu0 0.0
        %3041 = vmatprep.subr.mxu0 0.0
        %3042 = vmatpush1.msra.mxu0 0.0
        %3043 = vmatprep.subr.mxu0 0.0
        %3044 = vmatpush1.msra.mxu0 0.0
        %3045 = vmatprep.subr.mxu0 0.0
        %3046 = vmatpush1.msra.mxu0 0.0
        %3047 = vmatprep.subr.mxu0 0.0
        %3048 = vmatpush1.msra.mxu0 0.0
        %3049 = vmatprep.subr.mxu0 0.0
        %3050 = vmatpush1.msra.mxu0 0.0
        %3051 = vmatprep.subr.mxu0 0.0
        %3052 = vmatpush1.msra.mxu0 0.0
        %3053 = vmatprep.subr.mxu0 0.0
        %3054 = vmatpush1.msra.mxu0 0.0
        %3055 = vmatprep.subr.mxu0 0.0
        %3056 = vmatpush1.msra.mxu0 0.0
        %3057 = vmatprep.subr.mxu0 0.0
        %3058 = vmatpush1.msra.mxu0 0.0
        %3059 = vmatprep.subr.mxu0 0.0
        %3060 = vmatpush1.msra.mxu0 0.0
        %3061 = vmatprep.subr.mxu0 0.0
        %3062 = vmatpush1.msra.mxu0 0.0
        %3063 = vmatprep.subr.mxu0 0.0
        %3064 = vmatpush1.msra.mxu0 0.0
        %3065 = vmatprep.subr.mxu0 0.0
        %3066 = vmatpush1.msra.mxu0 0.0
        %3067 = vmatprep.subr.mxu0 0.0
        %3068 = vmatpush1.msra.mxu0 0.0
        %3069 = vmatprep.mubr.f32.mxu0 0.0
        %3070 = vmatmul.mubr.f32.gmra.mrb[0].mxu0 %v1176
        %v3071 = vpop.f32.mrb[0].mxu0
        %v3072 = vadd.f32 0.0, %v3071
        %v3073 = vpop.f32.mrb[0].mxu0
        %3074 = vmatprep.mubr.f32.mxu0 0.0
        %3075 = vmatmul.mubr.f32.gmra.mrb[0].mxu0 %v1179
        %v3076 = vpop.f32.mrb[0].mxu0
        %v3077 = vadd.f32 0.0, %v3076
        %v3078 = vpop.f32.mrb[0].mxu0
        %3079 = vmatprep.mubr.f32.mxu0 0.0
        %3080 = vmatmul.mubr.f32.gmra.mrb[0].mxu0 %v1182
        %v3081 = vpop.f32.mrb[0].mxu0
        %v3082 = vadd.f32 0.0, %v3081
        %v3083 = vpop.f32.mrb[0].mxu0
        %3084 = vmatprep.mubr.f32.mxu0 0.0
        %3085 = vmatmul.mubr.f32.gmra.mrb[0].mxu0 %v1185
        %v3086 = vpop.f32.mrb[0].mxu0
        %v3087 = vadd.f32 0.0, %v3086
        %v3088 = vpop.f32.mrb[0].mxu0
        %3089 = vdwg.mxu0
        %3090 = vmatprep.subr.mxu0 0.0
        %3091 = vmatpush1.msra.mxu0 %v2902
        %3092 = vmatprep.subr.mxu0 0.0
        %3093 = vmatpush1.msra.mxu0 %v2907
        %3094 = vmatprep.subr.mxu0 0.0
        %3095 = vmatpush1.msra.mxu0 %v2912
        %3096 = vmatprep.subr.mxu0 0.0
        %3097 = vmatpush1.msra.mxu0 %v2917
        %3098 = vmatprep.subr.mxu0 0.0
        %3099 = vmatpush1.msra.mxu0 0.0
        %3100 = vmatprep.subr.mxu0 0.0
        %3101 = vmatpush1.msra.mxu0 0.0
        %3102 = vmatprep.subr.mxu0 0.0
        %3103 = vmatpush1.msra.mxu0 0.0
        %3104 = vmatprep.subr.mxu0 0.0
        %3105 = vmatpush1.msra.mxu0 0.0
        %3106 = vmatprep.subr.mxu0 0.0
        %3107 = vmatpush1.msra.mxu0 0.0
        %3108 = vmatprep.subr.mxu0 0.0
        %3109 = vmatpush1.msra.mxu0 0.0
        %3110 = vmatprep.subr.mxu0 0.0
        %3111 = vmatpush1.msra.mxu0 0.0
        %3112 = vmatprep.subr.mxu0 0.0
        %3113 = vmatpush1.msra.mxu0 0.0
        %3114 = vmatprep.subr.mxu0 0.0
        %3115 = vmatpush1.msra.mxu0 0.0
        %3116 = vmatprep.subr.mxu0 0.0
        %3117 = vmatpush1.msra.mxu0 0.0
        %3118 = vmatprep.subr.mxu0 0.0
        %3119 = vmatpush1.msra.mxu0 0.0
        %3120 = vmatprep.subr.mxu0 0.0
        %3121 = vmatpush1.msra.mxu0 0.0
        %3122 = vmatprep.subr.mxu0 0.0
        %3123 = vmatpush1.msra.mxu0 0.0
        %3124 = vmatprep.subr.mxu0 0.0
        %3125 = vmatpush1.msra.mxu0 0.0
        %3126 = vmatprep.subr.mxu0 0.0
        %3127 = vmatpush1.msra.mxu0 0.0
        %3128 = vmatprep.subr.mxu0 0.0
        %3129 = vmatpush1.msra.mxu0 0.0
        %3130 = vmatprep.subr.mxu0 0.0
        %3131 = vmatpush1.msra.mxu0 0.0
        %3132 = vmatprep.subr.mxu0 0.0
        %3133 = vmatpush1.msra.mxu0 0.0
        %3134 = vmatprep.subr.mxu0 0.0
        %3135 = vmatpush1.msra.mxu0 0.0
        %3136 = vmatprep.subr.mxu0 0.0
        %3137 = vmatpush1.msra.mxu0 0.0
        %3138 = vmatprep.subr.mxu0 0.0
        %3139 = vmatpush1.msra.mxu0 0.0
        %3140 = vmatprep.subr.mxu0 0.0
        %3141 = vmatpush1.msra.mxu0 0.0
        %3142 = vmatprep.subr.mxu0 0.0
        %3143 = vmatpush1.msra.mxu0 0.0
        %3144 = vmatprep.subr.mxu0 0.0
        %3145 = vmatpush1.msra.mxu0 0.0
        %3146 = vmatprep.subr.mxu0 0.0
        %3147 = vmatpush1.msra.mxu0 0.0
        %3148 = vmatprep.subr.mxu0 0.0
        %3149 = vmatpush1.msra.mxu0 0.0
        %3150 = vmatprep.subr.mxu0 0.0
        %3151 = vmatpush1.msra.mxu0 0.0
        %3152 = vmatprep.subr.mxu0 0.0
        %3153 = vmatpush1.msra.mxu0 0.0
        %3154 = vmatprep.mubr.f32.mxu0 0.0
        %3155 = vmatmul.mubr.f32.gmra.mrb[0].mxu0 %v1273
        %v3156 = vpop.f32.mrb[0].mxu0
        %v3157 = vadd.f32 %v3072, %v3156
        %v3158 = vpop.f32.mrb[0].mxu0
        %3159 = vmatprep.mubr.f32.mxu0 0.0
        %3160 = vmatmul.mubr.f32.gmra.mrb[0].mxu0 %v1276
        %v3161 = vpop.f32.mrb[0].mxu0
        %v3162 = vadd.f32 %v3077, %v3161
        %v3163 = vpop.f32.mrb[0].mxu0
        %3164 = vmatprep.mubr.f32.mxu0 0.0
        %3165 = vmatmul.mubr.f32.gmra.mrb[0].mxu0 %v1279
        %v3166 = vpop.f32.mrb[0].mxu0
        %v3167 = vadd.f32 %v3082, %v3166
        %v3168 = vpop.f32.mrb[0].mxu0
        %3169 = vmatprep.mubr.f32.mxu0 0.0
        %3170 = vmatmul.mubr.f32.gmra.mrb[0].mxu0 %v1282
        %v3171 = vpop.f32.mrb[0].mxu0
        %v3172 = vadd.f32 %v3087, %v3171
        %v3173 = vpop.f32.mrb[0].mxu0
        %3174 = vdwg.mxu0
        %3175 = vmatprep.subr.mxu0 0.0
        %3176 = vmatpush1.msra.mxu0 %v1370
        %3177 = vmatprep.subr.mxu0 0.0
        %3178 = vmatpush1.msra.mxu0 %v1371
        %3179 = vmatprep.subr.mxu0 0.0
        %3180 = vmatpush1.msra.mxu0 %v1372
        %3181 = vmatprep.subr.mxu0 0.0
        %3182 = vmatpush1.msra.mxu0 %v1373
        %3183 = vmatprep.subr.mxu0 0.0
        %3184 = vmatpush1.msra.mxu0 %v1374
        %3185 = vmatprep.subr.mxu0 0.0
        %3186 = vmatpush1.msra.mxu0 %v1375
        %3187 = vmatprep.subr.mxu0 0.0
        %3188 = vmatpush1.msra.mxu0 %v1376
        %3189 = vmatprep.subr.mxu0 0.0
        %3190 = vmatpush1.msra.mxu0 %v1377
        %3191 = vmatprep.subr.mxu0 0.0
        %3192 = vmatpush1.msra.mxu0 %v1378
        %3193 = vmatprep.subr.mxu0 0.0
        %3194 = vmatpush1.msra.mxu0 %v1379
        %3195 = vmatprep.subr.mxu0 0.0
        %3196 = vmatpush1.msra.mxu0 %v1382
        %3197 = vmatprep.subr.mxu0 0.0
        %3198 = vmatpush1.msra.mxu0 0.0
        %3199 = vmatprep.subr.mxu0 0.0
        %3200 = vmatpush1.msra.mxu0 0.0
        %3201 = vmatprep.subr.mxu0 0.0
        %3202 = vmatpush1.msra.mxu0 0.0
        %3203 = vmatprep.subr.mxu0 0.0
        %3204 = vmatpush1.msra.mxu0 0.0
        %3205 = vmatprep.subr.mxu0 0.0
        %3206 = vmatpush1.msra.mxu0 0.0
        %3207 = vmatprep.subr.mxu0 0.0
        %3208 = vmatpush1.msra.mxu0 0.0
        %3209 = vmatprep.subr.mxu0 0.0
        %3210 = vmatpush1.msra.mxu0 0.0
        %3211 = vmatprep.subr.mxu0 0.0
        %3212 = vmatpush1.msra.mxu0 0.0
        %3213 = vmatprep.subr.mxu0 0.0
        %3214 = vmatpush1.msra.mxu0 0.0
        %3215 = vmatprep.subr.mxu0 0.0
        %3216 = vmatpush1.msra.mxu0 0.0
        %3217 = vmatprep.subr.mxu0 0.0
        %3218 = vmatpush1.msra.mxu0 0.0
        %3219 = vmatprep.subr.mxu0 0.0
        %3220 = vmatpush1.msra.mxu0 0.0
        %3221 = vmatprep.subr.mxu0 0.0
        %3222 = vmatpush1.msra.mxu0 0.0
        %3223 = vmatprep.subr.mxu0 0.0
        %3224 = vmatpush1.msra.mxu0 0.0
        %3225 = vmatprep.subr.mxu0 0.0
        %3226 = vmatpush1.msra.mxu0 0.0
        %3227 = vmatprep.subr.mxu0 0.0
        %3228 = vmatpush1.msra.mxu0 0.0
        %3229 = vmatprep.subr.mxu0 0.0
        %3230 = vmatpush1.msra.mxu0 0.0
        %3231 = vmatprep.subr.mxu0 0.0
        %3232 = vmatpush1.msra.mxu0 0.0
        %3233 = vmatprep.subr.mxu0 0.0
        %3234 = vmatpush1.msra.mxu0 0.0
        %3235 = vmatprep.subr.mxu0 0.0
        %3236 = vmatpush1.msra.mxu0 0.0
        %3237 = vmatprep.subr.mxu0 0.0
        %3238 = vmatpush1.msra.mxu0 0.0
        %3239 = vmatprep.mubr.f32.mxu0 0.0
        %3240 = vmatmul.mubr.f32.gmra.mrb[0].mxu0 %v2824
        %v3241 = vpop.f32.mrb[0].mxu0
        %v3242 = vadd.f32 0.0, %v3241
        %v3243 = vpop.f32.mrb[0].mxu0
        %3244 = vmatprep.mubr.f32.mxu0 0.0
        %3245 = vmatmul.mubr.f32.gmra.mrb[0].mxu0 %v2827
        %v3246 = vpop.f32.mrb[0].mxu0
        %v3247 = vadd.f32 0.0, %v3246
        %v3248 = vpop.f32.mrb[0].mxu0
        %3249 = vmatprep.mubr.f32.mxu0 0.0
        %3250 = vmatmul.mubr.f32.gmra.mrb[0].mxu0 %v2830
        %v3251 = vpop.f32.mrb[0].mxu0
        %v3252 = vadd.f32 0.0, %v3251
        %v3253 = vpop.f32.mrb[0].mxu0
        %3254 = vmatprep.mubr.f32.mxu0 0.0
        %3255 = vmatmul.mubr.f32.gmra.mrb[0].mxu0 %v2833
        %v3256 = vpop.f32.mrb[0].mxu0
        %v3257 = vadd.f32 0.0, %v3256
        %v3258 = vpop.f32.mrb[0].mxu0
        %3259 = vdwg.mxu0
        %3260 = vmatprep.subr.mxu0 0.0
        %3261 = vmatpush1.msra.mxu0 %v3242
        %3262 = vmatprep.subr.mxu0 0.0
        %3263 = vmatpush1.msra.mxu0 %v3247
        %3264 = vmatprep.subr.mxu0 0.0
        %3265 = vmatpush1.msra.mxu0 %v3252
        %3266 = vmatprep.subr.mxu0 0.0
        %3267 = vmatpush1.msra.mxu0 %v3257
        %3268 = vmatprep.subr.mxu0 0.0
        %3269 = vmatpush1.msra.mxu0 0.0
        %3270 = vmatprep.subr.mxu0 0.0
        %3271 = vmatpush1.msra.mxu0 0.0
        %3272 = vmatprep.subr.mxu0 0.0
        %3273 = vmatpush1.msra.mxu0 0.0
        %3274 = vmatprep.subr.mxu0 0.0
        %3275 = vmatpush1.msra.mxu0 0.0
        %3276 = vmatprep.subr.mxu0 0.0
        %3277 = vmatpush1.msra.mxu0 0.0
        %3278 = vmatprep.subr.mxu0 0.0
        %3279 = vmatpush1.msra.mxu0 0.0
        %3280 = vmatprep.subr.mxu0 0.0
        %3281 = vmatpush1.msra.mxu0 0.0
        %3282 = vmatprep.subr.mxu0 0.0
        %3283 = vmatpush1.msra.mxu0 0.0
        %3284 = vmatprep.subr.mxu0 0.0
        %3285 = vmatpush1.msra.mxu0 0.0
        %3286 = vmatprep.subr.mxu0 0.0
        %3287 = vmatpush1.msra.mxu0 0.0
        %3288 = vmatprep.subr.mxu0 0.0
        %3289 = vmatpush1.msra.mxu0 0.0
        %3290 = vmatprep.subr.mxu0 0.0
        %3291 = vmatpush1.msra.mxu0 0.0
        %3292 = vmatprep.subr.mxu0 0.0
        %3293 = vmatpush1.msra.mxu0 0.0
        %3294 = vmatprep.subr.mxu0 0.0
        %3295 = vmatpush1.msra.mxu0 0.0
        %3296 = vmatprep.subr.mxu0 0.0
        %3297 = vmatpush1.msra.mxu0 0.0
        %3298 = vmatprep.subr.mxu0 0.0
        %3299 = vmatpush1.msra.mxu0 0.0
        %3300 = vmatprep.subr.mxu0 0.0
        %3301 = vmatpush1.msra.mxu0 0.0
        %3302 = vmatprep.subr.mxu0 0.0
        %3303 = vmatpush1.msra.mxu0 0.0
        %3304 = vmatprep.subr.mxu0 0.0
        %3305 = vmatpush1.msra.mxu0 0.0
        %3306 = vmatprep.subr.mxu0 0.0
        %3307 = vmatpush1.msra.mxu0 0.0
        %3308 = vmatprep.subr.mxu0 0.0
        %3309 = vmatpush1.msra.mxu0 0.0
        %3310 = vmatprep.subr.mxu0 0.0
        %3311 = vmatpush1.msra.mxu0 0.0
        %3312 = vmatprep.subr.mxu0 0.0
        %3313 = vmatpush1.msra.mxu0 0.0
        %3314 = vmatprep.subr.mxu0 0.0
        %3315 = vmatpush1.msra.mxu0 0.0
        %3316 = vmatprep.subr.mxu0 0.0
        %3317 = vmatpush1.msra.mxu0 0.0
        %3318 = vmatprep.subr.mxu0 0.0
        %3319 = vmatpush1.msra.mxu0 0.0
        %3320 = vmatprep.subr.mxu0 0.0
        %3321 = vmatpush1.msra.mxu0 0.0
        %3322 = vmatprep.subr.mxu0 0.0
        %3323 = vmatpush1.msra.mxu0 0.0
        %3324 = vmatprep.mubr.f32.mxu0 0.0
        %3325 = vmatmul.mubr.f32.gmra.mrb[0].mxu0 %v1475
        %v3326 = vpop.f32.mrb[0].mxu0
        %v3327 = vadd.f32 0.0, %v3326
        %v3328 = vpop.f32.mrb[0].mxu0
        %3329 = vmatprep.mubr.f32.mxu0 0.0
        %3330 = vmatmul.mubr.f32.gmra.mrb[0].mxu0 %v1478
        %v3331 = vpop.f32.mrb[0].mxu0
        %v3332 = vadd.f32 0.0, %v3331
        %v3333 = vpop.f32.mrb[0].mxu0
        %3334 = vmatprep.mubr.f32.mxu0 0.0
        %3335 = vmatmul.mubr.f32.gmra.mrb[0].mxu0 %v1481
        %v3336 = vpop.f32.mrb[0].mxu0
        %v3337 = vadd.f32 0.0, %v3336
        %v3338 = vpop.f32.mrb[0].mxu0
        %3339 = vmatprep.mubr.f32.mxu0 0.0
        %3340 = vmatmul.mubr.f32.gmra.mrb[0].mxu0 %v1484
        %v3341 = vpop.f32.mrb[0].mxu0
        %v3342 = vadd.f32 0.0, %v3341
        %v3343 = vpop.f32.mrb[0].mxu0
        %3344 = vdwg.mxu0
        %v3345 = vadd.f32 %v3157, %v3327
        %v3346 = vadd.f32 %v3162, %v3332
        %v3347 = vadd.f32 %v3167, %v3337
        %v3348 = vadd.f32 %v3172, %v3342
        %3349 = vmatprep.subr.mxu0 0.0
        %3350 = vmatpush1.msra.mxu0 %v1576
        %3351 = vmatprep.subr.mxu0 0.0
        %3352 = vmatpush1.msra.mxu0 %v1577
        %3353 = vmatprep.subr.mxu0 0.0
        %3354 = vmatpush1.msra.mxu0 %v1578
        %3355 = vmatprep.subr.mxu0 0.0
        %3356 = vmatpush1.msra.mxu0 %v1579
        %3357 = vmatprep.subr.mxu0 0.0
        %3358 = vmatpush1.msra.mxu0 %v1580
        %3359 = vmatprep.subr.mxu0 0.0
        %3360 = vmatpush1.msra.mxu0 %v1581
        %3361 = vmatprep.subr.mxu0 0.0
        %3362 = vmatpush1.msra.mxu0 %v1582
        %3363 = vmatprep.subr.mxu0 0.0
        %3364 = vmatpush1.msra.mxu0 %v1583
        %3365 = vmatprep.subr.mxu0 0.0
        %3366 = vmatpush1.msra.mxu0 %v1584
        %3367 = vmatprep.subr.mxu0 0.0
        %3368 = vmatpush1.msra.mxu0 %v1585
        %3369 = vmatprep.subr.mxu0 0.0
        %3370 = vmatpush1.msra.mxu0 %v1588
        %3371 = vmatprep.subr.mxu0 0.0
        %3372 = vmatpush1.msra.mxu0 0.0
        %3373 = vmatprep.subr.mxu0 0.0
        %3374 = vmatpush1.msra.mxu0 0.0
        %3375 = vmatprep.subr.mxu0 0.0
        %3376 = vmatpush1.msra.mxu0 0.0
        %3377 = vmatprep.subr.mxu0 0.0
        %3378 = vmatpush1.msra.mxu0 0.0
        %3379 = vmatprep.subr.mxu0 0.0
        %3380 = vmatpush1.msra.mxu0 0.0
        %3381 = vmatprep.subr.mxu0 0.0
        %3382 = vmatpush1.msra.mxu0 0.0
        %3383 = vmatprep.subr.mxu0 0.0
        %3384 = vmatpush1.msra.mxu0 0.0
        %3385 = vmatprep.subr.mxu0 0.0
        %3386 = vmatpush1.msra.mxu0 0.0
        %3387 = vmatprep.subr.mxu0 0.0
        %3388 = vmatpush1.msra.mxu0 0.0
        %3389 = vmatprep.subr.mxu0 0.0
        %3390 = vmatpush1.msra.mxu0 0.0
        %3391 = vmatprep.subr.mxu0 0.0
        %3392 = vmatpush1.msra.mxu0 0.0
        %3393 = vmatprep.subr.mxu0 0.0
        %3394 = vmatpush1.msra.mxu0 0.0
        %3395 = vmatprep.subr.mxu0 0.0
        %3396 = vmatpush1.msra.mxu0 0.0
        %3397 = vmatprep.subr.mxu0 0.0
        %3398 = vmatpush1.msra.mxu0 0.0
        %3399 = vmatprep.subr.mxu0 0.0
        %3400 = vmatpush1.msra.mxu0 0.0
        %3401 = vmatprep.subr.mxu0 0.0
        %3402 = vmatpush1.msra.mxu0 0.0
        %3403 = vmatprep.subr.mxu0 0.0
        %3404 = vmatpush1.msra.mxu0 0.0
        %3405 = vmatprep.subr.mxu0 0.0
        %3406 = vmatpush1.msra.mxu0 0.0
        %3407 = vmatprep.subr.mxu0 0.0
        %3408 = vmatpush1.msra.mxu0 0.0
        %3409 = vmatprep.subr.mxu0 0.0
        %3410 = vmatpush1.msra.mxu0 0.0
        %3411 = vmatprep.subr.mxu0 0.0
        %3412 = vmatpush1.msra.mxu0 0.0
        %3413 = vmatprep.mubr.f32.mxu0 0.0
        %3414 = vmatmul.mubr.f32.gmra.mrb[0].mxu0 %v2824
        %v3415 = vpop.f32.mrb[0].mxu0
        %v3416 = vadd.f32 0.0, %v3415
        %v3417 = vpop.f32.mrb[0].mxu0
        %3418 = vmatprep.mubr.f32.mxu0 0.0
        %3419 = vmatmul.mubr.f32.gmra.mrb[0].mxu0 %v2827
        %v3420 = vpop.f32.mrb[0].mxu0
        %v3421 = vadd.f32 0.0, %v3420
        %v3422 = vpop.f32.mrb[0].mxu0
        %3423 = vmatprep.mubr.f32.mxu0 0.0
        %3424 = vmatmul.mubr.f32.gmra.mrb[0].mxu0 %v2830
        %v3425 = vpop.f32.mrb[0].mxu0
        %v3426 = vadd.f32 0.0, %v3425
        %v3427 = vpop.f32.mrb[0].mxu0
        %3428 = vmatprep.mubr.f32.mxu0 0.0
        %3429 = vmatmul.mubr.f32.gmra.mrb[0].mxu0 %v2833
        %v3430 = vpop.f32.mrb[0].mxu0
        %v3431 = vadd.f32 0.0, %v3430
        %v3432 = vpop.f32.mrb[0].mxu0
        %3433 = vdwg.mxu0
        %3434 = vmatprep.subr.mxu0 0.0
        %3435 = vmatpush1.msra.mxu0 %v3416
        %3436 = vmatprep.subr.mxu0 0.0
        %3437 = vmatpush1.msra.mxu0 %v3421
        %3438 = vmatprep.subr.mxu0 0.0
        %3439 = vmatpush1.msra.mxu0 %v3426
        %3440 = vmatprep.subr.mxu0 0.0
        %3441 = vmatpush1.msra.mxu0 %v3431
        %3442 = vmatprep.subr.mxu0 0.0
        %3443 = vmatpush1.msra.mxu0 0.0
        %3444 = vmatprep.subr.mxu0 0.0
        %3445 = vmatpush1.msra.mxu0 0.0
        %3446 = vmatprep.subr.mxu0 0.0
        %3447 = vmatpush1.msra.mxu0 0.0
        %3448 = vmatprep.subr.mxu0 0.0
        %3449 = vmatpush1.msra.mxu0 0.0
        %3450 = vmatprep.subr.mxu0 0.0
        %3451 = vmatpush1.msra.mxu0 0.0
        %3452 = vmatprep.subr.mxu0 0.0
        %3453 = vmatpush1.msra.mxu0 0.0
        %3454 = vmatprep.subr.mxu0 0.0
        %3455 = vmatpush1.msra.mxu0 0.0
        %3456 = vmatprep.subr.mxu0 0.0
        %3457 = vmatpush1.msra.mxu0 0.0
        %3458 = vmatprep.subr.mxu0 0.0
        %3459 = vmatpush1.msra.mxu0 0.0
        %3460 = vmatprep.subr.mxu0 0.0
        %3461 = vmatpush1.msra.mxu0 0.0
        %3462 = vmatprep.subr.mxu0 0.0
        %3463 = vmatpush1.msra.mxu0 0.0
        %3464 = vmatprep.subr.mxu0 0.0
        %3465 = vmatpush1.msra.mxu0 0.0
        %3466 = vmatprep.subr.mxu0 0.0
        %3467 = vmatpush1.msra.mxu0 0.0
        %3468 = vmatprep.subr.mxu0 0.0
        %3469 = vmatpush1.msra.mxu0 0.0
        %3470 = vmatprep.subr.mxu0 0.0
        %3471 = vmatpush1.msra.mxu0 0.0
        %3472 = vmatprep.subr.mxu0 0.0
        %3473 = vmatpush1.msra.mxu0 0.0
        %3474 = vmatprep.subr.mxu0 0.0
        %3475 = vmatpush1.msra.mxu0 0.0
        %3476 = vmatprep.subr.mxu0 0.0
        %3477 = vmatpush1.msra.mxu0 0.0
        %3478 = vmatprep.subr.mxu0 0.0
        %3479 = vmatpush1.msra.mxu0 0.0
        %3480 = vmatprep.subr.mxu0 0.0
        %3481 = vmatpush1.msra.mxu0 0.0
        %3482 = vmatprep.subr.mxu0 0.0
        %3483 = vmatpush1.msra.mxu0 0.0
        %3484 = vmatprep.subr.mxu0 0.0
        %3485 = vmatpush1.msra.mxu0 0.0
        %3486 = vmatprep.subr.mxu0 0.0
        %3487 = vmatpush1.msra.mxu0 0.0
        %3488 = vmatprep.subr.mxu0 0.0
        %3489 = vmatpush1.msra.mxu0 0.0
        %3490 = vmatprep.subr.mxu0 0.0
        %3491 = vmatpush1.msra.mxu0 0.0
        %3492 = vmatprep.subr.mxu0 0.0
        %3493 = vmatpush1.msra.mxu0 0.0
        %3494 = vmatprep.subr.mxu0 0.0
        %3495 = vmatpush1.msra.mxu0 0.0
        %3496 = vmatprep.subr.mxu0 0.0
        %3497 = vmatpush1.msra.mxu0 0.0
        %3498 = vmatprep.mubr.f32.mxu0 0.0
        %3499 = vmatmul.mubr.f32.gmra.mrb[0].mxu0 %v1681
        %v3500 = vpop.f32.mrb[0].mxu0
        %v3501 = vadd.f32 0.0, %v3500
        %v3502 = vpop.f32.mrb[0].mxu0
        %3503 = vmatprep.mubr.f32.mxu0 0.0
        %3504 = vmatmul.mubr.f32.gmra.mrb[0].mxu0 %v1684
        %v3505 = vpop.f32.mrb[0].mxu0
        %v3506 = vadd.f32 0.0, %v3505
        %v3507 = vpop.f32.mrb[0].mxu0
        %3508 = vmatprep.mubr.f32.mxu0 0.0
        %3509 = vmatmul.mubr.f32.gmra.mrb[0].mxu0 %v1687
        %v3510 = vpop.f32.mrb[0].mxu0
        %v3511 = vadd.f32 0.0, %v3510
        %v3512 = vpop.f32.mrb[0].mxu0
        %3513 = vmatprep.mubr.f32.mxu0 0.0
        %3514 = vmatmul.mubr.f32.gmra.mrb[0].mxu0 %v1690
        %v3515 = vpop.f32.mrb[0].mxu0
        %v3516 = vadd.f32 0.0, %v3515
        %v3517 = vpop.f32.mrb[0].mxu0
        %3518 = vdwg.mxu0
        %v3519 = vadd.f32 %v3345, %v3501
        %v3520 = vadd.f32 %v3346, %v3506
        %v3521 = vadd.f32 %v3347, %v3511
        %v3522 = vadd.f32 %v3348, %v3516
        %3523 = vmatprep.subr.mxu0 0.0
        %3524 = vmatpush1.msra.mxu0 %v1782
        %3525 = vmatprep.subr.mxu0 0.0
        %3526 = vmatpush1.msra.mxu0 %v1783
        %3527 = vmatprep.subr.mxu0 0.0
        %3528 = vmatpush1.msra.mxu0 %v1784
        %3529 = vmatprep.subr.mxu0 0.0
        %3530 = vmatpush1.msra.mxu0 %v1785
        %3531 = vmatprep.subr.mxu0 0.0
        %3532 = vmatpush1.msra.mxu0 %v1786
        %3533 = vmatprep.subr.mxu0 0.0
        %3534 = vmatpush1.msra.mxu0 %v1787
        %3535 = vmatprep.subr.mxu0 0.0
        %3536 = vmatpush1.msra.mxu0 %v1788
        %3537 = vmatprep.subr.mxu0 0.0
        %3538 = vmatpush1.msra.mxu0 %v1789
        %3539 = vmatprep.subr.mxu0 0.0
        %3540 = vmatpush1.msra.mxu0 %v1790
        %3541 = vmatprep.subr.mxu0 0.0
        %3542 = vmatpush1.msra.mxu0 %v1791
        %3543 = vmatprep.subr.mxu0 0.0
        %3544 = vmatpush1.msra.mxu0 %v1794
        %3545 = vmatprep.subr.mxu0 0.0
        %3546 = vmatpush1.msra.mxu0 0.0
        %3547 = vmatprep.subr.mxu0 0.0
        %3548 = vmatpush1.msra.mxu0 0.0
        %3549 = vmatprep.subr.mxu0 0.0
        %3550 = vmatpush1.msra.mxu0 0.0
        %3551 = vmatprep.subr.mxu0 0.0
        %3552 = vmatpush1.msra.mxu0 0.0
        %3553 = vmatprep.subr.mxu0 0.0
        %3554 = vmatpush1.msra.mxu0 0.0
        %3555 = vmatprep.subr.mxu0 0.0
        %3556 = vmatpush1.msra.mxu0 0.0
        %3557 = vmatprep.subr.mxu0 0.0
        %3558 = vmatpush1.msra.mxu0 0.0
        %3559 = vmatprep.subr.mxu0 0.0
        %3560 = vmatpush1.msra.mxu0 0.0
        %3561 = vmatprep.subr.mxu0 0.0
        %3562 = vmatpush1.msra.mxu0 0.0
        %3563 = vmatprep.subr.mxu0 0.0
        %3564 = vmatpush1.msra.mxu0 0.0
        %3565 = vmatprep.subr.mxu0 0.0
        %3566 = vmatpush1.msra.mxu0 0.0
        %3567 = vmatprep.subr.mxu0 0.0
        %3568 = vmatpush1.msra.mxu0 0.0
        %3569 = vmatprep.subr.mxu0 0.0
        %3570 = vmatpush1.msra.mxu0 0.0
        %3571 = vmatprep.subr.mxu0 0.0
        %3572 = vmatpush1.msra.mxu0 0.0
        %3573 = vmatprep.subr.mxu0 0.0
        %3574 = vmatpush1.msra.mxu0 0.0
        %3575 = vmatprep.subr.mxu0 0.0
        %3576 = vmatpush1.msra.mxu0 0.0
        %3577 = vmatprep.subr.mxu0 0.0
        %3578 = vmatpush1.msra.mxu0 0.0
        %3579 = vmatprep.subr.mxu0 0.0
        %3580 = vmatpush1.msra.mxu0 0.0
        %3581 = vmatprep.subr.mxu0 0.0
        %3582 = vmatpush1.msra.mxu0 0.0
        %3583 = vmatprep.subr.mxu0 0.0
        %3584 = vmatpush1.msra.mxu0 0.0
        %3585 = vmatprep.subr.mxu0 0.0
        %3586 = vmatpush1.msra.mxu0 0.0
        %3587 = vmatprep.mubr.f32.mxu0 0.0
        %3588 = vmatmul.mubr.f32.gmra.mrb[0].mxu0 %v2824
        %v3589 = vpop.f32.mrb[0].mxu0
        %v3590 = vadd.f32 0.0, %v3589
        %v3591 = vpop.f32.mrb[0].mxu0
        %3592 = vmatprep.mubr.f32.mxu0 0.0
        %3593 = vmatmul.mubr.f32.gmra.mrb[0].mxu0 %v2827
        %v3594 = vpop.f32.mrb[0].mxu0
        %v3595 = vadd.f32 0.0, %v3594
        %v3596 = vpop.f32.mrb[0].mxu0
        %3597 = vmatprep.mubr.f32.mxu0 0.0
        %3598 = vmatmul.mubr.f32.gmra.mrb[0].mxu0 %v2830
        %v3599 = vpop.f32.mrb[0].mxu0
        %v3600 = vadd.f32 0.0, %v3599
        %v3601 = vpop.f32.mrb[0].mxu0
        %3602 = vmatprep.mubr.f32.mxu0 0.0
        %3603 = vmatmul.mubr.f32.gmra.mrb[0].mxu0 %v2833
        %v3604 = vpop.f32.mrb[0].mxu0
        %v3605 = vadd.f32 0.0, %v3604
        %v3606 = vpop.f32.mrb[0].mxu0
        %3607 = vdwg.mxu0
        %3608 = vmatprep.subr.mxu0 0.0
        %3609 = vmatpush1.msra.mxu0 %v3590
        %3610 = vmatprep.subr.mxu0 0.0
        %3611 = vmatpush1.msra.mxu0 %v3595
        %3612 = vmatprep.subr.mxu0 0.0
        %3613 = vmatpush1.msra.mxu0 %v3600
        %3614 = vmatprep.subr.mxu0 0.0
        %3615 = vmatpush1.msra.mxu0 %v3605
        %3616 = vmatprep.subr.mxu0 0.0
        %3617 = vmatpush1.msra.mxu0 0.0
        %3618 = vmatprep.subr.mxu0 0.0
        %3619 = vmatpush1.msra.mxu0 0.0
        %3620 = vmatprep.subr.mxu0 0.0
        %3621 = vmatpush1.msra.mxu0 0.0
        %3622 = vmatprep.subr.mxu0 0.0
        %3623 = vmatpush1.msra.mxu0 0.0
        %3624 = vmatprep.subr.mxu0 0.0
        %3625 = vmatpush1.msra.mxu0 0.0
        %3626 = vmatprep.subr.mxu0 0.0
        %3627 = vmatpush1.msra.mxu0 0.0
        %3628 = vmatprep.subr.mxu0 0.0
        %3629 = vmatpush1.msra.mxu0 0.0
        %3630 = vmatprep.subr.mxu0 0.0
        %3631 = vmatpush1.msra.mxu0 0.0
        %3632 = vmatprep.subr.mxu0 0.0
        %3633 = vmatpush1.msra.mxu0 0.0
        %3634 = vmatprep.subr.mxu0 0.0
        %3635 = vmatpush1.msra.mxu0 0.0
        %3636 = vmatprep.subr.mxu0 0.0
        %3637 = vmatpush1.msra.mxu0 0.0
        %3638 = vmatprep.subr.mxu0 0.0
        %3639 = vmatpush1.msra.mxu0 0.0
        %3640 = vmatprep.subr.mxu0 0.0
        %3641 = vmatpush1.msra.mxu0 0.0
        %3642 = vmatprep.subr.mxu0 0.0
        %3643 = vmatpush1.msra.mxu0 0.0
        %3644 = vmatprep.subr.mxu0 0.0
        %3645 = vmatpush1.msra.mxu0 0.0
        %3646 = vmatprep.subr.mxu0 0.0
        %3647 = vmatpush1.msra.mxu0 0.0
        %3648 = vmatprep.subr.mxu0 0.0
        %3649 = vmatpush1.msra.mxu0 0.0
        %3650 = vmatprep.subr.mxu0 0.0
        %3651 = vmatpush1.msra.mxu0 0.0
        %3652 = vmatprep.subr.mxu0 0.0
        %3653 = vmatpush1.msra.mxu0 0.0
        %3654 = vmatprep.subr.mxu0 0.0
        %3655 = vmatpush1.msra.mxu0 0.0
        %3656 = vmatprep.subr.mxu0 0.0
        %3657 = vmatpush1.msra.mxu0 0.0
        %3658 = vmatprep.subr.mxu0 0.0
        %3659 = vmatpush1.msra.mxu0 0.0
        %3660 = vmatprep.subr.mxu0 0.0
        %3661 = vmatpush1.msra.mxu0 0.0
        %3662 = vmatprep.subr.mxu0 0.0
        %3663 = vmatpush1.msra.mxu0 0.0
        %3664 = vmatprep.subr.mxu0 0.0
        %3665 = vmatpush1.msra.mxu0 0.0
        %3666 = vmatprep.subr.mxu0 0.0
        %3667 = vmatpush1.msra.mxu0 0.0
        %3668 = vmatprep.subr.mxu0 0.0
        %3669 = vmatpush1.msra.mxu0 0.0
        %3670 = vmatprep.subr.mxu0 0.0
        %3671 = vmatpush1.msra.mxu0 0.0
        %3672 = vmatprep.mubr.f32.mxu0 0.0
        %3673 = vmatmul.mubr.f32.gmra.mrb[0].mxu0 %v1887
        %v3674 = vpop.f32.mrb[0].mxu0
        %v3675 = vadd.f32 0.0, %v3674
        %v3676 = vpop.f32.mrb[0].mxu0
        %3677 = vmatprep.mubr.f32.mxu0 0.0
        %3678 = vmatmul.mubr.f32.gmra.mrb[0].mxu0 %v1890
        %v3679 = vpop.f32.mrb[0].mxu0
        %v3680 = vadd.f32 0.0, %v3679
        %v3681 = vpop.f32.mrb[0].mxu0
        %3682 = vmatprep.mubr.f32.mxu0 0.0
        %3683 = vmatmul.mubr.f32.gmra.mrb[0].mxu0 %v1893
        %v3684 = vpop.f32.mrb[0].mxu0
        %v3685 = vadd.f32 0.0, %v3684
        %v3686 = vpop.f32.mrb[0].mxu0
        %3687 = vmatprep.mubr.f32.mxu0 0.0
        %3688 = vmatmul.mubr.f32.gmra.mrb[0].mxu0 %v1896
        %v3689 = vpop.f32.mrb[0].mxu0
        %v3690 = vadd.f32 0.0, %v3689
        %v3691 = vpop.f32.mrb[0].mxu0
        %3692 = vdwg.mxu0
        %v3693 = vadd.f32 %v3519, %v3675
        %v3694 = vadd.f32 %v3520, %v3680
        %v3695 = vadd.f32 %v3521, %v3685
        %v3696 = vadd.f32 %v3522, %v3690
        %3697 = vmatprep.subr.mxu0 0.0
        %3698 = vmatpush1.msra.mxu0 %v1988
        %3699 = vmatprep.subr.mxu0 0.0
        %3700 = vmatpush1.msra.mxu0 %v1989
        %3701 = vmatprep.subr.mxu0 0.0
        %3702 = vmatpush1.msra.mxu0 %v1990
        %3703 = vmatprep.subr.mxu0 0.0
        %3704 = vmatpush1.msra.mxu0 %v1991
        %3705 = vmatprep.subr.mxu0 0.0
        %3706 = vmatpush1.msra.mxu0 %v1992
        %3707 = vmatprep.subr.mxu0 0.0
        %3708 = vmatpush1.msra.mxu0 %v1993
        %3709 = vmatprep.subr.mxu0 0.0
        %3710 = vmatpush1.msra.mxu0 %v1994
        %3711 = vmatprep.subr.mxu0 0.0
        %3712 = vmatpush1.msra.mxu0 %v1995
        %3713 = vmatprep.subr.mxu0 0.0
        %3714 = vmatpush1.msra.mxu0 %v1996
        %3715 = vmatprep.subr.mxu0 0.0
        %3716 = vmatpush1.msra.mxu0 %v1997
        %3717 = vmatprep.subr.mxu0 0.0
        %3718 = vmatpush1.msra.mxu0 %v2000
        %3719 = vmatprep.subr.mxu0 0.0
        %3720 = vmatpush1.msra.mxu0 0.0
        %3721 = vmatprep.subr.mxu0 0.0
        %3722 = vmatpush1.msra.mxu0 0.0
        %3723 = vmatprep.subr.mxu0 0.0
        %3724 = vmatpush1.msra.mxu0 0.0
        %3725 = vmatprep.subr.mxu0 0.0
        %3726 = vmatpush1.msra.mxu0 0.0
        %3727 = vmatprep.subr.mxu0 0.0
        %3728 = vmatpush1.msra.mxu0 0.0
        %3729 = vmatprep.subr.mxu0 0.0
        %3730 = vmatpush1.msra.mxu0 0.0
        %3731 = vmatprep.subr.mxu0 0.0
        %3732 = vmatpush1.msra.mxu0 0.0
        %3733 = vmatprep.subr.mxu0 0.0
        %3734 = vmatpush1.msra.mxu0 0.0
        %3735 = vmatprep.subr.mxu0 0.0
        %3736 = vmatpush1.msra.mxu0 0.0
        %3737 = vmatprep.subr.mxu0 0.0
        %3738 = vmatpush1.msra.mxu0 0.0
        %3739 = vmatprep.subr.mxu0 0.0
        %3740 = vmatpush1.msra.mxu0 0.0
        %3741 = vmatprep.subr.mxu0 0.0
        %3742 = vmatpush1.msra.mxu0 0.0
        %3743 = vmatprep.subr.mxu0 0.0
        %3744 = vmatpush1.msra.mxu0 0.0
        %3745 = vmatprep.subr.mxu0 0.0
        %3746 = vmatpush1.msra.mxu0 0.0
        %3747 = vmatprep.subr.mxu0 0.0
        %3748 = vmatpush1.msra.mxu0 0.0
        %3749 = vmatprep.subr.mxu0 0.0
        %3750 = vmatpush1.msra.mxu0 0.0
        %3751 = vmatprep.subr.mxu0 0.0
        %3752 = vmatpush1.msra.mxu0 0.0
        %3753 = vmatprep.subr.mxu0 0.0
        %3754 = vmatpush1.msra.mxu0 0.0
        %3755 = vmatprep.subr.mxu0 0.0
        %3756 = vmatpush1.msra.mxu0 0.0
        %3757 = vmatprep.subr.mxu0 0.0
        %3758 = vmatpush1.msra.mxu0 0.0
        %3759 = vmatprep.subr.mxu0 0.0
        %3760 = vmatpush1.msra.mxu0 0.0
        %3761 = vmatprep.mubr.f32.mxu0 0.0
        %3762 = vmatmul.mubr.f32.gmra.mrb[0].mxu0 %v2824
        %v3763 = vpop.f32.mrb[0].mxu0
        %v3764 = vadd.f32 0.0, %v3763
        %v3765 = vpop.f32.mrb[0].mxu0
        %3766 = vmatprep.mubr.f32.mxu0 0.0
        %3767 = vmatmul.mubr.f32.gmra.mrb[0].mxu0 %v2827
        %v3768 = vpop.f32.mrb[0].mxu0
        %v3769 = vadd.f32 0.0, %v3768
        %v3770 = vpop.f32.mrb[0].mxu0
        %3771 = vmatprep.mubr.f32.mxu0 0.0
        %3772 = vmatmul.mubr.f32.gmra.mrb[0].mxu0 %v2830
        %v3773 = vpop.f32.mrb[0].mxu0
        %v3774 = vadd.f32 0.0, %v3773
        %v3775 = vpop.f32.mrb[0].mxu0
        %3776 = vmatprep.mubr.f32.mxu0 0.0
        %3777 = vmatmul.mubr.f32.gmra.mrb[0].mxu0 %v2833
        %v3778 = vpop.f32.mrb[0].mxu0
        %v3779 = vadd.f32 0.0, %v3778
        %v3780 = vpop.f32.mrb[0].mxu0
        %3781 = vdwg.mxu0
        %3782 = vmatprep.subr.mxu0 0.0
        %3783 = vmatpush1.msra.mxu0 %v3764
        %3784 = vmatprep.subr.mxu0 0.0
        %3785 = vmatpush1.msra.mxu0 %v3769
        %3786 = vmatprep.subr.mxu0 0.0
        %3787 = vmatpush1.msra.mxu0 %v3774
        %3788 = vmatprep.subr.mxu0 0.0
        %3789 = vmatpush1.msra.mxu0 %v3779
        %3790 = vmatprep.subr.mxu0 0.0
        %3791 = vmatpush1.msra.mxu0 0.0
        %3792 = vmatprep.subr.mxu0 0.0
        %3793 = vmatpush1.msra.mxu0 0.0
        %3794 = vmatprep.subr.mxu0 0.0
        %3795 = vmatpush1.msra.mxu0 0.0
        %3796 = vmatprep.subr.mxu0 0.0
        %3797 = vmatpush1.msra.mxu0 0.0
        %3798 = vmatprep.subr.mxu0 0.0
        %3799 = vmatpush1.msra.mxu0 0.0
        %3800 = vmatprep.subr.mxu0 0.0
        %3801 = vmatpush1.msra.mxu0 0.0
        %3802 = vmatprep.subr.mxu0 0.0
        %3803 = vmatpush1.msra.mxu0 0.0
        %3804 = vmatprep.subr.mxu0 0.0
        %3805 = vmatpush1.msra.mxu0 0.0
        %3806 = vmatprep.subr.mxu0 0.0
        %3807 = vmatpush1.msra.mxu0 0.0
        %3808 = vmatprep.subr.mxu0 0.0
        %3809 = vmatpush1.msra.mxu0 0.0
        %3810 = vmatprep.subr.mxu0 0.0
        %3811 = vmatpush1.msra.mxu0 0.0
        %3812 = vmatprep.subr.mxu0 0.0
        %3813 = vmatpush1.msra.mxu0 0.0
        %3814 = vmatprep.subr.mxu0 0.0
        %3815 = vmatpush1.msra.mxu0 0.0
        %3816 = vmatprep.subr.mxu0 0.0
        %3817 = vmatpush1.msra.mxu0 0.0
        %3818 = vmatprep.subr.mxu0 0.0
        %3819 = vmatpush1.msra.mxu0 0.0
        %3820 = vmatprep.subr.mxu0 0.0
        %3821 = vmatpush1.msra.mxu0 0.0
        %3822 = vmatprep.subr.mxu0 0.0
        %3823 = vmatpush1.msra.mxu0 0.0
        %3824 = vmatprep.subr.mxu0 0.0
        %3825 = vmatpush1.msra.mxu0 0.0
        %3826 = vmatprep.subr.mxu0 0.0
        %3827 = vmatpush1.msra.mxu0 0.0
        %3828 = vmatprep.subr.mxu0 0.0
        %3829 = vmatpush1.msra.mxu0 0.0
        %3830 = vmatprep.subr.mxu0 0.0
        %3831 = vmatpush1.msra.mxu0 0.0
        %3832 = vmatprep.subr.mxu0 0.0
        %3833 = vmatpush1.msra.mxu0 0.0
        %3834 = vmatprep.subr.mxu0 0.0
        %3835 = vmatpush1.msra.mxu0 0.0
        %3836 = vmatprep.subr.mxu0 0.0
        %3837 = vmatpush1.msra.mxu0 0.0
        %3838 = vmatprep.subr.mxu0 0.0
        %3839 = vmatpush1.msra.mxu0 0.0
        %3840 = vmatprep.subr.mxu0 0.0
        %3841 = vmatpush1.msra.mxu0 0.0
        %3842 = vmatprep.subr.mxu0 0.0
        %3843 = vmatpush1.msra.mxu0 0.0
        %3844 = vmatprep.subr.mxu0 0.0
        %3845 = vmatpush1.msra.mxu0 0.0
        %3846 = vmatprep.mubr.f32.mxu0 0.0
        %3847 = vmatmul.mubr.f32.gmra.mrb[0].mxu0 %v2093
        %v3848 = vpop.f32.mrb[0].mxu0
        %v3849 = vadd.f32 0.0, %v3848
        %v3850 = vpop.f32.mrb[0].mxu0
        %3851 = vmatprep.mubr.f32.mxu0 0.0
        %3852 = vmatmul.mubr.f32.gmra.mrb[0].mxu0 %v2096
        %v3853 = vpop.f32.mrb[0].mxu0
        %v3854 = vadd.f32 0.0, %v3853
        %v3855 = vpop.f32.mrb[0].mxu0
        %3856 = vmatprep.mubr.f32.mxu0 0.0
        %3857 = vmatmul.mubr.f32.gmra.mrb[0].mxu0 %v2099
        %v3858 = vpop.f32.mrb[0].mxu0
        %v3859 = vadd.f32 0.0, %v3858
        %v3860 = vpop.f32.mrb[0].mxu0
        %3861 = vmatprep.mubr.f32.mxu0 0.0
        %3862 = vmatmul.mubr.f32.gmra.mrb[0].mxu0 %v2102
        %v3863 = vpop.f32.mrb[0].mxu0
        %v3864 = vadd.f32 0.0, %v3863
        %v3865 = vpop.f32.mrb[0].mxu0
        %3866 = vdwg.mxu0
        %v3867 = vadd.f32 %v3693, %v3849
        %v3868 = vadd.f32 %v3694, %v3854
        %v3869 = vadd.f32 %v3695, %v3859
        %v3870 = vadd.f32 %v3696, %v3864
        %3871 = vmatprep.subr.mxu0 0.0
        %3872 = vmatpush1.msra.mxu0 %v2194
        %3873 = vmatprep.subr.mxu0 0.0
        %3874 = vmatpush1.msra.mxu0 %v2195
        %3875 = vmatprep.subr.mxu0 0.0
        %3876 = vmatpush1.msra.mxu0 %v2196
        %3877 = vmatprep.subr.mxu0 0.0
        %3878 = vmatpush1.msra.mxu0 %v2197
        %3879 = vmatprep.subr.mxu0 0.0
        %3880 = vmatpush1.msra.mxu0 %v2198
        %3881 = vmatprep.subr.mxu0 0.0
        %3882 = vmatpush1.msra.mxu0 %v2199
        %3883 = vmatprep.subr.mxu0 0.0
        %3884 = vmatpush1.msra.mxu0 %v2200
        %3885 = vmatprep.subr.mxu0 0.0
        %3886 = vmatpush1.msra.mxu0 %v2201
        %3887 = vmatprep.subr.mxu0 0.0
        %3888 = vmatpush1.msra.mxu0 %v2202
        %3889 = vmatprep.subr.mxu0 0.0
        %3890 = vmatpush1.msra.mxu0 %v2203
        %3891 = vmatprep.subr.mxu0 0.0
        %3892 = vmatpush1.msra.mxu0 %v2206
        %3893 = vmatprep.subr.mxu0 0.0
        %3894 = vmatpush1.msra.mxu0 0.0
        %3895 = vmatprep.subr.mxu0 0.0
        %3896 = vmatpush1.msra.mxu0 0.0
        %3897 = vmatprep.subr.mxu0 0.0
        %3898 = vmatpush1.msra.mxu0 0.0
        %3899 = vmatprep.subr.mxu0 0.0
        %3900 = vmatpush1.msra.mxu0 0.0
        %3901 = vmatprep.subr.mxu0 0.0
        %3902 = vmatpush1.msra.mxu0 0.0
        %3903 = vmatprep.subr.mxu0 0.0
        %3904 = vmatpush1.msra.mxu0 0.0
        %3905 = vmatprep.subr.mxu0 0.0
        %3906 = vmatpush1.msra.mxu0 0.0
        %3907 = vmatprep.subr.mxu0 0.0
        %3908 = vmatpush1.msra.mxu0 0.0
        %3909 = vmatprep.subr.mxu0 0.0
        %3910 = vmatpush1.msra.mxu0 0.0
        %3911 = vmatprep.subr.mxu0 0.0
        %3912 = vmatpush1.msra.mxu0 0.0
        %3913 = vmatprep.subr.mxu0 0.0
        %3914 = vmatpush1.msra.mxu0 0.0
        %3915 = vmatprep.subr.mxu0 0.0
        %3916 = vmatpush1.msra.mxu0 0.0
        %3917 = vmatprep.subr.mxu0 0.0
        %3918 = vmatpush1.msra.mxu0 0.0
        %3919 = vmatprep.subr.mxu0 0.0
        %3920 = vmatpush1.msra.mxu0 0.0
        %3921 = vmatprep.subr.mxu0 0.0
        %3922 = vmatpush1.msra.mxu0 0.0
        %3923 = vmatprep.subr.mxu0 0.0
        %3924 = vmatpush1.msra.mxu0 0.0
        %3925 = vmatprep.subr.mxu0 0.0
        %3926 = vmatpush1.msra.mxu0 0.0
        %3927 = vmatprep.subr.mxu0 0.0
        %3928 = vmatpush1.msra.mxu0 0.0
        %3929 = vmatprep.subr.mxu0 0.0
        %3930 = vmatpush1.msra.mxu0 0.0
        %3931 = vmatprep.subr.mxu0 0.0
        %3932 = vmatpush1.msra.mxu0 0.0
        %3933 = vmatprep.subr.mxu0 0.0
        %3934 = vmatpush1.msra.mxu0 0.0
        %3935 = vmatprep.mubr.f32.mxu0 0.0
        %3936 = vmatmul.mubr.f32.gmra.mrb[0].mxu0 %v2824
        %v3937 = vpop.f32.mrb[0].mxu0
        %v3938 = vadd.f32 0.0, %v3937
        %v3939 = vpop.f32.mrb[0].mxu0
        %3940 = vmatprep.mubr.f32.mxu0 0.0
        %3941 = vmatmul.mubr.f32.gmra.mrb[0].mxu0 %v2827
        %v3942 = vpop.f32.mrb[0].mxu0
        %v3943 = vadd.f32 0.0, %v3942
        %v3944 = vpop.f32.mrb[0].mxu0
        %3945 = vmatprep.mubr.f32.mxu0 0.0
        %3946 = vmatmul.mubr.f32.gmra.mrb[0].mxu0 %v2830
        %v3947 = vpop.f32.mrb[0].mxu0
        %v3948 = vadd.f32 0.0, %v3947
        %v3949 = vpop.f32.mrb[0].mxu0
        %3950 = vmatprep.mubr.f32.mxu0 0.0
        %3951 = vmatmul.mubr.f32.gmra.mrb[0].mxu0 %v2833
        %v3952 = vpop.f32.mrb[0].mxu0
        %v3953 = vadd.f32 0.0, %v3952
        %v3954 = vpop.f32.mrb[0].mxu0
        %3955 = vdwg.mxu0
        %3956 = vmatprep.subr.mxu0 0.0
        %3957 = vmatpush1.msra.mxu0 %v3938
        %3958 = vmatprep.subr.mxu0 0.0
        %3959 = vmatpush1.msra.mxu0 %v3943
        %3960 = vmatprep.subr.mxu0 0.0
        %3961 = vmatpush1.msra.mxu0 %v3948
        %3962 = vmatprep.subr.mxu0 0.0
        %3963 = vmatpush1.msra.mxu0 %v3953
        %3964 = vmatprep.subr.mxu0 0.0
        %3965 = vmatpush1.msra.mxu0 0.0
        %3966 = vmatprep.subr.mxu0 0.0
        %3967 = vmatpush1.msra.mxu0 0.0
        %3968 = vmatprep.subr.mxu0 0.0
        %3969 = vmatpush1.msra.mxu0 0.0
        %3970 = vmatprep.subr.mxu0 0.0
        %3971 = vmatpush1.msra.mxu0 0.0
        %3972 = vmatprep.subr.mxu0 0.0
        %3973 = vmatpush1.msra.mxu0 0.0
        %3974 = vmatprep.subr.mxu0 0.0
        %3975 = vmatpush1.msra.mxu0 0.0
        %3976 = vmatprep.subr.mxu0 0.0
        %3977 = vmatpush1.msra.mxu0 0.0
        %3978 = vmatprep.subr.mxu0 0.0
        %3979 = vmatpush1.msra.mxu0 0.0
        %3980 = vmatprep.subr.mxu0 0.0
        %3981 = vmatpush1.msra.mxu0 0.0
        %3982 = vmatprep.subr.mxu0 0.0
        %3983 = vmatpush1.msra.mxu0 0.0
        %3984 = vmatprep.subr.mxu0 0.0
        %3985 = vmatpush1.msra.mxu0 0.0
        %3986 = vmatprep.subr.mxu0 0.0
        %3987 = vmatpush1.msra.mxu0 0.0
        %3988 = vmatprep.subr.mxu0 0.0
        %3989 = vmatpush1.msra.mxu0 0.0
        %3990 = vmatprep.subr.mxu0 0.0
        %3991 = vmatpush1.msra.mxu0 0.0
        %3992 = vmatprep.subr.mxu0 0.0
        %3993 = vmatpush1.msra.mxu0 0.0
        %3994 = vmatprep.subr.mxu0 0.0
        %3995 = vmatpush1.msra.mxu0 0.0
        %3996 = vmatprep.subr.mxu0 0.0
        %3997 = vmatpush1.msra.mxu0 0.0
        %3998 = vmatprep.subr.mxu0 0.0
        %3999 = vmatpush1.msra.mxu0 0.0
        %4000 = vmatprep.subr.mxu0 0.0
        %4001 = vmatpush1.msra.mxu0 0.0
        %4002 = vmatprep.subr.mxu0 0.0
        %4003 = vmatpush1.msra.mxu0 0.0
        %4004 = vmatprep.subr.mxu0 0.0
        %4005 = vmatpush1.msra.mxu0 0.0
        %4006 = vmatprep.subr.mxu0 0.0
        %4007 = vmatpush1.msra.mxu0 0.0
        %4008 = vmatprep.subr.mxu0 0.0
        %4009 = vmatpush1.msra.mxu0 0.0
        %4010 = vmatprep.subr.mxu0 0.0
        %4011 = vmatpush1.msra.mxu0 0.0
        %4012 = vmatprep.subr.mxu0 0.0
        %4013 = vmatpush1.msra.mxu0 0.0
        %4014 = vmatprep.subr.mxu0 0.0
        %4015 = vmatpush1.msra.mxu0 0.0
        %4016 = vmatprep.subr.mxu0 0.0
        %4017 = vmatpush1.msra.mxu0 0.0
        %4018 = vmatprep.subr.mxu0 0.0
        %4019 = vmatpush1.msra.mxu0 0.0
        %4020 = vmatprep.mubr.f32.mxu0 0.0
        %4021 = vmatmul.mubr.f32.gmra.mrb[0].mxu0 %v2299
        %v4022 = vpop.f32.mrb[0].mxu0
        %v4023 = vadd.f32 0.0, %v4022
        %v4024 = vpop.f32.mrb[0].mxu0
        %4025 = vmatprep.mubr.f32.mxu0 0.0
        %4026 = vmatmul.mubr.f32.gmra.mrb[0].mxu0 %v2302
        %v4027 = vpop.f32.mrb[0].mxu0
        %v4028 = vadd.f32 0.0, %v4027
        %v4029 = vpop.f32.mrb[0].mxu0
        %4030 = vmatprep.mubr.f32.mxu0 0.0
        %4031 = vmatmul.mubr.f32.gmra.mrb[0].mxu0 %v2305
        %v4032 = vpop.f32.mrb[0].mxu0
        %v4033 = vadd.f32 0.0, %v4032
        %v4034 = vpop.f32.mrb[0].mxu0
        %4035 = vmatprep.mubr.f32.mxu0 0.0
        %4036 = vmatmul.mubr.f32.gmra.mrb[0].mxu0 %v2308
        %v4037 = vpop.f32.mrb[0].mxu0
        %v4038 = vadd.f32 0.0, %v4037
        %v4039 = vpop.f32.mrb[0].mxu0
        %4040 = vdwg.mxu0
        %v4041 = vadd.f32 %v3867, %v4023
        %v4042 = vadd.f32 %v3868, %v4028
        %v4043 = vadd.f32 %v3869, %v4033
        %v4044 = vadd.f32 %v3870, %v4038
        %4045 = vmatprep.subr.mxu0 0.0
        %4046 = vmatpush1.msra.mxu0 %v2400
        %4047 = vmatprep.subr.mxu0 0.0
        %4048 = vmatpush1.msra.mxu0 %v2401
        %4049 = vmatprep.subr.mxu0 0.0
        %4050 = vmatpush1.msra.mxu0 %v2402
        %4051 = vmatprep.subr.mxu0 0.0
        %4052 = vmatpush1.msra.mxu0 %v2403
        %4053 = vmatprep.subr.mxu0 0.0
        %4054 = vmatpush1.msra.mxu0 %v2404
        %4055 = vmatprep.subr.mxu0 0.0
        %4056 = vmatpush1.msra.mxu0 %v2405
        %4057 = vmatprep.subr.mxu0 0.0
        %4058 = vmatpush1.msra.mxu0 %v2406
        %4059 = vmatprep.subr.mxu0 0.0
        %4060 = vmatpush1.msra.mxu0 %v2407
        %4061 = vmatprep.subr.mxu0 0.0
        %4062 = vmatpush1.msra.mxu0 %v2408
        %4063 = vmatprep.subr.mxu0 0.0
        %4064 = vmatpush1.msra.mxu0 %v2409
        %4065 = vmatprep.subr.mxu0 0.0
        %4066 = vmatpush1.msra.mxu0 %v2412
        %4067 = vmatprep.subr.mxu0 0.0
        %4068 = vmatpush1.msra.mxu0 0.0
        %4069 = vmatprep.subr.mxu0 0.0
        %4070 = vmatpush1.msra.mxu0 0.0
        %4071 = vmatprep.subr.mxu0 0.0
        %4072 = vmatpush1.msra.mxu0 0.0
        %4073 = vmatprep.subr.mxu0 0.0
        %4074 = vmatpush1.msra.mxu0 0.0
        %4075 = vmatprep.subr.mxu0 0.0
        %4076 = vmatpush1.msra.mxu0 0.0
        %4077 = vmatprep.subr.mxu0 0.0
        %4078 = vmatpush1.msra.mxu0 0.0
        %4079 = vmatprep.subr.mxu0 0.0
        %4080 = vmatpush1.msra.mxu0 0.0
        %4081 = vmatprep.subr.mxu0 0.0
        %4082 = vmatpush1.msra.mxu0 0.0
        %4083 = vmatprep.subr.mxu0 0.0
        %4084 = vmatpush1.msra.mxu0 0.0
        %4085 = vmatprep.subr.mxu0 0.0
        %4086 = vmatpush1.msra.mxu0 0.0
        %4087 = vmatprep.subr.mxu0 0.0
        %4088 = vmatpush1.msra.mxu0 0.0
        %4089 = vmatprep.subr.mxu0 0.0
        %4090 = vmatpush1.msra.mxu0 0.0
        %4091 = vmatprep.subr.mxu0 0.0
        %4092 = vmatpush1.msra.mxu0 0.0
        %4093 = vmatprep.subr.mxu0 0.0
        %4094 = vmatpush1.msra.mxu0 0.0
        %4095 = vmatprep.subr.mxu0 0.0
        %4096 = vmatpush1.msra.mxu0 0.0
        %4097 = vmatprep.subr.mxu0 0.0
        %4098 = vmatpush1.msra.mxu0 0.0
        %4099 = vmatprep.subr.mxu0 0.0
        %4100 = vmatpush1.msra.mxu0 0.0
        %4101 = vmatprep.subr.mxu0 0.0
        %4102 = vmatpush1.msra.mxu0 0.0
        %4103 = vmatprep.subr.mxu0 0.0
        %4104 = vmatpush1.msra.mxu0 0.0
        %4105 = vmatprep.subr.mxu0 0.0
        %4106 = vmatpush1.msra.mxu0 0.0
        %4107 = vmatprep.subr.mxu0 0.0
        %4108 = vmatpush1.msra.mxu0 0.0
        %4109 = vmatprep.mubr.f32.mxu0 0.0
        %4110 = vmatmul.mubr.f32.gmra.mrb[0].mxu0 %v2824
        %v4111 = vpop.f32.mrb[0].mxu0
        %v4112 = vadd.f32 0.0, %v4111
        %v4113 = vpop.f32.mrb[0].mxu0
        %4114 = vmatprep.mubr.f32.mxu0 0.0
        %4115 = vmatmul.mubr.f32.gmra.mrb[0].mxu0 %v2827
        %v4116 = vpop.f32.mrb[0].mxu0
        %v4117 = vadd.f32 0.0, %v4116
        %v4118 = vpop.f32.mrb[0].mxu0
        %4119 = vmatprep.mubr.f32.mxu0 0.0
        %4120 = vmatmul.mubr.f32.gmra.mrb[0].mxu0 %v2830
        %v4121 = vpop.f32.mrb[0].mxu0
        %v4122 = vadd.f32 0.0, %v4121
        %v4123 = vpop.f32.mrb[0].mxu0
        %4124 = vmatprep.mubr.f32.mxu0 0.0
        %4125 = vmatmul.mubr.f32.gmra.mrb[0].mxu0 %v2833
        %v4126 = vpop.f32.mrb[0].mxu0
        %v4127 = vadd.f32 0.0, %v4126
        %v4128 = vpop.f32.mrb[0].mxu0
        %4129 = vdwg.mxu0
        %4130 = vmatprep.subr.mxu0 0.0
        %4131 = vmatpush1.msra.mxu0 %v4112
        %4132 = vmatprep.subr.mxu0 0.0
        %4133 = vmatpush1.msra.mxu0 %v4117
        %4134 = vmatprep.subr.mxu0 0.0
        %4135 = vmatpush1.msra.mxu0 %v4122
        %4136 = vmatprep.subr.mxu0 0.0
        %4137 = vmatpush1.msra.mxu0 %v4127
        %4138 = vmatprep.subr.mxu0 0.0
        %4139 = vmatpush1.msra.mxu0 0.0
        %4140 = vmatprep.subr.mxu0 0.0
        %4141 = vmatpush1.msra.mxu0 0.0
        %4142 = vmatprep.subr.mxu0 0.0
        %4143 = vmatpush1.msra.mxu0 0.0
        %4144 = vmatprep.subr.mxu0 0.0
        %4145 = vmatpush1.msra.mxu0 0.0
        %4146 = vmatprep.subr.mxu0 0.0
        %4147 = vmatpush1.msra.mxu0 0.0
        %4148 = vmatprep.subr.mxu0 0.0
        %4149 = vmatpush1.msra.mxu0 0.0
        %4150 = vmatprep.subr.mxu0 0.0
        %4151 = vmatpush1.msra.mxu0 0.0
        %4152 = vmatprep.subr.mxu0 0.0
        %4153 = vmatpush1.msra.mxu0 0.0
        %4154 = vmatprep.subr.mxu0 0.0
        %4155 = vmatpush1.msra.mxu0 0.0
        %4156 = vmatprep.subr.mxu0 0.0
        %4157 = vmatpush1.msra.mxu0 0.0
        %4158 = vmatprep.subr.mxu0 0.0
        %4159 = vmatpush1.msra.mxu0 0.0
        %4160 = vmatprep.subr.mxu0 0.0
        %4161 = vmatpush1.msra.mxu0 0.0
        %4162 = vmatprep.subr.mxu0 0.0
        %4163 = vmatpush1.msra.mxu0 0.0
        %4164 = vmatprep.subr.mxu0 0.0
        %4165 = vmatpush1.msra.mxu0 0.0
        %4166 = vmatprep.subr.mxu0 0.0
        %4167 = vmatpush1.msra.mxu0 0.0
        %4168 = vmatprep.subr.mxu0 0.0
        %4169 = vmatpush1.msra.mxu0 0.0
        %4170 = vmatprep.subr.mxu0 0.0
        %4171 = vmatpush1.msra.mxu0 0.0
        %4172 = vmatprep.subr.mxu0 0.0
        %4173 = vmatpush1.msra.mxu0 0.0
        %4174 = vmatprep.subr.mxu0 0.0
        %4175 = vmatpush1.msra.mxu0 0.0
        %4176 = vmatprep.subr.mxu0 0.0
        %4177 = vmatpush1.msra.mxu0 0.0
        %4178 = vmatprep.subr.mxu0 0.0
        %4179 = vmatpush1.msra.mxu0 0.0
        %4180 = vmatprep.subr.mxu0 0.0
        %4181 = vmatpush1.msra.mxu0 0.0
        %4182 = vmatprep.subr.mxu0 0.0
        %4183 = vmatpush1.msra.mxu0 0.0
        %4184 = vmatprep.subr.mxu0 0.0
        %4185 = vmatpush1.msra.mxu0 0.0
        %4186 = vmatprep.subr.mxu0 0.0
        %4187 = vmatpush1.msra.mxu0 0.0
        %4188 = vmatprep.subr.mxu0 0.0
        %4189 = vmatpush1.msra.mxu0 0.0
        %4190 = vmatprep.subr.mxu0 0.0
        %4191 = vmatpush1.msra.mxu0 0.0
        %4192 = vmatprep.subr.mxu0 0.0
        %4193 = vmatpush1.msra.mxu0 0.0
        %4194 = vmatprep.mubr.f32.mxu0 0.0
        %4195 = vmatmul.mubr.f32.gmra.mrb[0].mxu0 %v2505
        %v4196 = vpop.f32.mrb[0].mxu0
        %v4197 = vadd.f32 0.0, %v4196
        %v4198 = vpop.f32.mrb[0].mxu0
        %4199 = vmatprep.mubr.f32.mxu0 0.0
        %4200 = vmatmul.mubr.f32.gmra.mrb[0].mxu0 %v2508
        %v4201 = vpop.f32.mrb[0].mxu0
        %v4202 = vadd.f32 0.0, %v4201
        %v4203 = vpop.f32.mrb[0].mxu0
        %4204 = vmatprep.mubr.f32.mxu0 0.0
        %4205 = vmatmul.mubr.f32.gmra.mrb[0].mxu0 %v2511
        %v4206 = vpop.f32.mrb[0].mxu0
        %v4207 = vadd.f32 0.0, %v4206
        %v4208 = vpop.f32.mrb[0].mxu0
        %4209 = vmatprep.mubr.f32.mxu0 0.0
        %4210 = vmatmul.mubr.f32.gmra.mrb[0].mxu0 %v2514
        %v4211 = vpop.f32.mrb[0].mxu0
        %v4212 = vadd.f32 0.0, %v4211
        %v4213 = vpop.f32.mrb[0].mxu0
        %4214 = vdwg.mxu0
        %v4215 = vadd.f32 %v4041, %v4197
        %v4216 = vadd.f32 %v4042, %v4202
        %v4217 = vadd.f32 %v4043, %v4207
        %v4218 = vadd.f32 %v4044, %v4212
        %4219 = vmatprep.subr.mxu0 0.0
        %4220 = vmatpush1.msra.mxu0 %v2606
        %4221 = vmatprep.subr.mxu0 0.0
        %4222 = vmatpush1.msra.mxu0 %v2607
        %4223 = vmatprep.subr.mxu0 0.0
        %4224 = vmatpush1.msra.mxu0 %v2608
        %4225 = vmatprep.subr.mxu0 0.0
        %4226 = vmatpush1.msra.mxu0 %v2609
        %4227 = vmatprep.subr.mxu0 0.0
        %4228 = vmatpush1.msra.mxu0 %v2610
        %4229 = vmatprep.subr.mxu0 0.0
        %4230 = vmatpush1.msra.mxu0 %v2611
        %4231 = vmatprep.subr.mxu0 0.0
        %4232 = vmatpush1.msra.mxu0 %v2612
        %4233 = vmatprep.subr.mxu0 0.0
        %4234 = vmatpush1.msra.mxu0 %v2613
        %4235 = vmatprep.subr.mxu0 0.0
        %4236 = vmatpush1.msra.mxu0 %v2614
        %4237 = vmatprep.subr.mxu0 0.0
        %4238 = vmatpush1.msra.mxu0 %v2615
        %4239 = vmatprep.subr.mxu0 0.0
        %4240 = vmatpush1.msra.mxu0 %v2618
        %4241 = vmatprep.subr.mxu0 0.0
        %4242 = vmatpush1.msra.mxu0 0.0
        %4243 = vmatprep.subr.mxu0 0.0
        %4244 = vmatpush1.msra.mxu0 0.0
        %4245 = vmatprep.subr.mxu0 0.0
        %4246 = vmatpush1.msra.mxu0 0.0
        %4247 = vmatprep.subr.mxu0 0.0
        %4248 = vmatpush1.msra.mxu0 0.0
        %4249 = vmatprep.subr.mxu0 0.0
        %4250 = vmatpush1.msra.mxu0 0.0
        %4251 = vmatprep.subr.mxu0 0.0
        %4252 = vmatpush1.msra.mxu0 0.0
        %4253 = vmatprep.subr.mxu0 0.0
        %4254 = vmatpush1.msra.mxu0 0.0
        %4255 = vmatprep.subr.mxu0 0.0
        %4256 = vmatpush1.msra.mxu0 0.0
        %4257 = vmatprep.subr.mxu0 0.0
        %4258 = vmatpush1.msra.mxu0 0.0
        %4259 = vmatprep.subr.mxu0 0.0
        %4260 = vmatpush1.msra.mxu0 0.0
        %4261 = vmatprep.subr.mxu0 0.0
        %4262 = vmatpush1.msra.mxu0 0.0
        %4263 = vmatprep.subr.mxu0 0.0
        %4264 = vmatpush1.msra.mxu0 0.0
        %4265 = vmatprep.subr.mxu0 0.0
        %4266 = vmatpush1.msra.mxu0 0.0
        %4267 = vmatprep.subr.mxu0 0.0
        %4268 = vmatpush1.msra.mxu0 0.0
        %4269 = vmatprep.subr.mxu0 0.0
        %4270 = vmatpush1.msra.mxu0 0.0
        %4271 = vmatprep.subr.mxu0 0.0
        %4272 = vmatpush1.msra.mxu0 0.0
        %4273 = vmatprep.subr.mxu0 0.0
        %4274 = vmatpush1.msra.mxu0 0.0
        %4275 = vmatprep.subr.mxu0 0.0
        %4276 = vmatpush1.msra.mxu0 0.0
        %4277 = vmatprep.subr.mxu0 0.0
        %4278 = vmatpush1.msra.mxu0 0.0
        %4279 = vmatprep.subr.mxu0 0.0
        %4280 = vmatpush1.msra.mxu0 0.0
        %4281 = vmatprep.subr.mxu0 0.0
        %4282 = vmatpush1.msra.mxu0 0.0
        %4283 = vmatprep.mubr.f32.mxu0 0.0
        %4284 = vmatmul.mubr.f32.gmra.mrb[0].mxu0 %v2824
        %v4285 = vpop.f32.mrb[0].mxu0
        %v4286 = vadd.f32 0.0, %v4285
        %v4287 = vpop.f32.mrb[0].mxu0
        %4288 = vmatprep.mubr.f32.mxu0 0.0
        %4289 = vmatmul.mubr.f32.gmra.mrb[0].mxu0 %v2827
        %v4290 = vpop.f32.mrb[0].mxu0
        %v4291 = vadd.f32 0.0, %v4290
        %v4292 = vpop.f32.mrb[0].mxu0
        %4293 = vmatprep.mubr.f32.mxu0 0.0
        %4294 = vmatmul.mubr.f32.gmra.mrb[0].mxu0 %v2830
        %v4295 = vpop.f32.mrb[0].mxu0
        %v4296 = vadd.f32 0.0, %v4295
        %v4297 = vpop.f32.mrb[0].mxu0
        %4298 = vmatprep.mubr.f32.mxu0 0.0
        %4299 = vmatmul.mubr.f32.gmra.mrb[0].mxu0 %v2833
        %v4300 = vpop.f32.mrb[0].mxu0
        %v4301 = vadd.f32 0.0, %v4300
        %v4302 = vpop.f32.mrb[0].mxu0
        %4303 = vdwg.mxu0
        %4304 = vmatprep.subr.mxu0 0.0
        %4305 = vmatpush1.msra.mxu0 %v4286
        %4306 = vmatprep.subr.mxu0 0.0
        %4307 = vmatpush1.msra.mxu0 %v4291
        %4308 = vmatprep.subr.mxu0 0.0
        %4309 = vmatpush1.msra.mxu0 %v4296
        %4310 = vmatprep.subr.mxu0 0.0
        %4311 = vmatpush1.msra.mxu0 %v4301
        %4312 = vmatprep.subr.mxu0 0.0
        %4313 = vmatpush1.msra.mxu0 0.0
        %4314 = vmatprep.subr.mxu0 0.0
        %4315 = vmatpush1.msra.mxu0 0.0
        %4316 = vmatprep.subr.mxu0 0.0
        %4317 = vmatpush1.msra.mxu0 0.0
        %4318 = vmatprep.subr.mxu0 0.0
        %4319 = vmatpush1.msra.mxu0 0.0
        %4320 = vmatprep.subr.mxu0 0.0
        %4321 = vmatpush1.msra.mxu0 0.0
        %4322 = vmatprep.subr.mxu0 0.0
        %4323 = vmatpush1.msra.mxu0 0.0
        %4324 = vmatprep.subr.mxu0 0.0
        %4325 = vmatpush1.msra.mxu0 0.0
        %4326 = vmatprep.subr.mxu0 0.0
        %4327 = vmatpush1.msra.mxu0 0.0
        %4328 = vmatprep.subr.mxu0 0.0
        %4329 = vmatpush1.msra.mxu0 0.0
        %4330 = vmatprep.subr.mxu0 0.0
        %4331 = vmatpush1.msra.mxu0 0.0
        %4332 = vmatprep.subr.mxu0 0.0
        %4333 = vmatpush1.msra.mxu0 0.0
        %4334 = vmatprep.subr.mxu0 0.0
        %4335 = vmatpush1.msra.mxu0 0.0
        %4336 = vmatprep.subr.mxu0 0.0
        %4337 = vmatpush1.msra.mxu0 0.0
        %4338 = vmatprep.subr.mxu0 0.0
        %4339 = vmatpush1.msra.mxu0 0.0
        %4340 = vmatprep.subr.mxu0 0.0
        %4341 = vmatpush1.msra.mxu0 0.0
        %4342 = vmatprep.subr.mxu0 0.0
        %4343 = vmatpush1.msra.mxu0 0.0
        %4344 = vmatprep.subr.mxu0 0.0
        %4345 = vmatpush1.msra.mxu0 0.0
        %4346 = vmatprep.subr.mxu0 0.0
        %4347 = vmatpush1.msra.mxu0 0.0
        %4348 = vmatprep.subr.mxu0 0.0
        %4349 = vmatpush1.msra.mxu0 0.0
        %4350 = vmatprep.subr.mxu0 0.0
        %4351 = vmatpush1.msra.mxu0 0.0
        %4352 = vmatprep.subr.mxu0 0.0
        %4353 = vmatpush1.msra.mxu0 0.0
        %4354 = vmatprep.subr.mxu0 0.0
        %4355 = vmatpush1.msra.mxu0 0.0
        %4356 = vmatprep.subr.mxu0 0.0
        %4357 = vmatpush1.msra.mxu0 0.0
        %4358 = vmatprep.subr.mxu0 0.0
        %4359 = vmatpush1.msra.mxu0 0.0
        %4360 = vmatprep.subr.mxu0 0.0
        %4361 = vmatpush1.msra.mxu0 0.0
        %4362 = vmatprep.subr.mxu0 0.0
        %4363 = vmatpush1.msra.mxu0 0.0
        %4364 = vmatprep.subr.mxu0 0.0
        %4365 = vmatpush1.msra.mxu0 0.0
        %4366 = vmatprep.subr.mxu0 0.0
        %4367 = vmatpush1.msra.mxu0 0.0
        %4368 = vmatprep.mubr.f32.mxu0 0.0
        %4369 = vmatmul.mubr.f32.gmra.mrb[0].mxu0 %v2711
        %v4370 = vpop.f32.mrb[0].mxu0
        %v4371 = vadd.f32 0.0, %v4370
        %v4372 = vpop.f32.mrb[0].mxu0
        %4373 = vmatprep.mubr.f32.mxu0 0.0
        %4374 = vmatmul.mubr.f32.gmra.mrb[0].mxu0 %v2714
        %v4375 = vpop.f32.mrb[0].mxu0
        %v4376 = vadd.f32 0.0, %v4375
        %v4377 = vpop.f32.mrb[0].mxu0
        %4378 = vmatprep.mubr.f32.mxu0 0.0
        %4379 = vmatmul.mubr.f32.gmra.mrb[0].mxu0 %v2717
        %v4380 = vpop.f32.mrb[0].mxu0
        %v4381 = vadd.f32 0.0, %v4380
        %v4382 = vpop.f32.mrb[0].mxu0
        %4383 = vmatprep.mubr.f32.mxu0 0.0
        %4384 = vmatmul.mubr.f32.gmra.mrb[0].mxu0 %v2720
        %v4385 = vpop.f32.mrb[0].mxu0
        %v4386 = vadd.f32 0.0, %v4385
        %v4387 = vpop.f32.mrb[0].mxu0
        %4388 = vdwg.mxu0
        %v4389 = vadd.f32 %v4215, %v4371
        %v4390 = vadd.f32 %v4216, %v4376
        %v4391 = vadd.f32 %v4217, %v4381
        %v4392 = vadd.f32 %v4218, %v4386
        %v4393 = vadd.f32 %v4389, %v2811
        %v4394 = vadd.f32 %v4390, %v2812
        %v4395 = vadd.f32 %v4391, %v2813
        %v4396 = vadd.f32 %v4392, %v2814
        %v4397 = vmax.f32 %v4393, 0.0
        %v4398 = vmax.f32 %v4394, 0.0
        %v4399 = vmax.f32 %v4395, 0.0
        %v4400 = vmax.f32 %v4396, 0.0
        %v4401 = vld [vmem:[%s8] sm:$0xff]
        %v4402 = vld [vmem:[%s8 + $0x8] sm:$0xff]
        %v4403 = vld [vmem:[%s8 + $0x10] sm:$0xff]
        %v4404 = vld [vmem:[%s8 + $0x18] sm:$0xff]
        %v4405 = vld [vmem:[%s8 + $0x20] sm:$0xff]
        %v4406 = vld [vmem:[%s8 + $0x28] sm:$0xff]
        %v4407 = vld [vmem:[%s8 + $0x30] sm:$0xff]
        %v4408 = vld [vmem:[%s8 + $0x38] sm:$0xff]
        %v4409 = vld [vmem:[%s8 + $0x40] sm:$0xff]
        %v4410 = vld [vmem:[%s8 + $0x48] sm:$0xff]
        %v4411 = vld [vmem:[%s8 + $0x50] sm:$0x1]
        %v4413 = vsel %vm963, %v4397, 0
        %v4416 = vsel %vm963, %v4398, 0
        %v4419 = vsel %vm963, %v4399, 0
        %v4422 = vsel %vm963, %v4400, 0
        %v4425 = vsel %vm976, %v4411, 0
        %4427 = vmatprep.subr.mxu0 0.0
        %4428 = vmatpush1.msra.mxu0 %v4401
        %4429 = vmatprep.subr.mxu0 0.0
        %4430 = vmatpush1.msra.mxu0 %v4402
        %4431 = vmatprep.subr.mxu0 0.0
        %4432 = vmatpush1.msra.mxu0 %v4403
        %4433 = vmatprep.subr.mxu0 0.0
        %4434 = vmatpush1.msra.mxu0 %v4404
        %4435 = vmatprep.subr.mxu0 0.0
        %4436 = vmatpush1.msra.mxu0 %v4405
        %4437 = vmatprep.subr.mxu0 0.0
        %4438 = vmatpush1.msra.mxu0 %v4406
        %4439 = vmatprep.subr.mxu0 0.0
        %4440 = vmatpush1.msra.mxu0 %v4407
        %4441 = vmatprep.subr.mxu0 0.0
        %4442 = vmatpush1.msra.mxu0 %v4408
        %4443 = vmatprep.subr.mxu0 0.0
        %4444 = vmatpush1.msra.mxu0 %v4409
        %4445 = vmatprep.subr.mxu0 0.0
        %4446 = vmatpush1.msra.mxu0 %v4410
        %4447 = vmatprep.subr.mxu0 0.0
        %4448 = vmatpush1.msra.mxu0 %v4425
        %4449 = vmatprep.subr.mxu0 0.0
        %4450 = vmatpush1.msra.mxu0 0.0
        %4451 = vmatprep.subr.mxu0 0.0
        %4452 = vmatpush1.msra.mxu0 0.0
        %4453 = vmatprep.subr.mxu0 0.0
        %4454 = vmatpush1.msra.mxu0 0.0
        %4455 = vmatprep.subr.mxu0 0.0
        %4456 = vmatpush1.msra.mxu0 0.0
        %4457 = vmatprep.subr.mxu0 0.0
        %4458 = vmatpush1.msra.mxu0 0.0
        %4459 = vmatprep.subr.mxu0 0.0
        %4460 = vmatpush1.msra.mxu0 0.0
        %4461 = vmatprep.subr.mxu0 0.0
        %4462 = vmatpush1.msra.mxu0 0.0
        %4463 = vmatprep.subr.mxu0 0.0
        %4464 = vmatpush1.msra.mxu0 0.0
        %4465 = vmatprep.subr.mxu0 0.0
        %4466 = vmatpush1.msra.mxu0 0.0
        %4467 = vmatprep.subr.mxu0 0.0
        %4468 = vmatpush1.msra.mxu0 0.0
        %4469 = vmatprep.subr.mxu0 0.0
        %4470 = vmatpush1.msra.mxu0 0.0
        %4471 = vmatprep.subr.mxu0 0.0
        %4472 = vmatpush1.msra.mxu0 0.0
        %4473 = vmatprep.subr.mxu0 0.0
        %4474 = vmatpush1.msra.mxu0 0.0
        %4475 = vmatprep.subr.mxu0 0.0
        %4476 = vmatpush1.msra.mxu0 0.0
        %4477 = vmatprep.subr.mxu0 0.0
        %4478 = vmatpush1.msra.mxu0 0.0
        %4479 = vmatprep.subr.mxu0 0.0
        %4480 = vmatpush1.msra.mxu0 0.0
        %4481 = vmatprep.subr.mxu0 0.0
        %4482 = vmatpush1.msra.mxu0 0.0
        %4483 = vmatprep.subr.mxu0 0.0
        %4484 = vmatpush1.msra.mxu0 0.0
        %4485 = vmatprep.subr.mxu0 0.0
        %4486 = vmatpush1.msra.mxu0 0.0
        %4487 = vmatprep.subr.mxu0 0.0
        %4488 = vmatpush1.msra.mxu0 0.0
        %4489 = vmatprep.subr.mxu0 0.0
        %4490 = vmatpush1.msra.mxu0 0.0
        %4491 = vmatprep.mubr.f32.mxu0 0.0
        %4492 = vmatmul.mubr.f32.gmra.mrb[0].mxu0 %v4413
        %v4493 = vpop.f32.mrb[0].mxu0
        %v4494 = vadd.f32 0.0, %v4493
        %v4495 = vpop.f32.mrb[0].mxu0
        %4496 = vmatprep.mubr.f32.mxu0 0.0
        %4497 = vmatmul.mubr.f32.gmra.mrb[0].mxu0 %v4416
        %v4498 = vpop.f32.mrb[0].mxu0
        %v4499 = vadd.f32 0.0, %v4498
        %v4500 = vpop.f32.mrb[0].mxu0
        %4501 = vmatprep.mubr.f32.mxu0 0.0
        %4502 = vmatmul.mubr.f32.gmra.mrb[0].mxu0 %v4419
        %v4503 = vpop.f32.mrb[0].mxu0
        %v4504 = vadd.f32 0.0, %v4503
        %v4505 = vpop.f32.mrb[0].mxu0
        %4506 = vmatprep.mubr.f32.mxu0 0.0
        %4507 = vmatmul.mubr.f32.gmra.mrb[0].mxu0 %v4422
        %v4508 = vpop.f32.mrb[0].mxu0
        %v4509 = vadd.f32 0.0, %v4508
        %v4510 = vpop.f32.mrb[0].mxu0
        %4511 = vdwg.mxu0
        %s4512 = scalar_lea.vmem %s8, 88
        %v4513 = vld [vmem:[%s4512] sm:$0xff]
        %v4514 = vld [vmem:[%s4512 + $0x8] sm:$0xff]
        %v4515 = vld [vmem:[%s4512 + $0x10] sm:$0xff]
        %v4516 = vld [vmem:[%s4512 + $0x18] sm:$0xff]
        %v4517 = vld [vmem:[%s4512 + $0x20] sm:$0xff]
        %v4518 = vld [vmem:[%s4512 + $0x28] sm:$0xff]
        %v4519 = vld [vmem:[%s4512 + $0x30] sm:$0xff]
        %v4520 = vld [vmem:[%s4512 + $0x38] sm:$0xff]
        %v4521 = vld [vmem:[%s4512 + $0x40] sm:$0xff]
        %v4522 = vld [vmem:[%s4512 + $0x48] sm:$0xff]
        %v4523 = vld [vmem:[%s4512 + $0x50] sm:$0x1]
        %v4525 = vsel %vm976, %v4523, 0
        %4527 = vmatprep.subr.mxu0 0.0
        %4528 = vmatpush1.msra.mxu0 %v4513
        %4529 = vmatprep.subr.mxu0 0.0
        %4530 = vmatpush1.msra.mxu0 %v4514
        %4531 = vmatprep.subr.mxu0 0.0
        %4532 = vmatpush1.msra.mxu0 %v4515
        %4533 = vmatprep.subr.mxu0 0.0
        %4534 = vmatpush1.msra.mxu0 %v4516
        %4535 = vmatprep.subr.mxu0 0.0
        %4536 = vmatpush1.msra.mxu0 %v4517
        %4537 = vmatprep.subr.mxu0 0.0
        %4538 = vmatpush1.msra.mxu0 %v4518
        %4539 = vmatprep.subr.mxu0 0.0
        %4540 = vmatpush1.msra.mxu0 %v4519
        %4541 = vmatprep.subr.mxu0 0.0
        %4542 = vmatpush1.msra.mxu0 %v4520
        %4543 = vmatprep.subr.mxu0 0.0
        %4544 = vmatpush1.msra.mxu0 %v4521
        %4545 = vmatprep.subr.mxu0 0.0
        %4546 = vmatpush1.msra.mxu0 %v4522
        %4547 = vmatprep.subr.mxu0 0.0
        %4548 = vmatpush1.msra.mxu0 %v4525
        %4549 = vmatprep.subr.mxu0 0.0
        %4550 = vmatpush1.msra.mxu0 0.0
        %4551 = vmatprep.subr.mxu0 0.0
        %4552 = vmatpush1.msra.mxu0 0.0
        %4553 = vmatprep.subr.mxu0 0.0
        %4554 = vmatpush1.msra.mxu0 0.0
        %4555 = vmatprep.subr.mxu0 0.0
        %4556 = vmatpush1.msra.mxu0 0.0
        %4557 = vmatprep.subr.mxu0 0.0
        %4558 = vmatpush1.msra.mxu0 0.0
        %4559 = vmatprep.subr.mxu0 0.0
        %4560 = vmatpush1.msra.mxu0 0.0
        %4561 = vmatprep.subr.mxu0 0.0
        %4562 = vmatpush1.msra.mxu0 0.0
        %4563 = vmatprep.subr.mxu0 0.0
        %4564 = vmatpush1.msra.mxu0 0.0
        %4565 = vmatprep.subr.mxu0 0.0
        %4566 = vmatpush1.msra.mxu0 0.0
        %4567 = vmatprep.subr.mxu0 0.0
        %4568 = vmatpush1.msra.mxu0 0.0
        %4569 = vmatprep.subr.mxu0 0.0
        %4570 = vmatpush1.msra.mxu0 0.0
        %4571 = vmatprep.subr.mxu0 0.0
        %4572 = vmatpush1.msra.mxu0 0.0
        %4573 = vmatprep.subr.mxu0 0.0
        %4574 = vmatpush1.msra.mxu0 0.0
        %4575 = vmatprep.subr.mxu0 0.0
        %4576 = vmatpush1.msra.mxu0 0.0
        %4577 = vmatprep.subr.mxu0 0.0
        %4578 = vmatpush1.msra.mxu0 0.0
        %4579 = vmatprep.subr.mxu0 0.0
        %4580 = vmatpush1.msra.mxu0 0.0
        %4581 = vmatprep.subr.mxu0 0.0
        %4582 = vmatpush1.msra.mxu0 0.0
        %4583 = vmatprep.subr.mxu0 0.0
        %4584 = vmatpush1.msra.mxu0 0.0
        %4585 = vmatprep.subr.mxu0 0.0
        %4586 = vmatpush1.msra.mxu0 0.0
        %4587 = vmatprep.subr.mxu0 0.0
        %4588 = vmatpush1.msra.mxu0 0.0
        %4589 = vmatprep.subr.mxu0 0.0
        %4590 = vmatpush1.msra.mxu0 0.0
        %4591 = vmatprep.mubr.f32.mxu0 0.0
        %4592 = vmatmul.mubr.f32.gmra.mrb[0].mxu0 %v4413
        %v4593 = vpop.f32.mrb[0].mxu0
        %v4594 = vadd.f32 0.0, %v4593
        %v4595 = vpop.f32.mrb[0].mxu0
        %4596 = vmatprep.mubr.f32.mxu0 0.0
        %4597 = vmatmul.mubr.f32.gmra.mrb[0].mxu0 %v4416
        %v4598 = vpop.f32.mrb[0].mxu0
        %v4599 = vadd.f32 0.0, %v4598
        %v4600 = vpop.f32.mrb[0].mxu0
        %4601 = vmatprep.mubr.f32.mxu0 0.0
        %4602 = vmatmul.mubr.f32.gmra.mrb[0].mxu0 %v4419
        %v4603 = vpop.f32.mrb[0].mxu0
        %v4604 = vadd.f32 0.0, %v4603
        %v4605 = vpop.f32.mrb[0].mxu0
        %4606 = vmatprep.mubr.f32.mxu0 0.0
        %4607 = vmatmul.mubr.f32.gmra.mrb[0].mxu0 %v4422
        %v4608 = vpop.f32.mrb[0].mxu0
        %v4609 = vadd.f32 0.0, %v4608
        %v4610 = vpop.f32.mrb[0].mxu0
        %4611 = vdwg.mxu0
        %s4612 = scalar_lea.vmem %s8, 176
        %v4613 = vld [vmem:[%s4612] sm:$0xff]
        %v4614 = vld [vmem:[%s4612 + $0x8] sm:$0xff]
        %v4615 = vld [vmem:[%s4612 + $0x10] sm:$0xff]
        %v4616 = vld [vmem:[%s4612 + $0x18] sm:$0xff]
        %v4617 = vld [vmem:[%s4612 + $0x20] sm:$0xff]
        %v4618 = vld [vmem:[%s4612 + $0x28] sm:$0xff]
        %v4619 = vld [vmem:[%s4612 + $0x30] sm:$0xff]
        %v4620 = vld [vmem:[%s4612 + $0x38] sm:$0xff]
        %v4621 = vld [vmem:[%s4612 + $0x40] sm:$0xff]
        %v4622 = vld [vmem:[%s4612 + $0x48] sm:$0xff]
        %v4623 = vld [vmem:[%s4612 + $0x50] sm:$0x1]
        %v4625 = vsel %vm976, %v4623, 0
        %4627 = vmatprep.subr.mxu0 0.0
        %4628 = vmatpush1.msra.mxu0 %v4613
        %4629 = vmatprep.subr.mxu0 0.0
        %4630 = vmatpush1.msra.mxu0 %v4614
        %4631 = vmatprep.subr.mxu0 0.0
        %4632 = vmatpush1.msra.mxu0 %v4615
        %4633 = vmatprep.subr.mxu0 0.0
        %4634 = vmatpush1.msra.mxu0 %v4616
        %4635 = vmatprep.subr.mxu0 0.0
        %4636 = vmatpush1.msra.mxu0 %v4617
        %4637 = vmatprep.subr.mxu0 0.0
        %4638 = vmatpush1.msra.mxu0 %v4618
        %4639 = vmatprep.subr.mxu0 0.0
        %4640 = vmatpush1.msra.mxu0 %v4619
        %4641 = vmatprep.subr.mxu0 0.0
        %4642 = vmatpush1.msra.mxu0 %v4620
        %4643 = vmatprep.subr.mxu0 0.0
        %4644 = vmatpush1.msra.mxu0 %v4621
        %4645 = vmatprep.subr.mxu0 0.0
        %4646 = vmatpush1.msra.mxu0 %v4622
        %4647 = vmatprep.subr.mxu0 0.0
        %4648 = vmatpush1.msra.mxu0 %v4625
        %4649 = vmatprep.subr.mxu0 0.0
        %4650 = vmatpush1.msra.mxu0 0.0
        %4651 = vmatprep.subr.mxu0 0.0
        %4652 = vmatpush1.msra.mxu0 0.0
        %4653 = vmatprep.subr.mxu0 0.0
        %4654 = vmatpush1.msra.mxu0 0.0
        %4655 = vmatprep.subr.mxu0 0.0
        %4656 = vmatpush1.msra.mxu0 0.0
        %4657 = vmatprep.subr.mxu0 0.0
        %4658 = vmatpush1.msra.mxu0 0.0
        %4659 = vmatprep.subr.mxu0 0.0
        %4660 = vmatpush1.msra.mxu0 0.0
        %4661 = vmatprep.subr.mxu0 0.0
        %4662 = vmatpush1.msra.mxu0 0.0
        %4663 = vmatprep.subr.mxu0 0.0
        %4664 = vmatpush1.msra.mxu0 0.0
        %4665 = vmatprep.subr.mxu0 0.0
        %4666 = vmatpush1.msra.mxu0 0.0
        %4667 = vmatprep.subr.mxu0 0.0
        %4668 = vmatpush1.msra.mxu0 0.0
        %4669 = vmatprep.subr.mxu0 0.0
        %4670 = vmatpush1.msra.mxu0 0.0
        %4671 = vmatprep.subr.mxu0 0.0
        %4672 = vmatpush1.msra.mxu0 0.0
        %4673 = vmatprep.subr.mxu0 0.0
        %4674 = vmatpush1.msra.mxu0 0.0
        %4675 = vmatprep.subr.mxu0 0.0
        %4676 = vmatpush1.msra.mxu0 0.0
        %4677 = vmatprep.subr.mxu0 0.0
        %4678 = vmatpush1.msra.mxu0 0.0
        %4679 = vmatprep.subr.mxu0 0.0
        %4680 = vmatpush1.msra.mxu0 0.0
        %4681 = vmatprep.subr.mxu0 0.0
        %4682 = vmatpush1.msra.mxu0 0.0
        %4683 = vmatprep.subr.mxu0 0.0
        %4684 = vmatpush1.msra.mxu0 0.0
        %4685 = vmatprep.subr.mxu0 0.0
        %4686 = vmatpush1.msra.mxu0 0.0
        %4687 = vmatprep.subr.mxu0 0.0
        %4688 = vmatpush1.msra.mxu0 0.0
        %4689 = vmatprep.subr.mxu0 0.0
        %4690 = vmatpush1.msra.mxu0 0.0
        %4691 = vmatprep.mubr.f32.mxu0 0.0
        %4692 = vmatmul.mubr.f32.gmra.mrb[0].mxu0 %v4413
        %v4693 = vpop.f32.mrb[0].mxu0
        %v4694 = vadd.f32 0.0, %v4693
        %v4695 = vpop.f32.mrb[0].mxu0
        %4696 = vmatprep.mubr.f32.mxu0 0.0
        %4697 = vmatmul.mubr.f32.gmra.mrb[0].mxu0 %v4416
        %v4698 = vpop.f32.mrb[0].mxu0
        %v4699 = vadd.f32 0.0, %v4698
        %v4700 = vpop.f32.mrb[0].mxu0
        %4701 = vmatprep.mubr.f32.mxu0 0.0
        %4702 = vmatmul.mubr.f32.gmra.mrb[0].mxu0 %v4419
        %v4703 = vpop.f32.mrb[0].mxu0
        %v4704 = vadd.f32 0.0, %v4703
        %v4705 = vpop.f32.mrb[0].mxu0
        %4706 = vmatprep.mubr.f32.mxu0 0.0
        %4707 = vmatmul.mubr.f32.gmra.mrb[0].mxu0 %v4422
        %v4708 = vpop.f32.mrb[0].mxu0
        %v4709 = vadd.f32 0.0, %v4708
        %v4710 = vpop.f32.mrb[0].mxu0
        %4711 = vdwg.mxu0
        %s4712 = scalar_lea.vmem %s8, 264
        %v4713 = vld [vmem:[%s4712] sm:$0xff]
        %v4714 = vld [vmem:[%s4712 + $0x8] sm:$0xff]
        %v4715 = vld [vmem:[%s4712 + $0x10] sm:$0xff]
        %v4716 = vld [vmem:[%s4712 + $0x18] sm:$0xff]
        %v4717 = vld [vmem:[%s4712 + $0x20] sm:$0xff]
        %v4718 = vld [vmem:[%s4712 + $0x28] sm:$0xff]
        %v4719 = vld [vmem:[%s4712 + $0x30] sm:$0xff]
        %v4720 = vld [vmem:[%s4712 + $0x38] sm:$0xff]
        %v4721 = vld [vmem:[%s4712 + $0x40] sm:$0xff]
        %v4722 = vld [vmem:[%s4712 + $0x48] sm:$0xff]
        %v4723 = vld [vmem:[%s4712 + $0x50] sm:$0x1]
        %v4725 = vsel %vm976, %v4723, 0
        %4727 = vmatprep.subr.mxu0 0.0
        %4728 = vmatpush1.msra.mxu0 %v4713
        %4729 = vmatprep.subr.mxu0 0.0
        %4730 = vmatpush1.msra.mxu0 %v4714
        %4731 = vmatprep.subr.mxu0 0.0
        %4732 = vmatpush1.msra.mxu0 %v4715
        %4733 = vmatprep.subr.mxu0 0.0
        %4734 = vmatpush1.msra.mxu0 %v4716
        %4735 = vmatprep.subr.mxu0 0.0
        %4736 = vmatpush1.msra.mxu0 %v4717
        %4737 = vmatprep.subr.mxu0 0.0
        %4738 = vmatpush1.msra.mxu0 %v4718
        %4739 = vmatprep.subr.mxu0 0.0
        %4740 = vmatpush1.msra.mxu0 %v4719
        %4741 = vmatprep.subr.mxu0 0.0
        %4742 = vmatpush1.msra.mxu0 %v4720
        %4743 = vmatprep.subr.mxu0 0.0
        %4744 = vmatpush1.msra.mxu0 %v4721
        %4745 = vmatprep.subr.mxu0 0.0
        %4746 = vmatpush1.msra.mxu0 %v4722
        %4747 = vmatprep.subr.mxu0 0.0
        %4748 = vmatpush1.msra.mxu0 %v4725
        %4749 = vmatprep.subr.mxu0 0.0
        %4750 = vmatpush1.msra.mxu0 0.0
        %4751 = vmatprep.subr.mxu0 0.0
        %4752 = vmatpush1.msra.mxu0 0.0
        %4753 = vmatprep.subr.mxu0 0.0
        %4754 = vmatpush1.msra.mxu0 0.0
        %4755 = vmatprep.subr.mxu0 0.0
        %4756 = vmatpush1.msra.mxu0 0.0
        %4757 = vmatprep.subr.mxu0 0.0
        %4758 = vmatpush1.msra.mxu0 0.0
        %4759 = vmatprep.subr.mxu0 0.0
        %4760 = vmatpush1.msra.mxu0 0.0
        %4761 = vmatprep.subr.mxu0 0.0
        %4762 = vmatpush1.msra.mxu0 0.0
        %4763 = vmatprep.subr.mxu0 0.0
        %4764 = vmatpush1.msra.mxu0 0.0
        %4765 = vmatprep.subr.mxu0 0.0
        %4766 = vmatpush1.msra.mxu0 0.0
        %4767 = vmatprep.subr.mxu0 0.0
        %4768 = vmatpush1.msra.mxu0 0.0
        %4769 = vmatprep.subr.mxu0 0.0
        %4770 = vmatpush1.msra.mxu0 0.0
        %4771 = vmatprep.subr.mxu0 0.0
        %4772 = vmatpush1.msra.mxu0 0.0
        %4773 = vmatprep.subr.mxu0 0.0
        %4774 = vmatpush1.msra.mxu0 0.0
        %4775 = vmatprep.subr.mxu0 0.0
        %4776 = vmatpush1.msra.mxu0 0.0
        %4777 = vmatprep.subr.mxu0 0.0
        %4778 = vmatpush1.msra.mxu0 0.0
        %4779 = vmatprep.subr.mxu0 0.0
        %4780 = vmatpush1.msra.mxu0 0.0
        %4781 = vmatprep.subr.mxu0 0.0
        %4782 = vmatpush1.msra.mxu0 0.0
        %4783 = vmatprep.subr.mxu0 0.0
        %4784 = vmatpush1.msra.mxu0 0.0
        %4785 = vmatprep.subr.mxu0 0.0
        %4786 = vmatpush1.msra.mxu0 0.0
        %4787 = vmatprep.subr.mxu0 0.0
        %4788 = vmatpush1.msra.mxu0 0.0
        %4789 = vmatprep.subr.mxu0 0.0
        %4790 = vmatpush1.msra.mxu0 0.0
        %4791 = vmatprep.mubr.f32.mxu0 0.0
        %4792 = vmatmul.mubr.f32.gmra.mrb[0].mxu0 %v4413
        %v4793 = vpop.f32.mrb[0].mxu0
        %v4794 = vadd.f32 0.0, %v4793
        %v4795 = vpop.f32.mrb[0].mxu0
        %4796 = vmatprep.mubr.f32.mxu0 0.0
        %4797 = vmatmul.mubr.f32.gmra.mrb[0].mxu0 %v4416
        %v4798 = vpop.f32.mrb[0].mxu0
        %v4799 = vadd.f32 0.0, %v4798
        %v4800 = vpop.f32.mrb[0].mxu0
        %4801 = vmatprep.mubr.f32.mxu0 0.0
        %4802 = vmatmul.mubr.f32.gmra.mrb[0].mxu0 %v4419
        %v4803 = vpop.f32.mrb[0].mxu0
        %v4804 = vadd.f32 0.0, %v4803
        %v4805 = vpop.f32.mrb[0].mxu0
        %4806 = vmatprep.mubr.f32.mxu0 0.0
        %4807 = vmatmul.mubr.f32.gmra.mrb[0].mxu0 %v4422
        %v4808 = vpop.f32.mrb[0].mxu0
        %v4809 = vadd.f32 0.0, %v4808
        %v4810 = vpop.f32.mrb[0].mxu0
        %4811 = vdwg.mxu0
        %s4812 = scalar_lea.vmem %s6, 64
        %v4813 = vld [vmem:[%s4812] sm:$0xff]
        %v4814 = vld [vmem:[%s4812 + $0x8] sm:$0xff]
        %v4815 = vld [vmem:[%s7] sm:$0xff]
        %v4816 = vld [vmem:[%s7 + $0x8] sm:$0xff]
        %4818 = vset.pattern.permute.xlu0 0
        %4819 = vperm.xlu0 %4818, %v4815
        %v4820 = vpop.permute.xlu0 %4819
        %4823 = vset.pattern.permute.xlu0 0
        %4824 = vperm.xlu0 %4823, %v4816
        %v4825 = vpop.permute.xlu0 %4824
        %v4828 = vsel %vm1174, %v4813, 0
        %v4831 = vsel %vm1174, %v4814, 0
        %4833 = vmatprep.subr.mxu0 0.0
        %4834 = vmatpush1.msra.mxu0 %v4494
        %4835 = vmatprep.subr.mxu0 0.0
        %4836 = vmatpush1.msra.mxu0 %v4499
        %4837 = vmatprep.subr.mxu0 0.0
        %4838 = vmatpush1.msra.mxu0 %v4504
        %4839 = vmatprep.subr.mxu0 0.0
        %4840 = vmatpush1.msra.mxu0 %v4509
        %4841 = vmatprep.subr.mxu0 0.0
        %4842 = vmatpush1.msra.mxu0 0.0
        %4843 = vmatprep.subr.mxu0 0.0
        %4844 = vmatpush1.msra.mxu0 0.0
        %4845 = vmatprep.subr.mxu0 0.0
        %4846 = vmatpush1.msra.mxu0 0.0
        %4847 = vmatprep.subr.mxu0 0.0
        %4848 = vmatpush1.msra.mxu0 0.0
        %4849 = vmatprep.subr.mxu0 0.0
        %4850 = vmatpush1.msra.mxu0 0.0
        %4851 = vmatprep.subr.mxu0 0.0
        %4852 = vmatpush1.msra.mxu0 0.0
        %4853 = vmatprep.subr.mxu0 0.0
        %4854 = vmatpush1.msra.mxu0 0.0
        %4855 = vmatprep.subr.mxu0 0.0
        %4856 = vmatpush1.msra.mxu0 0.0
        %4857 = vmatprep.subr.mxu0 0.0
        %4858 = vmatpush1.msra.mxu0 0.0
        %4859 = vmatprep.subr.mxu0 0.0
        %4860 = vmatpush1.msra.mxu0 0.0
        %4861 = vmatprep.subr.mxu0 0.0
        %4862 = vmatpush1.msra.mxu0 0.0
        %4863 = vmatprep.subr.mxu0 0.0
        %4864 = vmatpush1.msra.mxu0 0.0
        %4865 = vmatprep.subr.mxu0 0.0
        %4866 = vmatpush1.msra.mxu0 0.0
        %4867 = vmatprep.subr.mxu0 0.0
        %4868 = vmatpush1.msra.mxu0 0.0
        %4869 = vmatprep.subr.mxu0 0.0
        %4870 = vmatpush1.msra.mxu0 0.0
        %4871 = vmatprep.subr.mxu0 0.0
        %4872 = vmatpush1.msra.mxu0 0.0
        %4873 = vmatprep.subr.mxu0 0.0
        %4874 = vmatpush1.msra.mxu0 0.0
        %4875 = vmatprep.subr.mxu0 0.0
        %4876 = vmatpush1.msra.mxu0 0.0
        %4877 = vmatprep.subr.mxu0 0.0
        %4878 = vmatpush1.msra.mxu0 0.0
        %4879 = vmatprep.subr.mxu0 0.0
        %4880 = vmatpush1.msra.mxu0 0.0
        %4881 = vmatprep.subr.mxu0 0.0
        %4882 = vmatpush1.msra.mxu0 0.0
        %4883 = vmatprep.subr.mxu0 0.0
        %4884 = vmatpush1.msra.mxu0 0.0
        %4885 = vmatprep.subr.mxu0 0.0
        %4886 = vmatpush1.msra.mxu0 0.0
        %4887 = vmatprep.subr.mxu0 0.0
        %4888 = vmatpush1.msra.mxu0 0.0
        %4889 = vmatprep.subr.mxu0 0.0
        %4890 = vmatpush1.msra.mxu0 0.0
        %4891 = vmatprep.subr.mxu0 0.0
        %4892 = vmatpush1.msra.mxu0 0.0
        %4893 = vmatprep.subr.mxu0 0.0
        %4894 = vmatpush1.msra.mxu0 0.0
        %4895 = vmatprep.subr.mxu0 0.0
        %4896 = vmatpush1.msra.mxu0 0.0
        %4897 = vmatprep.mubr.f32.mxu0 0.0
        %4898 = vmatmul.mubr.f32.gmra.mrb[0].mxu0 %v4828
        %v4899 = vpop.f32.mrb[0].mxu0
        %v4900 = vadd.f32 %v4820, %v4899
        %v4901 = vpop.f32.mrb[0].mxu0
        %4902 = vmatprep.mubr.f32.mxu0 0.0
        %4903 = vmatmul.mubr.f32.gmra.mrb[0].mxu0 %v4831
        %v4904 = vpop.f32.mrb[0].mxu0
        %v4905 = vadd.f32 %v4825, %v4904
        %v4906 = vpop.f32.mrb[0].mxu0
        %4907 = vdwg.mxu0
        %v4908 = vmax.f32 %v4900, 0.0
        %v4909 = vmax.f32 %v4905, 0.0
        %v4910 = vld [vmem:[%s9] sm:$0xff]
        %v4911 = vld [vmem:[%s9 + $0x8] sm:$0xff]
        %v4912 = vld [vmem:[%s9 + $0x10] sm:$0xff]
        %v4913 = vld [vmem:[%s9 + $0x18] sm:$0xff]
        %v4914 = vld [vmem:[%s9 + $0x20] sm:$0xff]
        %v4915 = vld [vmem:[%s9 + $0x28] sm:$0xff]
        %v4916 = vld [vmem:[%s9 + $0x30] sm:$0xff]
        %v4917 = vld [vmem:[%s9 + $0x38] sm:$0xff]
        %v4918 = vld [vmem:[%s9 + $0x40] sm:$0xff]
        %v4919 = vld [vmem:[%s9 + $0x48] sm:$0xff]
        %v4920 = vld [vmem:[%s9 + $0x50] sm:$0xff]
        %v4921 = vld [vmem:[%s9 + $0x58] sm:$0xff]
        %v4922 = vld [vmem:[%s9 + $0x60] sm:$0xff]
        %v4923 = vld [vmem:[%s9 + $0x68] sm:$0xff]
        %v4924 = vld [vmem:[%s9 + $0x70] sm:$0xff]
        %v4925 = vld [vmem:[%s9 + $0x78] sm:$0xff]
        %v4926 = vld [vmem:[%s9 + $0x80] sm:$0xff]
        %v4927 = vld [vmem:[%s9 + $0x88] sm:$0xff]
        %v4928 = vld [vmem:[%s9 + $0x90] sm:$0xff]
        %v4929 = vld [vmem:[%s9 + $0x98] sm:$0xff]
        %v4930 = vld [vmem:[%s9 + $0xa0] sm:$0x1]
        %v4931 = vld [vmem:[%s9 + $0xa8] sm:$0x1]
        %s4932 = scalar_lea.vmem %s6, 80
        %v4933 = vld [vmem:[%s4932] sm:$0xff]
        %v4934 = vld [vmem:[%s4932 + $0x8] sm:$0xff]
        %s4935 = scalar_lea.vmem %s6, 48
        %v4936 = vld [vmem:[%s4935] sm:$0xff]
        %v4937 = vld [vmem:[%s4935 + $0x8] sm:$0xff]
        %v4939 = vsel %vm1174, %v4936, 0
        %v4942 = vsel %vm1174, %v4937, 0
        %4944 = vmatprep.subr.mxu0 0.0
        %4945 = vmatpush1.msra.mxu0 %v4594
        %4946 = vmatprep.subr.mxu0 0.0
        %4947 = vmatpush1.msra.mxu0 %v4599
        %4948 = vmatprep.subr.mxu0 0.0
        %4949 = vmatpush1.msra.mxu0 %v4604
        %4950 = vmatprep.subr.mxu0 0.0
        %4951 = vmatpush1.msra.mxu0 %v4609
        %4952 = vmatprep.subr.mxu0 0.0
        %4953 = vmatpush1.msra.mxu0 0.0
        %4954 = vmatprep.subr.mxu0 0.0
        %4955 = vmatpush1.msra.mxu0 0.0
        %4956 = vmatprep.subr.mxu0 0.0
        %4957 = vmatpush1.msra.mxu0 0.0
        %4958 = vmatprep.subr.mxu0 0.0
        %4959 = vmatpush1.msra.mxu0 0.0
        %4960 = vmatprep.subr.mxu0 0.0
        %4961 = vmatpush1.msra.mxu0 0.0
        %4962 = vmatprep.subr.mxu0 0.0
        %4963 = vmatpush1.msra.mxu0 0.0
        %4964 = vmatprep.subr.mxu0 0.0
        %4965 = vmatpush1.msra.mxu0 0.0
        %4966 = vmatprep.subr.mxu0 0.0
        %4967 = vmatpush1.msra.mxu0 0.0
        %4968 = vmatprep.subr.mxu0 0.0
        %4969 = vmatpush1.msra.mxu0 0.0
        %4970 = vmatprep.subr.mxu0 0.0
        %4971 = vmatpush1.msra.mxu0 0.0
        %4972 = vmatprep.subr.mxu0 0.0
        %4973 = vmatpush1.msra.mxu0 0.0
        %4974 = vmatprep.subr.mxu0 0.0
        %4975 = vmatpush1.msra.mxu0 0.0
        %4976 = vmatprep.subr.mxu0 0.0
        %4977 = vmatpush1.msra.mxu0 0.0
        %4978 = vmatprep.subr.mxu0 0.0
        %4979 = vmatpush1.msra.mxu0 0.0
        %4980 = vmatprep.subr.mxu0 0.0
        %4981 = vmatpush1.msra.mxu0 0.0
        %4982 = vmatprep.subr.mxu0 0.0
        %4983 = vmatpush1.msra.mxu0 0.0
        %4984 = vmatprep.subr.mxu0 0.0
        %4985 = vmatpush1.msra.mxu0 0.0
        %4986 = vmatprep.subr.mxu0 0.0
        %4987 = vmatpush1.msra.mxu0 0.0
        %4988 = vmatprep.subr.mxu0 0.0
        %4989 = vmatpush1.msra.mxu0 0.0
        %4990 = vmatprep.subr.mxu0 0.0
        %4991 = vmatpush1.msra.mxu0 0.0
        %4992 = vmatprep.subr.mxu0 0.0
        %4993 = vmatpush1.msra.mxu0 0.0
        %4994 = vmatprep.subr.mxu0 0.0
        %4995 = vmatpush1.msra.mxu0 0.0
        %4996 = vmatprep.subr.mxu0 0.0
        %4997 = vmatpush1.msra.mxu0 0.0
        %4998 = vmatprep.subr.mxu0 0.0
        %4999 = vmatpush1.msra.mxu0 0.0
        %5000 = vmatprep.subr.mxu0 0.0
        %5001 = vmatpush1.msra.mxu0 0.0
        %5002 = vmatprep.subr.mxu0 0.0
        %5003 = vmatpush1.msra.mxu0 0.0
        %5004 = vmatprep.subr.mxu0 0.0
        %5005 = vmatpush1.msra.mxu0 0.0
        %5006 = vmatprep.subr.mxu0 0.0
        %5007 = vmatpush1.msra.mxu0 0.0
        %5008 = vmatprep.mubr.f32.mxu0 0.0
        %5009 = vmatmul.mubr.f32.gmra.mrb[0].mxu0 %v4939
        %v5010 = vpop.f32.mrb[0].mxu0
        %v5011 = vadd.f32 0.0, %v5010
        %v5012 = vpop.f32.mrb[0].mxu0
        %5013 = vmatprep.mubr.f32.mxu0 0.0
        %5014 = vmatmul.mubr.f32.gmra.mrb[0].mxu0 %v4942
        %v5015 = vpop.f32.mrb[0].mxu0
        %v5016 = vadd.f32 0.0, %v5015
        %v5017 = vpop.f32.mrb[0].mxu0
        %5018 = vdwg.mxu0
        %v5020 = vsel %vm1174, %v4933, 0
        %v5023 = vsel %vm1174, %v4934, 0
        %5025 = vmatprep.subr.mxu0 0.0
        %5026 = vmatpush1.msra.mxu0 %v4494
        %5027 = vmatprep.subr.mxu0 0.0
        %5028 = vmatpush1.msra.mxu0 %v4499
        %5029 = vmatprep.subr.mxu0 0.0
        %5030 = vmatpush1.msra.mxu0 %v4504
        %5031 = vmatprep.subr.mxu0 0.0
        %5032 = vmatpush1.msra.mxu0 %v4509
        %5033 = vmatprep.subr.mxu0 0.0
        %5034 = vmatpush1.msra.mxu0 0.0
        %5035 = vmatprep.subr.mxu0 0.0
        %5036 = vmatpush1.msra.mxu0 0.0
        %5037 = vmatprep.subr.mxu0 0.0
        %5038 = vmatpush1.msra.mxu0 0.0
        %5039 = vmatprep.subr.mxu0 0.0
        %5040 = vmatpush1.msra.mxu0 0.0
        %5041 = vmatprep.subr.mxu0 0.0
        %5042 = vmatpush1.msra.mxu0 0.0
        %5043 = vmatprep.subr.mxu0 0.0
        %5044 = vmatpush1.msra.mxu0 0.0
        %5045 = vmatprep.subr.mxu0 0.0
        %5046 = vmatpush1.msra.mxu0 0.0
        %5047 = vmatprep.subr.mxu0 0.0
        %5048 = vmatpush1.msra.mxu0 0.0
        %5049 = vmatprep.subr.mxu0 0.0
        %5050 = vmatpush1.msra.mxu0 0.0
        %5051 = vmatprep.subr.mxu0 0.0
        %5052 = vmatpush1.msra.mxu0 0.0
        %5053 = vmatprep.subr.mxu0 0.0
        %5054 = vmatpush1.msra.mxu0 0.0
        %5055 = vmatprep.subr.mxu0 0.0
        %5056 = vmatpush1.msra.mxu0 0.0
        %5057 = vmatprep.subr.mxu0 0.0
        %5058 = vmatpush1.msra.mxu0 0.0
        %5059 = vmatprep.subr.mxu0 0.0
        %5060 = vmatpush1.msra.mxu0 0.0
        %5061 = vmatprep.subr.mxu0 0.0
        %5062 = vmatpush1.msra.mxu0 0.0
        %5063 = vmatprep.subr.mxu0 0.0
        %5064 = vmatpush1.msra.mxu0 0.0
        %5065 = vmatprep.subr.mxu0 0.0
        %5066 = vmatpush1.msra.mxu0 0.0
        %5067 = vmatprep.subr.mxu0 0.0
        %5068 = vmatpush1.msra.mxu0 0.0
        %5069 = vmatprep.subr.mxu0 0.0
        %5070 = vmatpush1.msra.mxu0 0.0
        %5071 = vmatprep.subr.mxu0 0.0
        %5072 = vmatpush1.msra.mxu0 0.0
        %5073 = vmatprep.subr.mxu0 0.0
        %5074 = vmatpush1.msra.mxu0 0.0
        %5075 = vmatprep.subr.mxu0 0.0
        %5076 = vmatpush1.msra.mxu0 0.0
        %5077 = vmatprep.subr.mxu0 0.0
        %5078 = vmatpush1.msra.mxu0 0.0
        %5079 = vmatprep.subr.mxu0 0.0
        %5080 = vmatpush1.msra.mxu0 0.0
        %5081 = vmatprep.subr.mxu0 0.0
        %5082 = vmatpush1.msra.mxu0 0.0
        %5083 = vmatprep.subr.mxu0 0.0
        %5084 = vmatpush1.msra.mxu0 0.0
        %5085 = vmatprep.subr.mxu0 0.0
        %5086 = vmatpush1.msra.mxu0 0.0
        %5087 = vmatprep.subr.mxu0 0.0
        %5088 = vmatpush1.msra.mxu0 0.0
        %5089 = vmatprep.mubr.f32.mxu0 0.0
        %5090 = vmatmul.mubr.f32.gmra.mrb[0].mxu0 %v5020
        %v5091 = vpop.f32.mrb[0].mxu0
        %v5092 = vadd.f32 %v5011, %v5091
        %v5093 = vpop.f32.mrb[0].mxu0
        %5094 = vmatprep.mubr.f32.mxu0 0.0
        %5095 = vmatmul.mubr.f32.gmra.mrb[0].mxu0 %v5023
        %v5096 = vpop.f32.mrb[0].mxu0
        %v5097 = vadd.f32 %v5016, %v5096
        %v5098 = vpop.f32.mrb[0].mxu0
        %5099 = vdwg.mxu0
        %v5100 = vadd.f32 %v5092, %v4820
        %v5101 = vadd.f32 %v5097, %v4825
        %v5102 = vmax.f32 %v5100, 0.0
        %v5103 = vmax.f32 %v5101, 0.0
        %s5104 = scalar_lea.vmem %s9, 176
        %v5105 = vld [vmem:[%s5104] sm:$0xff]
        %v5106 = vld [vmem:[%s5104 + $0x8] sm:$0xff]
        %v5107 = vld [vmem:[%s5104 + $0x10] sm:$0xff]
        %v5108 = vld [vmem:[%s5104 + $0x18] sm:$0xff]
        %v5109 = vld [vmem:[%s5104 + $0x20] sm:$0xff]
        %v5110 = vld [vmem:[%s5104 + $0x28] sm:$0xff]
        %v5111 = vld [vmem:[%s5104 + $0x30] sm:$0xff]
        %v5112 = vld [vmem:[%s5104 + $0x38] sm:$0xff]
        %v5113 = vld [vmem:[%s5104 + $0x40] sm:$0xff]
        %v5114 = vld [vmem:[%s5104 + $0x48] sm:$0xff]
        %v5115 = vld [vmem:[%s5104 + $0x50] sm:$0xff]
        %v5116 = vld [vmem:[%s5104 + $0x58] sm:$0xff]
        %v5117 = vld [vmem:[%s5104 + $0x60] sm:$0xff]
        %v5118 = vld [vmem:[%s5104 + $0x68] sm:$0xff]
        %v5119 = vld [vmem:[%s5104 + $0x70] sm:$0xff]
        %v5120 = vld [vmem:[%s5104 + $0x78] sm:$0xff]
        %v5121 = vld [vmem:[%s5104 + $0x80] sm:$0xff]
        %v5122 = vld [vmem:[%s5104 + $0x88] sm:$0xff]
        %v5123 = vld [vmem:[%s5104 + $0x90] sm:$0xff]
        %v5124 = vld [vmem:[%s5104 + $0x98] sm:$0xff]
        %v5125 = vld [vmem:[%s5104 + $0xa0] sm:$0x1]
        %v5126 = vld [vmem:[%s5104 + $0xa8] sm:$0x1]
        %v5128 = vsel %vm963, %v5102, 0
        %v5131 = vsel %vm963, %v5103, 0
        %v5134 = vsel %vm976, %v5125, 0
        %v5137 = vsel %vm976, %v5126, 0
        %5139 = vmatprep.subr.mxu0 %v5106
        %5140 = vmatpush1.msra.mxu0 %v5105
        %5141 = vmatprep.subr.mxu0 %v5108
        %5142 = vmatpush1.msra.mxu0 %v5107
        %5143 = vmatprep.subr.mxu0 %v5110
        %5144 = vmatpush1.msra.mxu0 %v5109
        %5145 = vmatprep.subr.mxu0 %v5112
        %5146 = vmatpush1.msra.mxu0 %v5111
        %5147 = vmatprep.subr.mxu0 %v5114
        %5148 = vmatpush1.msra.mxu0 %v5113
        %5149 = vmatprep.subr.mxu0 %v5116
        %5150 = vmatpush1.msra.mxu0 %v5115
        %5151 = vmatprep.subr.mxu0 %v5118
        %5152 = vmatpush1.msra.mxu0 %v5117
        %5153 = vmatprep.subr.mxu0 %v5120
        %5154 = vmatpush1.msra.mxu0 %v5119
        %5155 = vmatprep.subr.mxu0 %v5122
        %5156 = vmatpush1.msra.mxu0 %v5121
        %5157 = vmatprep.subr.mxu0 %v5124
        %5158 = vmatpush1.msra.mxu0 %v5123
        %5159 = vmatprep.subr.mxu0 %v5137
        %5160 = vmatpush1.msra.mxu0 %v5134
        %5161 = vmatprep.subr.mxu0 0.0
        %5162 = vmatpush1.msra.mxu0 0.0
        %5163 = vmatprep.subr.mxu0 0.0
        %5164 = vmatpush1.msra.mxu0 0.0
        %5165 = vmatprep.subr.mxu0 0.0
        %5166 = vmatpush1.msra.mxu0 0.0
        %5167 = vmatprep.subr.mxu0 0.0
        %5168 = vmatpush1.msra.mxu0 0.0
        %5169 = vmatprep.subr.mxu0 0.0
        %5170 = vmatpush1.msra.mxu0 0.0
        %5171 = vmatprep.subr.mxu0 0.0
        %5172 = vmatpush1.msra.mxu0 0.0
        %5173 = vmatprep.subr.mxu0 0.0
        %5174 = vmatpush1.msra.mxu0 0.0
        %5175 = vmatprep.subr.mxu0 0.0
        %5176 = vmatpush1.msra.mxu0 0.0
        %5177 = vmatprep.subr.mxu0 0.0
        %5178 = vmatpush1.msra.mxu0 0.0
        %5179 = vmatprep.subr.mxu0 0.0
        %5180 = vmatpush1.msra.mxu0 0.0
        %5181 = vmatprep.subr.mxu0 0.0
        %5182 = vmatpush1.msra.mxu0 0.0
        %5183 = vmatprep.subr.mxu0 0.0
        %5184 = vmatpush1.msra.mxu0 0.0
        %5185 = vmatprep.subr.mxu0 0.0
        %5186 = vmatpush1.msra.mxu0 0.0
        %5187 = vmatprep.subr.mxu0 0.0
        %5188 = vmatpush1.msra.mxu0 0.0
        %5189 = vmatprep.subr.mxu0 0.0
        %5190 = vmatpush1.msra.mxu0 0.0
        %5191 = vmatprep.subr.mxu0 0.0
        %5192 = vmatpush1.msra.mxu0 0.0
        %5193 = vmatprep.subr.mxu0 0.0
        %5194 = vmatpush1.msra.mxu0 0.0
        %5195 = vmatprep.subr.mxu0 0.0
        %5196 = vmatpush1.msra.mxu0 0.0
        %5197 = vmatprep.subr.mxu0 0.0
        %5198 = vmatpush1.msra.mxu0 0.0
        %5199 = vmatprep.subr.mxu0 0.0
        %5200 = vmatpush1.msra.mxu0 0.0
        %5201 = vmatprep.subr.mxu0 0.0
        %5202 = vmatpush1.msra.mxu0 0.0
        %5203 = vmatprep.mubr.f32.mxu0 0.0
        %5204 = vmatmul.mubr.f32.gmra.mrb[0].mxu0 %v5128
        %v5205 = vpop.f32.mrb[0].mxu0
        %v5206 = vadd.f32 0.0, %v5205
        %v5207 = vpop.f32.mrb[0].mxu0
        %v5208 = vadd.f32 0.0, %v5207
        %5209 = vmatprep.mubr.f32.mxu0 0.0
        %5210 = vmatmul.mubr.f32.gmra.mrb[0].mxu0 %v5131
        %v5211 = vpop.f32.mrb[0].mxu0
        %v5212 = vadd.f32 0.0, %v5211
        %v5213 = vpop.f32.mrb[0].mxu0
        %v5214 = vadd.f32 0.0, %v5213
        %5215 = vdwg.mxu0
        %v5217 = vsel %vm963, %v4908, 0
        %v5220 = vsel %vm963, %v4909, 0
        %v5223 = vsel %vm976, %v4930, 0
        %v5226 = vsel %vm976, %v4931, 0
        %5228 = vmatprep.subr.mxu0 %v4911
        %5229 = vmatpush1.msra.mxu0 %v4910
        %5230 = vmatprep.subr.mxu0 %v4913
        %5231 = vmatpush1.msra.mxu0 %v4912
        %5232 = vmatprep.subr.mxu0 %v4915
        %5233 = vmatpush1.msra.mxu0 %v4914
        %5234 = vmatprep.subr.mxu0 %v4917
        %5235 = vmatpush1.msra.mxu0 %v4916
        %5236 = vmatprep.subr.mxu0 %v4919
        %5237 = vmatpush1.msra.mxu0 %v4918
        %5238 = vmatprep.subr.mxu0 %v4921
        %5239 = vmatpush1.msra.mxu0 %v4920
        %5240 = vmatprep.subr.mxu0 %v4923
        %5241 = vmatpush1.msra.mxu0 %v4922
        %5242 = vmatprep.subr.mxu0 %v4925
        %5243 = vmatpush1.msra.mxu0 %v4924
        %5244 = vmatprep.subr.mxu0 %v4927
        %5245 = vmatpush1.msra.mxu0 %v4926
        %5246 = vmatprep.subr.mxu0 %v4929
        %5247 = vmatpush1.msra.mxu0 %v4928
        %5248 = vmatprep.subr.mxu0 %v5226
        %5249 = vmatpush1.msra.mxu0 %v5223
        %5250 = vmatprep.subr.mxu0 0.0
        %5251 = vmatpush1.msra.mxu0 0.0
        %5252 = vmatprep.subr.mxu0 0.0
        %5253 = vmatpush1.msra.mxu0 0.0
        %5254 = vmatprep.subr.mxu0 0.0
        %5255 = vmatpush1.msra.mxu0 0.0
        %5256 = vmatprep.subr.mxu0 0.0
        %5257 = vmatpush1.msra.mxu0 0.0
        %5258 = vmatprep.subr.mxu0 0.0
        %5259 = vmatpush1.msra.mxu0 0.0
        %5260 = vmatprep.subr.mxu0 0.0
        %5261 = vmatpush1.msra.mxu0 0.0
        %5262 = vmatprep.subr.mxu0 0.0
        %5263 = vmatpush1.msra.mxu0 0.0
        %5264 = vmatprep.subr.mxu0 0.0
        %5265 = vmatpush1.msra.mxu0 0.0
        %5266 = vmatprep.subr.mxu0 0.0
        %5267 = vmatpush1.msra.mxu0 0.0
        %5268 = vmatprep.subr.mxu0 0.0
        %5269 = vmatpush1.msra.mxu0 0.0
        %5270 = vmatprep.subr.mxu0 0.0
        %5271 = vmatpush1.msra.mxu0 0.0
        %5272 = vmatprep.subr.mxu0 0.0
        %5273 = vmatpush1.msra.mxu0 0.0
        %5274 = vmatprep.subr.mxu0 0.0
        %5275 = vmatpush1.msra.mxu0 0.0
        %5276 = vmatprep.subr.mxu0 0.0
        %5277 = vmatpush1.msra.mxu0 0.0
        %5278 = vmatprep.subr.mxu0 0.0
        %5279 = vmatpush1.msra.mxu0 0.0
        %5280 = vmatprep.subr.mxu0 0.0
        %5281 = vmatpush1.msra.mxu0 0.0
        %5282 = vmatprep.subr.mxu0 0.0
        %5283 = vmatpush1.msra.mxu0 0.0
        %5284 = vmatprep.subr.mxu0 0.0
        %5285 = vmatpush1.msra.mxu0 0.0
        %5286 = vmatprep.subr.mxu0 0.0
        %5287 = vmatpush1.msra.mxu0 0.0
        %5288 = vmatprep.subr.mxu0 0.0
        %5289 = vmatpush1.msra.mxu0 0.0
        %5290 = vmatprep.subr.mxu0 0.0
        %5291 = vmatpush1.msra.mxu0 0.0
        %5292 = vmatprep.mubr.f32.mxu0 0.0
        %5293 = vmatmul.mubr.f32.gmra.mrb[0].mxu0 %v5217
        %v5294 = vpop.f32.mrb[0].mxu0
        %v5295 = vadd.f32 %v5206, %v5294
        %v5296 = vpop.f32.mrb[0].mxu0
        %v5297 = vadd.f32 %v5208, %v5296
        %5298 = vmatprep.mubr.f32.mxu0 0.0
        %5299 = vmatmul.mubr.f32.gmra.mrb[0].mxu0 %v5220
        %v5300 = vpop.f32.mrb[0].mxu0
        %v5301 = vadd.f32 %v5212, %v5300
        %v5302 = vpop.f32.mrb[0].mxu0
        %v5303 = vadd.f32 %v5214, %v5302
        %5304 = vdwg.mxu0
        %s5305 = scalar_lea.vmem %s6, 112
        %v5306 = vld [vmem:[%s5305] sm:$0xff]
        %v5307 = vld [vmem:[%s5305 + $0x8] sm:$0xff]
        %s5308 = scalar_lea.vmem %s6, 16
        %v5309 = vld [vmem:[%s5308] sm:$0xff]
        %v5310 = vld [vmem:[%s5308 + $0x8] sm:$0xff]
        %v5312 = vsel %vm1174, %v5309, 0
        %v5315 = vsel %vm1174, %v5310, 0
        %5317 = vmatprep.subr.mxu0 0.0
        %5318 = vmatpush1.msra.mxu0 %v4694
        %5319 = vmatprep.subr.mxu0 0.0
        %5320 = vmatpush1.msra.mxu0 %v4699
        %5321 = vmatprep.subr.mxu0 0.0
        %5322 = vmatpush1.msra.mxu0 %v4704
        %5323 = vmatprep.subr.mxu0 0.0
        %5324 = vmatpush1.msra.mxu0 %v4709
        %5325 = vmatprep.subr.mxu0 0.0
        %5326 = vmatpush1.msra.mxu0 0.0
        %5327 = vmatprep.subr.mxu0 0.0
        %5328 = vmatpush1.msra.mxu0 0.0
        %5329 = vmatprep.subr.mxu0 0.0
        %5330 = vmatpush1.msra.mxu0 0.0
        %5331 = vmatprep.subr.mxu0 0.0
        %5332 = vmatpush1.msra.mxu0 0.0
        %5333 = vmatprep.subr.mxu0 0.0
        %5334 = vmatpush1.msra.mxu0 0.0
        %5335 = vmatprep.subr.mxu0 0.0
        %5336 = vmatpush1.msra.mxu0 0.0
        %5337 = vmatprep.subr.mxu0 0.0
        %5338 = vmatpush1.msra.mxu0 0.0
        %5339 = vmatprep.subr.mxu0 0.0
        %5340 = vmatpush1.msra.mxu0 0.0
        %5341 = vmatprep.subr.mxu0 0.0
        %5342 = vmatpush1.msra.mxu0 0.0
        %5343 = vmatprep.subr.mxu0 0.0
        %5344 = vmatpush1.msra.mxu0 0.0
        %5345 = vmatprep.subr.mxu0 0.0
        %5346 = vmatpush1.msra.mxu0 0.0
        %5347 = vmatprep.subr.mxu0 0.0
        %5348 = vmatpush1.msra.mxu0 0.0
        %5349 = vmatprep.subr.mxu0 0.0
        %5350 = vmatpush1.msra.mxu0 0.0
        %5351 = vmatprep.subr.mxu0 0.0
        %5352 = vmatpush1.msra.mxu0 0.0
        %5353 = vmatprep.subr.mxu0 0.0
        %5354 = vmatpush1.msra.mxu0 0.0
        %5355 = vmatprep.subr.mxu0 0.0
        %5356 = vmatpush1.msra.mxu0 0.0
        %5357 = vmatprep.subr.mxu0 0.0
        %5358 = vmatpush1.msra.mxu0 0.0
        %5359 = vmatprep.subr.mxu0 0.0
        %5360 = vmatpush1.msra.mxu0 0.0
        %5361 = vmatprep.subr.mxu0 0.0
        %5362 = vmatpush1.msra.mxu0 0.0
        %5363 = vmatprep.subr.mxu0 0.0
        %5364 = vmatpush1.msra.mxu0 0.0
        %5365 = vmatprep.subr.mxu0 0.0
        %5366 = vmatpush1.msra.mxu0 0.0
        %5367 = vmatprep.subr.mxu0 0.0
        %5368 = vmatpush1.msra.mxu0 0.0
        %5369 = vmatprep.subr.mxu0 0.0
        %5370 = vmatpush1.msra.mxu0 0.0
        %5371 = vmatprep.subr.mxu0 0.0
        %5372 = vmatpush1.msra.mxu0 0.0
        %5373 = vmatprep.subr.mxu0 0.0
        %5374 = vmatpush1.msra.mxu0 0.0
        %5375 = vmatprep.subr.mxu0 0.0
        %5376 = vmatpush1.msra.mxu0 0.0
        %5377 = vmatprep.subr.mxu0 0.0
        %5378 = vmatpush1.msra.mxu0 0.0
        %5379 = vmatprep.subr.mxu0 0.0
        %5380 = vmatpush1.msra.mxu0 0.0
        %5381 = vmatprep.mubr.f32.mxu0 0.0
        %5382 = vmatmul.mubr.f32.gmra.mrb[0].mxu0 %v5312
        %v5383 = vpop.f32.mrb[0].mxu0
        %v5384 = vadd.f32 0.0, %v5383
        %v5385 = vpop.f32.mrb[0].mxu0
        %5386 = vmatprep.mubr.f32.mxu0 0.0
        %5387 = vmatmul.mubr.f32.gmra.mrb[0].mxu0 %v5315
        %v5388 = vpop.f32.mrb[0].mxu0
        %v5389 = vadd.f32 0.0, %v5388
        %v5390 = vpop.f32.mrb[0].mxu0
        %5391 = vdwg.mxu0
        %v5393 = vsel %vm1174, %v5306, 0
        %v5396 = vsel %vm1174, %v5307, 0
        %5398 = vmatprep.subr.mxu0 0.0
        %5399 = vmatpush1.msra.mxu0 %v4494
        %5400 = vmatprep.subr.mxu0 0.0
        %5401 = vmatpush1.msra.mxu0 %v4499
        %5402 = vmatprep.subr.mxu0 0.0
        %5403 = vmatpush1.msra.mxu0 %v4504
        %5404 = vmatprep.subr.mxu0 0.0
        %5405 = vmatpush1.msra.mxu0 %v4509
        %5406 = vmatprep.subr.mxu0 0.0
        %5407 = vmatpush1.msra.mxu0 0.0
        %5408 = vmatprep.subr.mxu0 0.0
        %5409 = vmatpush1.msra.mxu0 0.0
        %5410 = vmatprep.subr.mxu0 0.0
        %5411 = vmatpush1.msra.mxu0 0.0
        %5412 = vmatprep.subr.mxu0 0.0
        %5413 = vmatpush1.msra.mxu0 0.0
        %5414 = vmatprep.subr.mxu0 0.0
        %5415 = vmatpush1.msra.mxu0 0.0
        %5416 = vmatprep.subr.mxu0 0.0
        %5417 = vmatpush1.msra.mxu0 0.0
        %5418 = vmatprep.subr.mxu0 0.0
        %5419 = vmatpush1.msra.mxu0 0.0
        %5420 = vmatprep.subr.mxu0 0.0
        %5421 = vmatpush1.msra.mxu0 0.0
        %5422 = vmatprep.subr.mxu0 0.0
        %5423 = vmatpush1.msra.mxu0 0.0
        %5424 = vmatprep.subr.mxu0 0.0
        %5425 = vmatpush1.msra.mxu0 0.0
        %5426 = vmatprep.subr.mxu0 0.0
        %5427 = vmatpush1.msra.mxu0 0.0
        %5428 = vmatprep.subr.mxu0 0.0
        %5429 = vmatpush1.msra.mxu0 0.0
        %5430 = vmatprep.subr.mxu0 0.0
        %5431 = vmatpush1.msra.mxu0 0.0
        %5432 = vmatprep.subr.mxu0 0.0
        %5433 = vmatpush1.msra.mxu0 0.0
        %5434 = vmatprep.subr.mxu0 0.0
        %5435 = vmatpush1.msra.mxu0 0.0
        %5436 = vmatprep.subr.mxu0 0.0
        %5437 = vmatpush1.msra.mxu0 0.0
        %5438 = vmatprep.subr.mxu0 0.0
        %5439 = vmatpush1.msra.mxu0 0.0
        %5440 = vmatprep.subr.mxu0 0.0
        %5441 = vmatpush1.msra.mxu0 0.0
        %5442 = vmatprep.subr.mxu0 0.0
        %5443 = vmatpush1.msra.mxu0 0.0
        %5444 = vmatprep.subr.mxu0 0.0
        %5445 = vmatpush1.msra.mxu0 0.0
        %5446 = vmatprep.subr.mxu0 0.0
        %5447 = vmatpush1.msra.mxu0 0.0
        %5448 = vmatprep.subr.mxu0 0.0
        %5449 = vmatpush1.msra.mxu0 0.0
        %5450 = vmatprep.subr.mxu0 0.0
        %5451 = vmatpush1.msra.mxu0 0.0
        %5452 = vmatprep.subr.mxu0 0.0
        %5453 = vmatpush1.msra.mxu0 0.0
        %5454 = vmatprep.subr.mxu0 0.0
        %5455 = vmatpush1.msra.mxu0 0.0
        %5456 = vmatprep.subr.mxu0 0.0
        %5457 = vmatpush1.msra.mxu0 0.0
        %5458 = vmatprep.subr.mxu0 0.0
        %5459 = vmatpush1.msra.mxu0 0.0
        %5460 = vmatprep.subr.mxu0 0.0
        %5461 = vmatpush1.msra.mxu0 0.0
        %5462 = vmatprep.mubr.f32.mxu0 0.0
        %5463 = vmatmul.mubr.f32.gmra.mrb[0].mxu0 %v5393
        %v5464 = vpop.f32.mrb[0].mxu0
        %v5465 = vadd.f32 %v5384, %v5464
        %v5466 = vpop.f32.mrb[0].mxu0
        %5467 = vmatprep.mubr.f32.mxu0 0.0
        %5468 = vmatmul.mubr.f32.gmra.mrb[0].mxu0 %v5396
        %v5469 = vpop.f32.mrb[0].mxu0
        %v5470 = vadd.f32 %v5389, %v5469
        %v5471 = vpop.f32.mrb[0].mxu0
        %5472 = vdwg.mxu0
        %v5473 = vadd.f32 %v5465, %v4820
        %v5474 = vadd.f32 %v5470, %v4825
        %v5475 = vmax.f32 %v5473, 0.0
        %v5476 = vmax.f32 %v5474, 0.0
        %s5477 = scalar_lea.vmem %s9, 352
        %v5478 = vld [vmem:[%s5477] sm:$0xff]
        %v5479 = vld [vmem:[%s5477 + $0x8] sm:$0xff]
        %v5480 = vld [vmem:[%s5477 + $0x10] sm:$0xff]
        %v5481 = vld [vmem:[%s5477 + $0x18] sm:$0xff]
        %v5482 = vld [vmem:[%s5477 + $0x20] sm:$0xff]
        %v5483 = vld [vmem:[%s5477 + $0x28] sm:$0xff]
        %v5484 = vld [vmem:[%s5477 + $0x30] sm:$0xff]
        %v5485 = vld [vmem:[%s5477 + $0x38] sm:$0xff]
        %v5486 = vld [vmem:[%s5477 + $0x40] sm:$0xff]
        %v5487 = vld [vmem:[%s5477 + $0x48] sm:$0xff]
        %v5488 = vld [vmem:[%s5477 + $0x50] sm:$0xff]
        %v5489 = vld [vmem:[%s5477 + $0x58] sm:$0xff]
        %v5490 = vld [vmem:[%s5477 + $0x60] sm:$0xff]
        %v5491 = vld [vmem:[%s5477 + $0x68] sm:$0xff]
        %v5492 = vld [vmem:[%s5477 + $0x70] sm:$0xff]
        %v5493 = vld [vmem:[%s5477 + $0x78] sm:$0xff]
        %v5494 = vld [vmem:[%s5477 + $0x80] sm:$0xff]
        %v5495 = vld [vmem:[%s5477 + $0x88] sm:$0xff]
        %v5496 = vld [vmem:[%s5477 + $0x90] sm:$0xff]
        %v5497 = vld [vmem:[%s5477 + $0x98] sm:$0xff]
        %v5498 = vld [vmem:[%s5477 + $0xa0] sm:$0x1]
        %v5499 = vld [vmem:[%s5477 + $0xa8] sm:$0x1]
        %v5501 = vsel %vm963, %v5475, 0
        %v5504 = vsel %vm963, %v5476, 0
        %v5507 = vsel %vm976, %v5498, 0
        %v5510 = vsel %vm976, %v5499, 0
        %5512 = vmatprep.subr.mxu0 %v5479
        %5513 = vmatpush1.msra.mxu0 %v5478
        %5514 = vmatprep.subr.mxu0 %v5481
        %5515 = vmatpush1.msra.mxu0 %v5480
        %5516 = vmatprep.subr.mxu0 %v5483
        %5517 = vmatpush1.msra.mxu0 %v5482
        %5518 = vmatprep.subr.mxu0 %v5485
        %5519 = vmatpush1.msra.mxu0 %v5484
        %5520 = vmatprep.subr.mxu0 %v5487
        %5521 = vmatpush1.msra.mxu0 %v5486
        %5522 = vmatprep.subr.mxu0 %v5489
        %5523 = vmatpush1.msra.mxu0 %v5488
        %5524 = vmatprep.subr.mxu0 %v5491
        %5525 = vmatpush1.msra.mxu0 %v5490
        %5526 = vmatprep.subr.mxu0 %v5493
        %5527 = vmatpush1.msra.mxu0 %v5492
        %5528 = vmatprep.subr.mxu0 %v5495
        %5529 = vmatpush1.msra.mxu0 %v5494
        %5530 = vmatprep.subr.mxu0 %v5497
        %5531 = vmatpush1.msra.mxu0 %v5496
        %5532 = vmatprep.subr.mxu0 %v5510
        %5533 = vmatpush1.msra.mxu0 %v5507
        %5534 = vmatprep.subr.mxu0 0.0
        %5535 = vmatpush1.msra.mxu0 0.0
        %5536 = vmatprep.subr.mxu0 0.0
        %5537 = vmatpush1.msra.mxu0 0.0
        %5538 = vmatprep.subr.mxu0 0.0
        %5539 = vmatpush1.msra.mxu0 0.0
        %5540 = vmatprep.subr.mxu0 0.0
        %5541 = vmatpush1.msra.mxu0 0.0
        %5542 = vmatprep.subr.mxu0 0.0
        %5543 = vmatpush1.msra.mxu0 0.0
        %5544 = vmatprep.subr.mxu0 0.0
        %5545 = vmatpush1.msra.mxu0 0.0
        %5546 = vmatprep.subr.mxu0 0.0
        %5547 = vmatpush1.msra.mxu0 0.0
        %5548 = vmatprep.subr.mxu0 0.0
        %5549 = vmatpush1.msra.mxu0 0.0
        %5550 = vmatprep.subr.mxu0 0.0
        %5551 = vmatpush1.msra.mxu0 0.0
        %5552 = vmatprep.subr.mxu0 0.0
        %5553 = vmatpush1.msra.mxu0 0.0
        %5554 = vmatprep.subr.mxu0 0.0
        %5555 = vmatpush1.msra.mxu0 0.0
        %5556 = vmatprep.subr.mxu0 0.0
        %5557 = vmatpush1.msra.mxu0 0.0
        %5558 = vmatprep.subr.mxu0 0.0
        %5559 = vmatpush1.msra.mxu0 0.0
        %5560 = vmatprep.subr.mxu0 0.0
        %5561 = vmatpush1.msra.mxu0 0.0
        %5562 = vmatprep.subr.mxu0 0.0
        %5563 = vmatpush1.msra.mxu0 0.0
        %5564 = vmatprep.subr.mxu0 0.0
        %5565 = vmatpush1.msra.mxu0 0.0
        %5566 = vmatprep.subr.mxu0 0.0
        %5567 = vmatpush1.msra.mxu0 0.0
        %5568 = vmatprep.subr.mxu0 0.0
        %5569 = vmatpush1.msra.mxu0 0.0
        %5570 = vmatprep.subr.mxu0 0.0
        %5571 = vmatpush1.msra.mxu0 0.0
        %5572 = vmatprep.subr.mxu0 0.0
        %5573 = vmatpush1.msra.mxu0 0.0
        %5574 = vmatprep.subr.mxu0 0.0
        %5575 = vmatpush1.msra.mxu0 0.0
        %5576 = vmatprep.mubr.f32.mxu0 0.0
        %5577 = vmatmul.mubr.f32.gmra.mrb[0].mxu0 %v5501
        %v5578 = vpop.f32.mrb[0].mxu0
        %v5579 = vadd.f32 0.0, %v5578
        %v5580 = vpop.f32.mrb[0].mxu0
        %v5581 = vadd.f32 0.0, %v5580
        %5582 = vmatprep.mubr.f32.mxu0 0.0
        %5583 = vmatmul.mubr.f32.gmra.mrb[0].mxu0 %v5504
        %v5584 = vpop.f32.mrb[0].mxu0
        %v5585 = vadd.f32 0.0, %v5584
        %v5586 = vpop.f32.mrb[0].mxu0
        %v5587 = vadd.f32 0.0, %v5586
        %5588 = vdwg.mxu0
        %v5589 = vadd.f32 %v5295, %v5579
        %v5590 = vadd.f32 %v5297, %v5581
        %v5591 = vadd.f32 %v5301, %v5585
        %v5592 = vadd.f32 %v5303, %v5587
        %s5593 = scalar_lea.vmem %s6, 128
        %v5594 = vld [vmem:[%s5593] sm:$0xff]
        %v5595 = vld [vmem:[%s5593 + $0x8] sm:$0xff]
        %s5596 = scalar_lea.vmem %s6, 96
        %v5597 = vld [vmem:[%s5596] sm:$0xff]
        %v5598 = vld [vmem:[%s5596 + $0x8] sm:$0xff]
        %v5600 = vsel %vm1174, %v5597, 0
        %v5603 = vsel %vm1174, %v5598, 0
        %5605 = vmatprep.subr.mxu0 0.0
        %5606 = vmatpush1.msra.mxu0 %v4594
        %5607 = vmatprep.subr.mxu0 0.0
        %5608 = vmatpush1.msra.mxu0 %v4599
        %5609 = vmatprep.subr.mxu0 0.0
        %5610 = vmatpush1.msra.mxu0 %v4604
        %5611 = vmatprep.subr.mxu0 0.0
        %5612 = vmatpush1.msra.mxu0 %v4609
        %5613 = vmatprep.subr.mxu0 0.0
        %5614 = vmatpush1.msra.mxu0 0.0
        %5615 = vmatprep.subr.mxu0 0.0
        %5616 = vmatpush1.msra.mxu0 0.0
        %5617 = vmatprep.subr.mxu0 0.0
        %5618 = vmatpush1.msra.mxu0 0.0
        %5619 = vmatprep.subr.mxu0 0.0
        %5620 = vmatpush1.msra.mxu0 0.0
        %5621 = vmatprep.subr.mxu0 0.0
        %5622 = vmatpush1.msra.mxu0 0.0
        %5623 = vmatprep.subr.mxu0 0.0
        %5624 = vmatpush1.msra.mxu0 0.0
        %5625 = vmatprep.subr.mxu0 0.0
        %5626 = vmatpush1.msra.mxu0 0.0
        %5627 = vmatprep.subr.mxu0 0.0
        %5628 = vmatpush1.msra.mxu0 0.0
        %5629 = vmatprep.subr.mxu0 0.0
        %5630 = vmatpush1.msra.mxu0 0.0
        %5631 = vmatprep.subr.mxu0 0.0
        %5632 = vmatpush1.msra.mxu0 0.0
        %5633 = vmatprep.subr.mxu0 0.0
        %5634 = vmatpush1.msra.mxu0 0.0
        %5635 = vmatprep.subr.mxu0 0.0
        %5636 = vmatpush1.msra.mxu0 0.0
        %5637 = vmatprep.subr.mxu0 0.0
        %5638 = vmatpush1.msra.mxu0 0.0
        %5639 = vmatprep.subr.mxu0 0.0
        %5640 = vmatpush1.msra.mxu0 0.0
        %5641 = vmatprep.subr.mxu0 0.0
        %5642 = vmatpush1.msra.mxu0 0.0
        %5643 = vmatprep.subr.mxu0 0.0
        %5644 = vmatpush1.msra.mxu0 0.0
        %5645 = vmatprep.subr.mxu0 0.0
        %5646 = vmatpush1.msra.mxu0 0.0
        %5647 = vmatprep.subr.mxu0 0.0
        %5648 = vmatpush1.msra.mxu0 0.0
        %5649 = vmatprep.subr.mxu0 0.0
        %5650 = vmatpush1.msra.mxu0 0.0
        %5651 = vmatprep.subr.mxu0 0.0
        %5652 = vmatpush1.msra.mxu0 0.0
        %5653 = vmatprep.subr.mxu0 0.0
        %5654 = vmatpush1.msra.mxu0 0.0
        %5655 = vmatprep.subr.mxu0 0.0
        %5656 = vmatpush1.msra.mxu0 0.0
        %5657 = vmatprep.subr.mxu0 0.0
        %5658 = vmatpush1.msra.mxu0 0.0
        %5659 = vmatprep.subr.mxu0 0.0
        %5660 = vmatpush1.msra.mxu0 0.0
        %5661 = vmatprep.subr.mxu0 0.0
        %5662 = vmatpush1.msra.mxu0 0.0
        %5663 = vmatprep.subr.mxu0 0.0
        %5664 = vmatpush1.msra.mxu0 0.0
        %5665 = vmatprep.subr.mxu0 0.0
        %5666 = vmatpush1.msra.mxu0 0.0
        %5667 = vmatprep.subr.mxu0 0.0
        %5668 = vmatpush1.msra.mxu0 0.0
        %5669 = vmatprep.mubr.f32.mxu0 0.0
        %5670 = vmatmul.mubr.f32.gmra.mrb[0].mxu0 %v5600
        %v5671 = vpop.f32.mrb[0].mxu0
        %v5672 = vadd.f32 0.0, %v5671
        %v5673 = vpop.f32.mrb[0].mxu0
        %5674 = vmatprep.mubr.f32.mxu0 0.0
        %5675 = vmatmul.mubr.f32.gmra.mrb[0].mxu0 %v5603
        %v5676 = vpop.f32.mrb[0].mxu0
        %v5677 = vadd.f32 0.0, %v5676
        %v5678 = vpop.f32.mrb[0].mxu0
        %5679 = vdwg.mxu0
        %v5681 = vsel %vm1174, %v5594, 0
        %v5684 = vsel %vm1174, %v5595, 0
        %5686 = vmatprep.subr.mxu0 0.0
        %5687 = vmatpush1.msra.mxu0 %v4494
        %5688 = vmatprep.subr.mxu0 0.0
        %5689 = vmatpush1.msra.mxu0 %v4499
        %5690 = vmatprep.subr.mxu0 0.0
        %5691 = vmatpush1.msra.mxu0 %v4504
        %5692 = vmatprep.subr.mxu0 0.0
        %5693 = vmatpush1.msra.mxu0 %v4509
        %5694 = vmatprep.subr.mxu0 0.0
        %5695 = vmatpush1.msra.mxu0 0.0
        %5696 = vmatprep.subr.mxu0 0.0
        %5697 = vmatpush1.msra.mxu0 0.0
        %5698 = vmatprep.subr.mxu0 0.0
        %5699 = vmatpush1.msra.mxu0 0.0
        %5700 = vmatprep.subr.mxu0 0.0
        %5701 = vmatpush1.msra.mxu0 0.0
        %5702 = vmatprep.subr.mxu0 0.0
        %5703 = vmatpush1.msra.mxu0 0.0
        %5704 = vmatprep.subr.mxu0 0.0
        %5705 = vmatpush1.msra.mxu0 0.0
        %5706 = vmatprep.subr.mxu0 0.0
        %5707 = vmatpush1.msra.mxu0 0.0
        %5708 = vmatprep.subr.mxu0 0.0
        %5709 = vmatpush1.msra.mxu0 0.0
        %5710 = vmatprep.subr.mxu0 0.0
        %5711 = vmatpush1.msra.mxu0 0.0
        %5712 = vmatprep.subr.mxu0 0.0
        %5713 = vmatpush1.msra.mxu0 0.0
        %5714 = vmatprep.subr.mxu0 0.0
        %5715 = vmatpush1.msra.mxu0 0.0
        %5716 = vmatprep.subr.mxu0 0.0
        %5717 = vmatpush1.msra.mxu0 0.0
        %5718 = vmatprep.subr.mxu0 0.0
        %5719 = vmatpush1.msra.mxu0 0.0
        %5720 = vmatprep.subr.mxu0 0.0
        %5721 = vmatpush1.msra.mxu0 0.0
        %5722 = vmatprep.subr.mxu0 0.0
        %5723 = vmatpush1.msra.mxu0 0.0
        %5724 = vmatprep.subr.mxu0 0.0
        %5725 = vmatpush1.msra.mxu0 0.0
        %5726 = vmatprep.subr.mxu0 0.0
        %5727 = vmatpush1.msra.mxu0 0.0
        %5728 = vmatprep.subr.mxu0 0.0
        %5729 = vmatpush1.msra.mxu0 0.0
        %5730 = vmatprep.subr.mxu0 0.0
        %5731 = vmatpush1.msra.mxu0 0.0
        %5732 = vmatprep.subr.mxu0 0.0
        %5733 = vmatpush1.msra.mxu0 0.0
        %5734 = vmatprep.subr.mxu0 0.0
        %5735 = vmatpush1.msra.mxu0 0.0
        %5736 = vmatprep.subr.mxu0 0.0
        %5737 = vmatpush1.msra.mxu0 0.0
        %5738 = vmatprep.subr.mxu0 0.0
        %5739 = vmatpush1.msra.mxu0 0.0
        %5740 = vmatprep.subr.mxu0 0.0
        %5741 = vmatpush1.msra.mxu0 0.0
        %5742 = vmatprep.subr.mxu0 0.0
        %5743 = vmatpush1.msra.mxu0 0.0
        %5744 = vmatprep.subr.mxu0 0.0
        %5745 = vmatpush1.msra.mxu0 0.0
        %5746 = vmatprep.subr.mxu0 0.0
        %5747 = vmatpush1.msra.mxu0 0.0
        %5748 = vmatprep.subr.mxu0 0.0
        %5749 = vmatpush1.msra.mxu0 0.0
        %5750 = vmatprep.mubr.f32.mxu0 0.0
        %5751 = vmatmul.mubr.f32.gmra.mrb[0].mxu0 %v5681
        %v5752 = vpop.f32.mrb[0].mxu0
        %v5753 = vadd.f32 %v5672, %v5752
        %v5754 = vpop.f32.mrb[0].mxu0
        %5755 = vmatprep.mubr.f32.mxu0 0.0
        %5756 = vmatmul.mubr.f32.gmra.mrb[0].mxu0 %v5684
        %v5757 = vpop.f32.mrb[0].mxu0
        %v5758 = vadd.f32 %v5677, %v5757
        %v5759 = vpop.f32.mrb[0].mxu0
        %5760 = vdwg.mxu0
        %s5761 = scalar_lea.vmem %s6, 32
        %v5762 = vld [vmem:[%s5761] sm:$0xff]
        %v5763 = vld [vmem:[%s5761 + $0x8] sm:$0xff]
        %v5765 = vsel %vm1174, %v5762, 0
        %v5768 = vsel %vm1174, %v5763, 0
        %5770 = vmatprep.subr.mxu0 0.0
        %5771 = vmatpush1.msra.mxu0 %v4694
        %5772 = vmatprep.subr.mxu0 0.0
        %5773 = vmatpush1.msra.mxu0 %v4699
        %5774 = vmatprep.subr.mxu0 0.0
        %5775 = vmatpush1.msra.mxu0 %v4704
        %5776 = vmatprep.subr.mxu0 0.0
        %5777 = vmatpush1.msra.mxu0 %v4709
        %5778 = vmatprep.subr.mxu0 0.0
        %5779 = vmatpush1.msra.mxu0 0.0
        %5780 = vmatprep.subr.mxu0 0.0
        %5781 = vmatpush1.msra.mxu0 0.0
        %5782 = vmatprep.subr.mxu0 0.0
        %5783 = vmatpush1.msra.mxu0 0.0
        %5784 = vmatprep.subr.mxu0 0.0
        %5785 = vmatpush1.msra.mxu0 0.0
        %5786 = vmatprep.subr.mxu0 0.0
        %5787 = vmatpush1.msra.mxu0 0.0
        %5788 = vmatprep.subr.mxu0 0.0
        %5789 = vmatpush1.msra.mxu0 0.0
        %5790 = vmatprep.subr.mxu0 0.0
        %5791 = vmatpush1.msra.mxu0 0.0
        %5792 = vmatprep.subr.mxu0 0.0
        %5793 = vmatpush1.msra.mxu0 0.0
        %5794 = vmatprep.subr.mxu0 0.0
        %5795 = vmatpush1.msra.mxu0 0.0
        %5796 = vmatprep.subr.mxu0 0.0
        %5797 = vmatpush1.msra.mxu0 0.0
        %5798 = vmatprep.subr.mxu0 0.0
        %5799 = vmatpush1.msra.mxu0 0.0
        %5800 = vmatprep.subr.mxu0 0.0
        %5801 = vmatpush1.msra.mxu0 0.0
        %5802 = vmatprep.subr.mxu0 0.0
        %5803 = vmatpush1.msra.mxu0 0.0
        %5804 = vmatprep.subr.mxu0 0.0
        %5805 = vmatpush1.msra.mxu0 0.0
        %5806 = vmatprep.subr.mxu0 0.0
        %5807 = vmatpush1.msra.mxu0 0.0
        %5808 = vmatprep.subr.mxu0 0.0
        %5809 = vmatpush1.msra.mxu0 0.0
        %5810 = vmatprep.subr.mxu0 0.0
        %5811 = vmatpush1.msra.mxu0 0.0
        %5812 = vmatprep.subr.mxu0 0.0
        %5813 = vmatpush1.msra.mxu0 0.0
        %5814 = vmatprep.subr.mxu0 0.0
        %5815 = vmatpush1.msra.mxu0 0.0
        %5816 = vmatprep.subr.mxu0 0.0
        %5817 = vmatpush1.msra.mxu0 0.0
        %5818 = vmatprep.subr.mxu0 0.0
        %5819 = vmatpush1.msra.mxu0 0.0
        %5820 = vmatprep.subr.mxu0 0.0
        %5821 = vmatpush1.msra.mxu0 0.0
        %5822 = vmatprep.subr.mxu0 0.0
        %5823 = vmatpush1.msra.mxu0 0.0
        %5824 = vmatprep.subr.mxu0 0.0
        %5825 = vmatpush1.msra.mxu0 0.0
        %5826 = vmatprep.subr.mxu0 0.0
        %5827 = vmatpush1.msra.mxu0 0.0
        %5828 = vmatprep.subr.mxu0 0.0
        %5829 = vmatpush1.msra.mxu0 0.0
        %5830 = vmatprep.subr.mxu0 0.0
        %5831 = vmatpush1.msra.mxu0 0.0
        %5832 = vmatprep.subr.mxu0 0.0
        %5833 = vmatpush1.msra.mxu0 0.0
        %5834 = vmatprep.mubr.f32.mxu0 0.0
        %5835 = vmatmul.mubr.f32.gmra.mrb[0].mxu0 %v5765
        %v5836 = vpop.f32.mrb[0].mxu0
        %v5837 = vadd.f32 0.0, %v5836
        %v5838 = vpop.f32.mrb[0].mxu0
        %5839 = vmatprep.mubr.f32.mxu0 0.0
        %5840 = vmatmul.mubr.f32.gmra.mrb[0].mxu0 %v5768
        %v5841 = vpop.f32.mrb[0].mxu0
        %v5842 = vadd.f32 0.0, %v5841
        %v5843 = vpop.f32.mrb[0].mxu0
        %5844 = vdwg.mxu0
        %v5845 = vadd.f32 %v5753, %v5837
        %v5846 = vadd.f32 %v5758, %v5842
        %v5847 = vld [vmem:[%s6] sm:$0xff]
        %v5848 = vld [vmem:[%s6 + $0x8] sm:$0xff]
        %v5850 = vsel %vm1174, %v5847, 0
        %v5853 = vsel %vm1174, %v5848, 0
        %5855 = vmatprep.subr.mxu0 0.0
        %5856 = vmatpush1.msra.mxu0 %v4794
        %5857 = vmatprep.subr.mxu0 0.0
        %5858 = vmatpush1.msra.mxu0 %v4799
        %5859 = vmatprep.subr.mxu0 0.0
        %5860 = vmatpush1.msra.mxu0 %v4804
        %5861 = vmatprep.subr.mxu0 0.0
        %5862 = vmatpush1.msra.mxu0 %v4809
        %5863 = vmatprep.subr.mxu0 0.0
        %5864 = vmatpush1.msra.mxu0 0.0
        %5865 = vmatprep.subr.mxu0 0.0
        %5866 = vmatpush1.msra.mxu0 0.0
        %5867 = vmatprep.subr.mxu0 0.0
        %5868 = vmatpush1.msra.mxu0 0.0
        %5869 = vmatprep.subr.mxu0 0.0
        %5870 = vmatpush1.msra.mxu0 0.0
        %5871 = vmatprep.subr.mxu0 0.0
        %5872 = vmatpush1.msra.mxu0 0.0
        %5873 = vmatprep.subr.mxu0 0.0
        %5874 = vmatpush1.msra.mxu0 0.0
        %5875 = vmatprep.subr.mxu0 0.0
        %5876 = vmatpush1.msra.mxu0 0.0
        %5877 = vmatprep.subr.mxu0 0.0
        %5878 = vmatpush1.msra.mxu0 0.0
        %5879 = vmatprep.subr.mxu0 0.0
        %5880 = vmatpush1.msra.mxu0 0.0
        %5881 = vmatprep.subr.mxu0 0.0
        %5882 = vmatpush1.msra.mxu0 0.0
        %5883 = vmatprep.subr.mxu0 0.0
        %5884 = vmatpush1.msra.mxu0 0.0
        %5885 = vmatprep.subr.mxu0 0.0
        %5886 = vmatpush1.msra.mxu0 0.0
        %5887 = vmatprep.subr.mxu0 0.0
        %5888 = vmatpush1.msra.mxu0 0.0
        %5889 = vmatprep.subr.mxu0 0.0
        %5890 = vmatpush1.msra.mxu0 0.0
        %5891 = vmatprep.subr.mxu0 0.0
        %5892 = vmatpush1.msra.mxu0 0.0
        %5893 = vmatprep.subr.mxu0 0.0
        %5894 = vmatpush1.msra.mxu0 0.0
        %5895 = vmatprep.subr.mxu0 0.0
        %5896 = vmatpush1.msra.mxu0 0.0
        %5897 = vmatprep.subr.mxu0 0.0
        %5898 = vmatpush1.msra.mxu0 0.0
        %5899 = vmatprep.subr.mxu0 0.0
        %5900 = vmatpush1.msra.mxu0 0.0
        %5901 = vmatprep.subr.mxu0 0.0
        %5902 = vmatpush1.msra.mxu0 0.0
        %5903 = vmatprep.subr.mxu0 0.0
        %5904 = vmatpush1.msra.mxu0 0.0
        %5905 = vmatprep.subr.mxu0 0.0
        %5906 = vmatpush1.msra.mxu0 0.0
        %5907 = vmatprep.subr.mxu0 0.0
        %5908 = vmatpush1.msra.mxu0 0.0
        %5909 = vmatprep.subr.mxu0 0.0
        %5910 = vmatpush1.msra.mxu0 0.0
        %5911 = vmatprep.subr.mxu0 0.0
        %5912 = vmatpush1.msra.mxu0 0.0
        %5913 = vmatprep.subr.mxu0 0.0
        %5914 = vmatpush1.msra.mxu0 0.0
        %5915 = vmatprep.subr.mxu0 0.0
        %5916 = vmatpush1.msra.mxu0 0.0
        %5917 = vmatprep.subr.mxu0 0.0
        %5918 = vmatpush1.msra.mxu0 0.0
        %5919 = vmatprep.mubr.f32.mxu0 0.0
        %5920 = vmatmul.mubr.f32.gmra.mrb[0].mxu0 %v5850
        %v5921 = vpop.f32.mrb[0].mxu0
        %v5922 = vadd.f32 0.0, %v5921
        %v5923 = vpop.f32.mrb[0].mxu0
        %5924 = vmatprep.mubr.f32.mxu0 0.0
        %5925 = vmatmul.mubr.f32.gmra.mrb[0].mxu0 %v5853
        %v5926 = vpop.f32.mrb[0].mxu0
        %v5927 = vadd.f32 0.0, %v5926
        %v5928 = vpop.f32.mrb[0].mxu0
        %5929 = vdwg.mxu0
        %v5930 = vadd.f32 %v5845, %v5922
        %v5931 = vadd.f32 %v5846, %v5927
        %v5932 = vadd.f32 %v5930, %v4820
        %v5933 = vadd.f32 %v5931, %v4825
        %v5934 = vmax.f32 %v5932, 0.0
        %v5935 = vmax.f32 %v5933, 0.0
        %s5936 = scalar_lea.vmem %s9, 528
        %v5937 = vld [vmem:[%s5936] sm:$0xff]
        %v5938 = vld [vmem:[%s5936 + $0x8] sm:$0xff]
        %v5939 = vld [vmem:[%s5936 + $0x10] sm:$0xff]
        %v5940 = vld [vmem:[%s5936 + $0x18] sm:$0xff]
        %v5941 = vld [vmem:[%s5936 + $0x20] sm:$0xff]
        %v5942 = vld [vmem:[%s5936 + $0x28] sm:$0xff]
        %v5943 = vld [vmem:[%s5936 + $0x30] sm:$0xff]
        %v5944 = vld [vmem:[%s5936 + $0x38] sm:$0xff]
        %v5945 = vld [vmem:[%s5936 + $0x40] sm:$0xff]
        %v5946 = vld [vmem:[%s5936 + $0x48] sm:$0xff]
        %v5947 = vld [vmem:[%s5936 + $0x50] sm:$0xff]
        %v5948 = vld [vmem:[%s5936 + $0x58] sm:$0xff]
        %v5949 = vld [vmem:[%s5936 + $0x60] sm:$0xff]
        %v5950 = vld [vmem:[%s5936 + $0x68] sm:$0xff]
        %v5951 = vld [vmem:[%s5936 + $0x70] sm:$0xff]
        %v5952 = vld [vmem:[%s5936 + $0x78] sm:$0xff]
        %v5953 = vld [vmem:[%s5936 + $0x80] sm:$0xff]
        %v5954 = vld [vmem:[%s5936 + $0x88] sm:$0xff]
        %v5955 = vld [vmem:[%s5936 + $0x90] sm:$0xff]
        %v5956 = vld [vmem:[%s5936 + $0x98] sm:$0xff]
        %v5957 = vld [vmem:[%s5936 + $0xa0] sm:$0x1]
        %v5958 = vld [vmem:[%s5936 + $0xa8] sm:$0x1]
        %v5960 = vsel %vm963, %v5934, 0
        %v5963 = vsel %vm963, %v5935, 0
        %v5966 = vsel %vm976, %v5957, 0
        %v5969 = vsel %vm976, %v5958, 0
        %5971 = vmatprep.subr.mxu0 %v5938
        %5972 = vmatpush1.msra.mxu0 %v5937
        %5973 = vmatprep.subr.mxu0 %v5940
        %5974 = vmatpush1.msra.mxu0 %v5939
        %5975 = vmatprep.subr.mxu0 %v5942
        %5976 = vmatpush1.msra.mxu0 %v5941
        %5977 = vmatprep.subr.mxu0 %v5944
        %5978 = vmatpush1.msra.mxu0 %v5943
        %5979 = vmatprep.subr.mxu0 %v5946
        %5980 = vmatpush1.msra.mxu0 %v5945
        %5981 = vmatprep.subr.mxu0 %v5948
        %5982 = vmatpush1.msra.mxu0 %v5947
        %5983 = vmatprep.subr.mxu0 %v5950
        %5984 = vmatpush1.msra.mxu0 %v5949
        %5985 = vmatprep.subr.mxu0 %v5952
        %5986 = vmatpush1.msra.mxu0 %v5951
        %5987 = vmatprep.subr.mxu0 %v5954
        %5988 = vmatpush1.msra.mxu0 %v5953
        %5989 = vmatprep.subr.mxu0 %v5956
        %5990 = vmatpush1.msra.mxu0 %v5955
        %5991 = vmatprep.subr.mxu0 %v5969
        %5992 = vmatpush1.msra.mxu0 %v5966
        %5993 = vmatprep.subr.mxu0 0.0
        %5994 = vmatpush1.msra.mxu0 0.0
        %5995 = vmatprep.subr.mxu0 0.0
        %5996 = vmatpush1.msra.mxu0 0.0
        %5997 = vmatprep.subr.mxu0 0.0
        %5998 = vmatpush1.msra.mxu0 0.0
        %5999 = vmatprep.subr.mxu0 0.0
        %6000 = vmatpush1.msra.mxu0 0.0
        %6001 = vmatprep.subr.mxu0 0.0
        %6002 = vmatpush1.msra.mxu0 0.0
        %6003 = vmatprep.subr.mxu0 0.0
        %6004 = vmatpush1.msra.mxu0 0.0
        %6005 = vmatprep.subr.mxu0 0.0
        %6006 = vmatpush1.msra.mxu0 0.0
        %6007 = vmatprep.subr.mxu0 0.0
        %6008 = vmatpush1.msra.mxu0 0.0
        %6009 = vmatprep.subr.mxu0 0.0
        %6010 = vmatpush1.msra.mxu0 0.0
        %6011 = vmatprep.subr.mxu0 0.0
        %6012 = vmatpush1.msra.mxu0 0.0
        %6013 = vmatprep.subr.mxu0 0.0
        %6014 = vmatpush1.msra.mxu0 0.0
        %6015 = vmatprep.subr.mxu0 0.0
        %6016 = vmatpush1.msra.mxu0 0.0
        %6017 = vmatprep.subr.mxu0 0.0
        %6018 = vmatpush1.msra.mxu0 0.0
        %6019 = vmatprep.subr.mxu0 0.0
        %6020 = vmatpush1.msra.mxu0 0.0
        %6021 = vmatprep.subr.mxu0 0.0
        %6022 = vmatpush1.msra.mxu0 0.0
        %6023 = vmatprep.subr.mxu0 0.0
        %6024 = vmatpush1.msra.mxu0 0.0
        %6025 = vmatprep.subr.mxu0 0.0
        %6026 = vmatpush1.msra.mxu0 0.0
        %6027 = vmatprep.subr.mxu0 0.0
        %6028 = vmatpush1.msra.mxu0 0.0
        %6029 = vmatprep.subr.mxu0 0.0
        %6030 = vmatpush1.msra.mxu0 0.0
        %6031 = vmatprep.subr.mxu0 0.0
        %6032 = vmatpush1.msra.mxu0 0.0
        %6033 = vmatprep.subr.mxu0 0.0
        %6034 = vmatpush1.msra.mxu0 0.0
        %6035 = vmatprep.mubr.f32.mxu0 0.0
        %6036 = vmatmul.mubr.f32.gmra.mrb[0].mxu0 %v5960
        %v6037 = vpop.f32.mrb[0].mxu0
        %v6038 = vadd.f32 0.0, %v6037
        %v6039 = vpop.f32.mrb[0].mxu0
        %v6040 = vadd.f32 0.0, %v6039
        %6041 = vmatprep.mubr.f32.mxu0 0.0
        %6042 = vmatmul.mubr.f32.gmra.mrb[0].mxu0 %v5963
        %v6043 = vpop.f32.mrb[0].mxu0
        %v6044 = vadd.f32 0.0, %v6043
        %v6045 = vpop.f32.mrb[0].mxu0
        %v6046 = vadd.f32 0.0, %v6045
        %6047 = vdwg.mxu0
        %v6048 = vadd.f32 %v5589, %v6038
        %v6049 = vadd.f32 %v5590, %v6040
        %v6050 = vadd.f32 %v5591, %v6044
        %v6051 = vadd.f32 %v5592, %v6046
        %v6052 = vld [vmem:[%s12] sm:$0xff]
        %v6053 = vld [vmem:[%s12 + $0x8] sm:$0xff]
        %v6054 = vld [vmem:[%s12 + $0x10] sm:$0xff]
        %v6055 = vld [vmem:[%s12 + $0x18] sm:$0xff]
        %v6056 = vld [vmem:[%s12 + $0x20] sm:$0xff]
        %v6057 = vld [vmem:[%s12 + $0x28] sm:$0xff]
        %v6058 = vld [vmem:[%s12 + $0x30] sm:$0xff]
        %v6059 = vld [vmem:[%s12 + $0x38] sm:$0xff]
        %v6060 = vld [vmem:[%s12 + $0x40] sm:$0xff]
        %v6061 = vld [vmem:[%s12 + $0x48] sm:$0xff]
        %v6062 = vld [vmem:[%s12 + $0x50] sm:$0xff]
        %v6063 = vld [vmem:[%s12 + $0x58] sm:$0xff]
        %v6064 = vld [vmem:[%s12 + $0x60] sm:$0xff]
        %v6065 = vld [vmem:[%s12 + $0x68] sm:$0xff]
        %v6066 = vld [vmem:[%s12 + $0x70] sm:$0xff]
        %v6067 = vld [vmem:[%s12 + $0x78] sm:$0xff]
        %v6068 = vld [vmem:[%s12 + $0x80] sm:$0xff]
        %v6069 = vld [vmem:[%s12 + $0x88] sm:$0xff]
        %v6070 = vld [vmem:[%s12 + $0x90] sm:$0xff]
        %v6071 = vld [vmem:[%s12 + $0x98] sm:$0xff]
        %v6072 = vld [vmem:[%s12 + $0xa0] sm:$0xff]
        %v6073 = vld [vmem:[%s12 + $0xa8] sm:$0xff]
        %v6074 = vld [vmem:[%s12 + $0xb0] sm:$0xff]
        %v6075 = vld [vmem:[%s12 + $0xb8] sm:$0xff]
        %v6076 = vld [vmem:[%s12 + $0xc0] sm:$0xff]
        %v6077 = vld [vmem:[%s12 + $0xc8] sm:$0xff]
        %v6078 = vld [vmem:[%s12 + $0xd0] sm:$0xff]
        %v6079 = vld [vmem:[%s12 + $0xd8] sm:$0xff]
        %v6080 = vld [vmem:[%s12 + $0xe0] sm:$0xff]
        %v6081 = vld [vmem:[%s12 + $0xe8] sm:$0xff]
        %v6082 = vld [vmem:[%s12 + $0xf0] sm:$0xff]
        %v6083 = vld [vmem:[%s12 + $0xf8] sm:$0xff]
        %v6084 = vld [vmem:[%s12 + $0x100] sm:$0xff]
        %v6085 = vld [vmem:[%s12 + $0x108] sm:$0xff]
        %v6086 = vld [vmem:[%s12 + $0x110] sm:$0xff]
        %v6087 = vld [vmem:[%s12 + $0x118] sm:$0xff]
        %v6088 = vld [vmem:[%s12 + $0x120] sm:$0xff]
        %v6089 = vld [vmem:[%s12 + $0x128] sm:$0xff]
        %v6090 = vld [vmem:[%s12 + $0x130] sm:$0xff]
        %v6091 = vld [vmem:[%s12 + $0x138] sm:$0xff]
        %v6092 = vld [vmem:[%s12 + $0x140] sm:$0xff]
        %v6093 = vld [vmem:[%s12 + $0x148] sm:$0xff]
        %v6094 = vld [vmem:[%s12 + $0x150] sm:$0xff]
        %v6095 = vld [vmem:[%s12 + $0x158] sm:$0xff]
        %v6096 = vld [vmem:[%s12 + $0x160] sm:$0xff]
        %v6097 = vld [vmem:[%s12 + $0x168] sm:$0xff]
        %v6098 = vld [vmem:[%s12 + $0x170] sm:$0xff]
        %v6099 = vld [vmem:[%s12 + $0x178] sm:$0xff]
        %v6100 = vld [vmem:[%s12 + $0x180] sm:$0xff]
        %v6101 = vld [vmem:[%s12 + $0x188] sm:$0xff]
        %v6102 = vld [vmem:[%s12 + $0x190] sm:$0xff]
        %v6103 = vld [vmem:[%s12 + $0x198] sm:$0xff]
        %v6104 = vld [vmem:[%s12 + $0x1a0] sm:$0xff]
        %v6105 = vld [vmem:[%s12 + $0x1a8] sm:$0xff]
        %v6106 = vld [vmem:[%s12 + $0x1b0] sm:$0xff]
        %v6107 = vld [vmem:[%s12 + $0x1b8] sm:$0xff]
        %v6108 = vld [vmem:[%s12 + $0x1c0] sm:$0x1]
        %v6109 = vld [vmem:[%s12 + $0x1c8] sm:$0x1]
        %vm6110 = vcmask 793600
        %v6112 = vsel %vm6110, %v6049, 0
        %v6115 = vsel %vm6110, %v6051, 0
        %v6118 = vsel %vm976, %v6108, 0
        %v6121 = vsel %vm976, %v6109, 0
        %6123 = vmatprep.subr.mxu0 %v6053
        %6124 = vmatpush1.msra.mxu0 %v6052
        %6125 = vmatprep.subr.mxu0 %v6055
        %6126 = vmatpush1.msra.mxu0 %v6054
        %6127 = vmatprep.subr.mxu0 %v6057
        %6128 = vmatpush1.msra.mxu0 %v6056
        %6129 = vmatprep.subr.mxu0 %v6059
        %6130 = vmatpush1.msra.mxu0 %v6058
        %6131 = vmatprep.subr.mxu0 %v6061
        %6132 = vmatpush1.msra.mxu0 %v6060
        %6133 = vmatprep.subr.mxu0 %v6063
        %6134 = vmatpush1.msra.mxu0 %v6062
        %6135 = vmatprep.subr.mxu0 %v6065
        %6136 = vmatpush1.msra.mxu0 %v6064
        %6137 = vmatprep.subr.mxu0 %v6067
        %6138 = vmatpush1.msra.mxu0 %v6066
        %6139 = vmatprep.subr.mxu0 %v6069
        %6140 = vmatpush1.msra.mxu0 %v6068
        %6141 = vmatprep.subr.mxu0 %v6071
        %6142 = vmatpush1.msra.mxu0 %v6070
        %6143 = vmatprep.subr.mxu0 %v6073
        %6144 = vmatpush1.msra.mxu0 %v6072
        %6145 = vmatprep.subr.mxu0 %v6075
        %6146 = vmatpush1.msra.mxu0 %v6074
        %6147 = vmatprep.subr.mxu0 %v6077
        %6148 = vmatpush1.msra.mxu0 %v6076
        %6149 = vmatprep.subr.mxu0 %v6079
        %6150 = vmatpush1.msra.mxu0 %v6078
        %6151 = vmatprep.subr.mxu0 %v6081
        %6152 = vmatpush1.msra.mxu0 %v6080
        %6153 = vmatprep.subr.mxu0 %v6083
        %6154 = vmatpush1.msra.mxu0 %v6082
        %6155 = vmatprep.subr.mxu0 %v6085
        %6156 = vmatpush1.msra.mxu0 %v6084
        %6157 = vmatprep.subr.mxu0 %v6087
        %6158 = vmatpush1.msra.mxu0 %v6086
        %6159 = vmatprep.subr.mxu0 %v6089
        %6160 = vmatpush1.msra.mxu0 %v6088
        %6161 = vmatprep.subr.mxu0 %v6091
        %6162 = vmatpush1.msra.mxu0 %v6090
        %6163 = vmatprep.subr.mxu0 %v6093
        %6164 = vmatpush1.msra.mxu0 %v6092
        %6165 = vmatprep.subr.mxu0 %v6095
        %6166 = vmatpush1.msra.mxu0 %v6094
        %6167 = vmatprep.subr.mxu0 %v6097
        %6168 = vmatpush1.msra.mxu0 %v6096
        %6169 = vmatprep.subr.mxu0 %v6099
        %6170 = vmatpush1.msra.mxu0 %v6098
        %6171 = vmatprep.subr.mxu0 %v6101
        %6172 = vmatpush1.msra.mxu0 %v6100
        %6173 = vmatprep.subr.mxu0 %v6103
        %6174 = vmatpush1.msra.mxu0 %v6102
        %6175 = vmatprep.subr.mxu0 %v6105
        %6176 = vmatpush1.msra.mxu0 %v6104
        %6177 = vmatprep.subr.mxu0 %v6107
        %6178 = vmatpush1.msra.mxu0 %v6106
        %6179 = vmatprep.subr.mxu0 %v6121
        %6180 = vmatpush1.msra.mxu0 %v6118
        %6181 = vmatprep.subr.mxu0 0.0
        %6182 = vmatpush1.msra.mxu0 0.0
        %6183 = vmatprep.subr.mxu0 0.0
        %6184 = vmatpush1.msra.mxu0 0.0
        %6185 = vmatprep.subr.mxu0 0.0
        %6186 = vmatpush1.msra.mxu0 0.0
        %6187 = vmatprep.mubr.f32.mxu0 %v6112
        %6188 = vmatmul.mubr.f32.gmra.mrb[0].mxu0 %v6048
        %v6189 = vpop.f32.mrb[0].mxu0
        %v6190 = vadd.f32 0.0, %v6189
        %v6191 = vpop.f32.mrb[0].mxu0
        %v6192 = vadd.f32 0.0, %v6191
        %6193 = vmatprep.mubr.f32.mxu0 %v6115
        %6194 = vmatmul.mubr.f32.gmra.mrb[0].mxu0 %v6050
        %v6195 = vpop.f32.mrb[0].mxu0
        %v6196 = vadd.f32 0.0, %v6195
        %v6197 = vpop.f32.mrb[0].mxu0
        %v6198 = vadd.f32 0.0, %v6197
        %6199 = vdwg.mxu0
        %s6200 = scalar_lea.vmem %s12, 464
        %v6201 = vld [vmem:[%s6200] sm:$0xff]
        %v6202 = vld [vmem:[%s6200 + $0x8] sm:$0xff]
        %v6203 = vld [vmem:[%s6200 + $0x10] sm:$0xff]
        %v6204 = vld [vmem:[%s6200 + $0x18] sm:$0xff]
        %v6205 = vld [vmem:[%s6200 + $0x20] sm:$0xff]
        %v6206 = vld [vmem:[%s6200 + $0x28] sm:$0xff]
        %v6207 = vld [vmem:[%s6200 + $0x30] sm:$0xff]
        %v6208 = vld [vmem:[%s6200 + $0x38] sm:$0xff]
        %v6209 = vld [vmem:[%s6200 + $0x40] sm:$0xff]
        %v6210 = vld [vmem:[%s6200 + $0x48] sm:$0xff]
        %v6211 = vld [vmem:[%s6200 + $0x50] sm:$0xff]
        %v6212 = vld [vmem:[%s6200 + $0x58] sm:$0xff]
        %v6213 = vld [vmem:[%s6200 + $0x60] sm:$0xff]
        %v6214 = vld [vmem:[%s6200 + $0x68] sm:$0xff]
        %v6215 = vld [vmem:[%s6200 + $0x70] sm:$0xff]
        %v6216 = vld [vmem:[%s6200 + $0x78] sm:$0xff]
        %v6217 = vld [vmem:[%s6200 + $0x80] sm:$0xff]
        %v6218 = vld [vmem:[%s6200 + $0x88] sm:$0xff]
        %v6219 = vld [vmem:[%s6200 + $0x90] sm:$0xff]
        %v6220 = vld [vmem:[%s6200 + $0x98] sm:$0xff]
        %v6221 = vld [vmem:[%s6200 + $0xa0] sm:$0xff]
        %v6222 = vld [vmem:[%s6200 + $0xa8] sm:$0xff]
        %v6223 = vld [vmem:[%s6200 + $0xb0] sm:$0xff]
        %v6224 = vld [vmem:[%s6200 + $0xb8] sm:$0xff]
        %v6225 = vld [vmem:[%s6200 + $0xc0] sm:$0xff]
        %v6226 = vld [vmem:[%s6200 + $0xc8] sm:$0xff]
        %v6227 = vld [vmem:[%s6200 + $0xd0] sm:$0xff]
        %v6228 = vld [vmem:[%s6200 + $0xd8] sm:$0xff]
        %v6229 = vld [vmem:[%s6200 + $0xe0] sm:$0xff]
        %v6230 = vld [vmem:[%s6200 + $0xe8] sm:$0xff]
        %v6231 = vld [vmem:[%s6200 + $0xf0] sm:$0xff]
        %v6232 = vld [vmem:[%s6200 + $0xf8] sm:$0xff]
        %v6233 = vld [vmem:[%s6200 + $0x100] sm:$0xff]
        %v6234 = vld [vmem:[%s6200 + $0x108] sm:$0xff]
        %v6235 = vld [vmem:[%s6200 + $0x110] sm:$0xff]
        %v6236 = vld [vmem:[%s6200 + $0x118] sm:$0xff]
        %v6237 = vld [vmem:[%s6200 + $0x120] sm:$0xff]
        %v6238 = vld [vmem:[%s6200 + $0x128] sm:$0xff]
        %v6239 = vld [vmem:[%s6200 + $0x130] sm:$0xff]
        %v6240 = vld [vmem:[%s6200 + $0x138] sm:$0xff]
        %v6241 = vld [vmem:[%s6200 + $0x140] sm:$0xff]
        %v6242 = vld [vmem:[%s6200 + $0x148] sm:$0xff]
        %v6243 = vld [vmem:[%s6200 + $0x150] sm:$0xff]
        %v6244 = vld [vmem:[%s6200 + $0x158] sm:$0xff]
        %v6245 = vld [vmem:[%s6200 + $0x160] sm:$0xff]
        %v6246 = vld [vmem:[%s6200 + $0x168] sm:$0xff]
        %v6247 = vld [vmem:[%s6200 + $0x170] sm:$0xff]
        %v6248 = vld [vmem:[%s6200 + $0x178] sm:$0xff]
        %v6249 = vld [vmem:[%s6200 + $0x180] sm:$0xff]
        %v6250 = vld [vmem:[%s6200 + $0x188] sm:$0xff]
        %v6251 = vld [vmem:[%s6200 + $0x190] sm:$0xff]
        %v6252 = vld [vmem:[%s6200 + $0x198] sm:$0xff]
        %v6253 = vld [vmem:[%s6200 + $0x1a0] sm:$0xff]
        %v6254 = vld [vmem:[%s6200 + $0x1a8] sm:$0xff]
        %v6255 = vld [vmem:[%s6200 + $0x1b0] sm:$0xff]
        %v6256 = vld [vmem:[%s6200 + $0x1b8] sm:$0xff]
        %v6257 = vld [vmem:[%s6200 + $0x1c0] sm:$0x1]
        %v6258 = vld [vmem:[%s6200 + $0x1c8] sm:$0x1]
        %v6260 = vsel %vm976, %v6257, 0
        %v6263 = vsel %vm976, %v6258, 0
        %6265 = vmatprep.subr.mxu0 %v6202
        %6266 = vmatpush1.msra.mxu0 %v6201
        %6267 = vmatprep.subr.mxu0 %v6204
        %6268 = vmatpush1.msra.mxu0 %v6203
        %6269 = vmatprep.subr.mxu0 %v6206
        %6270 = vmatpush1.msra.mxu0 %v6205
        %6271 = vmatprep.subr.mxu0 %v6208
        %6272 = vmatpush1.msra.mxu0 %v6207
        %6273 = vmatprep.subr.mxu0 %v6210
        %6274 = vmatpush1.msra.mxu0 %v6209
        %6275 = vmatprep.subr.mxu0 %v6212
        %6276 = vmatpush1.msra.mxu0 %v6211
        %6277 = vmatprep.subr.mxu0 %v6214
        %6278 = vmatpush1.msra.mxu0 %v6213
        %6279 = vmatprep.subr.mxu0 %v6216
        %6280 = vmatpush1.msra.mxu0 %v6215
        %6281 = vmatprep.subr.mxu0 %v6218
        %6282 = vmatpush1.msra.mxu0 %v6217
        %6283 = vmatprep.subr.mxu0 %v6220
        %6284 = vmatpush1.msra.mxu0 %v6219
        %6285 = vmatprep.subr.mxu0 %v6222
        %6286 = vmatpush1.msra.mxu0 %v6221
        %6287 = vmatprep.subr.mxu0 %v6224
        %6288 = vmatpush1.msra.mxu0 %v6223
        %6289 = vmatprep.subr.mxu0 %v6226
        %6290 = vmatpush1.msra.mxu0 %v6225
        %6291 = vmatprep.subr.mxu0 %v6228
        %6292 = vmatpush1.msra.mxu0 %v6227
        %6293 = vmatprep.subr.mxu0 %v6230
        %6294 = vmatpush1.msra.mxu0 %v6229
        %6295 = vmatprep.subr.mxu0 %v6232
        %6296 = vmatpush1.msra.mxu0 %v6231
        %6297 = vmatprep.subr.mxu0 %v6234
        %6298 = vmatpush1.msra.mxu0 %v6233
        %6299 = vmatprep.subr.mxu0 %v6236
        %6300 = vmatpush1.msra.mxu0 %v6235
        %6301 = vmatprep.subr.mxu0 %v6238
        %6302 = vmatpush1.msra.mxu0 %v6237
        %6303 = vmatprep.subr.mxu0 %v6240
        %6304 = vmatpush1.msra.mxu0 %v6239
        %6305 = vmatprep.subr.mxu0 %v6242
        %6306 = vmatpush1.msra.mxu0 %v6241
        %6307 = vmatprep.subr.mxu0 %v6244
        %6308 = vmatpush1.msra.mxu0 %v6243
        %6309 = vmatprep.subr.mxu0 %v6246
        %6310 = vmatpush1.msra.mxu0 %v6245
        %6311 = vmatprep.subr.mxu0 %v6248
        %6312 = vmatpush1.msra.mxu0 %v6247
        %6313 = vmatprep.subr.mxu0 %v6250
        %6314 = vmatpush1.msra.mxu0 %v6249
        %6315 = vmatprep.subr.mxu0 %v6252
        %6316 = vmatpush1.msra.mxu0 %v6251
        %6317 = vmatprep.subr.mxu0 %v6254
        %6318 = vmatpush1.msra.mxu0 %v6253
        %6319 = vmatprep.subr.mxu0 %v6256
        %6320 = vmatpush1.msra.mxu0 %v6255
        %6321 = vmatprep.subr.mxu0 %v6263
        %6322 = vmatpush1.msra.mxu0 %v6260
        %6323 = vmatprep.subr.mxu0 0.0
        %6324 = vmatpush1.msra.mxu0 0.0
        %6325 = vmatprep.subr.mxu0 0.0
        %6326 = vmatpush1.msra.mxu0 0.0
        %6327 = vmatprep.subr.mxu0 0.0
        %6328 = vmatpush1.msra.mxu0 0.0
        %6329 = vmatprep.mubr.f32.mxu0 %v6112
        %6330 = vmatmul.mubr.f32.gmra.mrb[0].mxu0 %v6048
        %v6331 = vpop.f32.mrb[0].mxu0
        %v6332 = vadd.f32 0.0, %v6331
        %v6333 = vpop.f32.mrb[0].mxu0
        %v6334 = vadd.f32 0.0, %v6333
        %6335 = vmatprep.mubr.f32.mxu0 %v6115
        %6336 = vmatmul.mubr.f32.gmra.mrb[0].mxu0 %v6050
        %v6337 = vpop.f32.mrb[0].mxu0
        %v6338 = vadd.f32 0.0, %v6337
        %v6339 = vpop.f32.mrb[0].mxu0
        %v6340 = vadd.f32 0.0, %v6339
        %6341 = vdwg.mxu0
        %s6342 = scalar_lea.vmem %s12, 928
        %v6343 = vld [vmem:[%s6342] sm:$0xff]
        %v6344 = vld [vmem:[%s6342 + $0x8] sm:$0xff]
        %v6345 = vld [vmem:[%s6342 + $0x10] sm:$0xff]
        %v6346 = vld [vmem:[%s6342 + $0x18] sm:$0xff]
        %v6347 = vld [vmem:[%s6342 + $0x20] sm:$0xff]
        %v6348 = vld [vmem:[%s6342 + $0x28] sm:$0xff]
        %v6349 = vld [vmem:[%s6342 + $0x30] sm:$0xff]
        %v6350 = vld [vmem:[%s6342 + $0x38] sm:$0xff]
        %v6351 = vld [vmem:[%s6342 + $0x40] sm:$0xff]
        %v6352 = vld [vmem:[%s6342 + $0x48] sm:$0xff]
        %v6353 = vld [vmem:[%s6342 + $0x50] sm:$0xff]
        %v6354 = vld [vmem:[%s6342 + $0x58] sm:$0xff]
        %v6355 = vld [vmem:[%s6342 + $0x60] sm:$0xff]
        %v6356 = vld [vmem:[%s6342 + $0x68] sm:$0xff]
        %v6357 = vld [vmem:[%s6342 + $0x70] sm:$0xff]
        %v6358 = vld [vmem:[%s6342 + $0x78] sm:$0xff]
        %v6359 = vld [vmem:[%s6342 + $0x80] sm:$0xff]
        %v6360 = vld [vmem:[%s6342 + $0x88] sm:$0xff]
        %v6361 = vld [vmem:[%s6342 + $0x90] sm:$0xff]
        %v6362 = vld [vmem:[%s6342 + $0x98] sm:$0xff]
        %v6363 = vld [vmem:[%s6342 + $0xa0] sm:$0xff]
        %v6364 = vld [vmem:[%s6342 + $0xa8] sm:$0xff]
        %v6365 = vld [vmem:[%s6342 + $0xb0] sm:$0xff]
        %v6366 = vld [vmem:[%s6342 + $0xb8] sm:$0xff]
        %v6367 = vld [vmem:[%s6342 + $0xc0] sm:$0xff]
        %v6368 = vld [vmem:[%s6342 + $0xc8] sm:$0xff]
        %v6369 = vld [vmem:[%s6342 + $0xd0] sm:$0xff]
        %v6370 = vld [vmem:[%s6342 + $0xd8] sm:$0xff]
        %v6371 = vld [vmem:[%s6342 + $0xe0] sm:$0xff]
        %v6372 = vld [vmem:[%s6342 + $0xe8] sm:$0xff]
        %v6373 = vld [vmem:[%s6342 + $0xf0] sm:$0xff]
        %v6374 = vld [vmem:[%s6342 + $0xf8] sm:$0xff]
        %v6375 = vld [vmem:[%s6342 + $0x100] sm:$0xff]
        %v6376 = vld [vmem:[%s6342 + $0x108] sm:$0xff]
        %v6377 = vld [vmem:[%s6342 + $0x110] sm:$0xff]
        %v6378 = vld [vmem:[%s6342 + $0x118] sm:$0xff]
        %v6379 = vld [vmem:[%s6342 + $0x120] sm:$0xff]
        %v6380 = vld [vmem:[%s6342 + $0x128] sm:$0xff]
        %v6381 = vld [vmem:[%s6342 + $0x130] sm:$0xff]
        %v6382 = vld [vmem:[%s6342 + $0x138] sm:$0xff]
        %v6383 = vld [vmem:[%s6342 + $0x140] sm:$0xff]
        %v6384 = vld [vmem:[%s6342 + $0x148] sm:$0xff]
        %v6385 = vld [vmem:[%s6342 + $0x150] sm:$0xff]
        %v6386 = vld [vmem:[%s6342 + $0x158] sm:$0xff]
        %v6387 = vld [vmem:[%s6342 + $0x160] sm:$0xff]
        %v6388 = vld [vmem:[%s6342 + $0x168] sm:$0xff]
        %v6389 = vld [vmem:[%s6342 + $0x170] sm:$0xff]
        %v6390 = vld [vmem:[%s6342 + $0x178] sm:$0xff]
        %v6391 = vld [vmem:[%s6342 + $0x180] sm:$0xff]
        %v6392 = vld [vmem:[%s6342 + $0x188] sm:$0xff]
        %v6393 = vld [vmem:[%s6342 + $0x190] sm:$0xff]
        %v6394 = vld [vmem:[%s6342 + $0x198] sm:$0xff]
        %v6395 = vld [vmem:[%s6342 + $0x1a0] sm:$0xff]
        %v6396 = vld [vmem:[%s6342 + $0x1a8] sm:$0xff]
        %v6397 = vld [vmem:[%s6342 + $0x1b0] sm:$0xff]
        %v6398 = vld [vmem:[%s6342 + $0x1b8] sm:$0xff]
        %v6399 = vld [vmem:[%s6342 + $0x1c0] sm:$0x1]
        %v6400 = vld [vmem:[%s6342 + $0x1c8] sm:$0x1]
        %v6402 = vsel %vm976, %v6399, 0
        %v6405 = vsel %vm976, %v6400, 0
        %6407 = vmatprep.subr.mxu0 %v6344
        %6408 = vmatpush1.msra.mxu0 %v6343
        %6409 = vmatprep.subr.mxu0 %v6346
        %6410 = vmatpush1.msra.mxu0 %v6345
        %6411 = vmatprep.subr.mxu0 %v6348
        %6412 = vmatpush1.msra.mxu0 %v6347
        %6413 = vmatprep.subr.mxu0 %v6350
        %6414 = vmatpush1.msra.mxu0 %v6349
        %6415 = vmatprep.subr.mxu0 %v6352
        %6416 = vmatpush1.msra.mxu0 %v6351
        %6417 = vmatprep.subr.mxu0 %v6354
        %6418 = vmatpush1.msra.mxu0 %v6353
        %6419 = vmatprep.subr.mxu0 %v6356
        %6420 = vmatpush1.msra.mxu0 %v6355
        %6421 = vmatprep.subr.mxu0 %v6358
        %6422 = vmatpush1.msra.mxu0 %v6357
        %6423 = vmatprep.subr.mxu0 %v6360
        %6424 = vmatpush1.msra.mxu0 %v6359
        %6425 = vmatprep.subr.mxu0 %v6362
        %6426 = vmatpush1.msra.mxu0 %v6361
        %6427 = vmatprep.subr.mxu0 %v6364
        %6428 = vmatpush1.msra.mxu0 %v6363
        %6429 = vmatprep.subr.mxu0 %v6366
        %6430 = vmatpush1.msra.mxu0 %v6365
        %6431 = vmatprep.subr.mxu0 %v6368
        %6432 = vmatpush1.msra.mxu0 %v6367
        %6433 = vmatprep.subr.mxu0 %v6370
        %6434 = vmatpush1.msra.mxu0 %v6369
        %6435 = vmatprep.subr.mxu0 %v6372
        %6436 = vmatpush1.msra.mxu0 %v6371
        %6437 = vmatprep.subr.mxu0 %v6374
        %6438 = vmatpush1.msra.mxu0 %v6373
        %6439 = vmatprep.subr.mxu0 %v6376
        %6440 = vmatpush1.msra.mxu0 %v6375
        %6441 = vmatprep.subr.mxu0 %v6378
        %6442 = vmatpush1.msra.mxu0 %v6377
        %6443 = vmatprep.subr.mxu0 %v6380
        %6444 = vmatpush1.msra.mxu0 %v6379
        %6445 = vmatprep.subr.mxu0 %v6382
        %6446 = vmatpush1.msra.mxu0 %v6381
        %6447 = vmatprep.subr.mxu0 %v6384
        %6448 = vmatpush1.msra.mxu0 %v6383
        %6449 = vmatprep.subr.mxu0 %v6386
        %6450 = vmatpush1.msra.mxu0 %v6385
        %6451 = vmatprep.subr.mxu0 %v6388
        %6452 = vmatpush1.msra.mxu0 %v6387
        %6453 = vmatprep.subr.mxu0 %v6390
        %6454 = vmatpush1.msra.mxu0 %v6389
        %6455 = vmatprep.subr.mxu0 %v6392
        %6456 = vmatpush1.msra.mxu0 %v6391
        %6457 = vmatprep.subr.mxu0 %v6394
        %6458 = vmatpush1.msra.mxu0 %v6393
        %6459 = vmatprep.subr.mxu0 %v6396
        %6460 = vmatpush1.msra.mxu0 %v6395
        %6461 = vmatprep.subr.mxu0 %v6398
        %6462 = vmatpush1.msra.mxu0 %v6397
        %6463 = vmatprep.subr.mxu0 %v6405
        %6464 = vmatpush1.msra.mxu0 %v6402
        %6465 = vmatprep.subr.mxu0 0.0
        %6466 = vmatpush1.msra.mxu0 0.0
        %6467 = vmatprep.subr.mxu0 0.0
        %6468 = vmatpush1.msra.mxu0 0.0
        %6469 = vmatprep.subr.mxu0 0.0
        %6470 = vmatpush1.msra.mxu0 0.0
        %6471 = vmatprep.mubr.f32.mxu0 %v6112
        %6472 = vmatmul.mubr.f32.gmra.mrb[0].mxu0 %v6048
        %v6473 = vpop.f32.mrb[0].mxu0
        %v6474 = vadd.f32 0.0, %v6473
        %v6475 = vpop.f32.mrb[0].mxu0
        %v6476 = vadd.f32 0.0, %v6475
        %6477 = vmatprep.mubr.f32.mxu0 %v6115
        %6478 = vmatmul.mubr.f32.gmra.mrb[0].mxu0 %v6050
        %v6479 = vpop.f32.mrb[0].mxu0
        %v6480 = vadd.f32 0.0, %v6479
        %v6481 = vpop.f32.mrb[0].mxu0
        %v6482 = vadd.f32 0.0, %v6481
        %6483 = vdwg.mxu0
        %s6484 = scalar_lea.vmem %s12, 1392
        %v6485 = vld [vmem:[%s6484] sm:$0xff]
        %v6486 = vld [vmem:[%s6484 + $0x8] sm:$0xff]
        %v6487 = vld [vmem:[%s6484 + $0x10] sm:$0xff]
        %v6488 = vld [vmem:[%s6484 + $0x18] sm:$0xff]
        %v6489 = vld [vmem:[%s6484 + $0x20] sm:$0xff]
        %v6490 = vld [vmem:[%s6484 + $0x28] sm:$0xff]
        %v6491 = vld [vmem:[%s6484 + $0x30] sm:$0xff]
        %v6492 = vld [vmem:[%s6484 + $0x38] sm:$0xff]
        %v6493 = vld [vmem:[%s6484 + $0x40] sm:$0xff]
        %v6494 = vld [vmem:[%s6484 + $0x48] sm:$0xff]
        %v6495 = vld [vmem:[%s6484 + $0x50] sm:$0xff]
        %v6496 = vld [vmem:[%s6484 + $0x58] sm:$0xff]
        %v6497 = vld [vmem:[%s6484 + $0x60] sm:$0xff]
        %v6498 = vld [vmem:[%s6484 + $0x68] sm:$0xff]
        %v6499 = vld [vmem:[%s6484 + $0x70] sm:$0xff]
        %v6500 = vld [vmem:[%s6484 + $0x78] sm:$0xff]
        %v6501 = vld [vmem:[%s6484 + $0x80] sm:$0xff]
        %v6502 = vld [vmem:[%s6484 + $0x88] sm:$0xff]
        %v6503 = vld [vmem:[%s6484 + $0x90] sm:$0xff]
        %v6504 = vld [vmem:[%s6484 + $0x98] sm:$0xff]
        %v6505 = vld [vmem:[%s6484 + $0xa0] sm:$0xff]
        %v6506 = vld [vmem:[%s6484 + $0xa8] sm:$0xff]
        %v6507 = vld [vmem:[%s6484 + $0xb0] sm:$0xff]
        %v6508 = vld [vmem:[%s6484 + $0xb8] sm:$0xff]
        %v6509 = vld [vmem:[%s6484 + $0xc0] sm:$0xff]
        %v6510 = vld [vmem:[%s6484 + $0xc8] sm:$0xff]
        %v6511 = vld [vmem:[%s6484 + $0xd0] sm:$0xff]
        %v6512 = vld [vmem:[%s6484 + $0xd8] sm:$0xff]
        %v6513 = vld [vmem:[%s6484 + $0xe0] sm:$0xff]
        %v6514 = vld [vmem:[%s6484 + $0xe8] sm:$0xff]
        %v6515 = vld [vmem:[%s6484 + $0xf0] sm:$0xff]
        %v6516 = vld [vmem:[%s6484 + $0xf8] sm:$0xff]
        %v6517 = vld [vmem:[%s6484 + $0x100] sm:$0xff]
        %v6518 = vld [vmem:[%s6484 + $0x108] sm:$0xff]
        %v6519 = vld [vmem:[%s6484 + $0x110] sm:$0xff]
        %v6520 = vld [vmem:[%s6484 + $0x118] sm:$0xff]
        %v6521 = vld [vmem:[%s6484 + $0x120] sm:$0xff]
        %v6522 = vld [vmem:[%s6484 + $0x128] sm:$0xff]
        %v6523 = vld [vmem:[%s6484 + $0x130] sm:$0xff]
        %v6524 = vld [vmem:[%s6484 + $0x138] sm:$0xff]
        %v6525 = vld [vmem:[%s6484 + $0x140] sm:$0xff]
        %v6526 = vld [vmem:[%s6484 + $0x148] sm:$0xff]
        %v6527 = vld [vmem:[%s6484 + $0x150] sm:$0xff]
        %v6528 = vld [vmem:[%s6484 + $0x158] sm:$0xff]
        %v6529 = vld [vmem:[%s6484 + $0x160] sm:$0xff]
        %v6530 = vld [vmem:[%s6484 + $0x168] sm:$0xff]
        %v6531 = vld [vmem:[%s6484 + $0x170] sm:$0xff]
        %v6532 = vld [vmem:[%s6484 + $0x178] sm:$0xff]
        %v6533 = vld [vmem:[%s6484 + $0x180] sm:$0xff]
        %v6534 = vld [vmem:[%s6484 + $0x188] sm:$0xff]
        %v6535 = vld [vmem:[%s6484 + $0x190] sm:$0xff]
        %v6536 = vld [vmem:[%s6484 + $0x198] sm:$0xff]
        %v6537 = vld [vmem:[%s6484 + $0x1a0] sm:$0xff]
        %v6538 = vld [vmem:[%s6484 + $0x1a8] sm:$0xff]
        %v6539 = vld [vmem:[%s6484 + $0x1b0] sm:$0xff]
        %v6540 = vld [vmem:[%s6484 + $0x1b8] sm:$0xff]
        %v6541 = vld [vmem:[%s6484 + $0x1c0] sm:$0x1]
        %v6542 = vld [vmem:[%s6484 + $0x1c8] sm:$0x1]
        %v6544 = vsel %vm976, %v6541, 0
        %v6547 = vsel %vm976, %v6542, 0
        %6549 = vmatprep.subr.mxu0 %v6486
        %6550 = vmatpush1.msra.mxu0 %v6485
        %6551 = vmatprep.subr.mxu0 %v6488
        %6552 = vmatpush1.msra.mxu0 %v6487
        %6553 = vmatprep.subr.mxu0 %v6490
        %6554 = vmatpush1.msra.mxu0 %v6489
        %6555 = vmatprep.subr.mxu0 %v6492
        %6556 = vmatpush1.msra.mxu0 %v6491
        %6557 = vmatprep.subr.mxu0 %v6494
        %6558 = vmatpush1.msra.mxu0 %v6493
        %6559 = vmatprep.subr.mxu0 %v6496
        %6560 = vmatpush1.msra.mxu0 %v6495
        %6561 = vmatprep.subr.mxu0 %v6498
        %6562 = vmatpush1.msra.mxu0 %v6497
        %6563 = vmatprep.subr.mxu0 %v6500
        %6564 = vmatpush1.msra.mxu0 %v6499
        %6565 = vmatprep.subr.mxu0 %v6502
        %6566 = vmatpush1.msra.mxu0 %v6501
        %6567 = vmatprep.subr.mxu0 %v6504
        %6568 = vmatpush1.msra.mxu0 %v6503
        %6569 = vmatprep.subr.mxu0 %v6506
        %6570 = vmatpush1.msra.mxu0 %v6505
        %6571 = vmatprep.subr.mxu0 %v6508
        %6572 = vmatpush1.msra.mxu0 %v6507
        %6573 = vmatprep.subr.mxu0 %v6510
        %6574 = vmatpush1.msra.mxu0 %v6509
        %6575 = vmatprep.subr.mxu0 %v6512
        %6576 = vmatpush1.msra.mxu0 %v6511
        %6577 = vmatprep.subr.mxu0 %v6514
        %6578 = vmatpush1.msra.mxu0 %v6513
        %6579 = vmatprep.subr.mxu0 %v6516
        %6580 = vmatpush1.msra.mxu0 %v6515
        %6581 = vmatprep.subr.mxu0 %v6518
        %6582 = vmatpush1.msra.mxu0 %v6517
        %6583 = vmatprep.subr.mxu0 %v6520
        %6584 = vmatpush1.msra.mxu0 %v6519
        %6585 = vmatprep.subr.mxu0 %v6522
        %6586 = vmatpush1.msra.mxu0 %v6521
        %6587 = vmatprep.subr.mxu0 %v6524
        %6588 = vmatpush1.msra.mxu0 %v6523
        %6589 = vmatprep.subr.mxu0 %v6526
        %6590 = vmatpush1.msra.mxu0 %v6525
        %6591 = vmatprep.subr.mxu0 %v6528
        %6592 = vmatpush1.msra.mxu0 %v6527
        %6593 = vmatprep.subr.mxu0 %v6530
        %6594 = vmatpush1.msra.mxu0 %v6529
        %6595 = vmatprep.subr.mxu0 %v6532
        %6596 = vmatpush1.msra.mxu0 %v6531
        %6597 = vmatprep.subr.mxu0 %v6534
        %6598 = vmatpush1.msra.mxu0 %v6533
        %6599 = vmatprep.subr.mxu0 %v6536
        %6600 = vmatpush1.msra.mxu0 %v6535
        %6601 = vmatprep.subr.mxu0 %v6538
        %6602 = vmatpush1.msra.mxu0 %v6537
        %6603 = vmatprep.subr.mxu0 %v6540
        %6604 = vmatpush1.msra.mxu0 %v6539
        %6605 = vmatprep.subr.mxu0 %v6547
        %6606 = vmatpush1.msra.mxu0 %v6544
        %6607 = vmatprep.subr.mxu0 0.0
        %6608 = vmatpush1.msra.mxu0 0.0
        %6609 = vmatprep.subr.mxu0 0.0
        %6610 = vmatpush1.msra.mxu0 0.0
        %6611 = vmatprep.subr.mxu0 0.0
        %6612 = vmatpush1.msra.mxu0 0.0
        %6613 = vmatprep.mubr.f32.mxu0 %v6112
        %6614 = vmatmul.mubr.f32.gmra.mrb[0].mxu0 %v6048
        %v6615 = vpop.f32.mrb[0].mxu0
        %v6616 = vadd.f32 0.0, %v6615
        %v6617 = vpop.f32.mrb[0].mxu0
        %v6618 = vadd.f32 0.0, %v6617
        %6619 = vmatprep.mubr.f32.mxu0 %v6115
        %6620 = vmatmul.mubr.f32.gmra.mrb[0].mxu0 %v6050
        %v6621 = vpop.f32.mrb[0].mxu0
        %v6622 = vadd.f32 0.0, %v6621
        %v6623 = vpop.f32.mrb[0].mxu0
        %v6624 = vadd.f32 0.0, %v6623
        %6625 = vdwg.mxu0
        %s6626 = scalar_lea.vmem %s10, 4
        %v6627 = vld [vmem:[%s6626] sm:$0x1]
        %v6628 = vld [vmem:[#allocation2] sm:$0x1]
        %6630 = vset.pattern.permute.xlu0 0
        %6631 = vperm.xlu0 %6630, %v6628
        %v6632 = vpop.permute.xlu0 %6631
        %v6634 = vlaneseq
        %v6635 = vshrl.u32 %v6634, 7
        %v6636 = vsub.s32 0, %v6635
        %v6637 = vrot.slane %v6632, %v6636
        %vm6638 = vcmask 130048
        %v6640 = vsel %vm6638, %v6627, 0
        %6642 = vmatprep.subr.mxu0 %v6192
        %6643 = vmatpush1.msra.mxu0 %v6190
        %6644 = vmatprep.subr.mxu0 %v6198
        %6645 = vmatpush1.msra.mxu0 %v6196
        %6646 = vmatprep.subr.mxu0 0.0
        %6647 = vmatpush1.msra.mxu0 0.0
        %6648 = vmatprep.subr.mxu0 0.0
        %6649 = vmatpush1.msra.mxu0 0.0
        %6650 = vmatprep.subr.mxu0 0.0
        %6651 = vmatpush1.msra.mxu0 0.0
        %6652 = vmatprep.subr.mxu0 0.0
        %6653 = vmatpush1.msra.mxu0 0.0
        %6654 = vmatprep.subr.mxu0 0.0
        %6655 = vmatpush1.msra.mxu0 0.0
        %6656 = vmatprep.subr.mxu0 0.0
        %6657 = vmatpush1.msra.mxu0 0.0
        %6658 = vmatprep.subr.mxu0 0.0
        %6659 = vmatpush1.msra.mxu0 0.0
        %6660 = vmatprep.subr.mxu0 0.0
        %6661 = vmatpush1.msra.mxu0 0.0
        %6662 = vmatprep.subr.mxu0 0.0
        %6663 = vmatpush1.msra.mxu0 0.0
        %6664 = vmatprep.subr.mxu0 0.0
        %6665 = vmatpush1.msra.mxu0 0.0
        %6666 = vmatprep.subr.mxu0 0.0
        %6667 = vmatpush1.msra.mxu0 0.0
        %6668 = vmatprep.subr.mxu0 0.0
        %6669 = vmatpush1.msra.mxu0 0.0
        %6670 = vmatprep.subr.mxu0 0.0
        %6671 = vmatpush1.msra.mxu0 0.0
        %6672 = vmatprep.subr.mxu0 0.0
        %6673 = vmatpush1.msra.mxu0 0.0
        %6674 = vmatprep.subr.mxu0 0.0
        %6675 = vmatpush1.msra.mxu0 0.0
        %6676 = vmatprep.subr.mxu0 0.0
        %6677 = vmatpush1.msra.mxu0 0.0
        %6678 = vmatprep.subr.mxu0 0.0
        %6679 = vmatpush1.msra.mxu0 0.0
        %6680 = vmatprep.subr.mxu0 0.0
        %6681 = vmatpush1.msra.mxu0 0.0
        %6682 = vmatprep.subr.mxu0 0.0
        %6683 = vmatpush1.msra.mxu0 0.0
        %6684 = vmatprep.subr.mxu0 0.0
        %6685 = vmatpush1.msra.mxu0 0.0
        %6686 = vmatprep.subr.mxu0 0.0
        %6687 = vmatpush1.msra.mxu0 0.0
        %6688 = vmatprep.subr.mxu0 0.0
        %6689 = vmatpush1.msra.mxu0 0.0
        %6690 = vmatprep.subr.mxu0 0.0
        %6691 = vmatpush1.msra.mxu0 0.0
        %6692 = vmatprep.subr.mxu0 0.0
        %6693 = vmatpush1.msra.mxu0 0.0
        %6694 = vmatprep.subr.mxu0 0.0
        %6695 = vmatpush1.msra.mxu0 0.0
        %6696 = vmatprep.subr.mxu0 0.0
        %6697 = vmatpush1.msra.mxu0 0.0
        %6698 = vmatprep.subr.mxu0 0.0
        %6699 = vmatpush1.msra.mxu0 0.0
        %6700 = vmatprep.subr.mxu0 0.0
        %6701 = vmatpush1.msra.mxu0 0.0
        %6702 = vmatprep.subr.mxu0 0.0
        %6703 = vmatpush1.msra.mxu0 0.0
        %6704 = vmatprep.subr.mxu0 0.0
        %6705 = vmatpush1.msra.mxu0 0.0
        %6706 = vmatprep.mubr.f32.mxu0 0.0
        %6707 = vmatmul.mubr.f32.gmra.mrb[0].mxu0 %v6640
        %v6708 = vpop.f32.mrb[0].mxu0
        %v6709 = vadd.f32 %v6637, %v6708
        %v6710 = vpop.f32.mrb[0].mxu0
        %v6711 = vadd.f32 %v6637, %v6710
        %6712 = vdwg.mxu0
        %v6713 = vxor.u32 %v6709, 2147483648
        %v6714 = vxor.u32 %v6711, 2147483648
        %v6715 = vmul.f32 %v6713, 1.442695
        %v6716 = vpow.pop %v6715
        %v6717 = vmul.f32 %v6714, 1.442695
        %v6718 = vpow.pop %v6717
        %v6719 = vadd.f32 %v6716, 1.0
        %v6720 = vadd.f32 %v6718, 1.0
        %v6721 = vrcp.pop %v6719
        %v6722 = vmul.f32 1.0, %v6721
        %v6723 = vrcp.pop %v6720
        %v6724 = vmul.f32 1.0, %v6723
        %v6727 = vcombine.low %v6722, %v6724
        %v6729 = vunpack.c.l.s4 1966171168
        %v6730 = vunpack.c.0.s8 %v6729
        %v6731 = vlaneseq
        %v6732 = vshrl.u32 %v6731, 7
        %v6733 = vsub.s32 %v6730, %v6732
        %v6734 = vrot.slane %v6727, %v6733
        %v6736 = vunpack.c.l.s4 1966171168
        %v6737 = vunpack.c.0.s8 %v6736
        %v6738 = vlaneseq
        %v6739 = vshrl.u32 %v6738, 7
        %v6740 = vsub.s32 %v6737, %v6739
        %v6741 = vrot.slane %v6734, %v6740
        %v6743 = vlaneseq
        %vm6744 = vcmp.ge.s32.totalorder %v6743, 0
        %vm6745 = vcmp.lt.s32.totalorder %v6743, 225
        %vm6746 = vmand %vm6744, %vm6745
        %6747 = vst.msk [vmem:[%s436] ss:$4 sm:$0x3] %vm6746, %v6741
        %s6748 = scalar_lea.vmem %s10, 5
        %v6749 = vld [vmem:[%s6748] sm:$0x1]
        %s6750 = scalar_lea.vmem %s10, 3
        %v6751 = vld [vmem:[%s6750] sm:$0x1]
        %v6753 = vsel %vm6638, %v6751, 0
        %6755 = vmatprep.subr.mxu0 %v6334
        %6756 = vmatpush1.msra.mxu0 %v6332
        %6757 = vmatprep.subr.mxu0 %v6340
        %6758 = vmatpush1.msra.mxu0 %v6338
        %6759 = vmatprep.subr.mxu0 0.0
        %6760 = vmatpush1.msra.mxu0 0.0
        %6761 = vmatprep.subr.mxu0 0.0
        %6762 = vmatpush1.msra.mxu0 0.0
        %6763 = vmatprep.subr.mxu0 0.0
        %6764 = vmatpush1.msra.mxu0 0.0
        %6765 = vmatprep.subr.mxu0 0.0
        %6766 = vmatpush1.msra.mxu0 0.0
        %6767 = vmatprep.subr.mxu0 0.0
        %6768 = vmatpush1.msra.mxu0 0.0
        %6769 = vmatprep.subr.mxu0 0.0
        %6770 = vmatpush1.msra.mxu0 0.0
        %6771 = vmatprep.subr.mxu0 0.0
        %6772 = vmatpush1.msra.mxu0 0.0
        %6773 = vmatprep.subr.mxu0 0.0
        %6774 = vmatpush1.msra.mxu0 0.0
        %6775 = vmatprep.subr.mxu0 0.0
        %6776 = vmatpush1.msra.mxu0 0.0
        %6777 = vmatprep.subr.mxu0 0.0
        %6778 = vmatpush1.msra.mxu0 0.0
        %6779 = vmatprep.subr.mxu0 0.0
        %6780 = vmatpush1.msra.mxu0 0.0
        %6781 = vmatprep.subr.mxu0 0.0
        %6782 = vmatpush1.msra.mxu0 0.0
        %6783 = vmatprep.subr.mxu0 0.0
        %6784 = vmatpush1.msra.mxu0 0.0
        %6785 = vmatprep.subr.mxu0 0.0
        %6786 = vmatpush1.msra.mxu0 0.0
        %6787 = vmatprep.subr.mxu0 0.0
        %6788 = vmatpush1.msra.mxu0 0.0
        %6789 = vmatprep.subr.mxu0 0.0
        %6790 = vmatpush1.msra.mxu0 0.0
        %6791 = vmatprep.subr.mxu0 0.0
        %6792 = vmatpush1.msra.mxu0 0.0
        %6793 = vmatprep.subr.mxu0 0.0
        %6794 = vmatpush1.msra.mxu0 0.0
        %6795 = vmatprep.subr.mxu0 0.0
        %6796 = vmatpush1.msra.mxu0 0.0
        %6797 = vmatprep.subr.mxu0 0.0
        %6798 = vmatpush1.msra.mxu0 0.0
        %6799 = vmatprep.subr.mxu0 0.0
        %6800 = vmatpush1.msra.mxu0 0.0
        %6801 = vmatprep.subr.mxu0 0.0
        %6802 = vmatpush1.msra.mxu0 0.0
        %6803 = vmatprep.subr.mxu0 0.0
        %6804 = vmatpush1.msra.mxu0 0.0
        %6805 = vmatprep.subr.mxu0 0.0
        %6806 = vmatpush1.msra.mxu0 0.0
        %6807 = vmatprep.subr.mxu0 0.0
        %6808 = vmatpush1.msra.mxu0 0.0
        %6809 = vmatprep.subr.mxu0 0.0
        %6810 = vmatpush1.msra.mxu0 0.0
        %6811 = vmatprep.subr.mxu0 0.0
        %6812 = vmatpush1.msra.mxu0 0.0
        %6813 = vmatprep.subr.mxu0 0.0
        %6814 = vmatpush1.msra.mxu0 0.0
        %6815 = vmatprep.subr.mxu0 0.0
        %6816 = vmatpush1.msra.mxu0 0.0
        %6817 = vmatprep.subr.mxu0 0.0
        %6818 = vmatpush1.msra.mxu0 0.0
        %6819 = vmatprep.mubr.f32.mxu0 0.0
        %6820 = vmatmul.mubr.f32.gmra.mrb[0].mxu0 %v6753
        %v6821 = vpop.f32.mrb[0].mxu0
        %v6822 = vadd.f32 0.0, %v6821
        %v6823 = vpop.f32.mrb[0].mxu0
        %v6824 = vadd.f32 0.0, %v6823
        %6825 = vdwg.mxu0
        %v6827 = vsel %vm6638, %v6749, 0
        %6829 = vmatprep.subr.mxu0 %v6192
        %6830 = vmatpush1.msra.mxu0 %v6190
        %6831 = vmatprep.subr.mxu0 %v6198
        %6832 = vmatpush1.msra.mxu0 %v6196
        %6833 = vmatprep.subr.mxu0 0.0
        %6834 = vmatpush1.msra.mxu0 0.0
        %6835 = vmatprep.subr.mxu0 0.0
        %6836 = vmatpush1.msra.mxu0 0.0
        %6837 = vmatprep.subr.mxu0 0.0
        %6838 = vmatpush1.msra.mxu0 0.0
        %6839 = vmatprep.subr.mxu0 0.0
        %6840 = vmatpush1.msra.mxu0 0.0
        %6841 = vmatprep.subr.mxu0 0.0
        %6842 = vmatpush1.msra.mxu0 0.0
        %6843 = vmatprep.subr.mxu0 0.0
        %6844 = vmatpush1.msra.mxu0 0.0
        %6845 = vmatprep.subr.mxu0 0.0
        %6846 = vmatpush1.msra.mxu0 0.0
        %6847 = vmatprep.subr.mxu0 0.0
        %6848 = vmatpush1.msra.mxu0 0.0
        %6849 = vmatprep.subr.mxu0 0.0
        %6850 = vmatpush1.msra.mxu0 0.0
        %6851 = vmatprep.subr.mxu0 0.0
        %6852 = vmatpush1.msra.mxu0 0.0
        %6853 = vmatprep.subr.mxu0 0.0
        %6854 = vmatpush1.msra.mxu0 0.0
        %6855 = vmatprep.subr.mxu0 0.0
        %6856 = vmatpush1.msra.mxu0 0.0
        %6857 = vmatprep.subr.mxu0 0.0
        %6858 = vmatpush1.msra.mxu0 0.0
        %6859 = vmatprep.subr.mxu0 0.0
        %6860 = vmatpush1.msra.mxu0 0.0
        %6861 = vmatprep.subr.mxu0 0.0
        %6862 = vmatpush1.msra.mxu0 0.0
        %6863 = vmatprep.subr.mxu0 0.0
        %6864 = vmatpush1.msra.mxu0 0.0
        %6865 = vmatprep.subr.mxu0 0.0
        %6866 = vmatpush1.msra.mxu0 0.0
        %6867 = vmatprep.subr.mxu0 0.0
        %6868 = vmatpush1.msra.mxu0 0.0
        %6869 = vmatprep.subr.mxu0 0.0
        %6870 = vmatpush1.msra.mxu0 0.0
        %6871 = vmatprep.subr.mxu0 0.0
        %6872 = vmatpush1.msra.mxu0 0.0
        %6873 = vmatprep.subr.mxu0 0.0
        %6874 = vmatpush1.msra.mxu0 0.0
        %6875 = vmatprep.subr.mxu0 0.0
        %6876 = vmatpush1.msra.mxu0 0.0
        %6877 = vmatprep.subr.mxu0 0.0
        %6878 = vmatpush1.msra.mxu0 0.0
        %6879 = vmatprep.subr.mxu0 0.0
        %6880 = vmatpush1.msra.mxu0 0.0
        %6881 = vmatprep.subr.mxu0 0.0
        %6882 = vmatpush1.msra.mxu0 0.0
        %6883 = vmatprep.subr.mxu0 0.0
        %6884 = vmatpush1.msra.mxu0 0.0
        %6885 = vmatprep.subr.mxu0 0.0
        %6886 = vmatpush1.msra.mxu0 0.0
        %6887 = vmatprep.subr.mxu0 0.0
        %6888 = vmatpush1.msra.mxu0 0.0
        %6889 = vmatprep.subr.mxu0 0.0
        %6890 = vmatpush1.msra.mxu0 0.0
        %6891 = vmatprep.subr.mxu0 0.0
        %6892 = vmatpush1.msra.mxu0 0.0
        %6893 = vmatprep.mubr.f32.mxu0 0.0
        %6894 = vmatmul.mubr.f32.gmra.mrb[0].mxu0 %v6827
        %v6895 = vpop.f32.mrb[0].mxu0
        %v6896 = vadd.f32 %v6822, %v6895
        %v6897 = vpop.f32.mrb[0].mxu0
        %v6898 = vadd.f32 %v6824, %v6897
        %6899 = vdwg.mxu0
        %v6900 = vld [vmem:[#allocation2] sm:$0x1]
        %6902 = vset.pattern.permute.xlu0 0
        %6903 = vperm.xlu0 %6902, %v6900
        %v6904 = vpop.permute.xlu0 %6903
        %v6906 = vlaneseq
        %v6907 = vshrl.u32 %v6906, 7
        %v6908 = vsub.s32 0, %v6907
        %v6909 = vrot.slane %v6904, %v6908
        %v6910 = vadd.f32 %v6896, %v6909
        %v6911 = vadd.f32 %v6898, %v6909
        %v6912 = vxor.u32 %v6910, 2147483648
        %v6913 = vxor.u32 %v6911, 2147483648
        %v6914 = vmul.f32 %v6912, 1.442695
        %v6915 = vpow.pop %v6914
        %v6916 = vmul.f32 %v6913, 1.442695
        %v6917 = vpow.pop %v6916
        %v6918 = vadd.f32 %v6915, 1.0
        %v6919 = vadd.f32 %v6917, 1.0
        %v6920 = vrcp.pop %v6918
        %v6921 = vmul.f32 1.0, %v6920
        %v6922 = vrcp.pop %v6919
        %v6923 = vmul.f32 1.0, %v6922
        %v6926 = vcombine.low %v6921, %v6923
        %v6928 = vunpack.c.l.s4 1966171168
        %v6929 = vunpack.c.0.s8 %v6928
        %v6930 = vlaneseq
        %v6931 = vshrl.u32 %v6930, 7
        %v6932 = vsub.s32 %v6929, %v6931
        %v6933 = vrot.slane %v6926, %v6932
        %v6935 = vunpack.c.l.s4 1966171168
        %v6936 = vunpack.c.0.s8 %v6935
        %v6937 = vlaneseq
        %v6938 = vshrl.u32 %v6937, 7
        %v6939 = vsub.s32 %v6936, %v6938
        %v6940 = vrot.slane %v6933, %v6939
        %s6942 = scalar_lea.vmem %s436, 1
        %6943 = vst.msk [vmem:[%s6942] ss:$4 sm:$0x3] %vm6746, %v6940
        %s6944 = scalar_lea.vmem %s10, 7
        %v6945 = vld [vmem:[%s6944] sm:$0x1]
        %s6946 = scalar_lea.vmem %s10, 1
        %v6947 = vld [vmem:[%s6946] sm:$0x1]
        %v6949 = vsel %vm6638, %v6947, 0
        %6951 = vmatprep.subr.mxu0 %v6476
        %6952 = vmatpush1.msra.mxu0 %v6474
        %6953 = vmatprep.subr.mxu0 %v6482
        %6954 = vmatpush1.msra.mxu0 %v6480
        %6955 = vmatprep.subr.mxu0 0.0
        %6956 = vmatpush1.msra.mxu0 0.0
        %6957 = vmatprep.subr.mxu0 0.0
        %6958 = vmatpush1.msra.mxu0 0.0
        %6959 = vmatprep.subr.mxu0 0.0
        %6960 = vmatpush1.msra.mxu0 0.0
        %6961 = vmatprep.subr.mxu0 0.0
        %6962 = vmatpush1.msra.mxu0 0.0
        %6963 = vmatprep.subr.mxu0 0.0
        %6964 = vmatpush1.msra.mxu0 0.0
        %6965 = vmatprep.subr.mxu0 0.0
        %6966 = vmatpush1.msra.mxu0 0.0
        %6967 = vmatprep.subr.mxu0 0.0
        %6968 = vmatpush1.msra.mxu0 0.0
        %6969 = vmatprep.subr.mxu0 0.0
        %6970 = vmatpush1.msra.mxu0 0.0
        %6971 = vmatprep.subr.mxu0 0.0
        %6972 = vmatpush1.msra.mxu0 0.0
        %6973 = vmatprep.subr.mxu0 0.0
        %6974 = vmatpush1.msra.mxu0 0.0
        %6975 = vmatprep.subr.mxu0 0.0
        %6976 = vmatpush1.msra.mxu0 0.0
        %6977 = vmatprep.subr.mxu0 0.0
        %6978 = vmatpush1.msra.mxu0 0.0
        %6979 = vmatprep.subr.mxu0 0.0
        %6980 = vmatpush1.msra.mxu0 0.0
        %6981 = vmatprep.subr.mxu0 0.0
        %6982 = vmatpush1.msra.mxu0 0.0
        %6983 = vmatprep.subr.mxu0 0.0
        %6984 = vmatpush1.msra.mxu0 0.0
        %6985 = vmatprep.subr.mxu0 0.0
        %6986 = vmatpush1.msra.mxu0 0.0
        %6987 = vmatprep.subr.mxu0 0.0
        %6988 = vmatpush1.msra.mxu0 0.0
        %6989 = vmatprep.subr.mxu0 0.0
        %6990 = vmatpush1.msra.mxu0 0.0
        %6991 = vmatprep.subr.mxu0 0.0
        %6992 = vmatpush1.msra.mxu0 0.0
        %6993 = vmatprep.subr.mxu0 0.0
        %6994 = vmatpush1.msra.mxu0 0.0
        %6995 = vmatprep.subr.mxu0 0.0
        %6996 = vmatpush1.msra.mxu0 0.0
        %6997 = vmatprep.subr.mxu0 0.0
        %6998 = vmatpush1.msra.mxu0 0.0
        %6999 = vmatprep.subr.mxu0 0.0
        %7000 = vmatpush1.msra.mxu0 0.0
        %7001 = vmatprep.subr.mxu0 0.0
        %7002 = vmatpush1.msra.mxu0 0.0
        %7003 = vmatprep.subr.mxu0 0.0
        %7004 = vmatpush1.msra.mxu0 0.0
        %7005 = vmatprep.subr.mxu0 0.0
        %7006 = vmatpush1.msra.mxu0 0.0
        %7007 = vmatprep.subr.mxu0 0.0
        %7008 = vmatpush1.msra.mxu0 0.0
        %7009 = vmatprep.subr.mxu0 0.0
        %7010 = vmatpush1.msra.mxu0 0.0
        %7011 = vmatprep.subr.mxu0 0.0
        %7012 = vmatpush1.msra.mxu0 0.0
        %7013 = vmatprep.subr.mxu0 0.0
        %7014 = vmatpush1.msra.mxu0 0.0
        %7015 = vmatprep.mubr.f32.mxu0 0.0
        %7016 = vmatmul.mubr.f32.gmra.mrb[0].mxu0 %v6949
        %v7017 = vpop.f32.mrb[0].mxu0
        %v7018 = vadd.f32 0.0, %v7017
        %v7019 = vpop.f32.mrb[0].mxu0
        %v7020 = vadd.f32 0.0, %v7019
        %7021 = vdwg.mxu0
        %v7023 = vsel %vm6638, %v6945, 0
        %7025 = vmatprep.subr.mxu0 %v6192
        %7026 = vmatpush1.msra.mxu0 %v6190
        %7027 = vmatprep.subr.mxu0 %v6198
        %7028 = vmatpush1.msra.mxu0 %v6196
        %7029 = vmatprep.subr.mxu0 0.0
        %7030 = vmatpush1.msra.mxu0 0.0
        %7031 = vmatprep.subr.mxu0 0.0
        %7032 = vmatpush1.msra.mxu0 0.0
        %7033 = vmatprep.subr.mxu0 0.0
        %7034 = vmatpush1.msra.mxu0 0.0
        %7035 = vmatprep.subr.mxu0 0.0
        %7036 = vmatpush1.msra.mxu0 0.0
        %7037 = vmatprep.subr.mxu0 0.0
        %7038 = vmatpush1.msra.mxu0 0.0
        %7039 = vmatprep.subr.mxu0 0.0
        %7040 = vmatpush1.msra.mxu0 0.0
        %7041 = vmatprep.subr.mxu0 0.0
        %7042 = vmatpush1.msra.mxu0 0.0
        %7043 = vmatprep.subr.mxu0 0.0
        %7044 = vmatpush1.msra.mxu0 0.0
        %7045 = vmatprep.subr.mxu0 0.0
        %7046 = vmatpush1.msra.mxu0 0.0
        %7047 = vmatprep.subr.mxu0 0.0
        %7048 = vmatpush1.msra.mxu0 0.0
        %7049 = vmatprep.subr.mxu0 0.0
        %7050 = vmatpush1.msra.mxu0 0.0
        %7051 = vmatprep.subr.mxu0 0.0
        %7052 = vmatpush1.msra.mxu0 0.0
        %7053 = vmatprep.subr.mxu0 0.0
        %7054 = vmatpush1.msra.mxu0 0.0
        %7055 = vmatprep.subr.mxu0 0.0
        %7056 = vmatpush1.msra.mxu0 0.0
        %7057 = vmatprep.subr.mxu0 0.0
        %7058 = vmatpush1.msra.mxu0 0.0
        %7059 = vmatprep.subr.mxu0 0.0
        %7060 = vmatpush1.msra.mxu0 0.0
        %7061 = vmatprep.subr.mxu0 0.0
        %7062 = vmatpush1.msra.mxu0 0.0
        %7063 = vmatprep.subr.mxu0 0.0
        %7064 = vmatpush1.msra.mxu0 0.0
        %7065 = vmatprep.subr.mxu0 0.0
        %7066 = vmatpush1.msra.mxu0 0.0
        %7067 = vmatprep.subr.mxu0 0.0
        %7068 = vmatpush1.msra.mxu0 0.0
        %7069 = vmatprep.subr.mxu0 0.0
        %7070 = vmatpush1.msra.mxu0 0.0
        %7071 = vmatprep.subr.mxu0 0.0
        %7072 = vmatpush1.msra.mxu0 0.0
        %7073 = vmatprep.subr.mxu0 0.0
        %7074 = vmatpush1.msra.mxu0 0.0
        %7075 = vmatprep.subr.mxu0 0.0
        %7076 = vmatpush1.msra.mxu0 0.0
        %7077 = vmatprep.subr.mxu0 0.0
        %7078 = vmatpush1.msra.mxu0 0.0
        %7079 = vmatprep.subr.mxu0 0.0
        %7080 = vmatpush1.msra.mxu0 0.0
        %7081 = vmatprep.subr.mxu0 0.0
        %7082 = vmatpush1.msra.mxu0 0.0
        %7083 = vmatprep.subr.mxu0 0.0
        %7084 = vmatpush1.msra.mxu0 0.0
        %7085 = vmatprep.subr.mxu0 0.0
        %7086 = vmatpush1.msra.mxu0 0.0
        %7087 = vmatprep.subr.mxu0 0.0
        %7088 = vmatpush1.msra.mxu0 0.0
        %7089 = vmatprep.mubr.f32.mxu0 0.0
        %7090 = vmatmul.mubr.f32.gmra.mrb[0].mxu0 %v7023
        %v7091 = vpop.f32.mrb[0].mxu0
        %v7092 = vadd.f32 %v7018, %v7091
        %v7093 = vpop.f32.mrb[0].mxu0
        %v7094 = vadd.f32 %v7020, %v7093
        %7095 = vdwg.mxu0
        %v7096 = vld [vmem:[#allocation2] sm:$0x1]
        %7098 = vset.pattern.permute.xlu0 0
        %7099 = vperm.xlu0 %7098, %v7096
        %v7100 = vpop.permute.xlu0 %7099
        %v7102 = vlaneseq
        %v7103 = vshrl.u32 %v7102, 7
        %v7104 = vsub.s32 0, %v7103
        %v7105 = vrot.slane %v7100, %v7104
        %v7106 = vadd.f32 %v7092, %v7105
        %v7107 = vadd.f32 %v7094, %v7105
        %v7108 = vxor.u32 %v7106, 2147483648
        %v7109 = vxor.u32 %v7107, 2147483648
        %v7110 = vmul.f32 %v7108, 1.442695
        %v7111 = vpow.pop %v7110
        %v7112 = vmul.f32 %v7109, 1.442695
        %v7113 = vpow.pop %v7112
        %v7114 = vadd.f32 %v7111, 1.0
        %v7115 = vadd.f32 %v7113, 1.0
        %v7116 = vrcp.pop %v7114
        %v7117 = vmul.f32 1.0, %v7116
        %v7118 = vrcp.pop %v7115
        %v7119 = vmul.f32 1.0, %v7118
        %v7122 = vcombine.low %v7117, %v7119
        %v7124 = vunpack.c.l.s4 1966171168
        %v7125 = vunpack.c.0.s8 %v7124
        %v7126 = vlaneseq
        %v7127 = vshrl.u32 %v7126, 7
        %v7128 = vsub.s32 %v7125, %v7127
        %v7129 = vrot.slane %v7122, %v7128
        %v7131 = vunpack.c.l.s4 1966171168
        %v7132 = vunpack.c.0.s8 %v7131
        %v7133 = vlaneseq
        %v7134 = vshrl.u32 %v7133, 7
        %v7135 = vsub.s32 %v7132, %v7134
        %v7136 = vrot.slane %v7129, %v7135
        %s7138 = scalar_lea.vmem %s436, 2
        %7139 = vst.msk [vmem:[%s7138] ss:$4 sm:$0x3] %vm6746, %v7136
        %s7140 = scalar_lea.vmem %s10, 8
        %v7141 = vld [vmem:[%s7140] sm:$0x1]
        %s7142 = scalar_lea.vmem %s10, 6
        %v7143 = vld [vmem:[%s7142] sm:$0x1]
        %v7145 = vsel %vm6638, %v7143, 0
        %7147 = vmatprep.subr.mxu0 %v6334
        %7148 = vmatpush1.msra.mxu0 %v6332
        %7149 = vmatprep.subr.mxu0 %v6340
        %7150 = vmatpush1.msra.mxu0 %v6338
        %7151 = vmatprep.subr.mxu0 0.0
        %7152 = vmatpush1.msra.mxu0 0.0
        %7153 = vmatprep.subr.mxu0 0.0
        %7154 = vmatpush1.msra.mxu0 0.0
        %7155 = vmatprep.subr.mxu0 0.0
        %7156 = vmatpush1.msra.mxu0 0.0
        %7157 = vmatprep.subr.mxu0 0.0
        %7158 = vmatpush1.msra.mxu0 0.0
        %7159 = vmatprep.subr.mxu0 0.0
        %7160 = vmatpush1.msra.mxu0 0.0
        %7161 = vmatprep.subr.mxu0 0.0
        %7162 = vmatpush1.msra.mxu0 0.0
        %7163 = vmatprep.subr.mxu0 0.0
        %7164 = vmatpush1.msra.mxu0 0.0
        %7165 = vmatprep.subr.mxu0 0.0
        %7166 = vmatpush1.msra.mxu0 0.0
        %7167 = vmatprep.subr.mxu0 0.0
        %7168 = vmatpush1.msra.mxu0 0.0
        %7169 = vmatprep.subr.mxu0 0.0
        %7170 = vmatpush1.msra.mxu0 0.0
        %7171 = vmatprep.subr.mxu0 0.0
        %7172 = vmatpush1.msra.mxu0 0.0
        %7173 = vmatprep.subr.mxu0 0.0
        %7174 = vmatpush1.msra.mxu0 0.0
        %7175 = vmatprep.subr.mxu0 0.0
        %7176 = vmatpush1.msra.mxu0 0.0
        %7177 = vmatprep.subr.mxu0 0.0
        %7178 = vmatpush1.msra.mxu0 0.0
        %7179 = vmatprep.subr.mxu0 0.0
        %7180 = vmatpush1.msra.mxu0 0.0
        %7181 = vmatprep.subr.mxu0 0.0
        %7182 = vmatpush1.msra.mxu0 0.0
        %7183 = vmatprep.subr.mxu0 0.0
        %7184 = vmatpush1.msra.mxu0 0.0
        %7185 = vmatprep.subr.mxu0 0.0
        %7186 = vmatpush1.msra.mxu0 0.0
        %7187 = vmatprep.subr.mxu0 0.0
        %7188 = vmatpush1.msra.mxu0 0.0
        %7189 = vmatprep.subr.mxu0 0.0
        %7190 = vmatpush1.msra.mxu0 0.0
        %7191 = vmatprep.subr.mxu0 0.0
        %7192 = vmatpush1.msra.mxu0 0.0
        %7193 = vmatprep.subr.mxu0 0.0
        %7194 = vmatpush1.msra.mxu0 0.0
        %7195 = vmatprep.subr.mxu0 0.0
        %7196 = vmatpush1.msra.mxu0 0.0
        %7197 = vmatprep.subr.mxu0 0.0
        %7198 = vmatpush1.msra.mxu0 0.0
        %7199 = vmatprep.subr.mxu0 0.0
        %7200 = vmatpush1.msra.mxu0 0.0
        %7201 = vmatprep.subr.mxu0 0.0
        %7202 = vmatpush1.msra.mxu0 0.0
        %7203 = vmatprep.subr.mxu0 0.0
        %7204 = vmatpush1.msra.mxu0 0.0
        %7205 = vmatprep.subr.mxu0 0.0
        %7206 = vmatpush1.msra.mxu0 0.0
        %7207 = vmatprep.subr.mxu0 0.0
        %7208 = vmatpush1.msra.mxu0 0.0
        %7209 = vmatprep.subr.mxu0 0.0
        %7210 = vmatpush1.msra.mxu0 0.0
        %7211 = vmatprep.mubr.f32.mxu0 0.0
        %7212 = vmatmul.mubr.f32.gmra.mrb[0].mxu0 %v7145
        %v7213 = vpop.f32.mrb[0].mxu0
        %v7214 = vadd.f32 0.0, %v7213
        %v7215 = vpop.f32.mrb[0].mxu0
        %v7216 = vadd.f32 0.0, %v7215
        %7217 = vdwg.mxu0
        %v7219 = vsel %vm6638, %v7141, 0
        %7221 = vmatprep.subr.mxu0 %v6192
        %7222 = vmatpush1.msra.mxu0 %v6190
        %7223 = vmatprep.subr.mxu0 %v6198
        %7224 = vmatpush1.msra.mxu0 %v6196
        %7225 = vmatprep.subr.mxu0 0.0
        %7226 = vmatpush1.msra.mxu0 0.0
        %7227 = vmatprep.subr.mxu0 0.0
        %7228 = vmatpush1.msra.mxu0 0.0
        %7229 = vmatprep.subr.mxu0 0.0
        %7230 = vmatpush1.msra.mxu0 0.0
        %7231 = vmatprep.subr.mxu0 0.0
        %7232 = vmatpush1.msra.mxu0 0.0
        %7233 = vmatprep.subr.mxu0 0.0
        %7234 = vmatpush1.msra.mxu0 0.0
        %7235 = vmatprep.subr.mxu0 0.0
        %7236 = vmatpush1.msra.mxu0 0.0
        %7237 = vmatprep.subr.mxu0 0.0
        %7238 = vmatpush1.msra.mxu0 0.0
        %7239 = vmatprep.subr.mxu0 0.0
        %7240 = vmatpush1.msra.mxu0 0.0
        %7241 = vmatprep.subr.mxu0 0.0
        %7242 = vmatpush1.msra.mxu0 0.0
        %7243 = vmatprep.subr.mxu0 0.0
        %7244 = vmatpush1.msra.mxu0 0.0
        %7245 = vmatprep.subr.mxu0 0.0
        %7246 = vmatpush1.msra.mxu0 0.0
        %7247 = vmatprep.subr.mxu0 0.0
        %7248 = vmatpush1.msra.mxu0 0.0
        %7249 = vmatprep.subr.mxu0 0.0
        %7250 = vmatpush1.msra.mxu0 0.0
        %7251 = vmatprep.subr.mxu0 0.0
        %7252 = vmatpush1.msra.mxu0 0.0
        %7253 = vmatprep.subr.mxu0 0.0
        %7254 = vmatpush1.msra.mxu0 0.0
        %7255 = vmatprep.subr.mxu0 0.0
        %7256 = vmatpush1.msra.mxu0 0.0
        %7257 = vmatprep.subr.mxu0 0.0
        %7258 = vmatpush1.msra.mxu0 0.0
        %7259 = vmatprep.subr.mxu0 0.0
        %7260 = vmatpush1.msra.mxu0 0.0
        %7261 = vmatprep.subr.mxu0 0.0
        %7262 = vmatpush1.msra.mxu0 0.0
        %7263 = vmatprep.subr.mxu0 0.0
        %7264 = vmatpush1.msra.mxu0 0.0
        %7265 = vmatprep.subr.mxu0 0.0
        %7266 = vmatpush1.msra.mxu0 0.0
        %7267 = vmatprep.subr.mxu0 0.0
        %7268 = vmatpush1.msra.mxu0 0.0
        %7269 = vmatprep.subr.mxu0 0.0
        %7270 = vmatpush1.msra.mxu0 0.0
        %7271 = vmatprep.subr.mxu0 0.0
        %7272 = vmatpush1.msra.mxu0 0.0
        %7273 = vmatprep.subr.mxu0 0.0
        %7274 = vmatpush1.msra.mxu0 0.0
        %7275 = vmatprep.subr.mxu0 0.0
        %7276 = vmatpush1.msra.mxu0 0.0
        %7277 = vmatprep.subr.mxu0 0.0
        %7278 = vmatpush1.msra.mxu0 0.0
        %7279 = vmatprep.subr.mxu0 0.0
        %7280 = vmatpush1.msra.mxu0 0.0
        %7281 = vmatprep.subr.mxu0 0.0
        %7282 = vmatpush1.msra.mxu0 0.0
        %7283 = vmatprep.subr.mxu0 0.0
        %7284 = vmatpush1.msra.mxu0 0.0
        %7285 = vmatprep.mubr.f32.mxu0 0.0
        %7286 = vmatmul.mubr.f32.gmra.mrb[0].mxu0 %v7219
        %v7287 = vpop.f32.mrb[0].mxu0
        %v7288 = vadd.f32 %v7214, %v7287
        %v7289 = vpop.f32.mrb[0].mxu0
        %v7290 = vadd.f32 %v7216, %v7289
        %7291 = vdwg.mxu0
        %s7292 = scalar_lea.vmem %s10, 2
        %v7293 = vld [vmem:[%s7292] sm:$0x1]
        %v7295 = vsel %vm6638, %v7293, 0
        %7297 = vmatprep.subr.mxu0 %v6476
        %7298 = vmatpush1.msra.mxu0 %v6474
        %7299 = vmatprep.subr.mxu0 %v6482
        %7300 = vmatpush1.msra.mxu0 %v6480
        %7301 = vmatprep.subr.mxu0 0.0
        %7302 = vmatpush1.msra.mxu0 0.0
        %7303 = vmatprep.subr.mxu0 0.0
        %7304 = vmatpush1.msra.mxu0 0.0
        %7305 = vmatprep.subr.mxu0 0.0
        %7306 = vmatpush1.msra.mxu0 0.0
        %7307 = vmatprep.subr.mxu0 0.0
        %7308 = vmatpush1.msra.mxu0 0.0
        %7309 = vmatprep.subr.mxu0 0.0
        %7310 = vmatpush1.msra.mxu0 0.0
        %7311 = vmatprep.subr.mxu0 0.0
        %7312 = vmatpush1.msra.mxu0 0.0
        %7313 = vmatprep.subr.mxu0 0.0
        %7314 = vmatpush1.msra.mxu0 0.0
        %7315 = vmatprep.subr.mxu0 0.0
        %7316 = vmatpush1.msra.mxu0 0.0
        %7317 = vmatprep.subr.mxu0 0.0
        %7318 = vmatpush1.msra.mxu0 0.0
        %7319 = vmatprep.subr.mxu0 0.0
        %7320 = vmatpush1.msra.mxu0 0.0
        %7321 = vmatprep.subr.mxu0 0.0
        %7322 = vmatpush1.msra.mxu0 0.0
        %7323 = vmatprep.subr.mxu0 0.0
        %7324 = vmatpush1.msra.mxu0 0.0
        %7325 = vmatprep.subr.mxu0 0.0
        %7326 = vmatpush1.msra.mxu0 0.0
        %7327 = vmatprep.subr.mxu0 0.0
        %7328 = vmatpush1.msra.mxu0 0.0
        %7329 = vmatprep.subr.mxu0 0.0
        %7330 = vmatpush1.msra.mxu0 0.0
        %7331 = vmatprep.subr.mxu0 0.0
        %7332 = vmatpush1.msra.mxu0 0.0
        %7333 = vmatprep.subr.mxu0 0.0
        %7334 = vmatpush1.msra.mxu0 0.0
        %7335 = vmatprep.subr.mxu0 0.0
        %7336 = vmatpush1.msra.mxu0 0.0
        %7337 = vmatprep.subr.mxu0 0.0
        %7338 = vmatpush1.msra.mxu0 0.0
        %7339 = vmatprep.subr.mxu0 0.0
        %7340 = vmatpush1.msra.mxu0 0.0
        %7341 = vmatprep.subr.mxu0 0.0
        %7342 = vmatpush1.msra.mxu0 0.0
        %7343 = vmatprep.subr.mxu0 0.0
        %7344 = vmatpush1.msra.mxu0 0.0
        %7345 = vmatprep.subr.mxu0 0.0
        %7346 = vmatpush1.msra.mxu0 0.0
        %7347 = vmatprep.subr.mxu0 0.0
        %7348 = vmatpush1.msra.mxu0 0.0
        %7349 = vmatprep.subr.mxu0 0.0
        %7350 = vmatpush1.msra.mxu0 0.0
        %7351 = vmatprep.subr.mxu0 0.0
        %7352 = vmatpush1.msra.mxu0 0.0
        %7353 = vmatprep.subr.mxu0 0.0
        %7354 = vmatpush1.msra.mxu0 0.0
        %7355 = vmatprep.subr.mxu0 0.0
        %7356 = vmatpush1.msra.mxu0 0.0
        %7357 = vmatprep.subr.mxu0 0.0
        %7358 = vmatpush1.msra.mxu0 0.0
        %7359 = vmatprep.subr.mxu0 0.0
        %7360 = vmatpush1.msra.mxu0 0.0
        %7361 = vmatprep.mubr.f32.mxu0 0.0
        %7362 = vmatmul.mubr.f32.gmra.mrb[0].mxu0 %v7295
        %v7363 = vpop.f32.mrb[0].mxu0
        %v7364 = vadd.f32 0.0, %v7363
        %v7365 = vpop.f32.mrb[0].mxu0
        %v7366 = vadd.f32 0.0, %v7365
        %7367 = vdwg.mxu0
        %v7368 = vadd.f32 %v7288, %v7364
        %v7369 = vadd.f32 %v7290, %v7366
        %v7370 = vld [vmem:[%s10] sm:$0x1]
        %v7372 = vsel %vm6638, %v7370, 0
        %7374 = vmatprep.subr.mxu0 %v6618
        %7375 = vmatpush1.msra.mxu0 %v6616
        %7376 = vmatprep.subr.mxu0 %v6624
        %7377 = vmatpush1.msra.mxu0 %v6622
        %7378 = vmatprep.subr.mxu0 0.0
        %7379 = vmatpush1.msra.mxu0 0.0
        %7380 = vmatprep.subr.mxu0 0.0
        %7381 = vmatpush1.msra.mxu0 0.0
        %7382 = vmatprep.subr.mxu0 0.0
        %7383 = vmatpush1.msra.mxu0 0.0
        %7384 = vmatprep.subr.mxu0 0.0
        %7385 = vmatpush1.msra.mxu0 0.0
        %7386 = vmatprep.subr.mxu0 0.0
        %7387 = vmatpush1.msra.mxu0 0.0
        %7388 = vmatprep.subr.mxu0 0.0
        %7389 = vmatpush1.msra.mxu0 0.0
        %7390 = vmatprep.subr.mxu0 0.0
        %7391 = vmatpush1.msra.mxu0 0.0
        %7392 = vmatprep.subr.mxu0 0.0
        %7393 = vmatpush1.msra.mxu0 0.0
        %7394 = vmatprep.subr.mxu0 0.0
        %7395 = vmatpush1.msra.mxu0 0.0
        %7396 = vmatprep.subr.mxu0 0.0
        %7397 = vmatpush1.msra.mxu0 0.0
        %7398 = vmatprep.subr.mxu0 0.0
        %7399 = vmatpush1.msra.mxu0 0.0
        %7400 = vmatprep.subr.mxu0 0.0
        %7401 = vmatpush1.msra.mxu0 0.0
        %7402 = vmatprep.subr.mxu0 0.0
        %7403 = vmatpush1.msra.mxu0 0.0
        %7404 = vmatprep.subr.mxu0 0.0
        %7405 = vmatpush1.msra.mxu0 0.0
        %7406 = vmatprep.subr.mxu0 0.0
        %7407 = vmatpush1.msra.mxu0 0.0
        %7408 = vmatprep.subr.mxu0 0.0
        %7409 = vmatpush1.msra.mxu0 0.0
        %7410 = vmatprep.subr.mxu0 0.0
        %7411 = vmatpush1.msra.mxu0 0.0
        %7412 = vmatprep.subr.mxu0 0.0
        %7413 = vmatpush1.msra.mxu0 0.0
        %7414 = vmatprep.subr.mxu0 0.0
        %7415 = vmatpush1.msra.mxu0 0.0
        %7416 = vmatprep.subr.mxu0 0.0
        %7417 = vmatpush1.msra.mxu0 0.0
        %7418 = vmatprep.subr.mxu0 0.0
        %7419 = vmatpush1.msra.mxu0 0.0
        %7420 = vmatprep.subr.mxu0 0.0
        %7421 = vmatpush1.msra.mxu0 0.0
        %7422 = vmatprep.subr.mxu0 0.0
        %7423 = vmatpush1.msra.mxu0 0.0
        %7424 = vmatprep.subr.mxu0 0.0
        %7425 = vmatpush1.msra.mxu0 0.0
        %7426 = vmatprep.subr.mxu0 0.0
        %7427 = vmatpush1.msra.mxu0 0.0
        %7428 = vmatprep.subr.mxu0 0.0
        %7429 = vmatpush1.msra.mxu0 0.0
        %7430 = vmatprep.subr.mxu0 0.0
        %7431 = vmatpush1.msra.mxu0 0.0
        %7432 = vmatprep.subr.mxu0 0.0
        %7433 = vmatpush1.msra.mxu0 0.0
        %7434 = vmatprep.subr.mxu0 0.0
        %7435 = vmatpush1.msra.mxu0 0.0
        %7436 = vmatprep.subr.mxu0 0.0
        %7437 = vmatpush1.msra.mxu0 0.0
        %7438 = vmatprep.mubr.f32.mxu0 0.0
        %7439 = vmatmul.mubr.f32.gmra.mrb[0].mxu0 %v7372
        %v7440 = vpop.f32.mrb[0].mxu0
        %v7441 = vadd.f32 0.0, %v7440
        %v7442 = vpop.f32.mrb[0].mxu0
        %v7443 = vadd.f32 0.0, %v7442
        %7444 = vdwg.mxu0
        %v7445 = vadd.f32 %v7368, %v7441
        %v7446 = vadd.f32 %v7369, %v7443
        %v7447 = vld [vmem:[#allocation2] sm:$0x1]
        %7449 = vset.pattern.permute.xlu0 0
        %7450 = vperm.xlu0 %7449, %v7447
        %v7451 = vpop.permute.xlu0 %7450
        %v7453 = vlaneseq
        %v7454 = vshrl.u32 %v7453, 7
        %v7455 = vsub.s32 0, %v7454
        %v7456 = vrot.slane %v7451, %v7455
        %v7457 = vadd.f32 %v7445, %v7456
        %v7458 = vadd.f32 %v7446, %v7456
        %v7459 = vxor.u32 %v7457, 2147483648
        %v7460 = vxor.u32 %v7458, 2147483648
        %v7461 = vmul.f32 %v7459, 1.442695
        %v7462 = vpow.pop %v7461
        %v7463 = vmul.f32 %v7460, 1.442695
        %v7464 = vpow.pop %v7463
        %v7465 = vadd.f32 %v7462, 1.0
        %v7466 = vadd.f32 %v7464, 1.0
        %v7467 = vrcp.pop %v7465
        %v7468 = vmul.f32 1.0, %v7467
        %v7469 = vrcp.pop %v7466
        %v7470 = vmul.f32 1.0, %v7469
        %v7473 = vcombine.low %v7468, %v7470
        %v7475 = vunpack.c.l.s4 1966171168
        %v7476 = vunpack.c.0.s8 %v7475
        %v7477 = vlaneseq
        %v7478 = vshrl.u32 %v7477, 7
        %v7479 = vsub.s32 %v7476, %v7478
        %v7480 = vrot.slane %v7473, %v7479
        %v7482 = vunpack.c.l.s4 1966171168
        %v7483 = vunpack.c.0.s8 %v7482
        %v7484 = vlaneseq
        %v7485 = vshrl.u32 %v7484, 7
        %v7486 = vsub.s32 %v7483, %v7485
        %v7487 = vrot.slane %v7480, %v7486
        %s7489 = scalar_lea.vmem %s436, 3
        %7490 = vst.msk [vmem:[%s7489] ss:$4 sm:$0x3] %vm6746, %v7487
        %p7491 = scmp.lt.s32.totalorder %s27, 1
        %s7492 = scalar_select %p7491, %s27, 1
        %s7493 = smul.addr %s7492, 2
        %s7494 = smul.addr %s7493, 4
        %s7495 = scalar_lea.vmem %s13, %s7494
        // Predicated region
        $region77: #{decoder_depth_forward.1} parent=71 // pred_check
          %p7496 = pneg %p318
        $region78: #{decoder_depth_forward.1} parent=71 // pred_check_branch
          %7498 = sbr.rel (%p7496) target = $region80
        $region79: #{decoder_depth_forward.1} parent=71 // pred_region
          _
        $region80: #{decoder_depth_forward.1} parent=71 // pred_fallthru
          _
      $region72: #{decoder_depth_forward.1} parent=5 // pred_fallthru
        _
      %p7499 = scmp.le.s32.totalorder 2, %s22
      // Predicated region
      $region81: #{decoder_depth_forward.1} parent=5 // pred_check
        %p7500 = pneg %p7499
      $region82: #{decoder_depth_forward.1} parent=5 // pred_check_branch
        %7502 = sbr.rel (%p7500) target = $region84
      $region83: #{decoder_depth_forward.1} parent=5 // pred_region
        %s7503 = ssub.s32 %s22, 2
        // Predicated region
        $region85: #{decoder_depth_forward.1} parent=83 // pred_check
          %p7504 = pneg %p324
        $region86: #{decoder_depth_forward.1} parent=83 // pred_check_branch
          %7506 = sbr.rel (%p7504) target = $region88
        $region87: #{decoder_depth_forward.1} parent=83 // pred_region
          %p7507 = scmp.lt.s32.totalorder %s28, 1
          %s7508 = scalar_select %p7507, %s28, 1
          %s7509 = smul.addr %s7508, 2
          %s7510 = smul.addr %s7509, 4
          %s7511 = scalar_lea.vmem %s13, %s7510
        $region88: #{decoder_depth_forward.1} parent=83 // pred_fallthru
          _
      $region84: #{decoder_depth_forward.1} parent=5 // pred_fallthru
        _
    $region6: #{decoder_depth_forward.1} parent=1 // loop_footer
      %s26 = sadd.s32 1, %s22
    $region7: #{decoder_depth_forward.1} parent=1 // loop_footer_branch
      %21 = sbr.rel target = $region3
    $region8: #{decoder_depth_forward.1} parent=1 // loop_exit
      _
    %7512 = vsyncpa [#allocation4], 1
    %s7513 = scalar_lea.sflag [#allocation4], 1
    %7514 = vsyncpa %s7513, 1

</llo_original>
